<compile_context>
chip_gen: v5e
topology: v5e:2x2
jax: 0.10.0
libtpu: 0.0.40
codegen_flags: <defaults>
</compile_context>

<pallas_src>
import functools

import jax
import jax.numpy as jnp
from jax.experimental import pallas as pl
from jax.experimental.pallas import tpu as pltpu

# ---- static configuration (in_channels == 256 branch of the module) ----
C_IN = 256          # in_channels
C_RED = C_IN // 2   # reduce_dim output / cttlstm input & hidden channels
HID = C_RED
RANKS = 128
ORDER = 5
STEPS = 5
LAGS = STEPS - ORDER + 1   # == 1 -> Conv3d kernel (1,1,1)
TIMESTEPS = 4              # args.num_segments
BATCH = 2                  # batch_size = N // num_segments
H = W = 8
ROWS = BATCH * H * W       # rows per timestep (128)
NUM_ROW_BLOCKS = 2         # grid over independent row halves (64 rows each)
ROWS_BLK = ROWS // NUM_ROW_BLOCKS

# the fused TT path relies on no ring-buffer wraparound (slot written at step
# t is simply t, and only slots < t are nonzero when reading at step t)
assert TIMESTEPS <= STEPS
assert ROWS % NUM_ROW_BLOCKS == 0 and ROWS_BLK % 8 == 0


def _cttlstm_block_kernel(x_ref, wcat_ref, red_s_ref, red_b_ref,
                          wlx_ref, w3h_ref, wup_ref, up_s_ref, up_b_ref,
                          o_ref, hs_scr):
    f32 = jnp.float32
    bf16 = jnp.bfloat16
    rb = ROWS_BLK

    # --- time-independent matmuls, batched over all T timesteps of this block ---
    x = x_ref[...].reshape(TIMESTEPS * rb, C_IN)                    # bf16
    y = jnp.dot(x, wcat_ref[...], preferred_element_type=f32)       # [T*rb, C_IN+C_RED]
    res = y[:, :C_IN]                                               # short_cut
    xr = jnp.maximum(y[:, C_IN:] * red_s_ref[...] + red_b_ref[...], 0.0)  # BN(eval)+ReLU
    gx_all = jnp.dot(xr.astype(bf16), wlx_ref[...],
                     preferred_element_type=f32)                    # x-part of gates

    # --- ConvTTLSTM recurrence, unrolled at trace time ---
    c = jnp.zeros((rb, HID), f32)
    prev_out = None
    for t in range(TIMESTEPS):                                      # static unroll
        gates = gx_all[t * rb:(t + 1) * rb, :]                      # [rb, 4*HID]
        if t > 1:
            # hidden slots 0..t-2: independent of the previous step's output,
            # so this matmul can be overlapped with step t-1's nonlinearities.
            gates = gates + jnp.dot(
                hs_scr[:, 0:(t - 1) * HID],
                w3h_ref[(ORDER - t) * HID:(ORDER - 1) * HID, :],
                preferred_element_type=f32)
        if t > 0:
            # newest slot (t-1): use the previous output value directly.
            gates = gates + jnp.dot(
                prev_out, w3h_ref[(ORDER - 1) * HID:ORDER * HID, :],
                preferred_element_type=f32)

        i_g = jax.nn.sigmoid(gates[:, 0 * HID:1 * HID])
        f_g = jax.nn.sigmoid(gates[:, 1 * HID:2 * HID])
        o_g = jax.nn.sigmoid(gates[:, 2 * HID:3 * HID])
        g_g = jnp.tanh(gates[:, 3 * HID:4 * HID])

        c = f_g * c + i_g * g_g
        out = o_g * jnp.tanh(c)                                     # [rb, HID] f32
        out_bf = out.astype(bf16)
        prev_out = out_bf
        if t + 2 < TIMESTEPS:                                       # only read by steps >= t+2
            hs_scr[:, t * HID:(t + 1) * HID] = out_bf

        # up_dim (BN eval + ReLU) + residual, per step (fills recurrence bubbles)
        up = jnp.dot(out_bf, wup_ref[...], preferred_element_type=f32)
        up = jnp.maximum(up * up_s_ref[...] + up_b_ref[...], 0.0)
        o_ref[t] = up + res[t * rb:(t + 1) * rb, :]


def convlstm_block_pallas(x_trc_bf16, kp):
    """x_trc_bf16: [T, B*H*W, C_IN] bf16 -> [T, B*H*W, C_IN] f32."""
    rb = ROWS_BLK
    wspec = lambda *dims: pl.BlockSpec(dims, lambda i: (0,) * len(dims))
    return pl.pallas_call(
        _cttlstm_block_kernel,
        out_shape=jax.ShapeDtypeStruct((TIMESTEPS, ROWS, C_IN), jnp.float32),
        grid=(NUM_ROW_BLOCKS,),
        in_specs=[
            pl.BlockSpec((TIMESTEPS, rb, C_IN), lambda i: (0, i, 0)),  # x (bf16)
            wspec(C_IN, C_IN + C_RED),     # [W_sc | W_red]            (bf16)
            wspec(1, C_RED),               # reduce BN scale           (f32)
            wspec(1, C_RED),               # reduce BN bias            (f32)
            wspec(C_RED, 4 * HID),         # gate weight, x part       (bf16)
            wspec(ORDER * HID, 4 * HID),   # TT weights, W2&W_last_h folded (bf16)
            wspec(C_RED, C_IN),            # W_up                      (bf16)
            wspec(1, C_IN),                # up BN scale               (f32)
            wspec(1, C_IN),                # up BN bias                (f32)
        ],
        out_specs=pl.BlockSpec((TIMESTEPS, rb, C_IN), lambda i: (0, i, 0)),
        scratch_shapes=[
            pltpu.VMEM((rb, max(TIMESTEPS - 2, 1) * HID), jnp.bfloat16),  # old hidden slots
        ],
        compiler_params=pltpu.CompilerParams(
            dimension_semantics=("parallel",)),
        cost_estimate=pl.CostEstimate(
            flops=302_000_000, transcendentals=330_000,
            bytes_accessed=1_800_000),
    )(x_trc_bf16, kp["W_cat"], kp["red_scale"], kp["red_bias"],
      kp["W_last_x"], kp["W3h"], kp["W_up"], kp["up_scale"], kp["up_bias"])


def prepare_kernel_params(p):
    """Fold the TT Conv2d chain (W2) and the hidden half of the gate weight
    (W_last_h) into the Conv3d weights, fuse short_cut+reduce_dim weights, and
    cast matmul weights to bf16 (all folds done in f32; BN params stay f32)."""
    bf16 = jnp.bfloat16
    folded = []
    for l in range(ORDER):
        w = p["W3"][l]
        for m in range(l, ORDER - 1):
            w = w @ p["W2"][m]
        folded.append(w)
    w3_stacked = jnp.concatenate(folded, axis=0)                 # [ORDER*HID, RANKS]
    w_last_x = p["W_last"][:C_RED]                               # [C_RED, 4*HID]
    w_last_h = p["W_last"][C_RED:]                               # [RANKS, 4*HID]
    w3h = w3_stacked @ w_last_h                                  # [ORDER*HID, 4*HID]
    w_cat = jnp.concatenate([p["W_sc"], p["W_red"]], axis=1)     # [C_IN, C_IN+C_RED]
    return {
        "W_cat": w_cat.astype(bf16),
        "red_scale": p["red_scale"], "red_bias": p["red_bias"],
        "W_last_x": w_last_x.astype(bf16),
        "W3h": w3h.astype(bf16),
        "W_up": p["W_up"].astype(bf16),
        "up_scale": p["up_scale"], "up_bias": p["up_bias"],
    }


def convlstm_block_forward(x_nchw, kp, timesteps=TIMESTEPS):
    """PyTorch-convention wrapper: x_nchw [B*T, C, H, W] -> same shape (f32)."""
    N, C, h, w = x_nchw.shape
    B = max(N // timesteps, 1)
    x = x_nchw.astype(jnp.bfloat16)                          # cast BEFORE layout transposes
    # NCHW (n = b*T + t) -> [T, B*H*W, C]
    x = jnp.transpose(x, (0, 2, 3, 1)).reshape(B, timesteps, h * w, C)
    x = jnp.transpose(x, (1, 0, 2, 3)).reshape(timesteps, B * h * w, C)
    out = convlstm_block_pallas(x, kp)                       # [T, R, C] f32
    out = out.reshape(timesteps, B, h, w, C)
    out = jnp.transpose(out, (1, 0, 4, 2, 3)).reshape(N, C, h, w)   # back to NCHW
    return out


# ---------------- pure-JAX reference (f32, unfolded weights) ----------------
def reference_forward(x_tlc, p):
    T = x_tlc.shape[0]
    hbuf = [jnp.zeros((ROWS, HID), jnp.float32) for _ in range(STEPS)]
    c = jnp.zeros((ROWS, HID), jnp.float32)
    outs = []
    for t in range(T):
        x = x_tlc[t]
        res = x @ p["W_sc"]
        xr = jnp.maximum((x @ p["W_red"]) * p["red_scale"] + p["red_bias"], 0.0)
        temp = None
        for l in range(ORDER):
            u = hbuf[(t + l) % STEPS] @ p["W3"][l]
            temp = u if l == 0 else u + temp @ p["W2"][l - 1]
        gates = jnp.concatenate([xr, temp], axis=1) @ p["W_last"]
        i_g = jax.nn.sigmoid(gates[:, :HID])
        f_g = jax.nn.sigmoid(gates[:, HID:2 * HID])
        o_g = jax.nn.sigmoid(gates[:, 2 * HID:3 * HID])
        g_g = jnp.tanh(gates[:, 3 * HID:])
        c = f_g * c + i_g * g_g
        out = o_g * jnp.tanh(c)
        hbuf[t % STEPS] = out
        up = jnp.maximum((out @ p["W_up"]) * p["up_scale"] + p["up_bias"], 0.0)
        outs.append(up + res)
    return jnp.stack(outs, axis=0)


def init_params(key):
    ks = jax.random.split(key, 10)
    s = 0.05
    eps = 1e-5
    # BN eval mode: running_mean=0, running_var=1, learned gamma/beta
    g_red = 1.0 + 0.1 * jax.random.normal(ks[6], (1, C_RED), jnp.float32)
    b_red = 0.1 * jax.random.normal(ks[7], (1, C_RED), jnp.float32)
    g_up = 1.0 + 0.1 * jax.random.normal(ks[8], (1, C_IN), jnp.float32)
    b_up = 0.1 * jax.random.normal(ks[9], (1, C_IN), jnp.float32)
    inv = 1.0 / jnp.sqrt(1.0 + eps)
    return {
        "W_sc": s * jax.random.normal(ks[0], (C_IN, C_IN), jnp.float32),
        "W_red": s * jax.random.normal(ks[1], (C_IN, C_RED), jnp.float32),
        "W3": s * jax.random.normal(ks[2], (ORDER, HID, RANKS), jnp.float32),
        "W2": s * jax.random.normal(ks[3], (ORDER - 1, RANKS, RANKS), jnp.float32),
        "W_last": s * jax.random.normal(ks[4], (C_RED + RANKS, 4 * HID), jnp.float32),
        "W_up": s * jax.random.normal(ks[5], (C_RED, C_IN), jnp.float32),
        "red_scale": g_red * inv, "red_bias": b_red,
        "up_scale": g_up * inv, "up_bias": b_up,
    }


if __name__ == "__main__":
    key = jax.random.PRNGKey(0)
    kx, kparam = jax.random.split(key)
    params = init_params(kparam)
    kparams = prepare_kernel_params(params)

    # PyTorch-style NCHW input: N = batch_size * num_segments = 2 * 4 = 8
    x_nchw = jax.random.normal(kx, (BATCH * TIMESTEPS, C_IN, H, W), jnp.float32)

    fwd = jax.jit(functools.partial(convlstm_block_forward, timesteps=TIMESTEPS))
    out = jax.block_until_ready(fwd(x_nchw, kparams))
    assert out.shape == x_nchw.shape and out.dtype == jnp.float32

    # correctness check against the f32 pure-JAX reference (unfolded weights)
    x_tlc = jnp.transpose(x_nchw, (0, 2, 3, 1)).reshape(
        BATCH, TIMESTEPS, H * W, C_IN)
    x_tlc = jnp.transpose(x_tlc, (1, 0, 2, 3)).reshape(TIMESTEPS, ROWS, C_IN)
    ref_tlc = reference_forward(x_tlc, params)
    ref = jnp.transpose(ref_tlc.reshape(TIMESTEPS, BATCH, H, W, C_IN),
                        (1, 0, 4, 2, 3)).reshape(BATCH * TIMESTEPS, C_IN, H, W)
    # bf16 MXU operands + folded (W2, W_last_h) weights -> loose tolerance
    if not jnp.allclose(out, ref, rtol=3e-2, atol=3e-2):
        raise SystemExit("mismatch vs reference")

    print("KERNEL_OK")
</pallas_src>

<mosaic_0001>
module attributes {stable_mosaic.version = 11 : i64} {
  func.func @_cttlstm_block_kernel(%arg0: i32, %arg1: memref<4x64x256xbf16, #tpu.memory_space<vmem>>, %arg2: memref<256x384xbf16, #tpu.memory_space<vmem>>, %arg3: memref<1x128xf32, #tpu.memory_space<vmem>>, %arg4: memref<1x128xf32, #tpu.memory_space<vmem>>, %arg5: memref<128x512xbf16, #tpu.memory_space<vmem>>, %arg6: memref<640x512xbf16, #tpu.memory_space<vmem>>, %arg7: memref<128x256xbf16, #tpu.memory_space<vmem>>, %arg8: memref<1x256xf32, #tpu.memory_space<vmem>>, %arg9: memref<1x256xf32, #tpu.memory_space<vmem>>, %arg10: memref<4x64x256xf32, #tpu.memory_space<vmem>>, %arg11: memref<64x256xbf16, #tpu.memory_space<vmem>>) attributes {dimension_semantics = [#tpu.dimension_semantics<parallel>], iteration_bounds = array<i64: 2>, scalar_prefetch = 0 : i64, scratch_operands = 1 : i64, tpu.core_type = #tpu.core_type<tc>, window_params = [{transform_indices = @transform_0, window_bounds = array<i64: 4, 64, 256>}, {pipeline_mode = #tpu.pipeline_mode<synchronous>, transform_indices = @transform_1, window_bounds = array<i64: 256, 384>}, {pipeline_mode = #tpu.pipeline_mode<synchronous>, transform_indices = @transform_2, window_bounds = array<i64: 1, 128>}, {pipeline_mode = #tpu.pipeline_mode<synchronous>, transform_indices = @transform_3, window_bounds = array<i64: 1, 128>}, {pipeline_mode = #tpu.pipeline_mode<synchronous>, transform_indices = @transform_4, window_bounds = array<i64: 128, 512>}, {pipeline_mode = #tpu.pipeline_mode<synchronous>, transform_indices = @transform_5, window_bounds = array<i64: 640, 512>}, {pipeline_mode = #tpu.pipeline_mode<synchronous>, transform_indices = @transform_6, window_bounds = array<i64: 128, 256>}, {pipeline_mode = #tpu.pipeline_mode<synchronous>, transform_indices = @transform_7, window_bounds = array<i64: 1, 256>}, {pipeline_mode = #tpu.pipeline_mode<synchronous>, transform_indices = @transform_8, window_bounds = array<i64: 1, 256>}, {transform_indices = @transform_9, window_bounds = array<i64: 4, 64, 256>}]} {
    %c0 = arith.constant 0 : index
    %c0_0 = arith.constant 0 : index
    %c0_1 = arith.constant 0 : index
    %0 = vector.load %arg1[%c0, %c0_0, %c0_1] : memref<4x64x256xbf16, #tpu.memory_space<vmem>>, vector<4x64x256xbf16>
    %1 = vector.shape_cast %0 : vector<4x64x256xbf16> to vector<256x256xbf16>
    %c0_2 = arith.constant 0 : index
    %c0_3 = arith.constant 0 : index
    %2 = vector.load %arg2[%c0_2, %c0_3] : memref<256x384xbf16, #tpu.memory_space<vmem>>, vector<256x384xbf16>
    %cst = arith.constant dense<0.000000e+00> : vector<256x384xf32>
    %3 = tpu.matmul %1, %2, %cst {dimension_numbers = #tpu.dot_dimension_numbers<[1], [0], [0], [1], [0, 0, 1, 1], [], []>} : vector<256x256xbf16>, vector<256x384xbf16>, vector<256x384xf32> -> vector<256x384xf32>
    %4 = vector.extract_strided_slice %3 {offsets = [0, 0], sizes = [256, 256], strides = [1, 1]} : vector<256x384xf32> to vector<256x256xf32>
    %5 = vector.extract_strided_slice %3 {offsets = [0, 256], sizes = [256, 128], strides = [1, 1]} : vector<256x384xf32> to vector<256x128xf32>
    %c0_4 = arith.constant 0 : index
    %c0_5 = arith.constant 0 : index
    %6 = vector.load %arg3[%c0_4, %c0_5] : memref<1x128xf32, #tpu.memory_space<vmem>>, vector<1x128xf32>
    %7 = vector.broadcast %6 : vector<1x128xf32> to vector<256x128xf32>
    %8 = arith.mulf %5, %7 : vector<256x128xf32>
    %c0_6 = arith.constant 0 : index
    %c0_7 = arith.constant 0 : index
    %9 = vector.load %arg4[%c0_6, %c0_7] : memref<1x128xf32, #tpu.memory_space<vmem>>, vector<1x128xf32>
    %10 = vector.broadcast %9 : vector<1x128xf32> to vector<256x128xf32>
    %11 = arith.addf %8, %10 : vector<256x128xf32>
    %cst_8 = arith.constant 0.000000e+00 : f32
    %12 = vector.broadcast %cst_8 : f32 to vector<256x128xf32>
    %13 = arith.maximumf %11, %12 : vector<256x128xf32>
    %14 = arith.truncf %13 : vector<256x128xf32> to vector<256x128xbf16>
    %c0_9 = arith.constant 0 : index
    %c0_10 = arith.constant 0 : index
    %15 = vector.load %arg5[%c0_9, %c0_10] : memref<128x512xbf16, #tpu.memory_space<vmem>>, vector<128x512xbf16>
    %cst_11 = arith.constant dense<0.000000e+00> : vector<256x512xf32>
    %16 = tpu.matmul %14, %15, %cst_11 {dimension_numbers = #tpu.dot_dimension_numbers<[1], [0], [0], [1], [0, 0, 1, 1], [], []>} : vector<256x128xbf16>, vector<128x512xbf16>, vector<256x512xf32> -> vector<256x512xf32>
    %cst_12 = arith.constant 0.000000e+00 : f32
    %17 = vector.broadcast %cst_12 : f32 to vector<64x128xf32>
    %18 = vector.extract_strided_slice %16 {offsets = [0, 0], sizes = [64, 512], strides = [1, 1]} : vector<256x512xf32> to vector<64x512xf32>
    %19 = vector.extract_strided_slice %18 {offsets = [0, 0], sizes = [64, 128], strides = [1, 1]} : vector<64x512xf32> to vector<64x128xf32>
    %20 = arith.negf %19 : vector<64x128xf32>
    %21 = math.exp %20 : vector<64x128xf32>
    %cst_13 = arith.constant 1.000000e+00 : f32
    %22 = vector.broadcast %cst_13 : f32 to vector<64x128xf32>
    %23 = arith.addf %22, %21 : vector<64x128xf32>
    %24 = arith.divf %22, %23 : vector<64x128xf32>
    %25 = vector.extract_strided_slice %18 {offsets = [0, 128], sizes = [64, 128], strides = [1, 1]} : vector<64x512xf32> to vector<64x128xf32>
    %26 = arith.negf %25 : vector<64x128xf32>
    %27 = math.exp %26 : vector<64x128xf32>
    %cst_14 = arith.constant 1.000000e+00 : f32
    %28 = vector.broadcast %cst_14 : f32 to vector<64x128xf32>
    %29 = arith.addf %28, %27 : vector<64x128xf32>
    %30 = arith.divf %28, %29 : vector<64x128xf32>
    %31 = vector.extract_strided_slice %18 {offsets = [0, 256], sizes = [64, 128], strides = [1, 1]} : vector<64x512xf32> to vector<64x128xf32>
    %32 = arith.negf %31 : vector<64x128xf32>
    %33 = math.exp %32 : vector<64x128xf32>
    %cst_15 = arith.constant 1.000000e+00 : f32
    %34 = vector.broadcast %cst_15 : f32 to vector<64x128xf32>
    %35 = arith.addf %34, %33 : vector<64x128xf32>
    %36 = arith.divf %34, %35 : vector<64x128xf32>
    %37 = vector.extract_strided_slice %18 {offsets = [0, 384], sizes = [64, 128], strides = [1, 1]} : vector<64x512xf32> to vector<64x128xf32>
    %38 = math.tanh %37 : vector<64x128xf32>
    %39 = arith.mulf %30, %17 : vector<64x128xf32>
    %40 = arith.mulf %24, %38 : vector<64x128xf32>
    %41 = arith.addf %39, %40 : vector<64x128xf32>
    %42 = math.tanh %41 : vector<64x128xf32>
    %43 = arith.mulf %36, %42 : vector<64x128xf32>
    %44 = arith.truncf %43 : vector<64x128xf32> to vector<64x128xbf16>
    %c0_16 = arith.constant 0 : index
    %c0_17 = arith.constant 0 : index
    %45 = vector.load %arg11[%c0_16, %c0_17] : memref<64x256xbf16, #tpu.memory_space<vmem>>, vector<64x128xbf16>
    tpu.vector_store %arg11[%c0_16, %c0_17], %44 {strides = array<i32>} : memref<64x256xbf16, #tpu.memory_space<vmem>>, vector<64x128xbf16>,
    %c0_18 = arith.constant 0 : index
    %c0_19 = arith.constant 0 : index
    %46 = vector.load %arg7[%c0_18, %c0_19] : memref<128x256xbf16, #tpu.memory_space<vmem>>, vector<128x256xbf16>
    %cst_20 = arith.constant dense<0.000000e+00> : vector<64x256xf32>
    %47 = tpu.matmul %44, %46, %cst_20 {dimension_numbers = #tpu.dot_dimension_numbers<[1], [0], [0], [1], [0, 0, 1, 1], [], []>} : vector<64x128xbf16>, vector<128x256xbf16>, vector<64x256xf32> -> vector<64x256xf32>
    %c0_21 = arith.constant 0 : index
    %c0_22 = arith.constant 0 : index
    %48 = vector.load %arg8[%c0_21, %c0_22] : memref<1x256xf32, #tpu.memory_space<vmem>>, vector<1x256xf32>
    %49 = vector.broadcast %48 : vector<1x256xf32> to vector<64x256xf32>
    %50 = arith.mulf %47, %49 : vector<64x256xf32>
    %c0_23 = arith.constant 0 : index
    %c0_24 = arith.constant 0 : index
    %51 = vector.load %arg9[%c0_23, %c0_24] : memref<1x256xf32, #tpu.memory_space<vmem>>, vector<1x256xf32>
    %52 = vector.broadcast %51 : vector<1x256xf32> to vector<64x256xf32>
    %53 = arith.addf %50, %52 : vector<64x256xf32>
    %cst_25 = arith.constant 0.000000e+00 : f32
    %54 = vector.broadcast %cst_25 : f32 to vector<64x256xf32>
    %55 = arith.maximumf %53, %54 : vector<64x256xf32>
    %56 = vector.extract_strided_slice %4 {offsets = [0, 0], sizes = [64, 256], strides = [1, 1]} : vector<256x256xf32> to vector<64x256xf32>
    %57 = arith.addf %55, %56 : vector<64x256xf32>
    %c0_26 = arith.constant 0 : index
    %c0_27 = arith.constant 0 : index
    %c0_28 = arith.constant 0 : index
    %58 = vector.load %arg10[%c0_26, %c0_27, %c0_28] : memref<4x64x256xf32, #tpu.memory_space<vmem>>, vector<1x64x256xf32>
    %59 = vector.shape_cast %58 : vector<1x64x256xf32> to vector<64x256xf32>
    %60 = vector.shape_cast %57 : vector<64x256xf32> to vector<1x64x256xf32>
    tpu.vector_store %arg10[%c0_26, %c0_27, %c0_28], %60 {strides = array<i32>} : memref<4x64x256xf32, #tpu.memory_space<vmem>>, vector<1x64x256xf32>,
    %61 = vector.extract_strided_slice %16 {offsets = [64, 0], sizes = [64, 512], strides = [1, 1]} : vector<256x512xf32> to vector<64x512xf32>
    %c512 = arith.constant 512 : index
    %c0_29 = arith.constant 0 : index
    %62 = vector.load %arg6[%c512, %c0_29] : memref<640x512xbf16, #tpu.memory_space<vmem>>, vector<128x512xbf16>
    %cst_30 = arith.constant dense<0.000000e+00> : vector<64x512xf32>
    %63 = tpu.matmul %44, %62, %cst_30 {dimension_numbers = #tpu.dot_dimension_numbers<[1], [0], [0], [1], [0, 0, 1, 1], [], []>} : vector<64x128xbf16>, vector<128x512xbf16>, vector<64x512xf32> -> vector<64x512xf32>
    %64 = arith.addf %61, %63 : vector<64x512xf32>
    %65 = vector.extract_strided_slice %64 {offsets = [0, 0], sizes = [64, 128], strides = [1, 1]} : vector<64x512xf32> to vector<64x128xf32>
    %66 = arith.negf %65 : vector<64x128xf32>
    %67 = math.exp %66 : vector<64x128xf32>
    %cst_31 = arith.constant 1.000000e+00 : f32
    %68 = vector.broadcast %cst_31 : f32 to vector<64x128xf32>
    %69 = arith.addf %68, %67 : vector<64x128xf32>
    %70 = arith.divf %68, %69 : vector<64x128xf32>
    %71 = vector.extract_strided_slice %64 {offsets = [0, 128], sizes = [64, 128], strides = [1, 1]} : vector<64x512xf32> to vector<64x128xf32>
    %72 = arith.negf %71 : vector<64x128xf32>
    %73 = math.exp %72 : vector<64x128xf32>
    %cst_32 = arith.constant 1.000000e+00 : f32
    %74 = vector.broadcast %cst_32 : f32 to vector<64x128xf32>
    %75 = arith.addf %74, %73 : vector<64x128xf32>
    %76 = arith.divf %74, %75 : vector<64x128xf32>
    %77 = vector.extract_strided_slice %64 {offsets = [0, 256], sizes = [64, 128], strides = [1, 1]} : vector<64x512xf32> to vector<64x128xf32>
    %78 = arith.negf %77 : vector<64x128xf32>
    %79 = math.exp %78 : vector<64x128xf32>
    %cst_33 = arith.constant 1.000000e+00 : f32
    %80 = vector.broadcast %cst_33 : f32 to vector<64x128xf32>
    %81 = arith.addf %80, %79 : vector<64x128xf32>
    %82 = arith.divf %80, %81 : vector<64x128xf32>
    %83 = vector.extract_strided_slice %64 {offsets = [0, 384], sizes = [64, 128], strides = [1, 1]} : vector<64x512xf32> to vector<64x128xf32>
    %84 = math.tanh %83 : vector<64x128xf32>
    %85 = arith.mulf %76, %41 : vector<64x128xf32>
    %86 = arith.mulf %70, %84 : vector<64x128xf32>
    %87 = arith.addf %85, %86 : vector<64x128xf32>
    %88 = math.tanh %87 : vector<64x128xf32>
    %89 = arith.mulf %82, %88 : vector<64x128xf32>
    %90 = arith.truncf %89 : vector<64x128xf32> to vector<64x128xbf16>
    %c0_34 = arith.constant 0 : index
    %c128 = arith.constant 128 : index
    %91 = vector.load %arg11[%c0_34, %c128] : memref<64x256xbf16, #tpu.memory_space<vmem>>, vector<64x128xbf16>
    tpu.vector_store %arg11[%c0_34, %c128], %90 {strides = array<i32>} : memref<64x256xbf16, #tpu.memory_space<vmem>>, vector<64x128xbf16>,
    %c0_35 = arith.constant 0 : index
    %c0_36 = arith.constant 0 : index
    %92 = vector.load %arg7[%c0_35, %c0_36] : memref<128x256xbf16, #tpu.memory_space<vmem>>, vector<128x256xbf16>
    %cst_37 = arith.constant dense<0.000000e+00> : vector<64x256xf32>
    %93 = tpu.matmul %90, %92, %cst_37 {dimension_numbers = #tpu.dot_dimension_numbers<[1], [0], [0], [1], [0, 0, 1, 1], [], []>} : vector<64x128xbf16>, vector<128x256xbf16>, vector<64x256xf32> -> vector<64x256xf32>
    %c0_38 = arith.constant 0 : index
    %c0_39 = arith.constant 0 : index
    %94 = vector.load %arg8[%c0_38, %c0_39] : memref<1x256xf32, #tpu.memory_space<vmem>>, vector<1x256xf32>
    %95 = vector.broadcast %94 : vector<1x256xf32> to vector<64x256xf32>
    %96 = arith.mulf %93, %95 : vector<64x256xf32>
    %c0_40 = arith.constant 0 : index
    %c0_41 = arith.constant 0 : index
    %97 = vector.load %arg9[%c0_40, %c0_41] : memref<1x256xf32, #tpu.memory_space<vmem>>, vector<1x256xf32>
    %98 = vector.broadcast %97 : vector<1x256xf32> to vector<64x256xf32>
    %99 = arith.addf %96, %98 : vector<64x256xf32>
    %cst_42 = arith.constant 0.000000e+00 : f32
    %100 = vector.broadcast %cst_42 : f32 to vector<64x256xf32>
    %101 = arith.maximumf %99, %100 : vector<64x256xf32>
    %102 = vector.extract_strided_slice %4 {offsets = [64, 0], sizes = [64, 256], strides = [1, 1]} : vector<256x256xf32> to vector<64x256xf32>
    %103 = arith.addf %101, %102 : vector<64x256xf32>
    %c1 = arith.constant 1 : index
    %c0_43 = arith.constant 0 : index
    %c0_44 = arith.constant 0 : index
    %104 = vector.load %arg10[%c1, %c0_43, %c0_44] : memref<4x64x256xf32, #tpu.memory_space<vmem>>, vector<1x64x256xf32>
    %105 = vector.shape_cast %104 : vector<1x64x256xf32> to vector<64x256xf32>
    %106 = vector.shape_cast %103 : vector<64x256xf32> to vector<1x64x256xf32>
    tpu.vector_store %arg10[%c1, %c0_43, %c0_44], %106 {strides = array<i32>} : memref<4x64x256xf32, #tpu.memory_space<vmem>>, vector<1x64x256xf32>,
    %107 = vector.extract_strided_slice %16 {offsets = [128, 0], sizes = [64, 512], strides = [1, 1]} : vector<256x512xf32> to vector<64x512xf32>
    %c0_45 = arith.constant 0 : index
    %c0_46 = arith.constant 0 : index
    %108 = vector.load %arg11[%c0_45, %c0_46] : memref<64x256xbf16, #tpu.memory_space<vmem>>, vector<64x128xbf16>
    %c384 = arith.constant 384 : index
    %c0_47 = arith.constant 0 : index
    %109 = vector.load %arg6[%c384, %c0_47] : memref<640x512xbf16, #tpu.memory_space<vmem>>, vector<128x512xbf16>
    %cst_48 = arith.constant dense<0.000000e+00> : vector<64x512xf32>
    %110 = tpu.matmul %108, %109, %cst_48 {dimension_numbers = #tpu.dot_dimension_numbers<[1], [0], [0], [1], [0, 0, 1, 1], [], []>} : vector<64x128xbf16>, vector<128x512xbf16>, vector<64x512xf32> -> vector<64x512xf32>
    %111 = arith.addf %107, %110 : vector<64x512xf32>
    %c512_49 = arith.constant 512 : index
    %c0_50 = arith.constant 0 : index
    %112 = vector.load %arg6[%c512_49, %c0_50] : memref<640x512xbf16, #tpu.memory_space<vmem>>, vector<128x512xbf16>
    %cst_51 = arith.constant dense<0.000000e+00> : vector<64x512xf32>
    %113 = tpu.matmul %90, %112, %cst_51 {dimension_numbers = #tpu.dot_dimension_numbers<[1], [0], [0], [1], [0, 0, 1, 1], [], []>} : vector<64x128xbf16>, vector<128x512xbf16>, vector<64x512xf32> -> vector<64x512xf32>
    %114 = arith.addf %111, %113 : vector<64x512xf32>
    %115 = vector.extract_strided_slice %114 {offsets = [0, 0], sizes = [64, 128], strides = [1, 1]} : vector<64x512xf32> to vector<64x128xf32>
    %116 = arith.negf %115 : vector<64x128xf32>
    %117 = math.exp %116 : vector<64x128xf32>
    %cst_52 = arith.constant 1.000000e+00 : f32
    %118 = vector.broadcast %cst_52 : f32 to vector<64x128xf32>
    %119 = arith.addf %118, %117 : vector<64x128xf32>
    %120 = arith.divf %118, %119 : vector<64x128xf32>
    %121 = vector.extract_strided_slice %114 {offsets = [0, 128], sizes = [64, 128], strides = [1, 1]} : vector<64x512xf32> to vector<64x128xf32>
    %122 = arith.negf %121 : vector<64x128xf32>
    %123 = math.exp %122 : vector<64x128xf32>
    %cst_53 = arith.constant 1.000000e+00 : f32
    %124 = vector.broadcast %cst_53 : f32 to vector<64x128xf32>
    %125 = arith.addf %124, %123 : vector<64x128xf32>
    %126 = arith.divf %124, %125 : vector<64x128xf32>
    %127 = vector.extract_strided_slice %114 {offsets = [0, 256], sizes = [64, 128], strides = [1, 1]} : vector<64x512xf32> to vector<64x128xf32>
    %128 = arith.negf %127 : vector<64x128xf32>
    %129 = math.exp %128 : vector<64x128xf32>
    %cst_54 = arith.constant 1.000000e+00 : f32
    %130 = vector.broadcast %cst_54 : f32 to vector<64x128xf32>
    %131 = arith.addf %130, %129 : vector<64x128xf32>
    %132 = arith.divf %130, %131 : vector<64x128xf32>
    %133 = vector.extract_strided_slice %114 {offsets = [0, 384], sizes = [64, 128], strides = [1, 1]} : vector<64x512xf32> to vector<64x128xf32>
    %134 = math.tanh %133 : vector<64x128xf32>
    %135 = arith.mulf %126, %87 : vector<64x128xf32>
    %136 = arith.mulf %120, %134 : vector<64x128xf32>
    %137 = arith.addf %135, %136 : vector<64x128xf32>
    %138 = math.tanh %137 : vector<64x128xf32>
    %139 = arith.mulf %132, %138 : vector<64x128xf32>
    %140 = arith.truncf %139 : vector<64x128xf32> to vector<64x128xbf16>
    %c0_55 = arith.constant 0 : index
    %c0_56 = arith.constant 0 : index
    %141 = vector.load %arg7[%c0_55, %c0_56] : memref<128x256xbf16, #tpu.memory_space<vmem>>, vector<128x256xbf16>
    %cst_57 = arith.constant dense<0.000000e+00> : vector<64x256xf32>
    %142 = tpu.matmul %140, %141, %cst_57 {dimension_numbers = #tpu.dot_dimension_numbers<[1], [0], [0], [1], [0, 0, 1, 1], [], []>} : vector<64x128xbf16>, vector<128x256xbf16>, vector<64x256xf32> -> vector<64x256xf32>
    %c0_58 = arith.constant 0 : index
    %c0_59 = arith.constant 0 : index
    %143 = vector.load %arg8[%c0_58, %c0_59] : memref<1x256xf32, #tpu.memory_space<vmem>>, vector<1x256xf32>
    %144 = vector.broadcast %143 : vector<1x256xf32> to vector<64x256xf32>
    %145 = arith.mulf %142, %144 : vector<64x256xf32>
    %c0_60 = arith.constant 0 : index
    %c0_61 = arith.constant 0 : index
    %146 = vector.load %arg9[%c0_60, %c0_61] : memref<1x256xf32, #tpu.memory_space<vmem>>, vector<1x256xf32>
    %147 = vector.broadcast %146 : vector<1x256xf32> to vector<64x256xf32>
    %148 = arith.addf %145, %147 : vector<64x256xf32>
    %cst_62 = arith.constant 0.000000e+00 : f32
    %149 = vector.broadcast %cst_62 : f32 to vector<64x256xf32>
    %150 = arith.maximumf %148, %149 : vector<64x256xf32>
    %151 = vector.extract_strided_slice %4 {offsets = [128, 0], sizes = [64, 256], strides = [1, 1]} : vector<256x256xf32> to vector<64x256xf32>
    %152 = arith.addf %150, %151 : vector<64x256xf32>
    %c2 = arith.constant 2 : index
    %c0_63 = arith.constant 0 : index
    %c0_64 = arith.constant 0 : index
    %153 = vector.load %arg10[%c2, %c0_63, %c0_64] : memref<4x64x256xf32, #tpu.memory_space<vmem>>, vector<1x64x256xf32>
    %154 = vector.shape_cast %153 : vector<1x64x256xf32> to vector<64x256xf32>
    %155 = vector.shape_cast %152 : vector<64x256xf32> to vector<1x64x256xf32>
    tpu.vector_store %arg10[%c2, %c0_63, %c0_64], %155 {strides = array<i32>} : memref<4x64x256xf32, #tpu.memory_space<vmem>>, vector<1x64x256xf32>,
    %156 = vector.extract_strided_slice %16 {offsets = [192, 0], sizes = [64, 512], strides = [1, 1]} : vector<256x512xf32> to vector<64x512xf32>
    %c0_65 = arith.constant 0 : index
    %c0_66 = arith.constant 0 : index
    %157 = vector.load %arg11[%c0_65, %c0_66] : memref<64x256xbf16, #tpu.memory_space<vmem>>, vector<64x256xbf16>
    %c256 = arith.constant 256 : index
    %c0_67 = arith.constant 0 : index
    %158 = vector.load %arg6[%c256, %c0_67] : memref<640x512xbf16, #tpu.memory_space<vmem>>, vector<256x512xbf16>
    %cst_68 = arith.constant dense<0.000000e+00> : vector<64x512xf32>
    %159 = tpu.matmul %157, %158, %cst_68 {dimension_numbers = #tpu.dot_dimension_numbers<[1], [0], [0], [1], [0, 0, 1, 1], [], []>} : vector<64x256xbf16>, vector<256x512xbf16>, vector<64x512xf32> -> vector<64x512xf32>
    %160 = arith.addf %156, %159 : vector<64x512xf32>
    %c512_69 = arith.constant 512 : index
    %c0_70 = arith.constant 0 : index
    %161 = vector.load %arg6[%c512_69, %c0_70] : memref<640x512xbf16, #tpu.memory_space<vmem>>, vector<128x512xbf16>
    %cst_71 = arith.constant dense<0.000000e+00> : vector<64x512xf32>
    %162 = tpu.matmul %140, %161, %cst_71 {dimension_numbers = #tpu.dot_dimension_numbers<[1], [0], [0], [1], [0, 0, 1, 1], [], []>} : vector<64x128xbf16>, vector<128x512xbf16>, vector<64x512xf32> -> vector<64x512xf32>
    %163 = arith.addf %160, %162 : vector<64x512xf32>
    %164 = vector.extract_strided_slice %163 {offsets = [0, 0], sizes = [64, 128], strides = [1, 1]} : vector<64x512xf32> to vector<64x128xf32>
    %165 = arith.negf %164 : vector<64x128xf32>
    %166 = math.exp %165 : vector<64x128xf32>
    %cst_72 = arith.constant 1.000000e+00 : f32
    %167 = vector.broadcast %cst_72 : f32 to vector<64x128xf32>
    %168 = arith.addf %167, %166 : vector<64x128xf32>
    %169 = arith.divf %167, %168 : vector<64x128xf32>
    %170 = vector.extract_strided_slice %163 {offsets = [0, 128], sizes = [64, 128], strides = [1, 1]} : vector<64x512xf32> to vector<64x128xf32>
    %171 = arith.negf %170 : vector<64x128xf32>
    %172 = math.exp %171 : vector<64x128xf32>
    %cst_73 = arith.constant 1.000000e+00 : f32
    %173 = vector.broadcast %cst_73 : f32 to vector<64x128xf32>
    %174 = arith.addf %173, %172 : vector<64x128xf32>
    %175 = arith.divf %173, %174 : vector<64x128xf32>
    %176 = vector.extract_strided_slice %163 {offsets = [0, 256], sizes = [64, 128], strides = [1, 1]} : vector<64x512xf32> to vector<64x128xf32>
    %177 = arith.negf %176 : vector<64x128xf32>
    %178 = math.exp %177 : vector<64x128xf32>
    %cst_74 = arith.constant 1.000000e+00 : f32
    %179 = vector.broadcast %cst_74 : f32 to vector<64x128xf32>
    %180 = arith.addf %179, %178 : vector<64x128xf32>
    %181 = arith.divf %179, %180 : vector<64x128xf32>
    %182 = vector.extract_strided_slice %163 {offsets = [0, 384], sizes = [64, 128], strides = [1, 1]} : vector<64x512xf32> to vector<64x128xf32>
    %183 = math.tanh %182 : vector<64x128xf32>
    %184 = arith.mulf %175, %137 : vector<64x128xf32>
    %185 = arith.mulf %169, %183 : vector<64x128xf32>
    %186 = arith.addf %184, %185 : vector<64x128xf32>
    %187 = math.tanh %186 : vector<64x128xf32>
    %188 = arith.mulf %181, %187 : vector<64x128xf32>
    %189 = arith.truncf %188 : vector<64x128xf32> to vector<64x128xbf16>
    %c0_75 = arith.constant 0 : index
    %c0_76 = arith.constant 0 : index
    %190 = vector.load %arg7[%c0_75, %c0_76] : memref<128x256xbf16, #tpu.memory_space<vmem>>, vector<128x256xbf16>
    %cst_77 = arith.constant dense<0.000000e+00> : vector<64x256xf32>
    %191 = tpu.matmul %189, %190, %cst_77 {dimension_numbers = #tpu.dot_dimension_numbers<[1], [0], [0], [1], [0, 0, 1, 1], [], []>} : vector<64x128xbf16>, vector<128x256xbf16>, vector<64x256xf32> -> vector<64x256xf32>
    %c0_78 = arith.constant 0 : index
    %c0_79 = arith.constant 0 : index
    %192 = vector.load %arg8[%c0_78, %c0_79] : memref<1x256xf32, #tpu.memory_space<vmem>>, vector<1x256xf32>
    %193 = vector.broadcast %192 : vector<1x256xf32> to vector<64x256xf32>
    %194 = arith.mulf %191, %193 : vector<64x256xf32>
    %c0_80 = arith.constant 0 : index
    %c0_81 = arith.constant 0 : index
    %195 = vector.load %arg9[%c0_80, %c0_81] : memref<1x256xf32, #tpu.memory_space<vmem>>, vector<1x256xf32>
    %196 = vector.broadcast %195 : vector<1x256xf32> to vector<64x256xf32>
    %197 = arith.addf %194, %196 : vector<64x256xf32>
    %cst_82 = arith.constant 0.000000e+00 : f32
    %198 = vector.broadcast %cst_82 : f32 to vector<64x256xf32>
    %199 = arith.maximumf %197, %198 : vector<64x256xf32>
    %200 = vector.extract_strided_slice %4 {offsets = [192, 0], sizes = [64, 256], strides = [1, 1]} : vector<256x256xf32> to vector<64x256xf32>
    %201 = arith.addf %199, %200 : vector<64x256xf32>
    %c3 = arith.constant 3 : index
    %c0_83 = arith.constant 0 : index
    %c0_84 = arith.constant 0 : index
    %202 = vector.load %arg10[%c3, %c0_83, %c0_84] : memref<4x64x256xf32, #tpu.memory_space<vmem>>, vector<1x64x256xf32>
    %203 = vector.shape_cast %202 : vector<1x64x256xf32> to vector<64x256xf32>
    %204 = vector.shape_cast %201 : vector<64x256xf32> to vector<1x64x256xf32>
    tpu.vector_store %arg10[%c3, %c0_83, %c0_84], %204 {strides = array<i32>} : memref<4x64x256xf32, #tpu.memory_space<vmem>>, vector<1x64x256xf32>,
    return
  }
  func.func @transform_0(%arg0: i32) -> (i32, i32, i32) {
    %c0_i32 = arith.constant 0 : i32
    %c0_i32_0 = arith.constant 0 : i32
    %c0_i32_1 = arith.constant 0 : i32
    return %c0_i32, %arg0, %c0_i32_0 : i32, i32, i32
  }
  func.func @transform_1(%arg0: i32) -> (i32, i32) {
    %c0_i32 = arith.constant 0 : i32
    %c0_i32_0 = arith.constant 0 : i32
    %c0_i32_1 = arith.constant 0 : i32
    return %c0_i32, %c0_i32_0 : i32, i32
  }
  func.func @transform_2(%arg0: i32) -> (i32, i32) {
    %c0_i32 = arith.constant 0 : i32
    %c0_i32_0 = arith.constant 0 : i32
    %c0_i32_1 = arith.constant 0 : i32
    return %c0_i32, %c0_i32_0 : i32, i32
  }
  func.func @transform_3(%arg0: i32) -> (i32, i32) {
    %c0_i32 = arith.constant 0 : i32
    %c0_i32_0 = arith.constant 0 : i32
    %c0_i32_1 = arith.constant 0 : i32
    return %c0_i32, %c0_i32_0 : i32, i32
  }
  func.func @transform_4(%arg0: i32) -> (i32, i32) {
    %c0_i32 = arith.constant 0 : i32
    %c0_i32_0 = arith.constant 0 : i32
    %c0_i32_1 = arith.constant 0 : i32
    return %c0_i32, %c0_i32_0 : i32, i32
  }
  func.func @transform_5(%arg0: i32) -> (i32, i32) {
    %c0_i32 = arith.constant 0 : i32
    %c0_i32_0 = arith.constant 0 : i32
    %c0_i32_1 = arith.constant 0 : i32
    return %c0_i32, %c0_i32_0 : i32, i32
  }
  func.func @transform_6(%arg0: i32) -> (i32, i32) {
    %c0_i32 = arith.constant 0 : i32
    %c0_i32_0 = arith.constant 0 : i32
    %c0_i32_1 = arith.constant 0 : i32
    return %c0_i32, %c0_i32_0 : i32, i32
  }
  func.func @transform_7(%arg0: i32) -> (i32, i32) {
    %c0_i32 = arith.constant 0 : i32
    %c0_i32_0 = arith.constant 0 : i32
    %c0_i32_1 = arith.constant 0 : i32
    return %c0_i32, %c0_i32_0 : i32, i32
  }
  func.func @transform_8(%arg0: i32) -> (i32, i32) {
    %c0_i32 = arith.constant 0 : i32
    %c0_i32_0 = arith.constant 0 : i32
    %c0_i32_1 = arith.constant 0 : i32
    return %c0_i32, %c0_i32_0 : i32, i32
  }
  func.func @transform_9(%arg0: i32) -> (i32, i32, i32) {
    %c0_i32 = arith.constant 0 : i32
    %c0_i32_0 = arith.constant 0 : i32
    %c0_i32_1 = arith.constant 0 : i32
    return %c0_i32, %arg0, %c0_i32_0 : i32, i32, i32
  }
}

</mosaic_0001>

<llo_original>
// kernel: convlstm_block_forward.1
$region0: #{convlstm_block_forward.1}
  #allocation0 [shape = 'u32[]', space=smem, size = 0x4, offset = 0x4, fixed_abs, tag = 'smem constant byte address 0x4 - core index']
  #allocation1 [shape = 'u32[72,128]{1,0:T(1,128)}', space=vmem, size = 0x9000, scoped, tag = 'internal scratch']
  #allocation2 [shape = 'bf16[64,256]{1,0:T(8,128)(2,1)}', space=vmem, size = 0x8000, scoped, tag = 'scratch operand']
  %s0 = inlined_call_operand.vmem [shape: bf16[4,128,256], index: 0, kind: input, shape index: {}]
  %s1 = inlined_call_operand.vmem [shape: bf16[256,384], index: 1, kind: input, shape index: {}]
  %s2 = inlined_call_operand.vmem [shape: f32[1,128], index: 2, kind: input, shape index: {}]
  %s3 = inlined_call_operand.vmem [shape: f32[1,128], index: 3, kind: input, shape index: {}]
  %s4 = inlined_call_operand.vmem [shape: bf16[128,512], index: 4, kind: input, shape index: {}]
  %s5 = inlined_call_operand.vmem [shape: bf16[640,512], index: 5, kind: input, shape index: {}]
  %s6 = inlined_call_operand.vmem [shape: bf16[128,256], index: 6, kind: input, shape index: {}]
  %s7 = inlined_call_operand.vmem [shape: f32[1,256], index: 7, kind: input, shape index: {}]
  %s8 = inlined_call_operand.vmem [shape: f32[1,256], index: 8, kind: input, shape index: {}]
  %s9 = inlined_call_operand.vmem [shape: f32[4,128,256], index: 9, kind: output, shape index: {}]
  %s10 = sld [smem:[#allocation0]]
  $region126: #{convlstm_block_forward.1} parent=0
    _
  %s12 = ssub.s32 1, %s10
  %s13 = scalar_select 0, %s12, %s10
  $region1: #{convlstm_block_forward.1} parent=0
    #allocation3 [shape = 'u8[262144]{0}', space=vmem, size = 0x40000, scoped, tag = 'input window, operand 0']
    #allocation4 [shape = 'u8[524288]{0}', space=vmem, size = 0x80000, scoped, tag = 'output window, operand 0']
    loop: start=0, step=1, limit=4
    $region2: #{convlstm_block_forward.1} parent=1 // loop_pre_header
      _
    $region3: #{convlstm_block_forward.1} parent=1 // loop_header
      %s15 = sphi 0, %s19
      %p16 = scmp.ge.s32.totalorder %s15, 4
      %s25 = sphi 0, %s27
      %s28 = sphi 0, %s25
      %s29 = sphi 0, %s28
      %s45 = sphi 0, %s29
      %s49 = sphi 0, %s49
      %s51 = sphi 0, %s49
      %s52 = sphi 0, %s51
      %s66 = sphi 0, %s52
      %s70 = sphi 0, %s70
      %s72 = sphi 0, %s70
      %s73 = sphi 0, %s72
      %s87 = sphi 0, %s73
      %s91 = sphi 0, %s91
      %s93 = sphi 0, %s91
      %s94 = sphi 0, %s93
      %s108 = sphi 0, %s94
      %s112 = sphi 0, %s112
      %s114 = sphi 0, %s112
      %s115 = sphi 0, %s114
      %s129 = sphi 0, %s115
      %s133 = sphi 0, %s133
      %s135 = sphi 0, %s133
      %s136 = sphi 0, %s135
      %s150 = sphi 0, %s136
      %s154 = sphi 0, %s154
      %s156 = sphi 0, %s154
      %s157 = sphi 0, %s156
      %s171 = sphi 0, %s157
      %s175 = sphi 0, %s175
      %s177 = sphi 0, %s175
      %s178 = sphi 0, %s177
      %s192 = sphi 0, %s178
      %s196 = sphi 0, %s196
      %s198 = sphi 0, %s196
      %s199 = sphi 0, %s198
      %s213 = sphi 0, %s199
      %s219 = sphi 0, %s221
      %s222 = sphi 0, %s219
      %s223 = sphi 0, %s222
      %s239 = sphi 0, %s223
    $region4: #{convlstm_block_forward.1} parent=1 // loop_header_branch
      %18 = sbr.rel (%p16) target = $region8
    $region5: #{convlstm_block_forward.1} parent=1 // loop_body
      %s20 = ssub.s32 %s15, 1
      %s21 = ssub.s32 %s15, 2
      %s22 = sadd.s32 %s15, 1
      %s23 = ssub.s32 %s15, %s22
      %p24 = scmp.eq.s32.totalorder %s23, 0
      %s26 = sadd.s32 %s25, 1
      %s27 = scalar_select %p24, %s25, %s26
      %p30 = pneg %p24
      %p31 = scmp.eq.s32.totalorder %s15, 1
      %p32 = por %p30, %p31
      %p33 = scmp.ne.s32.totalorder %s25, %s28
      %p34 = scmp.eq.s32.totalorder %s15, 0
      %p35 = por %p33, %p34
      %p36 = scmp.ne.s32.totalorder %s25, %s28
      %p37 = scmp.eq.s32.totalorder %s20, 1
      %p38 = por %p36, %p37
      %p39 = scmp.ne.s32.totalorder %s28, %s29
      %p40 = scmp.eq.s32.totalorder %s20, 0
      %p41 = por %p39, %p40
      %p42 = scmp.ne.s32.totalorder %s28, %s29
      %p43 = scmp.eq.s32.totalorder %s21, 1
      %p44 = por %p42, %p43
      %p46 = scmp.ne.s32.totalorder %s29, %s45
      %p47 = scmp.eq.s32.totalorder %s21, 0
      %p48 = por %p46, %p47
      %s50 = sadd.s32 %s49, 1
      %p53 = scmp.eq.s32.totalorder %s15, 1
      %p54 = scmp.ne.s32.totalorder %s49, %s51
      %p55 = scmp.eq.s32.totalorder %s15, 0
      %p56 = por %p54, %p55
      %p57 = scmp.ne.s32.totalorder %s49, %s51
      %p58 = scmp.eq.s32.totalorder %s20, 1
      %p59 = por %p57, %p58
      %p60 = scmp.ne.s32.totalorder %s51, %s52
      %p61 = scmp.eq.s32.totalorder %s20, 0
      %p62 = por %p60, %p61
      %p63 = scmp.ne.s32.totalorder %s51, %s52
      %p64 = scmp.eq.s32.totalorder %s21, 1
      %p65 = por %p63, %p64
      %p67 = scmp.ne.s32.totalorder %s52, %s66
      %p68 = scmp.eq.s32.totalorder %s21, 0
      %p69 = por %p67, %p68
      %s71 = sadd.s32 %s70, 1
      %p74 = scmp.eq.s32.totalorder %s15, 1
      %p75 = scmp.ne.s32.totalorder %s70, %s72
      %p76 = scmp.eq.s32.totalorder %s15, 0
      %p77 = por %p75, %p76
      %p78 = scmp.ne.s32.totalorder %s70, %s72
      %p79 = scmp.eq.s32.totalorder %s20, 1
      %p80 = por %p78, %p79
      %p81 = scmp.ne.s32.totalorder %s72, %s73
      %p82 = scmp.eq.s32.totalorder %s20, 0
      %p83 = por %p81, %p82
      %p84 = scmp.ne.s32.totalorder %s72, %s73
      %p85 = scmp.eq.s32.totalorder %s21, 1
      %p86 = por %p84, %p85
      %p88 = scmp.ne.s32.totalorder %s73, %s87
      %p89 = scmp.eq.s32.totalorder %s21, 0
      %p90 = por %p88, %p89
      %s92 = sadd.s32 %s91, 1
      %p95 = scmp.eq.s32.totalorder %s15, 1
      %p96 = scmp.ne.s32.totalorder %s91, %s93
      %p97 = scmp.eq.s32.totalorder %s15, 0
      %p98 = por %p96, %p97
      %p99 = scmp.ne.s32.totalorder %s91, %s93
      %p100 = scmp.eq.s32.totalorder %s20, 1
      %p101 = por %p99, %p100
      %p102 = scmp.ne.s32.totalorder %s93, %s94
      %p103 = scmp.eq.s32.totalorder %s20, 0
      %p104 = por %p102, %p103
      %p105 = scmp.ne.s32.totalorder %s93, %s94
      %p106 = scmp.eq.s32.totalorder %s21, 1
      %p107 = por %p105, %p106
      %p109 = scmp.ne.s32.totalorder %s94, %s108
      %p110 = scmp.eq.s32.totalorder %s21, 0
      %p111 = por %p109, %p110
      %s113 = sadd.s32 %s112, 1
      %p116 = scmp.eq.s32.totalorder %s15, 1
      %p117 = scmp.ne.s32.totalorder %s112, %s114
      %p118 = scmp.eq.s32.totalorder %s15, 0
      %p119 = por %p117, %p118
      %p120 = scmp.ne.s32.totalorder %s112, %s114
      %p121 = scmp.eq.s32.totalorder %s20, 1
      %p122 = por %p120, %p121
      %p123 = scmp.ne.s32.totalorder %s114, %s115
      %p124 = scmp.eq.s32.totalorder %s20, 0
      %p125 = por %p123, %p124
      %p126 = scmp.ne.s32.totalorder %s114, %s115
      %p127 = scmp.eq.s32.totalorder %s21, 1
      %p128 = por %p126, %p127
      %p130 = scmp.ne.s32.totalorder %s115, %s129
      %p131 = scmp.eq.s32.totalorder %s21, 0
      %p132 = por %p130, %p131
      %s134 = sadd.s32 %s133, 1
      %p137 = scmp.eq.s32.totalorder %s15, 1
      %p138 = scmp.ne.s32.totalorder %s133, %s135
      %p139 = scmp.eq.s32.totalorder %s15, 0
      %p140 = por %p138, %p139
      %p141 = scmp.ne.s32.totalorder %s133, %s135
      %p142 = scmp.eq.s32.totalorder %s20, 1
      %p143 = por %p141, %p142
      %p144 = scmp.ne.s32.totalorder %s135, %s136
      %p145 = scmp.eq.s32.totalorder %s20, 0
      %p146 = por %p144, %p145
      %p147 = scmp.ne.s32.totalorder %s135, %s136
      %p148 = scmp.eq.s32.totalorder %s21, 1
      %p149 = por %p147, %p148
      %p151 = scmp.ne.s32.totalorder %s136, %s150
      %p152 = scmp.eq.s32.totalorder %s21, 0
      %p153 = por %p151, %p152
      %s155 = sadd.s32 %s154, 1
      %p158 = scmp.eq.s32.totalorder %s15, 1
      %p159 = scmp.ne.s32.totalorder %s154, %s156
      %p160 = scmp.eq.s32.totalorder %s15, 0
      %p161 = por %p159, %p160
      %p162 = scmp.ne.s32.totalorder %s154, %s156
      %p163 = scmp.eq.s32.totalorder %s20, 1
      %p164 = por %p162, %p163
      %p165 = scmp.ne.s32.totalorder %s156, %s157
      %p166 = scmp.eq.s32.totalorder %s20, 0
      %p167 = por %p165, %p166
      %p168 = scmp.ne.s32.totalorder %s156, %s157
      %p169 = scmp.eq.s32.totalorder %s21, 1
      %p170 = por %p168, %p169
      %p172 = scmp.ne.s32.totalorder %s157, %s171
      %p173 = scmp.eq.s32.totalorder %s21, 0
      %p174 = por %p172, %p173
      %s176 = sadd.s32 %s175, 1
      %p179 = scmp.eq.s32.totalorder %s15, 1
      %p180 = scmp.ne.s32.totalorder %s175, %s177
      %p181 = scmp.eq.s32.totalorder %s15, 0
      %p182 = por %p180, %p181
      %p183 = scmp.ne.s32.totalorder %s175, %s177
      %p184 = scmp.eq.s32.totalorder %s20, 1
      %p185 = por %p183, %p184
      %p186 = scmp.ne.s32.totalorder %s177, %s178
      %p187 = scmp.eq.s32.totalorder %s20, 0
      %p188 = por %p186, %p187
      %p189 = scmp.ne.s32.totalorder %s177, %s178
      %p190 = scmp.eq.s32.totalorder %s21, 1
      %p191 = por %p189, %p190
      %p193 = scmp.ne.s32.totalorder %s178, %s192
      %p194 = scmp.eq.s32.totalorder %s21, 0
      %p195 = por %p193, %p194
      %s197 = sadd.s32 %s196, 1
      %p200 = scmp.eq.s32.totalorder %s15, 1
      %p201 = scmp.ne.s32.totalorder %s196, %s198
      %p202 = scmp.eq.s32.totalorder %s15, 0
      %p203 = por %p201, %p202
      %p204 = scmp.ne.s32.totalorder %s196, %s198
      %p205 = scmp.eq.s32.totalorder %s20, 1
      %p206 = por %p204, %p205
      %p207 = scmp.ne.s32.totalorder %s198, %s199
      %p208 = scmp.eq.s32.totalorder %s20, 0
      %p209 = por %p207, %p208
      %p210 = scmp.ne.s32.totalorder %s198, %s199
      %p211 = scmp.eq.s32.totalorder %s21, 1
      %p212 = por %p210, %p211
      %p214 = scmp.ne.s32.totalorder %s199, %s213
      %p215 = scmp.eq.s32.totalorder %s21, 0
      %p216 = por %p214, %p215
      %s217 = ssub.s32 %s15, %s22
      %p218 = scmp.eq.s32.totalorder %s217, 0
      %s220 = sadd.s32 %s219, 1
      %s221 = scalar_select %p218, %s219, %s220
      %p224 = pneg %p218
      %p225 = scmp.eq.s32.totalorder %s15, 1
      %p226 = por %p224, %p225
      %p227 = scmp.ne.s32.totalorder %s219, %s222
      %p228 = scmp.eq.s32.totalorder %s15, 0
      %p229 = por %p227, %p228
      %p230 = scmp.ne.s32.totalorder %s219, %s222
      %p231 = scmp.eq.s32.totalorder %s20, 1
      %p232 = por %p230, %p231
      %p233 = scmp.ne.s32.totalorder %s222, %s223
      %p234 = scmp.eq.s32.totalorder %s20, 0
      %p235 = por %p233, %p234
      %p236 = scmp.ne.s32.totalorder %s222, %s223
      %p237 = scmp.eq.s32.totalorder %s21, 1
      %p238 = por %p236, %p237
      %p240 = scmp.ne.s32.totalorder %s223, %s239
      %p241 = scmp.eq.s32.totalorder %s21, 0
      %p242 = por %p240, %p241
      %p243 = scmp.le.s32.totalorder 1, %s15
      %p244 = scmp.lt.s32.totalorder %s15, 3
      %p245 = pnand %p243, %p244
      %p246 = pneg %p245
      // Predicated region
      $region9: #{convlstm_block_forward.1} parent=5 // pred_check
        _
      $region10: #{convlstm_block_forward.1} parent=5 // pred_check_branch
        %248 = sbr.rel (%p245) target = $region12
      $region11: #{convlstm_block_forward.1} parent=5 // pred_region
        %s249 = ssub.s32 %s15, 1
        // Predicated region
        $region13: #{convlstm_block_forward.1} parent=11 // pred_check
          %p250 = pneg %p62
        $region14: #{convlstm_block_forward.1} parent=11 // pred_check_branch
          %252 = sbr.rel (%p250) target = $region16
        $region15: #{convlstm_block_forward.1} parent=11 // pred_region
          _
        $region16: #{convlstm_block_forward.1} parent=11 // pred_fallthru
          _
        // Predicated region
        $region17: #{convlstm_block_forward.1} parent=11 // pred_check
          %p253 = pneg %p83
        $region18: #{convlstm_block_forward.1} parent=11 // pred_check_branch
          %255 = sbr.rel (%p253) target = $region20
        $region19: #{convlstm_block_forward.1} parent=11 // pred_region
          _
        $region20: #{convlstm_block_forward.1} parent=11 // pred_fallthru
          _
        // Predicated region
        $region21: #{convlstm_block_forward.1} parent=11 // pred_check
          %p256 = pneg %p104
        $region22: #{convlstm_block_forward.1} parent=11 // pred_check_branch
          %258 = sbr.rel (%p256) target = $region24
        $region23: #{convlstm_block_forward.1} parent=11 // pred_region
          _
        $region24: #{convlstm_block_forward.1} parent=11 // pred_fallthru
          _
        // Predicated region
        $region25: #{convlstm_block_forward.1} parent=11 // pred_check
          %p259 = pneg %p125
        $region26: #{convlstm_block_forward.1} parent=11 // pred_check_branch
          %261 = sbr.rel (%p259) target = $region28
        $region27: #{convlstm_block_forward.1} parent=11 // pred_region
          _
        $region28: #{convlstm_block_forward.1} parent=11 // pred_fallthru
          _
        // Predicated region
        $region29: #{convlstm_block_forward.1} parent=11 // pred_check
          %p262 = pneg %p146
        $region30: #{convlstm_block_forward.1} parent=11 // pred_check_branch
          %264 = sbr.rel (%p262) target = $region32
        $region31: #{convlstm_block_forward.1} parent=11 // pred_region
          _
        $region32: #{convlstm_block_forward.1} parent=11 // pred_fallthru
          _
        // Predicated region
        $region33: #{convlstm_block_forward.1} parent=11 // pred_check
          %p265 = pneg %p167
        $region34: #{convlstm_block_forward.1} parent=11 // pred_check_branch
          %267 = sbr.rel (%p265) target = $region36
        $region35: #{convlstm_block_forward.1} parent=11 // pred_region
          _
        $region36: #{convlstm_block_forward.1} parent=11 // pred_fallthru
          _
        // Predicated region
        $region37: #{convlstm_block_forward.1} parent=11 // pred_check
          %p268 = pneg %p188
        $region38: #{convlstm_block_forward.1} parent=11 // pred_check_branch
          %270 = sbr.rel (%p268) target = $region40
        $region39: #{convlstm_block_forward.1} parent=11 // pred_region
          _
        $region40: #{convlstm_block_forward.1} parent=11 // pred_fallthru
          _
        // Predicated region
        $region41: #{convlstm_block_forward.1} parent=11 // pred_check
          %p271 = pneg %p209
        $region42: #{convlstm_block_forward.1} parent=11 // pred_check_branch
          %273 = sbr.rel (%p271) target = $region44
        $region43: #{convlstm_block_forward.1} parent=11 // pred_region
          _
        $region44: #{convlstm_block_forward.1} parent=11 // pred_fallthru
          _
      $region12: #{convlstm_block_forward.1} parent=5 // pred_fallthru
        _
      %p274 = scmp.lt.s32.totalorder %s15, 2
      // Predicated region
      $region45: #{convlstm_block_forward.1} parent=5 // pred_check
        %p275 = pneg %p274
      $region46: #{convlstm_block_forward.1} parent=5 // pred_check_branch
        %277 = sbr.rel (%p275) target = $region48
      $region47: #{convlstm_block_forward.1} parent=5 // pred_region
        // Predicated region
        $region49: #{convlstm_block_forward.1} parent=47 // pred_check
          %p278 = pneg %p35
        $region50: #{convlstm_block_forward.1} parent=47 // pred_check_branch
          %280 = sbr.rel (%p278) target = $region52
        $region51: #{convlstm_block_forward.1} parent=47 // pred_region
          %s281 = sand.u32 %s25, 1
          %s282 = sand.u32 %s25, 1
          %s283 = smul.addr %s282, 256
          %s284 = scalar_lea.vmem [#allocation3], %s283
          %s285 = smul.u32 8, %s15
          %s286 = smul.addr %s285, 2
          %s287 = smul.addr %s286, 4
          %s288 = scalar_lea.vmem %s0, %s287
          // Predicated region
          $region53: #{convlstm_block_forward.1} parent=51 // pred_check
            _
          $region54: #{convlstm_block_forward.1} parent=51 // pred_check_branch
            %290 = sbr.rel (0) target = $region56
          $region55: #{convlstm_block_forward.1} parent=51 // pred_region
            // Predicated region
            $region57: #{convlstm_block_forward.1} parent=55 // pred_check
              _
            $region58: #{convlstm_block_forward.1} parent=55 // pred_check_branch
              %292 = sbr.rel (0) target = $region60
            $region59: #{convlstm_block_forward.1} parent=55 // pred_region
              // Predicated region
              $region72: #{convlstm_block_forward.1} parent=59 // pred_check
                _
              $region73: #{convlstm_block_forward.1} parent=59 // pred_check_branch
                %370 = sbr.rel (0) target = $region75
              $region74: #{convlstm_block_forward.1} parent=59 // pred_region
                loop: start=0, step=1, limit=1
                $region76: #{convlstm_block_forward.1} parent=74 // loop_pre_header
                  _
                $region77: #{convlstm_block_forward.1} parent=74 // loop_header
                  %s372 = sphi 0, %s376
                  %p373 = scmp.ge.s32.totalorder %s372, 1
                  %s377 = sphi %s288, %s288
                  %s378 = sphi %s284, %s284
                $region78: #{convlstm_block_forward.1} parent=74 // loop_header_branch
                  %375 = sbr.rel (%p373) target = $region82
                $region79: #{convlstm_block_forward.1} parent=74 // loop_body
                  %v379 = vld [vmem:[%s377] sm:$0xff]
                  %380 = vst [vmem:[%s378] sm:$0xff] %v379
                  %v381 = vld [vmem:[%s377 + $0x8] sm:$0xff]
                  %382 = vst [vmem:[%s378 + $0x8] sm:$0xff] %v381
                  %v383 = vld [vmem:[%s377 + $0x10] sm:$0xff]
                  %384 = vst [vmem:[%s378 + $0x10] sm:$0xff] %v383
                  %v385 = vld [vmem:[%s377 + $0x18] sm:$0xff]
                  %386 = vst [vmem:[%s378 + $0x18] sm:$0xff] %v385
                  %v387 = vld [vmem:[%s377 + $0x20] sm:$0xff]
                  %388 = vst [vmem:[%s378 + $0x20] sm:$0xff] %v387
                  %v389 = vld [vmem:[%s377 + $0x28] sm:$0xff]
                  %390 = vst [vmem:[%s378 + $0x28] sm:$0xff] %v389
                  %v391 = vld [vmem:[%s377 + $0x30] sm:$0xff]
                  %392 = vst [vmem:[%s378 + $0x30] sm:$0xff] %v391
                  %v393 = vld [vmem:[%s377 + $0x38] sm:$0xff]
                  %394 = vst [vmem:[%s378 + $0x38] sm:$0xff] %v393
                  %v395 = vld [vmem:[%s377 + $0x80] sm:$0xff]
                  %396 = vst [vmem:[%s378 + $0x40] sm:$0xff] %v395
                  %v397 = vld [vmem:[%s377 + $0x88] sm:$0xff]
                  %398 = vst [vmem:[%s378 + $0x48] sm:$0xff] %v397
                  %v399 = vld [vmem:[%s377 + $0x90] sm:$0xff]
                  %400 = vst [vmem:[%s378 + $0x50] sm:$0xff] %v399
                  %v401 = vld [vmem:[%s377 + $0x98] sm:$0xff]
                  %402 = vst [vmem:[%s378 + $0x58] sm:$0xff] %v401
                  %v403 = vld [vmem:[%s377 + $0xa0] sm:$0xff]
                  %404 = vst [vmem:[%s378 + $0x60] sm:$0xff] %v403
                  %v405 = vld [vmem:[%s377 + $0xa8] sm:$0xff]
                  %406 = vst [vmem:[%s378 + $0x68] sm:$0xff] %v405
                  %v407 = vld [vmem:[%s377 + $0xb0] sm:$0xff]
                  %408 = vst [vmem:[%s378 + $0x70] sm:$0xff] %v407
                  %v409 = vld [vmem:[%s377 + $0xb8] sm:$0xff]
                  %410 = vst [vmem:[%s378 + $0x78] sm:$0xff] %v409
                  %v411 = vld [vmem:[%s377 + $0x100] sm:$0xff]
                  %412 = vst [vmem:[%s378 + $0x80] sm:$0xff] %v411
                  %v413 = vld [vmem:[%s377 + $0x108] sm:$0xff]
                  %414 = vst [vmem:[%s378 + $0x88] sm:$0xff] %v413
                  %v415 = vld [vmem:[%s377 + $0x110] sm:$0xff]
                  %416 = vst [vmem:[%s378 + $0x90] sm:$0xff] %v415
                  %v417 = vld [vmem:[%s377 + $0x118] sm:$0xff]
                  %418 = vst [vmem:[%s378 + $0x98] sm:$0xff] %v417
                  %v419 = vld [vmem:[%s377 + $0x120] sm:$0xff]
                  %420 = vst [vmem:[%s378 + $0xa0] sm:$0xff] %v419
                  %v421 = vld [vmem:[%s377 + $0x128] sm:$0xff]
                  %422 = vst [vmem:[%s378 + $0xa8] sm:$0xff] %v421
                  %v423 = vld [vmem:[%s377 + $0x130] sm:$0xff]
                  %424 = vst [vmem:[%s378 + $0xb0] sm:$0xff] %v423
                  %v425 = vld [vmem:[%s377 + $0x138] sm:$0xff]
                  %426 = vst [vmem:[%s378 + $0xb8] sm:$0xff] %v425
                  %v427 = vld [vmem:[%s377 + $0x180] sm:$0xff]
                  %428 = vst [vmem:[%s378 + $0xc0] sm:$0xff] %v427
                  %v429 = vld [vmem:[%s377 + $0x188] sm:$0xff]
                  %430 = vst [vmem:[%s378 + $0xc8] sm:$0xff] %v429
                  %v431 = vld [vmem:[%s377 + $0x190] sm:$0xff]
                  %432 = vst [vmem:[%s378 + $0xd0] sm:$0xff] %v431
                  %v433 = vld [vmem:[%s377 + $0x198] sm:$0xff]
                  %434 = vst [vmem:[%s378 + $0xd8] sm:$0xff] %v433
                  %v435 = vld [vmem:[%s377 + $0x1a0] sm:$0xff]
                  %436 = vst [vmem:[%s378 + $0xe0] sm:$0xff] %v435
                  %v437 = vld [vmem:[%s377 + $0x1a8] sm:$0xff]
                  %438 = vst [vmem:[%s378 + $0xe8] sm:$0xff] %v437
                  %v439 = vld [vmem:[%s377 + $0x1b0] sm:$0xff]
                  %440 = vst [vmem:[%s378 + $0xf0] sm:$0xff] %v439
                  %v441 = vld [vmem:[%s377 + $0x1b8] sm:$0xff]
                  %442 = vst [vmem:[%s378 + $0xf8] sm:$0xff] %v441
                $region80: #{convlstm_block_forward.1} parent=74 // loop_footer
                  %s376 = sadd.s32 1, %s372
                $region81: #{convlstm_block_forward.1} parent=74 // loop_footer_branch
                  %371 = sbr.rel target = $region77
                $region82: #{convlstm_block_forward.1} parent=74 // loop_exit
                  _
              $region75: #{convlstm_block_forward.1} parent=59 // pred_fallthru
                _
              // Predicated region
              $region83: #{convlstm_block_forward.1} parent=59 // pred_check
                _
              $region84: #{convlstm_block_forward.1} parent=59 // pred_check_branch
                %444 = sbr.rel target = $region86
              $region85: #{convlstm_block_forward.1} parent=59 // pred_region
                _
              $region86: #{convlstm_block_forward.1} parent=59 // pred_fallthru
                _
            $region60: #{convlstm_block_forward.1} parent=55 // pred_fallthru
              _
            // Predicated region
            $region61: #{convlstm_block_forward.1} parent=55 // pred_check
              _
            $region62: #{convlstm_block_forward.1} parent=55 // pred_check_branch
              %294 = sbr.rel target = $region64
            $region63: #{convlstm_block_forward.1} parent=55 // pred_region
              %s296 = ssub.s32 256, 1
              loop: start=0, step=1, limit=1
              $region65: #{convlstm_block_forward.1} parent=63 // loop_pre_header
                _
              $region66: #{convlstm_block_forward.1} parent=63 // loop_header
                %s298 = sphi 0, %s302
                %p299 = scmp.ge.s32.totalorder %s298, 1
                %s303 = sphi %s288, %s288
                %s304 = sphi %s284, %s284
              $region67: #{convlstm_block_forward.1} parent=63 // loop_header_branch
                %301 = sbr.rel (%p299) target = $region71
              $region68: #{convlstm_block_forward.1} parent=63 // loop_body
                %v305 = vld [vmem:[%s303] sm:%s296]
                %306 = vst [vmem:[%s304] sm:%s296] %v305
                %v307 = vld [vmem:[%s303 + $0x8] sm:%s296]
                %308 = vst [vmem:[%s304 + $0x8] sm:%s296] %v307
                %v309 = vld [vmem:[%s303 + $0x10] sm:%s296]
                %310 = vst [vmem:[%s304 + $0x10] sm:%s296] %v309
                %v311 = vld [vmem:[%s303 + $0x18] sm:%s296]
                %312 = vst [vmem:[%s304 + $0x18] sm:%s296] %v311
                %v313 = vld [vmem:[%s303 + $0x20] sm:%s296]
                %314 = vst [vmem:[%s304 + $0x20] sm:%s296] %v313
                %v315 = vld [vmem:[%s303 + $0x28] sm:%s296]
                %316 = vst [vmem:[%s304 + $0x28] sm:%s296] %v315
                %v317 = vld [vmem:[%s303 + $0x30] sm:%s296]
                %318 = vst [vmem:[%s304 + $0x30] sm:%s296] %v317
                %v319 = vld [vmem:[%s303 + $0x38] sm:%s296]
                %320 = vst [vmem:[%s304 + $0x38] sm:%s296] %v319
                %v321 = vld [vmem:[%s303 + $0x80] sm:%s296]
                %322 = vst [vmem:[%s304 + $0x40] sm:%s296] %v321
                %v323 = vld [vmem:[%s303 + $0x88] sm:%s296]
                %324 = vst [vmem:[%s304 + $0x48] sm:%s296] %v323
                %v325 = vld [vmem:[%s303 + $0x90] sm:%s296]
                %326 = vst [vmem:[%s304 + $0x50] sm:%s296] %v325
                %v327 = vld [vmem:[%s303 + $0x98] sm:%s296]
                %328 = vst [vmem:[%s304 + $0x58] sm:%s296] %v327
                %v329 = vld [vmem:[%s303 + $0xa0] sm:%s296]
                %330 = vst [vmem:[%s304 + $0x60] sm:%s296] %v329
                %v331 = vld [vmem:[%s303 + $0xa8] sm:%s296]
                %332 = vst [vmem:[%s304 + $0x68] sm:%s296] %v331
                %v333 = vld [vmem:[%s303 + $0xb0] sm:%s296]
                %334 = vst [vmem:[%s304 + $0x70] sm:%s296] %v333
                %v335 = vld [vmem:[%s303 + $0xb8] sm:%s296]
                %336 = vst [vmem:[%s304 + $0x78] sm:%s296] %v335
                %v337 = vld [vmem:[%s303 + $0x100] sm:%s296]
                %338 = vst [vmem:[%s304 + $0x80] sm:%s296] %v337
                %v339 = vld [vmem:[%s303 + $0x108] sm:%s296]
                %340 = vst [vmem:[%s304 + $0x88] sm:%s296] %v339
                %v341 = vld [vmem:[%s303 + $0x110] sm:%s296]
                %342 = vst [vmem:[%s304 + $0x90] sm:%s296] %v341
                %v343 = vld [vmem:[%s303 + $0x118] sm:%s296]
                %344 = vst [vmem:[%s304 + $0x98] sm:%s296] %v343
                %v345 = vld [vmem:[%s303 + $0x120] sm:%s296]
                %346 = vst [vmem:[%s304 + $0xa0] sm:%s296] %v345
                %v347 = vld [vmem:[%s303 + $0x128] sm:%s296]
                %348 = vst [vmem:[%s304 + $0xa8] sm:%s296] %v347
                %v349 = vld [vmem:[%s303 + $0x130] sm:%s296]
                %350 = vst [vmem:[%s304 + $0xb0] sm:%s296] %v349
                %v351 = vld [vmem:[%s303 + $0x138] sm:%s296]
                %352 = vst [vmem:[%s304 + $0xb8] sm:%s296] %v351
                %v353 = vld [vmem:[%s303 + $0x180] sm:%s296]
                %354 = vst [vmem:[%s304 + $0xc0] sm:%s296] %v353
                %v355 = vld [vmem:[%s303 + $0x188] sm:%s296]
                %356 = vst [vmem:[%s304 + $0xc8] sm:%s296] %v355
                %v357 = vld [vmem:[%s303 + $0x190] sm:%s296]
                %358 = vst [vmem:[%s304 + $0xd0] sm:%s296] %v357
                %v359 = vld [vmem:[%s303 + $0x198] sm:%s296]
                %360 = vst [vmem:[%s304 + $0xd8] sm:%s296] %v359
                %v361 = vld [vmem:[%s303 + $0x1a0] sm:%s296]
                %362 = vst [vmem:[%s304 + $0xe0] sm:%s296] %v361
                %v363 = vld [vmem:[%s303 + $0x1a8] sm:%s296]
                %364 = vst [vmem:[%s304 + $0xe8] sm:%s296] %v363
                %v365 = vld [vmem:[%s303 + $0x1b0] sm:%s296]
                %366 = vst [vmem:[%s304 + $0xf0] sm:%s296] %v365
                %v367 = vld [vmem:[%s303 + $0x1b8] sm:%s296]
                %368 = vst [vmem:[%s304 + $0xf8] sm:%s296] %v367
              $region69: #{convlstm_block_forward.1} parent=63 // loop_footer
                %s302 = sadd.s32 1, %s298
              $region70: #{convlstm_block_forward.1} parent=63 // loop_footer_branch
                %297 = sbr.rel target = $region66
              $region71: #{convlstm_block_forward.1} parent=63 // loop_exit
                _
            $region64: #{convlstm_block_forward.1} parent=55 // pred_fallthru
              _
          $region56: #{convlstm_block_forward.1} parent=51 // pred_fallthru
            _
          %445 = vnop
        $region52: #{convlstm_block_forward.1} parent=47 // pred_fallthru
          _
      $region48: #{convlstm_block_forward.1} parent=5 // pred_fallthru
        _
      %p446 = scmp.le.s32.totalorder 1, %s15
      %p447 = scmp.lt.s32.totalorder %s15, 3
      %p448 = pnand %p446, %p447
      %p449 = pneg %p448
      // Predicated region
      $region87: #{convlstm_block_forward.1} parent=5 // pred_check
        _
      $region88: #{convlstm_block_forward.1} parent=5 // pred_check_branch
        %451 = sbr.rel (%p448) target = $region90
      $region89: #{convlstm_block_forward.1} parent=5 // pred_region
        %s452 = ssub.s32 %s15, 1
        %s453 = sand.u32 %s28, 1
        %s454 = sand.u32 %s28, 1
        %s455 = smul.addr %s454, 256
        %s456 = scalar_lea.vmem [#allocation3], %s455
        // Predicated region
        $region91: #{convlstm_block_forward.1} parent=89 // pred_check
          %p457 = pneg %p41
        $region92: #{convlstm_block_forward.1} parent=89 // pred_check_branch
          %459 = sbr.rel (%p457) target = $region94
        $region93: #{convlstm_block_forward.1} parent=89 // pred_region
          _
        $region94: #{convlstm_block_forward.1} parent=89 // pred_fallthru
          _
        %s460 = sand.u32 %s28, 1
        %s461 = sand.u32 %s28, 1
        %s462 = smul.addr %s461, 256
        %s463 = scalar_lea.vmem [#allocation3], %s462
        %p464 = pneg %p41
        %p465 = pneg %p38
        %p466 = pneg %p62
        %p467 = pneg %p59
        %p468 = pneg %p83
        %p469 = pneg %p80
        %p470 = pneg %p104
        %p471 = pneg %p101
        %p472 = pneg %p125
        %p473 = pneg %p122
        %p474 = pneg %p146
        %p475 = pneg %p143
        %p476 = pneg %p167
        %p477 = pneg %p164
        %p478 = pneg %p188
        %p479 = pneg %p185
        %p480 = pneg %p209
        %p481 = pneg %p206
        %p482 = pneg %p235
        %p483 = pneg %p232
        %s484 = sand.u32 %s222, 1
        %s485 = sand.u32 %s222, 1
        %s486 = smul.addr %s485, 512
        %s487 = scalar_lea.vmem [#allocation4], %s486
        %s488 = smul.u32 8, %s20
        %s489 = smul.u32 8, %s20
        %v490 = vld [vmem:[%s456] sm:$0xff]
        %v491 = vld [vmem:[%s456 + $0x8] sm:$0xff]
        %v492 = vld [vmem:[%s456 + $0x10] sm:$0xff]
        %v493 = vld [vmem:[%s456 + $0x18] sm:$0xff]
        %v494 = vld [vmem:[%s456 + $0x20] sm:$0xff]
        %v495 = vld [vmem:[%s456 + $0x28] sm:$0xff]
        %v496 = vld [vmem:[%s456 + $0x30] sm:$0xff]
        %v497 = vld [vmem:[%s456 + $0x38] sm:$0xff]
        %v498 = vld [vmem:[%s456 + $0x40] sm:$0xff]
        %v499 = vld [vmem:[%s456 + $0x48] sm:$0xff]
        %v500 = vld [vmem:[%s456 + $0x50] sm:$0xff]
        %v501 = vld [vmem:[%s456 + $0x58] sm:$0xff]
        %v502 = vld [vmem:[%s456 + $0x60] sm:$0xff]
        %v503 = vld [vmem:[%s456 + $0x68] sm:$0xff]
        %v504 = vld [vmem:[%s456 + $0x70] sm:$0xff]
        %v505 = vld [vmem:[%s456 + $0x78] sm:$0xff]
        %v506 = vld [vmem:[%s456 + $0x80] sm:$0xff]
        %v507 = vld [vmem:[%s456 + $0x88] sm:$0xff]
        %v508 = vld [vmem:[%s456 + $0x90] sm:$0xff]
        %v509 = vld [vmem:[%s456 + $0x98] sm:$0xff]
        %v510 = vld [vmem:[%s456 + $0xa0] sm:$0xff]
        %v511 = vld [vmem:[%s456 + $0xa8] sm:$0xff]
        %v512 = vld [vmem:[%s456 + $0xb0] sm:$0xff]
        %v513 = vld [vmem:[%s456 + $0xb8] sm:$0xff]
        %v514 = vld [vmem:[%s456 + $0xc0] sm:$0xff]
        %v515 = vld [vmem:[%s456 + $0xc8] sm:$0xff]
        %v516 = vld [vmem:[%s456 + $0xd0] sm:$0xff]
        %v517 = vld [vmem:[%s456 + $0xd8] sm:$0xff]
        %v518 = vld [vmem:[%s456 + $0xe0] sm:$0xff]
        %v519 = vld [vmem:[%s456 + $0xe8] sm:$0xff]
        %v520 = vld [vmem:[%s456 + $0xf0] sm:$0xff]
        %v521 = vld [vmem:[%s456 + $0xf8] sm:$0xff]
        %v522 = vld [vmem:[%s1] sm:$0xff]
        %v523 = vld [vmem:[%s1 + $0x8] sm:$0xf]
        %v524 = vld [vmem:[%s1 + $0xc] sm:$0xff]
        %v525 = vld [vmem:[%s1 + $0x14] sm:$0xf]
        %v526 = vld [vmem:[%s1 + $0x18] sm:$0xff]
        %v527 = vld [vmem:[%s1 + $0x20] sm:$0xf]
        %v528 = vld [vmem:[%s1 + $0x24] sm:$0xff]
        %v529 = vld [vmem:[%s1 + $0x2c] sm:$0xf]
        %v530 = vld [vmem:[%s1 + $0x30] sm:$0xff]
        %v531 = vld [vmem:[%s1 + $0x38] sm:$0xf]
        %v532 = vld [vmem:[%s1 + $0x3c] sm:$0xff]
        %v533 = vld [vmem:[%s1 + $0x44] sm:$0xf]
        %v534 = vld [vmem:[%s1 + $0x48] sm:$0xff]
        %v535 = vld [vmem:[%s1 + $0x50] sm:$0xf]
        %v536 = vld [vmem:[%s1 + $0x54] sm:$0xff]
        %v537 = vld [vmem:[%s1 + $0x5c] sm:$0xf]
        %v538 = vld [vmem:[%s1 + $0x60] sm:$0xff]
        %v539 = vld [vmem:[%s1 + $0x68] sm:$0xf]
        %v540 = vld [vmem:[%s1 + $0x6c] sm:$0xff]
        %v541 = vld [vmem:[%s1 + $0x74] sm:$0xf]
        %v542 = vld [vmem:[%s1 + $0x78] sm:$0xff]
        %v543 = vld [vmem:[%s1 + $0x80] sm:$0xf]
        %v544 = vld [vmem:[%s1 + $0x84] sm:$0xff]
        %v545 = vld [vmem:[%s1 + $0x8c] sm:$0xf]
        %v546 = vld [vmem:[%s1 + $0x90] sm:$0xff]
        %v547 = vld [vmem:[%s1 + $0x98] sm:$0xf]
        %v548 = vld [vmem:[%s1 + $0x9c] sm:$0xff]
        %v549 = vld [vmem:[%s1 + $0xa4] sm:$0xf]
        %v550 = vld [vmem:[%s1 + $0xa8] sm:$0xff]
        %v551 = vld [vmem:[%s1 + $0xb0] sm:$0xf]
        %v552 = vld [vmem:[%s1 + $0xb4] sm:$0xff]
        %v553 = vld [vmem:[%s1 + $0xbc] sm:$0xf]
        %v554 = vld [vmem:[%s1 + $0xc0] sm:$0xff]
        %v555 = vld [vmem:[%s1 + $0xc8] sm:$0xf]
        %v556 = vld [vmem:[%s1 + $0xcc] sm:$0xff]
        %v557 = vld [vmem:[%s1 + $0xd4] sm:$0xf]
        %v558 = vld [vmem:[%s1 + $0xd8] sm:$0xff]
        %v559 = vld [vmem:[%s1 + $0xe0] sm:$0xf]
        %v560 = vld [vmem:[%s1 + $0xe4] sm:$0xff]
        %v561 = vld [vmem:[%s1 + $0xec] sm:$0xf]
        %v562 = vld [vmem:[%s1 + $0xf0] sm:$0xff]
        %v563 = vld [vmem:[%s1 + $0xf8] sm:$0xf]
        %v564 = vld [vmem:[%s1 + $0xfc] sm:$0xff]
        %v565 = vld [vmem:[%s1 + $0x104] sm:$0xf]
        %v566 = vld [vmem:[%s1 + $0x108] sm:$0xff]
        %v567 = vld [vmem:[%s1 + $0x110] sm:$0xf]
        %v568 = vld [vmem:[%s1 + $0x114] sm:$0xff]
        %v569 = vld [vmem:[%s1 + $0x11c] sm:$0xf]
        %v570 = vld [vmem:[%s1 + $0x120] sm:$0xff]
        %v571 = vld [vmem:[%s1 + $0x128] sm:$0xf]
        %v572 = vld [vmem:[%s1 + $0x12c] sm:$0xff]
        %v573 = vld [vmem:[%s1 + $0x134] sm:$0xf]
        %v574 = vld [vmem:[%s1 + $0x138] sm:$0xff]
        %v575 = vld [vmem:[%s1 + $0x140] sm:$0xf]
        %v576 = vld [vmem:[%s1 + $0x144] sm:$0xff]
        %v577 = vld [vmem:[%s1 + $0x14c] sm:$0xf]
        %v578 = vld [vmem:[%s1 + $0x150] sm:$0xff]
        %v579 = vld [vmem:[%s1 + $0x158] sm:$0xf]
        %v580 = vld [vmem:[%s1 + $0x15c] sm:$0xff]
        %v581 = vld [vmem:[%s1 + $0x164] sm:$0xf]
        %v582 = vld [vmem:[%s1 + $0x168] sm:$0xff]
        %v583 = vld [vmem:[%s1 + $0x170] sm:$0xf]
        %v584 = vld [vmem:[%s1 + $0x174] sm:$0xff]
        %v585 = vld [vmem:[%s1 + $0x17c] sm:$0xf]
        %v618 = vunpack.c.l.b16 %v490
        %v619 = vunpack.c.h.b16 %v490
        %v620 = vunpack.c.l.b16 %v491
        %v621 = vunpack.c.h.b16 %v491
        %v622 = vunpack.c.l.b16 %v492
        %v623 = vunpack.c.h.b16 %v492
        %v624 = vunpack.c.l.b16 %v493
        %v625 = vunpack.c.h.b16 %v493
        %v626 = vunpack.c.l.b16 %v494
        %v627 = vunpack.c.h.b16 %v494
        %v628 = vunpack.c.l.b16 %v495
        %v629 = vunpack.c.h.b16 %v495
        %v630 = vunpack.c.l.b16 %v496
        %v631 = vunpack.c.h.b16 %v496
        %v632 = vunpack.c.l.b16 %v497
        %v633 = vunpack.c.h.b16 %v497
        %v634 = vunpack.c.l.b16 %v498
        %v635 = vunpack.c.h.b16 %v498
        %v636 = vunpack.c.l.b16 %v499
        %v637 = vunpack.c.h.b16 %v499
        %v638 = vunpack.c.l.b16 %v500
        %v639 = vunpack.c.h.b16 %v500
        %v640 = vunpack.c.l.b16 %v501
        %v641 = vunpack.c.h.b16 %v501
        %v642 = vunpack.c.l.b16 %v502
        %v643 = vunpack.c.h.b16 %v502
        %v644 = vunpack.c.l.b16 %v503
        %v645 = vunpack.c.h.b16 %v503
        %v646 = vunpack.c.l.b16 %v504
        %v647 = vunpack.c.h.b16 %v504
        %v648 = vunpack.c.l.b16 %v505
        %v649 = vunpack.c.h.b16 %v505
        %v650 = vunpack.c.l.b16 %v506
        %v651 = vunpack.c.h.b16 %v506
        %v652 = vunpack.c.l.b16 %v507
        %v653 = vunpack.c.h.b16 %v507
        %v654 = vunpack.c.l.b16 %v508
        %v655 = vunpack.c.h.b16 %v508
        %v656 = vunpack.c.l.b16 %v509
        %v657 = vunpack.c.h.b16 %v509
        %v658 = vunpack.c.l.b16 %v510
        %v659 = vunpack.c.h.b16 %v510
        %v660 = vunpack.c.l.b16 %v511
        %v661 = vunpack.c.h.b16 %v511
        %v662 = vunpack.c.l.b16 %v512
        %v663 = vunpack.c.h.b16 %v512
        %v664 = vunpack.c.l.b16 %v513
        %v665 = vunpack.c.h.b16 %v513
        %v666 = vunpack.c.l.b16 %v514
        %v667 = vunpack.c.h.b16 %v514
        %v668 = vunpack.c.l.b16 %v515
        %v669 = vunpack.c.h.b16 %v515
        %v670 = vunpack.c.l.b16 %v516
        %v671 = vunpack.c.h.b16 %v516
        %v672 = vunpack.c.l.b16 %v517
        %v673 = vunpack.c.h.b16 %v517
        %v674 = vunpack.c.l.b16 %v518
        %v675 = vunpack.c.h.b16 %v518
        %v676 = vunpack.c.l.b16 %v519
        %v677 = vunpack.c.h.b16 %v519
        %v678 = vunpack.c.l.b16 %v520
        %v679 = vunpack.c.h.b16 %v520
        %v680 = vunpack.c.l.b16 %v521
        %v681 = vunpack.c.h.b16 %v521
        %v682 = vpack.c.b16 %v620, %v618
        %v683 = vpack.c.b16 %v621, %v619
        %v684 = vpack.c.b16 %v624, %v622
        %v685 = vpack.c.b16 %v625, %v623
        %v686 = vpack.c.b16 %v628, %v626
        %v687 = vpack.c.b16 %v629, %v627
        %v688 = vpack.c.b16 %v632, %v630
        %v689 = vpack.c.b16 %v633, %v631
        %v690 = vpack.c.b16 %v636, %v634
        %v691 = vpack.c.b16 %v637, %v635
        %v692 = vpack.c.b16 %v640, %v638
        %v693 = vpack.c.b16 %v641, %v639
        %v694 = vpack.c.b16 %v644, %v642
        %v695 = vpack.c.b16 %v645, %v643
        %v696 = vpack.c.b16 %v648, %v646
        %v697 = vpack.c.b16 %v649, %v647
        %v698 = vpack.c.b16 %v652, %v650
        %v699 = vpack.c.b16 %v653, %v651
        %v700 = vpack.c.b16 %v656, %v654
        %v701 = vpack.c.b16 %v657, %v655
        %v702 = vpack.c.b16 %v660, %v658
        %v703 = vpack.c.b16 %v661, %v659
        %v704 = vpack.c.b16 %v664, %v662
        %v705 = vpack.c.b16 %v665, %v663
        %v706 = vpack.c.b16 %v668, %v666
        %v707 = vpack.c.b16 %v669, %v667
        %v708 = vpack.c.b16 %v672, %v670
        %v709 = vpack.c.b16 %v673, %v671
        %v710 = vpack.c.b16 %v676, %v674
        %v711 = vpack.c.b16 %v677, %v675
        %v712 = vpack.c.b16 %v680, %v678
        %v713 = vpack.c.b16 %v681, %v679
        %v810 = vunpack.c.l.b16 %v522
        %v811 = vunpack.c.h.b16 %v522
        %v812 = vunpack.c.l.b16 %v523
        %v813 = vunpack.c.l.b16 %v524
        %v814 = vunpack.c.h.b16 %v524
        %v815 = vunpack.c.l.b16 %v525
        %v816 = vunpack.c.l.b16 %v526
        %v817 = vunpack.c.h.b16 %v526
        %v818 = vunpack.c.l.b16 %v527
        %v819 = vunpack.c.l.b16 %v528
        %v820 = vunpack.c.h.b16 %v528
        %v821 = vunpack.c.l.b16 %v529
        %v822 = vunpack.c.l.b16 %v530
        %v823 = vunpack.c.h.b16 %v530
        %v824 = vunpack.c.l.b16 %v531
        %v825 = vunpack.c.l.b16 %v532
        %v826 = vunpack.c.h.b16 %v532
        %v827 = vunpack.c.l.b16 %v533
        %v828 = vunpack.c.l.b16 %v534
        %v829 = vunpack.c.h.b16 %v534
        %v830 = vunpack.c.l.b16 %v535
        %v831 = vunpack.c.l.b16 %v536
        %v832 = vunpack.c.h.b16 %v536
        %v833 = vunpack.c.l.b16 %v537
        %v834 = vunpack.c.l.b16 %v538
        %v835 = vunpack.c.h.b16 %v538
        %v836 = vunpack.c.l.b16 %v539
        %v837 = vunpack.c.l.b16 %v540
        %v838 = vunpack.c.h.b16 %v540
        %v839 = vunpack.c.l.b16 %v541
        %v840 = vunpack.c.l.b16 %v542
        %v841 = vunpack.c.h.b16 %v542
        %v842 = vunpack.c.l.b16 %v543
        %v843 = vunpack.c.l.b16 %v544
        %v844 = vunpack.c.h.b16 %v544
        %v845 = vunpack.c.l.b16 %v545
        %v846 = vunpack.c.l.b16 %v546
        %v847 = vunpack.c.h.b16 %v546
        %v848 = vunpack.c.l.b16 %v547
        %v849 = vunpack.c.l.b16 %v548
        %v850 = vunpack.c.h.b16 %v548
        %v851 = vunpack.c.l.b16 %v549
        %v852 = vunpack.c.l.b16 %v550
        %v853 = vunpack.c.h.b16 %v550
        %v854 = vunpack.c.l.b16 %v551
        %v855 = vunpack.c.l.b16 %v552
        %v856 = vunpack.c.h.b16 %v552
        %v857 = vunpack.c.l.b16 %v553
        %v858 = vunpack.c.l.b16 %v554
        %v859 = vunpack.c.h.b16 %v554
        %v860 = vunpack.c.l.b16 %v555
        %v861 = vunpack.c.l.b16 %v556
        %v862 = vunpack.c.h.b16 %v556
        %v863 = vunpack.c.l.b16 %v557
        %v864 = vunpack.c.l.b16 %v558
        %v865 = vunpack.c.h.b16 %v558
        %v866 = vunpack.c.l.b16 %v559
        %v867 = vunpack.c.l.b16 %v560
        %v868 = vunpack.c.h.b16 %v560
        %v869 = vunpack.c.l.b16 %v561
        %v870 = vunpack.c.l.b16 %v562
        %v871 = vunpack.c.h.b16 %v562
        %v872 = vunpack.c.l.b16 %v563
        %v873 = vunpack.c.l.b16 %v564
        %v874 = vunpack.c.h.b16 %v564
        %v875 = vunpack.c.l.b16 %v565
        %v876 = vunpack.c.l.b16 %v566
        %v877 = vunpack.c.h.b16 %v566
        %v878 = vunpack.c.l.b16 %v567
        %v879 = vunpack.c.l.b16 %v568
        %v880 = vunpack.c.h.b16 %v568
        %v881 = vunpack.c.l.b16 %v569
        %v882 = vunpack.c.l.b16 %v570
        %v883 = vunpack.c.h.b16 %v570
        %v884 = vunpack.c.l.b16 %v571
        %v885 = vunpack.c.l.b16 %v572
        %v886 = vunpack.c.h.b16 %v572
        %v887 = vunpack.c.l.b16 %v573
        %v888 = vunpack.c.l.b16 %v574
        %v889 = vunpack.c.h.b16 %v574
        %v890 = vunpack.c.l.b16 %v575
        %v891 = vunpack.c.l.b16 %v576
        %v892 = vunpack.c.h.b16 %v576
        %v893 = vunpack.c.l.b16 %v577
        %v894 = vunpack.c.l.b16 %v578
        %v895 = vunpack.c.h.b16 %v578
        %v896 = vunpack.c.l.b16 %v579
        %v897 = vunpack.c.l.b16 %v580
        %v898 = vunpack.c.h.b16 %v580
        %v899 = vunpack.c.l.b16 %v581
        %v900 = vunpack.c.l.b16 %v582
        %v901 = vunpack.c.h.b16 %v582
        %v902 = vunpack.c.l.b16 %v583
        %v903 = vunpack.c.l.b16 %v584
        %v904 = vunpack.c.h.b16 %v584
        %v905 = vunpack.c.l.b16 %v585
        %v906 = vpack.c.b16 %v813, %v810
        %v907 = vpack.c.b16 %v814, %v811
        %v908 = vpack.c.b16 %v815, %v812
        %v909 = vpack.c.b16 %v819, %v816
        %v910 = vpack.c.b16 %v820, %v817
        %v911 = vpack.c.b16 %v821, %v818
        %v912 = vpack.c.b16 %v825, %v822
        %v913 = vpack.c.b16 %v826, %v823
        %v914 = vpack.c.b16 %v827, %v824
        %v915 = vpack.c.b16 %v831, %v828
        %v916 = vpack.c.b16 %v832, %v829
        %v917 = vpack.c.b16 %v833, %v830
        %v918 = vpack.c.b16 %v837, %v834
        %v919 = vpack.c.b16 %v838, %v835
        %v920 = vpack.c.b16 %v839, %v836
        %v921 = vpack.c.b16 %v843, %v840
        %v922 = vpack.c.b16 %v844, %v841
        %v923 = vpack.c.b16 %v845, %v842
        %v924 = vpack.c.b16 %v849, %v846
        %v925 = vpack.c.b16 %v850, %v847
        %v926 = vpack.c.b16 %v851, %v848
        %v927 = vpack.c.b16 %v855, %v852
        %v928 = vpack.c.b16 %v856, %v853
        %v929 = vpack.c.b16 %v857, %v854
        %v930 = vpack.c.b16 %v861, %v858
        %v931 = vpack.c.b16 %v862, %v859
        %v932 = vpack.c.b16 %v863, %v860
        %v933 = vpack.c.b16 %v867, %v864
        %v934 = vpack.c.b16 %v868, %v865
        %v935 = vpack.c.b16 %v869, %v866
        %v936 = vpack.c.b16 %v873, %v870
        %v937 = vpack.c.b16 %v874, %v871
        %v938 = vpack.c.b16 %v875, %v872
        %v939 = vpack.c.b16 %v879, %v876
        %v940 = vpack.c.b16 %v880, %v877
        %v941 = vpack.c.b16 %v881, %v878
        %v942 = vpack.c.b16 %v885, %v882
        %v943 = vpack.c.b16 %v886, %v883
        %v944 = vpack.c.b16 %v887, %v884
        %v945 = vpack.c.b16 %v891, %v888
        %v946 = vpack.c.b16 %v892, %v889
        %v947 = vpack.c.b16 %v893, %v890
        %v948 = vpack.c.b16 %v897, %v894
        %v949 = vpack.c.b16 %v898, %v895
        %v950 = vpack.c.b16 %v899, %v896
        %v951 = vpack.c.b16 %v903, %v900
        %v952 = vpack.c.b16 %v904, %v901
        %v953 = vpack.c.b16 %v905, %v902
        %1002 = vmatpush.bf16.msra.mxu0 %v927
        %1003 = vmatpush.bf16.msra.mxu0 %v924
        %1004 = vmatpush.bf16.msra.mxu0 %v921
        %1005 = vmatpush.bf16.msra.mxu0 %v918
        %1006 = vmatpush.bf16.msra.mxu0 %v915
        %1007 = vmatpush.bf16.msra.mxu0 %v912
        %1008 = vmatpush.bf16.msra.mxu0 %v909
        %1009 = vmatpush.bf16.msra.mxu0 %v906
        %1010 = vmatmul.bf16.gmra.mxu0 %v682
        %v1011 = vpop.f32.mrf.mxu0
        %v1012 = vadd.f32 0.0, %v1011
        %v1013 = vpop.f32.mrf.mxu0
        %v1014 = vadd.f32 0.0, %v1013
        %1015 = vmatmul.bf16.gmra.mxu0 %v684
        %v1016 = vpop.f32.mrf.mxu0
        %v1017 = vadd.f32 0.0, %v1016
        %v1018 = vpop.f32.mrf.mxu0
        %v1019 = vadd.f32 0.0, %v1018
        %1020 = vmatmul.bf16.gmra.mxu0 %v686
        %v1021 = vpop.f32.mrf.mxu0
        %v1022 = vadd.f32 0.0, %v1021
        %v1023 = vpop.f32.mrf.mxu0
        %v1024 = vadd.f32 0.0, %v1023
        %1025 = vmatmul.bf16.gmra.mxu0 %v688
        %v1026 = vpop.f32.mrf.mxu0
        %v1027 = vadd.f32 0.0, %v1026
        %v1028 = vpop.f32.mrf.mxu0
        %v1029 = vadd.f32 0.0, %v1028
        %1030 = vmatmul.bf16.gmra.mxu0 %v690
        %v1031 = vpop.f32.mrf.mxu0
        %v1032 = vadd.f32 0.0, %v1031
        %v1033 = vpop.f32.mrf.mxu0
        %v1034 = vadd.f32 0.0, %v1033
        %1035 = vmatmul.bf16.gmra.mxu0 %v692
        %v1036 = vpop.f32.mrf.mxu0
        %v1037 = vadd.f32 0.0, %v1036
        %v1038 = vpop.f32.mrf.mxu0
        %v1039 = vadd.f32 0.0, %v1038
        %1040 = vmatmul.bf16.gmra.mxu0 %v694
        %v1041 = vpop.f32.mrf.mxu0
        %v1042 = vadd.f32 0.0, %v1041
        %v1043 = vpop.f32.mrf.mxu0
        %v1044 = vadd.f32 0.0, %v1043
        %1045 = vmatmul.bf16.gmra.mxu0 %v696
        %v1046 = vpop.f32.mrf.mxu0
        %v1047 = vadd.f32 0.0, %v1046
        %v1048 = vpop.f32.mrf.mxu0
        %v1049 = vadd.f32 0.0, %v1048
        %1050 = vmatmul.bf16.gmra.mxu0 %v698
        %v1051 = vpop.f32.mrf.mxu0
        %v1052 = vadd.f32 0.0, %v1051
        %v1053 = vpop.f32.mrf.mxu0
        %v1054 = vadd.f32 0.0, %v1053
        %1055 = vmatmul.bf16.gmra.mxu0 %v700
        %v1056 = vpop.f32.mrf.mxu0
        %v1057 = vadd.f32 0.0, %v1056
        %v1058 = vpop.f32.mrf.mxu0
        %v1059 = vadd.f32 0.0, %v1058
        %1060 = vmatmul.bf16.gmra.mxu0 %v702
        %v1061 = vpop.f32.mrf.mxu0
        %v1062 = vadd.f32 0.0, %v1061
        %v1063 = vpop.f32.mrf.mxu0
        %v1064 = vadd.f32 0.0, %v1063
        %1065 = vmatmul.bf16.gmra.mxu0 %v704
        %v1066 = vpop.f32.mrf.mxu0
        %v1067 = vadd.f32 0.0, %v1066
        %v1068 = vpop.f32.mrf.mxu0
        %v1069 = vadd.f32 0.0, %v1068
        %1070 = vmatmul.bf16.gmra.mxu0 %v706
        %v1071 = vpop.f32.mrf.mxu0
        %v1072 = vadd.f32 0.0, %v1071
        %v1073 = vpop.f32.mrf.mxu0
        %v1074 = vadd.f32 0.0, %v1073
        %1075 = vmatmul.bf16.gmra.mxu0 %v708
        %v1076 = vpop.f32.mrf.mxu0
        %v1077 = vadd.f32 0.0, %v1076
        %v1078 = vpop.f32.mrf.mxu0
        %v1079 = vadd.f32 0.0, %v1078
        %1080 = vmatmul.bf16.gmra.mxu0 %v710
        %v1081 = vpop.f32.mrf.mxu0
        %v1082 = vadd.f32 0.0, %v1081
        %v1083 = vpop.f32.mrf.mxu0
        %v1084 = vadd.f32 0.0, %v1083
        %1085 = vmatmul.bf16.gmra.mxu0 %v712
        %v1086 = vpop.f32.mrf.mxu0
        %v1087 = vadd.f32 0.0, %v1086
        %v1088 = vpop.f32.mrf.mxu0
        %v1089 = vadd.f32 0.0, %v1088
        %1090 = vdwg.mxu0
        %1091 = vmatpush.bf16.msra.mxu0 %v951
        %1092 = vmatpush.bf16.msra.mxu0 %v948
        %1093 = vmatpush.bf16.msra.mxu0 %v945
        %1094 = vmatpush.bf16.msra.mxu0 %v942
        %1095 = vmatpush.bf16.msra.mxu0 %v939
        %1096 = vmatpush.bf16.msra.mxu0 %v936
        %1097 = vmatpush.bf16.msra.mxu0 %v933
        %1098 = vmatpush.bf16.msra.mxu0 %v930
        %1099 = vmatmul.bf16.gmra.mxu0 %v683
        %v1100 = vpop.f32.mrf.mxu0
        %v1101 = vadd.f32 %v1012, %v1100
        %v1102 = vpop.f32.mrf.mxu0
        %v1103 = vadd.f32 %v1014, %v1102
        %1104 = vmatmul.bf16.gmra.mxu0 %v685
        %v1105 = vpop.f32.mrf.mxu0
        %v1106 = vadd.f32 %v1017, %v1105
        %v1107 = vpop.f32.mrf.mxu0
        %v1108 = vadd.f32 %v1019, %v1107
        %1109 = vmatmul.bf16.gmra.mxu0 %v687
        %v1110 = vpop.f32.mrf.mxu0
        %v1111 = vadd.f32 %v1022, %v1110
        %v1112 = vpop.f32.mrf.mxu0
        %v1113 = vadd.f32 %v1024, %v1112
        %1114 = vmatmul.bf16.gmra.mxu0 %v689
        %v1115 = vpop.f32.mrf.mxu0
        %v1116 = vadd.f32 %v1027, %v1115
        %v1117 = vpop.f32.mrf.mxu0
        %v1118 = vadd.f32 %v1029, %v1117
        %1119 = vmatmul.bf16.gmra.mxu0 %v691
        %v1120 = vpop.f32.mrf.mxu0
        %v1121 = vadd.f32 %v1032, %v1120
        %v1122 = vpop.f32.mrf.mxu0
        %v1123 = vadd.f32 %v1034, %v1122
        %1124 = vmatmul.bf16.gmra.mxu0 %v693
        %v1125 = vpop.f32.mrf.mxu0
        %v1126 = vadd.f32 %v1037, %v1125
        %v1127 = vpop.f32.mrf.mxu0
        %v1128 = vadd.f32 %v1039, %v1127
        %1129 = vmatmul.bf16.gmra.mxu0 %v695
        %v1130 = vpop.f32.mrf.mxu0
        %v1131 = vadd.f32 %v1042, %v1130
        %v1132 = vpop.f32.mrf.mxu0
        %v1133 = vadd.f32 %v1044, %v1132
        %1134 = vmatmul.bf16.gmra.mxu0 %v697
        %v1135 = vpop.f32.mrf.mxu0
        %v1136 = vadd.f32 %v1047, %v1135
        %v1137 = vpop.f32.mrf.mxu0
        %v1138 = vadd.f32 %v1049, %v1137
        %1139 = vmatmul.bf16.gmra.mxu0 %v699
        %v1140 = vpop.f32.mrf.mxu0
        %v1141 = vadd.f32 %v1052, %v1140
        %v1142 = vpop.f32.mrf.mxu0
        %v1143 = vadd.f32 %v1054, %v1142
        %1144 = vmatmul.bf16.gmra.mxu0 %v701
        %v1145 = vpop.f32.mrf.mxu0
        %v1146 = vadd.f32 %v1057, %v1145
        %v1147 = vpop.f32.mrf.mxu0
        %v1148 = vadd.f32 %v1059, %v1147
        %1149 = vmatmul.bf16.gmra.mxu0 %v703
        %v1150 = vpop.f32.mrf.mxu0
        %v1151 = vadd.f32 %v1062, %v1150
        %v1152 = vpop.f32.mrf.mxu0
        %v1153 = vadd.f32 %v1064, %v1152
        %1154 = vmatmul.bf16.gmra.mxu0 %v705
        %v1155 = vpop.f32.mrf.mxu0
        %v1156 = vadd.f32 %v1067, %v1155
        %v1157 = vpop.f32.mrf.mxu0
        %v1158 = vadd.f32 %v1069, %v1157
        %1159 = vmatmul.bf16.gmra.mxu0 %v707
        %v1160 = vpop.f32.mrf.mxu0
        %v1161 = vadd.f32 %v1072, %v1160
        %v1162 = vpop.f32.mrf.mxu0
        %v1163 = vadd.f32 %v1074, %v1162
        %1164 = vmatmul.bf16.gmra.mxu0 %v709
        %v1165 = vpop.f32.mrf.mxu0
        %v1166 = vadd.f32 %v1077, %v1165
        %v1167 = vpop.f32.mrf.mxu0
        %v1168 = vadd.f32 %v1079, %v1167
        %1169 = vmatmul.bf16.gmra.mxu0 %v711
        %v1170 = vpop.f32.mrf.mxu0
        %v1171 = vadd.f32 %v1082, %v1170
        %v1172 = vpop.f32.mrf.mxu0
        %v1173 = vadd.f32 %v1084, %v1172
        %1174 = vmatmul.bf16.gmra.mxu0 %v713
        %v1175 = vpop.f32.mrf.mxu0
        %v1176 = vadd.f32 %v1087, %v1175
        %v1177 = vpop.f32.mrf.mxu0
        %v1178 = vadd.f32 %v1089, %v1177
        %1179 = vdwg.mxu0
        %1180 = vmatpush.bf16.msra.mxu0 %v928
        %1181 = vmatpush.bf16.msra.mxu0 %v925
        %1182 = vmatpush.bf16.msra.mxu0 %v922
        %1183 = vmatpush.bf16.msra.mxu0 %v919
        %1184 = vmatpush.bf16.msra.mxu0 %v916
        %1185 = vmatpush.bf16.msra.mxu0 %v913
        %1186 = vmatpush.bf16.msra.mxu0 %v910
        %1187 = vmatpush.bf16.msra.mxu0 %v907
        %1188 = vmatmul.bf16.gmra.mxu0 %v682
        %v1189 = vpop.f32.mrf.mxu0
        %v1190 = vadd.f32 0.0, %v1189
        %v1191 = vpop.f32.mrf.mxu0
        %v1192 = vadd.f32 0.0, %v1191
        %1193 = vmatmul.bf16.gmra.mxu0 %v684
        %v1194 = vpop.f32.mrf.mxu0
        %v1195 = vadd.f32 0.0, %v1194
        %v1196 = vpop.f32.mrf.mxu0
        %v1197 = vadd.f32 0.0, %v1196
        %1198 = vmatmul.bf16.gmra.mxu0 %v686
        %v1199 = vpop.f32.mrf.mxu0
        %v1200 = vadd.f32 0.0, %v1199
        %v1201 = vpop.f32.mrf.mxu0
        %v1202 = vadd.f32 0.0, %v1201
        %1203 = vmatmul.bf16.gmra.mxu0 %v688
        %v1204 = vpop.f32.mrf.mxu0
        %v1205 = vadd.f32 0.0, %v1204
        %v1206 = vpop.f32.mrf.mxu0
        %v1207 = vadd.f32 0.0, %v1206
        %1208 = vmatmul.bf16.gmra.mxu0 %v690
        %v1209 = vpop.f32.mrf.mxu0
        %v1210 = vadd.f32 0.0, %v1209
        %v1211 = vpop.f32.mrf.mxu0
        %v1212 = vadd.f32 0.0, %v1211
        %1213 = vmatmul.bf16.gmra.mxu0 %v692
        %v1214 = vpop.f32.mrf.mxu0
        %v1215 = vadd.f32 0.0, %v1214
        %v1216 = vpop.f32.mrf.mxu0
        %v1217 = vadd.f32 0.0, %v1216
        %1218 = vmatmul.bf16.gmra.mxu0 %v694
        %v1219 = vpop.f32.mrf.mxu0
        %v1220 = vadd.f32 0.0, %v1219
        %v1221 = vpop.f32.mrf.mxu0
        %v1222 = vadd.f32 0.0, %v1221
        %1223 = vmatmul.bf16.gmra.mxu0 %v696
        %v1224 = vpop.f32.mrf.mxu0
        %v1225 = vadd.f32 0.0, %v1224
        %v1226 = vpop.f32.mrf.mxu0
        %v1227 = vadd.f32 0.0, %v1226
        %1228 = vmatmul.bf16.gmra.mxu0 %v698
        %v1229 = vpop.f32.mrf.mxu0
        %v1230 = vadd.f32 0.0, %v1229
        %v1231 = vpop.f32.mrf.mxu0
        %v1232 = vadd.f32 0.0, %v1231
        %1233 = vmatmul.bf16.gmra.mxu0 %v700
        %v1234 = vpop.f32.mrf.mxu0
        %v1235 = vadd.f32 0.0, %v1234
        %v1236 = vpop.f32.mrf.mxu0
        %v1237 = vadd.f32 0.0, %v1236
        %1238 = vmatmul.bf16.gmra.mxu0 %v702
        %v1239 = vpop.f32.mrf.mxu0
        %v1240 = vadd.f32 0.0, %v1239
        %v1241 = vpop.f32.mrf.mxu0
        %v1242 = vadd.f32 0.0, %v1241
        %1243 = vmatmul.bf16.gmra.mxu0 %v704
        %v1244 = vpop.f32.mrf.mxu0
        %v1245 = vadd.f32 0.0, %v1244
        %v1246 = vpop.f32.mrf.mxu0
        %v1247 = vadd.f32 0.0, %v1246
        %1248 = vmatmul.bf16.gmra.mxu0 %v706
        %v1249 = vpop.f32.mrf.mxu0
        %v1250 = vadd.f32 0.0, %v1249
        %v1251 = vpop.f32.mrf.mxu0
        %v1252 = vadd.f32 0.0, %v1251
        %1253 = vmatmul.bf16.gmra.mxu0 %v708
        %v1254 = vpop.f32.mrf.mxu0
        %v1255 = vadd.f32 0.0, %v1254
        %v1256 = vpop.f32.mrf.mxu0
        %v1257 = vadd.f32 0.0, %v1256
        %1258 = vmatmul.bf16.gmra.mxu0 %v710
        %v1259 = vpop.f32.mrf.mxu0
        %v1260 = vadd.f32 0.0, %v1259
        %v1261 = vpop.f32.mrf.mxu0
        %v1262 = vadd.f32 0.0, %v1261
        %1263 = vmatmul.bf16.gmra.mxu0 %v712
        %v1264 = vpop.f32.mrf.mxu0
        %v1265 = vadd.f32 0.0, %v1264
        %v1266 = vpop.f32.mrf.mxu0
        %v1267 = vadd.f32 0.0, %v1266
        %1268 = vdwg.mxu0
        %1269 = vmatpush.bf16.msra.mxu0 %v952
        %1270 = vmatpush.bf16.msra.mxu0 %v949
        %1271 = vmatpush.bf16.msra.mxu0 %v946
        %1272 = vmatpush.bf16.msra.mxu0 %v943
        %1273 = vmatpush.bf16.msra.mxu0 %v940
        %1274 = vmatpush.bf16.msra.mxu0 %v937
        %1275 = vmatpush.bf16.msra.mxu0 %v934
        %1276 = vmatpush.bf16.msra.mxu0 %v931
        %1277 = vmatmul.bf16.gmra.mxu0 %v683
        %v1278 = vpop.f32.mrf.mxu0
        %v1279 = vadd.f32 %v1190, %v1278
        %v1280 = vpop.f32.mrf.mxu0
        %v1281 = vadd.f32 %v1192, %v1280
        %1282 = vmatmul.bf16.gmra.mxu0 %v685
        %v1283 = vpop.f32.mrf.mxu0
        %v1284 = vadd.f32 %v1195, %v1283
        %v1285 = vpop.f32.mrf.mxu0
        %v1286 = vadd.f32 %v1197, %v1285
        %1287 = vmatmul.bf16.gmra.mxu0 %v687
        %v1288 = vpop.f32.mrf.mxu0
        %v1289 = vadd.f32 %v1200, %v1288
        %v1290 = vpop.f32.mrf.mxu0
        %v1291 = vadd.f32 %v1202, %v1290
        %1292 = vmatmul.bf16.gmra.mxu0 %v689
        %v1293 = vpop.f32.mrf.mxu0
        %v1294 = vadd.f32 %v1205, %v1293
        %v1295 = vpop.f32.mrf.mxu0
        %v1296 = vadd.f32 %v1207, %v1295
        %1297 = vmatmul.bf16.gmra.mxu0 %v691
        %v1298 = vpop.f32.mrf.mxu0
        %v1299 = vadd.f32 %v1210, %v1298
        %v1300 = vpop.f32.mrf.mxu0
        %v1301 = vadd.f32 %v1212, %v1300
        %1302 = vmatmul.bf16.gmra.mxu0 %v693
        %v1303 = vpop.f32.mrf.mxu0
        %v1304 = vadd.f32 %v1215, %v1303
        %v1305 = vpop.f32.mrf.mxu0
        %v1306 = vadd.f32 %v1217, %v1305
        %1307 = vmatmul.bf16.gmra.mxu0 %v695
        %v1308 = vpop.f32.mrf.mxu0
        %v1309 = vadd.f32 %v1220, %v1308
        %v1310 = vpop.f32.mrf.mxu0
        %v1311 = vadd.f32 %v1222, %v1310
        %1312 = vmatmul.bf16.gmra.mxu0 %v697
        %v1313 = vpop.f32.mrf.mxu0
        %v1314 = vadd.f32 %v1225, %v1313
        %v1315 = vpop.f32.mrf.mxu0
        %v1316 = vadd.f32 %v1227, %v1315
        %1317 = vmatmul.bf16.gmra.mxu0 %v699
        %v1318 = vpop.f32.mrf.mxu0
        %v1319 = vadd.f32 %v1230, %v1318
        %v1320 = vpop.f32.mrf.mxu0
        %v1321 = vadd.f32 %v1232, %v1320
        %1322 = vmatmul.bf16.gmra.mxu0 %v701
        %v1323 = vpop.f32.mrf.mxu0
        %v1324 = vadd.f32 %v1235, %v1323
        %v1325 = vpop.f32.mrf.mxu0
        %v1326 = vadd.f32 %v1237, %v1325
        %1327 = vmatmul.bf16.gmra.mxu0 %v703
        %v1328 = vpop.f32.mrf.mxu0
        %v1329 = vadd.f32 %v1240, %v1328
        %v1330 = vpop.f32.mrf.mxu0
        %v1331 = vadd.f32 %v1242, %v1330
        %1332 = vmatmul.bf16.gmra.mxu0 %v705
        %v1333 = vpop.f32.mrf.mxu0
        %v1334 = vadd.f32 %v1245, %v1333
        %v1335 = vpop.f32.mrf.mxu0
        %v1336 = vadd.f32 %v1247, %v1335
        %1337 = vmatmul.bf16.gmra.mxu0 %v707
        %v1338 = vpop.f32.mrf.mxu0
        %v1339 = vadd.f32 %v1250, %v1338
        %v1340 = vpop.f32.mrf.mxu0
        %v1341 = vadd.f32 %v1252, %v1340
        %1342 = vmatmul.bf16.gmra.mxu0 %v709
        %v1343 = vpop.f32.mrf.mxu0
        %v1344 = vadd.f32 %v1255, %v1343
        %v1345 = vpop.f32.mrf.mxu0
        %v1346 = vadd.f32 %v1257, %v1345
        %1347 = vmatmul.bf16.gmra.mxu0 %v711
        %v1348 = vpop.f32.mrf.mxu0
        %v1349 = vadd.f32 %v1260, %v1348
        %v1350 = vpop.f32.mrf.mxu0
        %v1351 = vadd.f32 %v1262, %v1350
        %1352 = vmatmul.bf16.gmra.mxu0 %v713
        %v1353 = vpop.f32.mrf.mxu0
        %v1354 = vadd.f32 %v1265, %v1353
        %v1355 = vpop.f32.mrf.mxu0
        %v1356 = vadd.f32 %v1267, %v1355
        %1357 = vdwg.mxu0
        %1358 = vmatpush.bf16.msra.mxu0 %v929
        %1359 = vmatpush.bf16.msra.mxu0 %v926
        %1360 = vmatpush.bf16.msra.mxu0 %v923
        %1361 = vmatpush.bf16.msra.mxu0 %v920
        %1362 = vmatpush.bf16.msra.mxu0 %v917
        %1363 = vmatpush.bf16.msra.mxu0 %v914
        %1364 = vmatpush.bf16.msra.mxu0 %v911
        %1365 = vmatpush.bf16.msra.mxu0 %v908
        %1366 = vmatmul.bf16.gmra.mxu0 %v682
        %v1367 = vpop.f32.mrf.mxu0
        %v1368 = vadd.f32 0.0, %v1367
        %v1369 = vpop.f32.mrf.mxu0
        %v1370 = vadd.f32 0.0, %v1369
        %1371 = vmatmul.bf16.gmra.mxu0 %v684
        %v1372 = vpop.f32.mrf.mxu0
        %v1373 = vadd.f32 0.0, %v1372
        %v1374 = vpop.f32.mrf.mxu0
        %v1375 = vadd.f32 0.0, %v1374
        %1376 = vmatmul.bf16.gmra.mxu0 %v686
        %v1377 = vpop.f32.mrf.mxu0
        %v1378 = vadd.f32 0.0, %v1377
        %v1379 = vpop.f32.mrf.mxu0
        %v1380 = vadd.f32 0.0, %v1379
        %1381 = vmatmul.bf16.gmra.mxu0 %v688
        %v1382 = vpop.f32.mrf.mxu0
        %v1383 = vadd.f32 0.0, %v1382
        %v1384 = vpop.f32.mrf.mxu0
        %v1385 = vadd.f32 0.0, %v1384
        %1386 = vmatmul.bf16.gmra.mxu0 %v690
        %v1387 = vpop.f32.mrf.mxu0
        %v1388 = vadd.f32 0.0, %v1387
        %v1389 = vpop.f32.mrf.mxu0
        %v1390 = vadd.f32 0.0, %v1389
        %1391 = vmatmul.bf16.gmra.mxu0 %v692
        %v1392 = vpop.f32.mrf.mxu0
        %v1393 = vadd.f32 0.0, %v1392
        %v1394 = vpop.f32.mrf.mxu0
        %v1395 = vadd.f32 0.0, %v1394
        %1396 = vmatmul.bf16.gmra.mxu0 %v694
        %v1397 = vpop.f32.mrf.mxu0
        %v1398 = vadd.f32 0.0, %v1397
        %v1399 = vpop.f32.mrf.mxu0
        %v1400 = vadd.f32 0.0, %v1399
        %1401 = vmatmul.bf16.gmra.mxu0 %v696
        %v1402 = vpop.f32.mrf.mxu0
        %v1403 = vadd.f32 0.0, %v1402
        %v1404 = vpop.f32.mrf.mxu0
        %v1405 = vadd.f32 0.0, %v1404
        %1406 = vmatmul.bf16.gmra.mxu0 %v698
        %v1407 = vpop.f32.mrf.mxu0
        %v1408 = vadd.f32 0.0, %v1407
        %v1409 = vpop.f32.mrf.mxu0
        %v1410 = vadd.f32 0.0, %v1409
        %1411 = vmatmul.bf16.gmra.mxu0 %v700
        %v1412 = vpop.f32.mrf.mxu0
        %v1413 = vadd.f32 0.0, %v1412
        %v1414 = vpop.f32.mrf.mxu0
        %v1415 = vadd.f32 0.0, %v1414
        %1416 = vmatmul.bf16.gmra.mxu0 %v702
        %v1417 = vpop.f32.mrf.mxu0
        %v1418 = vadd.f32 0.0, %v1417
        %v1419 = vpop.f32.mrf.mxu0
        %v1420 = vadd.f32 0.0, %v1419
        %1421 = vmatmul.bf16.gmra.mxu0 %v704
        %v1422 = vpop.f32.mrf.mxu0
        %v1423 = vadd.f32 0.0, %v1422
        %v1424 = vpop.f32.mrf.mxu0
        %v1425 = vadd.f32 0.0, %v1424
        %1426 = vmatmul.bf16.gmra.mxu0 %v706
        %v1427 = vpop.f32.mrf.mxu0
        %v1428 = vadd.f32 0.0, %v1427
        %v1429 = vpop.f32.mrf.mxu0
        %v1430 = vadd.f32 0.0, %v1429
        %1431 = vmatmul.bf16.gmra.mxu0 %v708
        %v1432 = vpop.f32.mrf.mxu0
        %v1433 = vadd.f32 0.0, %v1432
        %v1434 = vpop.f32.mrf.mxu0
        %v1435 = vadd.f32 0.0, %v1434
        %1436 = vmatmul.bf16.gmra.mxu0 %v710
        %v1437 = vpop.f32.mrf.mxu0
        %v1438 = vadd.f32 0.0, %v1437
        %v1439 = vpop.f32.mrf.mxu0
        %v1440 = vadd.f32 0.0, %v1439
        %1441 = vmatmul.bf16.gmra.mxu0 %v712
        %v1442 = vpop.f32.mrf.mxu0
        %v1443 = vadd.f32 0.0, %v1442
        %v1444 = vpop.f32.mrf.mxu0
        %v1445 = vadd.f32 0.0, %v1444
        %1446 = vdwg.mxu0
        %1447 = vmatpush.bf16.msra.mxu0 %v953
        %1448 = vmatpush.bf16.msra.mxu0 %v950
        %1449 = vmatpush.bf16.msra.mxu0 %v947
        %1450 = vmatpush.bf16.msra.mxu0 %v944
        %1451 = vmatpush.bf16.msra.mxu0 %v941
        %1452 = vmatpush.bf16.msra.mxu0 %v938
        %1453 = vmatpush.bf16.msra.mxu0 %v935
        %1454 = vmatpush.bf16.msra.mxu0 %v932
        %1455 = vmatmul.bf16.gmra.mxu0 %v683
        %v1456 = vpop.f32.mrf.mxu0
        %v1457 = vadd.f32 %v1368, %v1456
        %v1458 = vpop.f32.mrf.mxu0
        %v1459 = vadd.f32 %v1370, %v1458
        %1460 = vmatmul.bf16.gmra.mxu0 %v685
        %v1461 = vpop.f32.mrf.mxu0
        %v1462 = vadd.f32 %v1373, %v1461
        %v1463 = vpop.f32.mrf.mxu0
        %v1464 = vadd.f32 %v1375, %v1463
        %1465 = vmatmul.bf16.gmra.mxu0 %v687
        %v1466 = vpop.f32.mrf.mxu0
        %v1467 = vadd.f32 %v1378, %v1466
        %v1468 = vpop.f32.mrf.mxu0
        %v1469 = vadd.f32 %v1380, %v1468
        %1470 = vmatmul.bf16.gmra.mxu0 %v689
        %v1471 = vpop.f32.mrf.mxu0
        %v1472 = vadd.f32 %v1383, %v1471
        %v1473 = vpop.f32.mrf.mxu0
        %v1474 = vadd.f32 %v1385, %v1473
        %1475 = vmatmul.bf16.gmra.mxu0 %v691
        %v1476 = vpop.f32.mrf.mxu0
        %v1477 = vadd.f32 %v1388, %v1476
        %v1478 = vpop.f32.mrf.mxu0
        %v1479 = vadd.f32 %v1390, %v1478
        %1480 = vmatmul.bf16.gmra.mxu0 %v693
        %v1481 = vpop.f32.mrf.mxu0
        %v1482 = vadd.f32 %v1393, %v1481
        %v1483 = vpop.f32.mrf.mxu0
        %v1484 = vadd.f32 %v1395, %v1483
        %1485 = vmatmul.bf16.gmra.mxu0 %v695
        %v1486 = vpop.f32.mrf.mxu0
        %v1487 = vadd.f32 %v1398, %v1486
        %v1488 = vpop.f32.mrf.mxu0
        %v1489 = vadd.f32 %v1400, %v1488
        %1490 = vmatmul.bf16.gmra.mxu0 %v697
        %v1491 = vpop.f32.mrf.mxu0
        %v1492 = vadd.f32 %v1403, %v1491
        %v1493 = vpop.f32.mrf.mxu0
        %v1494 = vadd.f32 %v1405, %v1493
        %1495 = vmatmul.bf16.gmra.mxu0 %v699
        %v1496 = vpop.f32.mrf.mxu0
        %v1497 = vadd.f32 %v1408, %v1496
        %v1498 = vpop.f32.mrf.mxu0
        %v1499 = vadd.f32 %v1410, %v1498
        %1500 = vmatmul.bf16.gmra.mxu0 %v701
        %v1501 = vpop.f32.mrf.mxu0
        %v1502 = vadd.f32 %v1413, %v1501
        %v1503 = vpop.f32.mrf.mxu0
        %v1504 = vadd.f32 %v1415, %v1503
        %1505 = vmatmul.bf16.gmra.mxu0 %v703
        %v1506 = vpop.f32.mrf.mxu0
        %v1507 = vadd.f32 %v1418, %v1506
        %v1508 = vpop.f32.mrf.mxu0
        %v1509 = vadd.f32 %v1420, %v1508
        %1510 = vmatmul.bf16.gmra.mxu0 %v705
        %v1511 = vpop.f32.mrf.mxu0
        %v1512 = vadd.f32 %v1423, %v1511
        %v1513 = vpop.f32.mrf.mxu0
        %v1514 = vadd.f32 %v1425, %v1513
        %1515 = vmatmul.bf16.gmra.mxu0 %v707
        %v1516 = vpop.f32.mrf.mxu0
        %v1517 = vadd.f32 %v1428, %v1516
        %v1518 = vpop.f32.mrf.mxu0
        %v1519 = vadd.f32 %v1430, %v1518
        %1520 = vmatmul.bf16.gmra.mxu0 %v709
        %v1521 = vpop.f32.mrf.mxu0
        %v1522 = vadd.f32 %v1433, %v1521
        %v1523 = vpop.f32.mrf.mxu0
        %v1524 = vadd.f32 %v1435, %v1523
        %1525 = vmatmul.bf16.gmra.mxu0 %v711
        %v1526 = vpop.f32.mrf.mxu0
        %v1527 = vadd.f32 %v1438, %v1526
        %v1528 = vpop.f32.mrf.mxu0
        %v1529 = vadd.f32 %v1440, %v1528
        %1530 = vmatmul.bf16.gmra.mxu0 %v713
        %v1531 = vpop.f32.mrf.mxu0
        %v1532 = vadd.f32 %v1443, %v1531
        %v1533 = vpop.f32.mrf.mxu0
        %v1534 = vadd.f32 %v1445, %v1533
        %1535 = vdwg.mxu0
        %v1536 = vld [vmem:[%s2] sm:$0x1]
        %v1538 = vperm.slane %v1536, 0
        %v1540 = vmul.f32 %v1457, %v1538
        %v1541 = vmul.f32 %v1459, %v1538
        %v1542 = vmul.f32 %v1462, %v1538
        %v1543 = vmul.f32 %v1464, %v1538
        %v1544 = vmul.f32 %v1467, %v1538
        %v1545 = vmul.f32 %v1469, %v1538
        %v1546 = vmul.f32 %v1472, %v1538
        %v1547 = vmul.f32 %v1474, %v1538
        %v1548 = vmul.f32 %v1477, %v1538
        %v1549 = vmul.f32 %v1479, %v1538
        %v1550 = vmul.f32 %v1482, %v1538
        %v1551 = vmul.f32 %v1484, %v1538
        %v1552 = vmul.f32 %v1487, %v1538
        %v1553 = vmul.f32 %v1489, %v1538
        %v1554 = vmul.f32 %v1492, %v1538
        %v1555 = vmul.f32 %v1494, %v1538
        %v1556 = vmul.f32 %v1497, %v1538
        %v1557 = vmul.f32 %v1499, %v1538
        %v1558 = vmul.f32 %v1502, %v1538
        %v1559 = vmul.f32 %v1504, %v1538
        %v1560 = vmul.f32 %v1507, %v1538
        %v1561 = vmul.f32 %v1509, %v1538
        %v1562 = vmul.f32 %v1512, %v1538
        %v1563 = vmul.f32 %v1514, %v1538
        %v1564 = vmul.f32 %v1517, %v1538
        %v1565 = vmul.f32 %v1519, %v1538
        %v1566 = vmul.f32 %v1522, %v1538
        %v1567 = vmul.f32 %v1524, %v1538
        %v1568 = vmul.f32 %v1527, %v1538
        %v1569 = vmul.f32 %v1529, %v1538
        %v1570 = vmul.f32 %v1532, %v1538
        %v1571 = vmul.f32 %v1534, %v1538
        %v1572 = vld [vmem:[%s3] sm:$0x1]
        %v1574 = vperm.slane %v1572, 0
        %v1576 = vadd.f32 %v1540, %v1574
        %v1577 = vadd.f32 %v1541, %v1574
        %v1578 = vadd.f32 %v1542, %v1574
        %v1579 = vadd.f32 %v1543, %v1574
        %v1580 = vadd.f32 %v1544, %v1574
        %v1581 = vadd.f32 %v1545, %v1574
        %v1582 = vadd.f32 %v1546, %v1574
        %v1583 = vadd.f32 %v1547, %v1574
        %v1584 = vadd.f32 %v1548, %v1574
        %v1585 = vadd.f32 %v1549, %v1574
        %v1586 = vadd.f32 %v1550, %v1574
        %v1587 = vadd.f32 %v1551, %v1574
        %v1588 = vadd.f32 %v1552, %v1574
        %v1589 = vadd.f32 %v1553, %v1574
        %v1590 = vadd.f32 %v1554, %v1574
        %v1591 = vadd.f32 %v1555, %v1574
        %v1592 = vadd.f32 %v1556, %v1574
        %v1593 = vadd.f32 %v1557, %v1574
        %v1594 = vadd.f32 %v1558, %v1574
        %v1595 = vadd.f32 %v1559, %v1574
        %v1596 = vadd.f32 %v1560, %v1574
        %v1597 = vadd.f32 %v1561, %v1574
        %v1598 = vadd.f32 %v1562, %v1574
        %v1599 = vadd.f32 %v1563, %v1574
        %v1600 = vadd.f32 %v1564, %v1574
        %v1601 = vadd.f32 %v1565, %v1574
        %v1602 = vadd.f32 %v1566, %v1574
        %v1603 = vadd.f32 %v1567, %v1574
        %v1604 = vadd.f32 %v1568, %v1574
        %v1605 = vadd.f32 %v1569, %v1574
        %v1606 = vadd.f32 %v1570, %v1574
        %v1607 = vadd.f32 %v1571, %v1574
        %v1608 = vmax.f32 %v1576, 0.0
        %v1609 = vmax.f32 %v1577, 0.0
        %v1610 = vmax.f32 %v1578, 0.0
        %v1611 = vmax.f32 %v1579, 0.0
        %v1612 = vmax.f32 %v1580, 0.0
        %v1613 = vmax.f32 %v1581, 0.0
        %v1614 = vmax.f32 %v1582, 0.0
        %v1615 = vmax.f32 %v1583, 0.0
        %v1616 = vmax.f32 %v1584, 0.0
        %v1617 = vmax.f32 %v1585, 0.0
        %v1618 = vmax.f32 %v1586, 0.0
        %v1619 = vmax.f32 %v1587, 0.0
        %v1620 = vmax.f32 %v1588, 0.0
        %v1621 = vmax.f32 %v1589, 0.0
        %v1622 = vmax.f32 %v1590, 0.0
        %v1623 = vmax.f32 %v1591, 0.0
        %v1624 = vmax.f32 %v1592, 0.0
        %v1625 = vmax.f32 %v1593, 0.0
        %v1626 = vmax.f32 %v1594, 0.0
        %v1627 = vmax.f32 %v1595, 0.0
        %v1628 = vmax.f32 %v1596, 0.0
        %v1629 = vmax.f32 %v1597, 0.0
        %v1630 = vmax.f32 %v1598, 0.0
        %v1631 = vmax.f32 %v1599, 0.0
        %v1632 = vmax.f32 %v1600, 0.0
        %v1633 = vmax.f32 %v1601, 0.0
        %v1634 = vmax.f32 %v1602, 0.0
        %v1635 = vmax.f32 %v1603, 0.0
        %v1636 = vmax.f32 %v1604, 0.0
        %v1637 = vmax.f32 %v1605, 0.0
        %v1638 = vmax.f32 %v1606, 0.0
        %v1639 = vmax.f32 %v1607, 0.0
        %v1640 = vpack.c.bf16 %v1609, %v1608
        %v1641 = vpack.c.bf16 %v1611, %v1610
        %v1642 = vpack.c.bf16 %v1613, %v1612
        %v1643 = vpack.c.bf16 %v1615, %v1614
        %v1644 = vpack.c.bf16 %v1617, %v1616
        %v1645 = vpack.c.bf16 %v1619, %v1618
        %v1646 = vpack.c.bf16 %v1621, %v1620
        %v1647 = vpack.c.bf16 %v1623, %v1622
        %v1648 = vpack.c.bf16 %v1625, %v1624
        %v1649 = vpack.c.bf16 %v1627, %v1626
        %v1650 = vpack.c.bf16 %v1629, %v1628
        %v1651 = vpack.c.bf16 %v1631, %v1630
        %v1652 = vpack.c.bf16 %v1633, %v1632
        %v1653 = vpack.c.bf16 %v1635, %v1634
        %v1654 = vpack.c.bf16 %v1637, %v1636
        %v1655 = vpack.c.bf16 %v1639, %v1638
        %v1656 = vld [vmem:[%s4] sm:$0xff]
        %v1657 = vld [vmem:[%s4 + $0x8] sm:$0xff]
        %v1658 = vld [vmem:[%s4 + $0x10] sm:$0xff]
        %v1659 = vld [vmem:[%s4 + $0x18] sm:$0xff]
        %v1660 = vld [vmem:[%s4 + $0x20] sm:$0xff]
        %v1661 = vld [vmem:[%s4 + $0x28] sm:$0xff]
        %v1662 = vld [vmem:[%s4 + $0x30] sm:$0xff]
        %v1663 = vld [vmem:[%s4 + $0x38] sm:$0xff]
        %v1664 = vld [vmem:[%s4 + $0x40] sm:$0xff]
        %v1665 = vld [vmem:[%s4 + $0x48] sm:$0xff]
        %v1666 = vld [vmem:[%s4 + $0x50] sm:$0xff]
        %v1667 = vld [vmem:[%s4 + $0x58] sm:$0xff]
        %v1668 = vld [vmem:[%s4 + $0x60] sm:$0xff]
        %v1669 = vld [vmem:[%s4 + $0x68] sm:$0xff]
        %v1670 = vld [vmem:[%s4 + $0x70] sm:$0xff]
        %v1671 = vld [vmem:[%s4 + $0x78] sm:$0xff]
        %v1672 = vld [vmem:[%s4 + $0x80] sm:$0xff]
        %v1673 = vld [vmem:[%s4 + $0x88] sm:$0xff]
        %v1674 = vld [vmem:[%s4 + $0x90] sm:$0xff]
        %v1675 = vld [vmem:[%s4 + $0x98] sm:$0xff]
        %v1676 = vld [vmem:[%s4 + $0xa0] sm:$0xff]
        %v1677 = vld [vmem:[%s4 + $0xa8] sm:$0xff]
        %v1678 = vld [vmem:[%s4 + $0xb0] sm:$0xff]
        %v1679 = vld [vmem:[%s4 + $0xb8] sm:$0xff]
        %v1680 = vld [vmem:[%s4 + $0xc0] sm:$0xff]
        %v1681 = vld [vmem:[%s4 + $0xc8] sm:$0xff]
        %v1682 = vld [vmem:[%s4 + $0xd0] sm:$0xff]
        %v1683 = vld [vmem:[%s4 + $0xd8] sm:$0xff]
        %v1684 = vld [vmem:[%s4 + $0xe0] sm:$0xff]
        %v1685 = vld [vmem:[%s4 + $0xe8] sm:$0xff]
        %v1686 = vld [vmem:[%s4 + $0xf0] sm:$0xff]
        %v1687 = vld [vmem:[%s4 + $0xf8] sm:$0xff]
        %v1720 = vunpack.c.l.b16 %v1656
        %v1721 = vunpack.c.h.b16 %v1656
        %v1722 = vunpack.c.l.b16 %v1657
        %v1723 = vunpack.c.h.b16 %v1657
        %v1724 = vunpack.c.l.b16 %v1658
        %v1725 = vunpack.c.h.b16 %v1658
        %v1726 = vunpack.c.l.b16 %v1659
        %v1727 = vunpack.c.h.b16 %v1659
        %v1728 = vunpack.c.l.b16 %v1660
        %v1729 = vunpack.c.h.b16 %v1660
        %v1730 = vunpack.c.l.b16 %v1661
        %v1731 = vunpack.c.h.b16 %v1661
        %v1732 = vunpack.c.l.b16 %v1662
        %v1733 = vunpack.c.h.b16 %v1662
        %v1734 = vunpack.c.l.b16 %v1663
        %v1735 = vunpack.c.h.b16 %v1663
        %v1736 = vunpack.c.l.b16 %v1664
        %v1737 = vunpack.c.h.b16 %v1664
        %v1738 = vunpack.c.l.b16 %v1665
        %v1739 = vunpack.c.h.b16 %v1665
        %v1740 = vunpack.c.l.b16 %v1666
        %v1741 = vunpack.c.h.b16 %v1666
        %v1742 = vunpack.c.l.b16 %v1667
        %v1743 = vunpack.c.h.b16 %v1667
        %v1744 = vunpack.c.l.b16 %v1668
        %v1745 = vunpack.c.h.b16 %v1668
        %v1746 = vunpack.c.l.b16 %v1669
        %v1747 = vunpack.c.h.b16 %v1669
        %v1748 = vunpack.c.l.b16 %v1670
        %v1749 = vunpack.c.h.b16 %v1670
        %v1750 = vunpack.c.l.b16 %v1671
        %v1751 = vunpack.c.h.b16 %v1671
        %v1752 = vunpack.c.l.b16 %v1672
        %v1753 = vunpack.c.h.b16 %v1672
        %v1754 = vunpack.c.l.b16 %v1673
        %v1755 = vunpack.c.h.b16 %v1673
        %v1756 = vunpack.c.l.b16 %v1674
        %v1757 = vunpack.c.h.b16 %v1674
        %v1758 = vunpack.c.l.b16 %v1675
        %v1759 = vunpack.c.h.b16 %v1675
        %v1760 = vunpack.c.l.b16 %v1676
        %v1761 = vunpack.c.h.b16 %v1676
        %v1762 = vunpack.c.l.b16 %v1677
        %v1763 = vunpack.c.h.b16 %v1677
        %v1764 = vunpack.c.l.b16 %v1678
        %v1765 = vunpack.c.h.b16 %v1678
        %v1766 = vunpack.c.l.b16 %v1679
        %v1767 = vunpack.c.h.b16 %v1679
        %v1768 = vunpack.c.l.b16 %v1680
        %v1769 = vunpack.c.h.b16 %v1680
        %v1770 = vunpack.c.l.b16 %v1681
        %v1771 = vunpack.c.h.b16 %v1681
        %v1772 = vunpack.c.l.b16 %v1682
        %v1773 = vunpack.c.h.b16 %v1682
        %v1774 = vunpack.c.l.b16 %v1683
        %v1775 = vunpack.c.h.b16 %v1683
        %v1776 = vunpack.c.l.b16 %v1684
        %v1777 = vunpack.c.h.b16 %v1684
        %v1778 = vunpack.c.l.b16 %v1685
        %v1779 = vunpack.c.h.b16 %v1685
        %v1780 = vunpack.c.l.b16 %v1686
        %v1781 = vunpack.c.h.b16 %v1686
        %v1782 = vunpack.c.l.b16 %v1687
        %v1783 = vunpack.c.h.b16 %v1687
        %v1784 = vpack.c.b16 %v1724, %v1720
        %v1785 = vpack.c.b16 %v1725, %v1721
        %v1786 = vpack.c.b16 %v1726, %v1722
        %v1787 = vpack.c.b16 %v1727, %v1723
        %v1788 = vpack.c.b16 %v1732, %v1728
        %v1789 = vpack.c.b16 %v1733, %v1729
        %v1790 = vpack.c.b16 %v1734, %v1730
        %v1791 = vpack.c.b16 %v1735, %v1731
        %v1792 = vpack.c.b16 %v1740, %v1736
        %v1793 = vpack.c.b16 %v1741, %v1737
        %v1794 = vpack.c.b16 %v1742, %v1738
        %v1795 = vpack.c.b16 %v1743, %v1739
        %v1796 = vpack.c.b16 %v1748, %v1744
        %v1797 = vpack.c.b16 %v1749, %v1745
        %v1798 = vpack.c.b16 %v1750, %v1746
        %v1799 = vpack.c.b16 %v1751, %v1747
        %v1800 = vpack.c.b16 %v1756, %v1752
        %v1801 = vpack.c.b16 %v1757, %v1753
        %v1802 = vpack.c.b16 %v1758, %v1754
        %v1803 = vpack.c.b16 %v1759, %v1755
        %v1804 = vpack.c.b16 %v1764, %v1760
        %v1805 = vpack.c.b16 %v1765, %v1761
        %v1806 = vpack.c.b16 %v1766, %v1762
        %v1807 = vpack.c.b16 %v1767, %v1763
        %v1808 = vpack.c.b16 %v1772, %v1768
        %v1809 = vpack.c.b16 %v1773, %v1769
        %v1810 = vpack.c.b16 %v1774, %v1770
        %v1811 = vpack.c.b16 %v1775, %v1771
        %v1812 = vpack.c.b16 %v1780, %v1776
        %v1813 = vpack.c.b16 %v1781, %v1777
        %v1814 = vpack.c.b16 %v1782, %v1778
        %v1815 = vpack.c.b16 %v1783, %v1779
        %1848 = vmatpush.bf16.msra.mxu0 %v1812
        %1849 = vmatpush.bf16.msra.mxu0 %v1808
        %1850 = vmatpush.bf16.msra.mxu0 %v1804
        %1851 = vmatpush.bf16.msra.mxu0 %v1800
        %1852 = vmatpush.bf16.msra.mxu0 %v1796
        %1853 = vmatpush.bf16.msra.mxu0 %v1792
        %1854 = vmatpush.bf16.msra.mxu0 %v1788
        %1855 = vmatpush.bf16.msra.mxu0 %v1784
        %1856 = vmatmul.bf16.gmra.mxu0 %v1640
        %v1857 = vpop.f32.mrf.mxu0
        %v1858 = vadd.f32 0.0, %v1857
        %v1859 = vpop.f32.mrf.mxu0
        %v1860 = vadd.f32 0.0, %v1859
        %1861 = vmatmul.bf16.gmra.mxu0 %v1641
        %v1862 = vpop.f32.mrf.mxu0
        %v1863 = vadd.f32 0.0, %v1862
        %v1864 = vpop.f32.mrf.mxu0
        %v1865 = vadd.f32 0.0, %v1864
        %1866 = vmatmul.bf16.gmra.mxu0 %v1642
        %v1867 = vpop.f32.mrf.mxu0
        %v1868 = vadd.f32 0.0, %v1867
        %v1869 = vpop.f32.mrf.mxu0
        %v1870 = vadd.f32 0.0, %v1869
        %1871 = vmatmul.bf16.gmra.mxu0 %v1643
        %v1872 = vpop.f32.mrf.mxu0
        %v1873 = vadd.f32 0.0, %v1872
        %v1874 = vpop.f32.mrf.mxu0
        %v1875 = vadd.f32 0.0, %v1874
        %1876 = vmatmul.bf16.gmra.mxu0 %v1644
        %v1877 = vpop.f32.mrf.mxu0
        %v1878 = vadd.f32 0.0, %v1877
        %v1879 = vpop.f32.mrf.mxu0
        %v1880 = vadd.f32 0.0, %v1879
        %1881 = vmatmul.bf16.gmra.mxu0 %v1645
        %v1882 = vpop.f32.mrf.mxu0
        %v1883 = vadd.f32 0.0, %v1882
        %v1884 = vpop.f32.mrf.mxu0
        %v1885 = vadd.f32 0.0, %v1884
        %1886 = vmatmul.bf16.gmra.mxu0 %v1646
        %v1887 = vpop.f32.mrf.mxu0
        %v1888 = vadd.f32 0.0, %v1887
        %v1889 = vpop.f32.mrf.mxu0
        %v1890 = vadd.f32 0.0, %v1889
        %1891 = vmatmul.bf16.gmra.mxu0 %v1647
        %v1892 = vpop.f32.mrf.mxu0
        %v1893 = vadd.f32 0.0, %v1892
        %v1894 = vpop.f32.mrf.mxu0
        %v1895 = vadd.f32 0.0, %v1894
        %1896 = vmatmul.bf16.gmra.mxu0 %v1648
        %v1897 = vpop.f32.mrf.mxu0
        %v1898 = vadd.f32 0.0, %v1897
        %v1899 = vpop.f32.mrf.mxu0
        %v1900 = vadd.f32 0.0, %v1899
        %1901 = vmatmul.bf16.gmra.mxu0 %v1649
        %v1902 = vpop.f32.mrf.mxu0
        %v1903 = vadd.f32 0.0, %v1902
        %v1904 = vpop.f32.mrf.mxu0
        %v1905 = vadd.f32 0.0, %v1904
        %1906 = vmatmul.bf16.gmra.mxu0 %v1650
        %v1907 = vpop.f32.mrf.mxu0
        %v1908 = vadd.f32 0.0, %v1907
        %v1909 = vpop.f32.mrf.mxu0
        %v1910 = vadd.f32 0.0, %v1909
        %1911 = vmatmul.bf16.gmra.mxu0 %v1651
        %v1912 = vpop.f32.mrf.mxu0
        %v1913 = vadd.f32 0.0, %v1912
        %v1914 = vpop.f32.mrf.mxu0
        %v1915 = vadd.f32 0.0, %v1914
        %1916 = vmatmul.bf16.gmra.mxu0 %v1652
        %v1917 = vpop.f32.mrf.mxu0
        %v1918 = vadd.f32 0.0, %v1917
        %v1919 = vpop.f32.mrf.mxu0
        %v1920 = vadd.f32 0.0, %v1919
        %1921 = vmatmul.bf16.gmra.mxu0 %v1653
        %v1922 = vpop.f32.mrf.mxu0
        %v1923 = vadd.f32 0.0, %v1922
        %v1924 = vpop.f32.mrf.mxu0
        %v1925 = vadd.f32 0.0, %v1924
        %1926 = vmatmul.bf16.gmra.mxu0 %v1654
        %v1927 = vpop.f32.mrf.mxu0
        %v1928 = vadd.f32 0.0, %v1927
        %v1929 = vpop.f32.mrf.mxu0
        %v1930 = vadd.f32 0.0, %v1929
        %1931 = vmatmul.bf16.gmra.mxu0 %v1655
        %v1932 = vpop.f32.mrf.mxu0
        %v1933 = vadd.f32 0.0, %v1932
        %v1934 = vpop.f32.mrf.mxu0
        %v1935 = vadd.f32 0.0, %v1934
        %1936 = vdwg.mxu0
        %1937 = vmatpush.bf16.msra.mxu0 %v1813
        %1938 = vmatpush.bf16.msra.mxu0 %v1809
        %1939 = vmatpush.bf16.msra.mxu0 %v1805
        %1940 = vmatpush.bf16.msra.mxu0 %v1801
        %1941 = vmatpush.bf16.msra.mxu0 %v1797
        %1942 = vmatpush.bf16.msra.mxu0 %v1793
        %1943 = vmatpush.bf16.msra.mxu0 %v1789
        %1944 = vmatpush.bf16.msra.mxu0 %v1785
        %1945 = vmatmul.bf16.gmra.mxu0 %v1640
        %v1946 = vpop.f32.mrf.mxu0
        %v1947 = vadd.f32 0.0, %v1946
        %v1948 = vpop.f32.mrf.mxu0
        %v1949 = vadd.f32 0.0, %v1948
        %1950 = vmatmul.bf16.gmra.mxu0 %v1641
        %v1951 = vpop.f32.mrf.mxu0
        %v1952 = vadd.f32 0.0, %v1951
        %v1953 = vpop.f32.mrf.mxu0
        %v1954 = vadd.f32 0.0, %v1953
        %1955 = vmatmul.bf16.gmra.mxu0 %v1642
        %v1956 = vpop.f32.mrf.mxu0
        %v1957 = vadd.f32 0.0, %v1956
        %v1958 = vpop.f32.mrf.mxu0
        %v1959 = vadd.f32 0.0, %v1958
        %1960 = vmatmul.bf16.gmra.mxu0 %v1643
        %v1961 = vpop.f32.mrf.mxu0
        %v1962 = vadd.f32 0.0, %v1961
        %v1963 = vpop.f32.mrf.mxu0
        %v1964 = vadd.f32 0.0, %v1963
        %1965 = vmatmul.bf16.gmra.mxu0 %v1644
        %v1966 = vpop.f32.mrf.mxu0
        %v1967 = vadd.f32 0.0, %v1966
        %v1968 = vpop.f32.mrf.mxu0
        %v1969 = vadd.f32 0.0, %v1968
        %1970 = vmatmul.bf16.gmra.mxu0 %v1645
        %v1971 = vpop.f32.mrf.mxu0
        %v1972 = vadd.f32 0.0, %v1971
        %v1973 = vpop.f32.mrf.mxu0
        %v1974 = vadd.f32 0.0, %v1973
        %1975 = vmatmul.bf16.gmra.mxu0 %v1646
        %v1976 = vpop.f32.mrf.mxu0
        %v1977 = vadd.f32 0.0, %v1976
        %v1978 = vpop.f32.mrf.mxu0
        %v1979 = vadd.f32 0.0, %v1978
        %1980 = vmatmul.bf16.gmra.mxu0 %v1647
        %v1981 = vpop.f32.mrf.mxu0
        %v1982 = vadd.f32 0.0, %v1981
        %v1983 = vpop.f32.mrf.mxu0
        %v1984 = vadd.f32 0.0, %v1983
        %1985 = vmatmul.bf16.gmra.mxu0 %v1648
        %v1986 = vpop.f32.mrf.mxu0
        %v1987 = vadd.f32 0.0, %v1986
        %v1988 = vpop.f32.mrf.mxu0
        %v1989 = vadd.f32 0.0, %v1988
        %1990 = vmatmul.bf16.gmra.mxu0 %v1649
        %v1991 = vpop.f32.mrf.mxu0
        %v1992 = vadd.f32 0.0, %v1991
        %v1993 = vpop.f32.mrf.mxu0
        %v1994 = vadd.f32 0.0, %v1993
        %1995 = vmatmul.bf16.gmra.mxu0 %v1650
        %v1996 = vpop.f32.mrf.mxu0
        %v1997 = vadd.f32 0.0, %v1996
        %v1998 = vpop.f32.mrf.mxu0
        %v1999 = vadd.f32 0.0, %v1998
        %2000 = vmatmul.bf16.gmra.mxu0 %v1651
        %v2001 = vpop.f32.mrf.mxu0
        %v2002 = vadd.f32 0.0, %v2001
        %v2003 = vpop.f32.mrf.mxu0
        %v2004 = vadd.f32 0.0, %v2003
        %2005 = vmatmul.bf16.gmra.mxu0 %v1652
        %v2006 = vpop.f32.mrf.mxu0
        %v2007 = vadd.f32 0.0, %v2006
        %v2008 = vpop.f32.mrf.mxu0
        %v2009 = vadd.f32 0.0, %v2008
        %2010 = vmatmul.bf16.gmra.mxu0 %v1653
        %v2011 = vpop.f32.mrf.mxu0
        %v2012 = vadd.f32 0.0, %v2011
        %v2013 = vpop.f32.mrf.mxu0
        %v2014 = vadd.f32 0.0, %v2013
        %2015 = vmatmul.bf16.gmra.mxu0 %v1654
        %v2016 = vpop.f32.mrf.mxu0
        %v2017 = vadd.f32 0.0, %v2016
        %v2018 = vpop.f32.mrf.mxu0
        %v2019 = vadd.f32 0.0, %v2018
        %2020 = vmatmul.bf16.gmra.mxu0 %v1655
        %v2021 = vpop.f32.mrf.mxu0
        %v2022 = vadd.f32 0.0, %v2021
        %v2023 = vpop.f32.mrf.mxu0
        %v2024 = vadd.f32 0.0, %v2023
        %2025 = vdwg.mxu0
        %2026 = vmatpush.bf16.msra.mxu0 %v1814
        %2027 = vmatpush.bf16.msra.mxu0 %v1810
        %2028 = vmatpush.bf16.msra.mxu0 %v1806
        %2029 = vmatpush.bf16.msra.mxu0 %v1802
        %2030 = vmatpush.bf16.msra.mxu0 %v1798
        %2031 = vmatpush.bf16.msra.mxu0 %v1794
        %2032 = vmatpush.bf16.msra.mxu0 %v1790
        %2033 = vmatpush.bf16.msra.mxu0 %v1786
        %2034 = vmatmul.bf16.gmra.mxu0 %v1640
        %v2035 = vpop.f32.mrf.mxu0
        %v2036 = vadd.f32 0.0, %v2035
        %v2037 = vpop.f32.mrf.mxu0
        %v2038 = vadd.f32 0.0, %v2037
        %2039 = vmatmul.bf16.gmra.mxu0 %v1641
        %v2040 = vpop.f32.mrf.mxu0
        %v2041 = vadd.f32 0.0, %v2040
        %v2042 = vpop.f32.mrf.mxu0
        %v2043 = vadd.f32 0.0, %v2042
        %2044 = vmatmul.bf16.gmra.mxu0 %v1642
        %v2045 = vpop.f32.mrf.mxu0
        %v2046 = vadd.f32 0.0, %v2045
        %v2047 = vpop.f32.mrf.mxu0
        %v2048 = vadd.f32 0.0, %v2047
        %2049 = vmatmul.bf16.gmra.mxu0 %v1643
        %v2050 = vpop.f32.mrf.mxu0
        %v2051 = vadd.f32 0.0, %v2050
        %v2052 = vpop.f32.mrf.mxu0
        %v2053 = vadd.f32 0.0, %v2052
        %2054 = vmatmul.bf16.gmra.mxu0 %v1644
        %v2055 = vpop.f32.mrf.mxu0
        %v2056 = vadd.f32 0.0, %v2055
        %v2057 = vpop.f32.mrf.mxu0
        %v2058 = vadd.f32 0.0, %v2057
        %2059 = vmatmul.bf16.gmra.mxu0 %v1645
        %v2060 = vpop.f32.mrf.mxu0
        %v2061 = vadd.f32 0.0, %v2060
        %v2062 = vpop.f32.mrf.mxu0
        %v2063 = vadd.f32 0.0, %v2062
        %2064 = vmatmul.bf16.gmra.mxu0 %v1646
        %v2065 = vpop.f32.mrf.mxu0
        %v2066 = vadd.f32 0.0, %v2065
        %v2067 = vpop.f32.mrf.mxu0
        %v2068 = vadd.f32 0.0, %v2067
        %2069 = vmatmul.bf16.gmra.mxu0 %v1647
        %v2070 = vpop.f32.mrf.mxu0
        %v2071 = vadd.f32 0.0, %v2070
        %v2072 = vpop.f32.mrf.mxu0
        %v2073 = vadd.f32 0.0, %v2072
        %2074 = vmatmul.bf16.gmra.mxu0 %v1648
        %v2075 = vpop.f32.mrf.mxu0
        %v2076 = vadd.f32 0.0, %v2075
        %v2077 = vpop.f32.mrf.mxu0
        %v2078 = vadd.f32 0.0, %v2077
        %2079 = vmatmul.bf16.gmra.mxu0 %v1649
        %v2080 = vpop.f32.mrf.mxu0
        %v2081 = vadd.f32 0.0, %v2080
        %v2082 = vpop.f32.mrf.mxu0
        %v2083 = vadd.f32 0.0, %v2082
        %2084 = vmatmul.bf16.gmra.mxu0 %v1650
        %v2085 = vpop.f32.mrf.mxu0
        %v2086 = vadd.f32 0.0, %v2085
        %v2087 = vpop.f32.mrf.mxu0
        %v2088 = vadd.f32 0.0, %v2087
        %2089 = vmatmul.bf16.gmra.mxu0 %v1651
        %v2090 = vpop.f32.mrf.mxu0
        %v2091 = vadd.f32 0.0, %v2090
        %v2092 = vpop.f32.mrf.mxu0
        %v2093 = vadd.f32 0.0, %v2092
        %2094 = vmatmul.bf16.gmra.mxu0 %v1652
        %v2095 = vpop.f32.mrf.mxu0
        %v2096 = vadd.f32 0.0, %v2095
        %v2097 = vpop.f32.mrf.mxu0
        %v2098 = vadd.f32 0.0, %v2097
        %2099 = vmatmul.bf16.gmra.mxu0 %v1653
        %v2100 = vpop.f32.mrf.mxu0
        %v2101 = vadd.f32 0.0, %v2100
        %v2102 = vpop.f32.mrf.mxu0
        %v2103 = vadd.f32 0.0, %v2102
        %2104 = vmatmul.bf16.gmra.mxu0 %v1654
        %v2105 = vpop.f32.mrf.mxu0
        %v2106 = vadd.f32 0.0, %v2105
        %v2107 = vpop.f32.mrf.mxu0
        %v2108 = vadd.f32 0.0, %v2107
        %2109 = vmatmul.bf16.gmra.mxu0 %v1655
        %v2110 = vpop.f32.mrf.mxu0
        %v2111 = vadd.f32 0.0, %v2110
        %v2112 = vpop.f32.mrf.mxu0
        %v2113 = vadd.f32 0.0, %v2112
        %2114 = vdwg.mxu0
        %2115 = vmatpush.bf16.msra.mxu0 %v1815
        %2116 = vmatpush.bf16.msra.mxu0 %v1811
        %2117 = vmatpush.bf16.msra.mxu0 %v1807
        %2118 = vmatpush.bf16.msra.mxu0 %v1803
        %2119 = vmatpush.bf16.msra.mxu0 %v1799
        %2120 = vmatpush.bf16.msra.mxu0 %v1795
        %2121 = vmatpush.bf16.msra.mxu0 %v1791
        %2122 = vmatpush.bf16.msra.mxu0 %v1787
        %2123 = vmatmul.bf16.gmra.mxu0 %v1640
        %v2124 = vpop.f32.mrf.mxu0
        %v2125 = vadd.f32 0.0, %v2124
        %v2126 = vpop.f32.mrf.mxu0
        %v2127 = vadd.f32 0.0, %v2126
        %2128 = vmatmul.bf16.gmra.mxu0 %v1641
        %v2129 = vpop.f32.mrf.mxu0
        %v2130 = vadd.f32 0.0, %v2129
        %v2131 = vpop.f32.mrf.mxu0
        %v2132 = vadd.f32 0.0, %v2131
        %2133 = vmatmul.bf16.gmra.mxu0 %v1642
        %v2134 = vpop.f32.mrf.mxu0
        %v2135 = vadd.f32 0.0, %v2134
        %v2136 = vpop.f32.mrf.mxu0
        %v2137 = vadd.f32 0.0, %v2136
        %2138 = vmatmul.bf16.gmra.mxu0 %v1643
        %v2139 = vpop.f32.mrf.mxu0
        %v2140 = vadd.f32 0.0, %v2139
        %v2141 = vpop.f32.mrf.mxu0
        %v2142 = vadd.f32 0.0, %v2141
        %2143 = vmatmul.bf16.gmra.mxu0 %v1644
        %v2144 = vpop.f32.mrf.mxu0
        %v2145 = vadd.f32 0.0, %v2144
        %v2146 = vpop.f32.mrf.mxu0
        %v2147 = vadd.f32 0.0, %v2146
        %2148 = vmatmul.bf16.gmra.mxu0 %v1645
        %v2149 = vpop.f32.mrf.mxu0
        %v2150 = vadd.f32 0.0, %v2149
        %v2151 = vpop.f32.mrf.mxu0
        %v2152 = vadd.f32 0.0, %v2151
        %2153 = vmatmul.bf16.gmra.mxu0 %v1646
        %v2154 = vpop.f32.mrf.mxu0
        %v2155 = vadd.f32 0.0, %v2154
        %v2156 = vpop.f32.mrf.mxu0
        %v2157 = vadd.f32 0.0, %v2156
        %2158 = vmatmul.bf16.gmra.mxu0 %v1647
        %v2159 = vpop.f32.mrf.mxu0
        %v2160 = vadd.f32 0.0, %v2159
        %v2161 = vpop.f32.mrf.mxu0
        %v2162 = vadd.f32 0.0, %v2161
        %2163 = vmatmul.bf16.gmra.mxu0 %v1648
        %v2164 = vpop.f32.mrf.mxu0
        %v2165 = vadd.f32 0.0, %v2164
        %v2166 = vpop.f32.mrf.mxu0
        %v2167 = vadd.f32 0.0, %v2166
        %2168 = vmatmul.bf16.gmra.mxu0 %v1649
        %v2169 = vpop.f32.mrf.mxu0
        %v2170 = vadd.f32 0.0, %v2169
        %v2171 = vpop.f32.mrf.mxu0
        %v2172 = vadd.f32 0.0, %v2171
        %2173 = vmatmul.bf16.gmra.mxu0 %v1650
        %v2174 = vpop.f32.mrf.mxu0
        %v2175 = vadd.f32 0.0, %v2174
        %v2176 = vpop.f32.mrf.mxu0
        %v2177 = vadd.f32 0.0, %v2176
        %2178 = vmatmul.bf16.gmra.mxu0 %v1651
        %v2179 = vpop.f32.mrf.mxu0
        %v2180 = vadd.f32 0.0, %v2179
        %v2181 = vpop.f32.mrf.mxu0
        %v2182 = vadd.f32 0.0, %v2181
        %2183 = vmatmul.bf16.gmra.mxu0 %v1652
        %v2184 = vpop.f32.mrf.mxu0
        %v2185 = vadd.f32 0.0, %v2184
        %v2186 = vpop.f32.mrf.mxu0
        %v2187 = vadd.f32 0.0, %v2186
        %2188 = vmatmul.bf16.gmra.mxu0 %v1653
        %v2189 = vpop.f32.mrf.mxu0
        %v2190 = vadd.f32 0.0, %v2189
        %v2191 = vpop.f32.mrf.mxu0
        %v2192 = vadd.f32 0.0, %v2191
        %2193 = vmatmul.bf16.gmra.mxu0 %v1654
        %v2194 = vpop.f32.mrf.mxu0
        %v2195 = vadd.f32 0.0, %v2194
        %v2196 = vpop.f32.mrf.mxu0
        %v2197 = vadd.f32 0.0, %v2196
        %2198 = vmatmul.bf16.gmra.mxu0 %v1655
        %v2199 = vpop.f32.mrf.mxu0
        %v2200 = vadd.f32 0.0, %v2199
        %v2201 = vpop.f32.mrf.mxu0
        %v2202 = vadd.f32 0.0, %v2201
        %2203 = vdwg.mxu0
        %v2204 = vxor.u32 %v1858, 2147483648
        %v2205 = vxor.u32 %v1860, 2147483648
        %v2206 = vxor.u32 %v1863, 2147483648
        %v2207 = vxor.u32 %v1865, 2147483648
        %v2208 = vxor.u32 %v1868, 2147483648
        %v2209 = vxor.u32 %v1870, 2147483648
        %v2210 = vxor.u32 %v1873, 2147483648
        %v2211 = vxor.u32 %v1875, 2147483648
        %v2212 = vmul.f32 %v2204, 1.442695
        %v2213 = vpow.pop %v2212
        %v2214 = vmul.f32 %v2205, 1.442695
        %v2215 = vpow.pop %v2214
        %v2216 = vmul.f32 %v2206, 1.442695
        %v2217 = vpow.pop %v2216
        %v2218 = vmul.f32 %v2207, 1.442695
        %v2219 = vpow.pop %v2218
        %v2220 = vmul.f32 %v2208, 1.442695
        %v2221 = vpow.pop %v2220
        %v2222 = vmul.f32 %v2209, 1.442695
        %v2223 = vpow.pop %v2222
        %v2224 = vmul.f32 %v2210, 1.442695
        %v2225 = vpow.pop %v2224
        %v2226 = vmul.f32 %v2211, 1.442695
        %v2227 = vpow.pop %v2226
        %v2228 = vadd.f32 %v2213, 1.0
        %v2229 = vadd.f32 %v2215, 1.0
        %v2230 = vadd.f32 %v2217, 1.0
        %v2231 = vadd.f32 %v2219, 1.0
        %v2232 = vadd.f32 %v2221, 1.0
        %v2233 = vadd.f32 %v2223, 1.0
        %v2234 = vadd.f32 %v2225, 1.0
        %v2235 = vadd.f32 %v2227, 1.0
        %v2236 = vrcp.pop %v2228
        %v2237 = vmul.f32 %v2228, %v2236
        %v2238 = vsub.f32 1.0, %v2237
        %v2239 = vmul.f32 %v2236, %v2238
        %v2240 = vadd.f32 %v2236, %v2239
        %vm2241 = vweird.f32 %v2228
        %vm2242 = vweird.f32 %v2236
        %vm2243 = vmor %vm2241, %vm2242
        %v2244 = vsel %vm2243, %v2236, %v2240
        %v2245 = vand.u32 2147483647, %v2228
        %vm2246 = vcmp.eq.f32.partialorder %v2245, 8.507059e+37
        %v2247 = vand.u32 %v2228, 2147483648
        %v2248 = vor.u32 1.1754944e-38, %v2247
        %v2249 = vsel %vm2246, %v2248, %v2244
        %v2250 = vmul.f32 1.0, %v2249
        %v2251 = vrcp.pop %v2229
        %v2252 = vmul.f32 %v2229, %v2251
        %v2253 = vsub.f32 1.0, %v2252
        %v2254 = vmul.f32 %v2251, %v2253
        %v2255 = vadd.f32 %v2251, %v2254
        %vm2256 = vweird.f32 %v2229
        %vm2257 = vweird.f32 %v2251
        %vm2258 = vmor %vm2256, %vm2257
        %v2259 = vsel %vm2258, %v2251, %v2255
        %v2260 = vand.u32 2147483647, %v2229
        %vm2261 = vcmp.eq.f32.partialorder %v2260, 8.507059e+37
        %v2262 = vand.u32 %v2229, 2147483648
        %v2263 = vor.u32 1.1754944e-38, %v2262
        %v2264 = vsel %vm2261, %v2263, %v2259
        %v2265 = vmul.f32 1.0, %v2264
        %v2266 = vrcp.pop %v2230
        %v2267 = vmul.f32 %v2230, %v2266
        %v2268 = vsub.f32 1.0, %v2267
        %v2269 = vmul.f32 %v2266, %v2268
        %v2270 = vadd.f32 %v2266, %v2269
        %vm2271 = vweird.f32 %v2230
        %vm2272 = vweird.f32 %v2266
        %vm2273 = vmor %vm2271, %vm2272
        %v2274 = vsel %vm2273, %v2266, %v2270
        %v2275 = vand.u32 2147483647, %v2230
        %vm2276 = vcmp.eq.f32.partialorder %v2275, 8.507059e+37
        %v2277 = vand.u32 %v2230, 2147483648
        %v2278 = vor.u32 1.1754944e-38, %v2277
        %v2279 = vsel %vm2276, %v2278, %v2274
        %v2280 = vmul.f32 1.0, %v2279
        %v2281 = vrcp.pop %v2231
        %v2282 = vmul.f32 %v2231, %v2281
        %v2283 = vsub.f32 1.0, %v2282
        %v2284 = vmul.f32 %v2281, %v2283
        %v2285 = vadd.f32 %v2281, %v2284
        %vm2286 = vweird.f32 %v2231
        %vm2287 = vweird.f32 %v2281
        %vm2288 = vmor %vm2286, %vm2287
        %v2289 = vsel %vm2288, %v2281, %v2285
        %v2290 = vand.u32 2147483647, %v2231
        %vm2291 = vcmp.eq.f32.partialorder %v2290, 8.507059e+37
        %v2292 = vand.u32 %v2231, 2147483648
        %v2293 = vor.u32 1.1754944e-38, %v2292
        %v2294 = vsel %vm2291, %v2293, %v2289
        %v2295 = vmul.f32 1.0, %v2294
        %v2296 = vrcp.pop %v2232
        %v2297 = vmul.f32 %v2232, %v2296
        %v2298 = vsub.f32 1.0, %v2297
        %v2299 = vmul.f32 %v2296, %v2298
        %v2300 = vadd.f32 %v2296, %v2299
        %vm2301 = vweird.f32 %v2232
        %vm2302 = vweird.f32 %v2296
        %vm2303 = vmor %vm2301, %vm2302
        %v2304 = vsel %vm2303, %v2296, %v2300
        %v2305 = vand.u32 2147483647, %v2232
        %vm2306 = vcmp.eq.f32.partialorder %v2305, 8.507059e+37
        %v2307 = vand.u32 %v2232, 2147483648
        %v2308 = vor.u32 1.1754944e-38, %v2307
        %v2309 = vsel %vm2306, %v2308, %v2304
        %v2310 = vmul.f32 1.0, %v2309
        %v2311 = vrcp.pop %v2233
        %v2312 = vmul.f32 %v2233, %v2311
        %v2313 = vsub.f32 1.0, %v2312
        %v2314 = vmul.f32 %v2311, %v2313
        %v2315 = vadd.f32 %v2311, %v2314
        %vm2316 = vweird.f32 %v2233
        %vm2317 = vweird.f32 %v2311
        %vm2318 = vmor %vm2316, %vm2317
        %v2319 = vsel %vm2318, %v2311, %v2315
        %v2320 = vand.u32 2147483647, %v2233
        %vm2321 = vcmp.eq.f32.partialorder %v2320, 8.507059e+37
        %v2322 = vand.u32 %v2233, 2147483648
        %v2323 = vor.u32 1.1754944e-38, %v2322
        %v2324 = vsel %vm2321, %v2323, %v2319
        %v2325 = vmul.f32 1.0, %v2324
        %v2326 = vrcp.pop %v2234
        %v2327 = vmul.f32 %v2234, %v2326
        %v2328 = vsub.f32 1.0, %v2327
        %v2329 = vmul.f32 %v2326, %v2328
        %v2330 = vadd.f32 %v2326, %v2329
        %vm2331 = vweird.f32 %v2234
        %vm2332 = vweird.f32 %v2326
        %vm2333 = vmor %vm2331, %vm2332
        %v2334 = vsel %vm2333, %v2326, %v2330
        %v2335 = vand.u32 2147483647, %v2234
        %vm2336 = vcmp.eq.f32.partialorder %v2335, 8.507059e+37
        %v2337 = vand.u32 %v2234, 2147483648
        %v2338 = vor.u32 1.1754944e-38, %v2337
        %v2339 = vsel %vm2336, %v2338, %v2334
        %v2340 = vmul.f32 1.0, %v2339
        %v2341 = vrcp.pop %v2235
        %v2342 = vmul.f32 %v2235, %v2341
        %v2343 = vsub.f32 1.0, %v2342
        %v2344 = vmul.f32 %v2341, %v2343
        %v2345 = vadd.f32 %v2341, %v2344
        %vm2346 = vweird.f32 %v2235
        %vm2347 = vweird.f32 %v2341
        %vm2348 = vmor %vm2346, %vm2347
        %v2349 = vsel %vm2348, %v2341, %v2345
        %v2350 = vand.u32 2147483647, %v2235
        %vm2351 = vcmp.eq.f32.partialorder %v2350, 8.507059e+37
        %v2352 = vand.u32 %v2235, 2147483648
        %v2353 = vor.u32 1.1754944e-38, %v2352
        %v2354 = vsel %vm2351, %v2353, %v2349
        %v2355 = vmul.f32 1.0, %v2354
        %v2356 = vxor.u32 %v1947, 2147483648
        %v2357 = vxor.u32 %v1949, 2147483648
        %v2358 = vxor.u32 %v1952, 2147483648
        %v2359 = vxor.u32 %v1954, 2147483648
        %v2360 = vxor.u32 %v1957, 2147483648
        %v2361 = vxor.u32 %v1959, 2147483648
        %v2362 = vxor.u32 %v1962, 2147483648
        %v2363 = vxor.u32 %v1964, 2147483648
        %v2364 = vmul.f32 %v2356, 1.442695
        %v2365 = vpow.pop %v2364
        %v2366 = vmul.f32 %v2357, 1.442695
        %v2367 = vpow.pop %v2366
        %v2368 = vmul.f32 %v2358, 1.442695
        %v2369 = vpow.pop %v2368
        %v2370 = vmul.f32 %v2359, 1.442695
        %v2371 = vpow.pop %v2370
        %v2372 = vmul.f32 %v2360, 1.442695
        %v2373 = vpow.pop %v2372
        %v2374 = vmul.f32 %v2361, 1.442695
        %v2375 = vpow.pop %v2374
        %v2376 = vmul.f32 %v2362, 1.442695
        %v2377 = vpow.pop %v2376
        %v2378 = vmul.f32 %v2363, 1.442695
        %v2379 = vpow.pop %v2378
        %v2380 = vadd.f32 %v2365, 1.0
        %v2381 = vadd.f32 %v2367, 1.0
        %v2382 = vadd.f32 %v2369, 1.0
        %v2383 = vadd.f32 %v2371, 1.0
        %v2384 = vadd.f32 %v2373, 1.0
        %v2385 = vadd.f32 %v2375, 1.0
        %v2386 = vadd.f32 %v2377, 1.0
        %v2387 = vadd.f32 %v2379, 1.0
        %v2388 = vrcp.pop %v2380
        %v2389 = vmul.f32 %v2380, %v2388
        %v2390 = vsub.f32 1.0, %v2389
        %v2391 = vmul.f32 %v2388, %v2390
        %v2392 = vadd.f32 %v2388, %v2391
        %vm2393 = vweird.f32 %v2380
        %vm2394 = vweird.f32 %v2388
        %vm2395 = vmor %vm2393, %vm2394
        %v2396 = vsel %vm2395, %v2388, %v2392
        %v2397 = vand.u32 2147483647, %v2380
        %vm2398 = vcmp.eq.f32.partialorder %v2397, 8.507059e+37
        %v2399 = vand.u32 %v2380, 2147483648
        %v2400 = vor.u32 1.1754944e-38, %v2399
        %v2401 = vsel %vm2398, %v2400, %v2396
        %v2402 = vmul.f32 1.0, %v2401
        %v2403 = vrcp.pop %v2381
        %v2404 = vmul.f32 %v2381, %v2403
        %v2405 = vsub.f32 1.0, %v2404
        %v2406 = vmul.f32 %v2403, %v2405
        %v2407 = vadd.f32 %v2403, %v2406
        %vm2408 = vweird.f32 %v2381
        %vm2409 = vweird.f32 %v2403
        %vm2410 = vmor %vm2408, %vm2409
        %v2411 = vsel %vm2410, %v2403, %v2407
        %v2412 = vand.u32 2147483647, %v2381
        %vm2413 = vcmp.eq.f32.partialorder %v2412, 8.507059e+37
        %v2414 = vand.u32 %v2381, 2147483648
        %v2415 = vor.u32 1.1754944e-38, %v2414
        %v2416 = vsel %vm2413, %v2415, %v2411
        %v2417 = vmul.f32 1.0, %v2416
        %v2418 = vrcp.pop %v2382
        %v2419 = vmul.f32 %v2382, %v2418
        %v2420 = vsub.f32 1.0, %v2419
        %v2421 = vmul.f32 %v2418, %v2420
        %v2422 = vadd.f32 %v2418, %v2421
        %vm2423 = vweird.f32 %v2382
        %vm2424 = vweird.f32 %v2418
        %vm2425 = vmor %vm2423, %vm2424
        %v2426 = vsel %vm2425, %v2418, %v2422
        %v2427 = vand.u32 2147483647, %v2382
        %vm2428 = vcmp.eq.f32.partialorder %v2427, 8.507059e+37
        %v2429 = vand.u32 %v2382, 2147483648
        %v2430 = vor.u32 1.1754944e-38, %v2429
        %v2431 = vsel %vm2428, %v2430, %v2426
        %v2432 = vmul.f32 1.0, %v2431
        %v2433 = vrcp.pop %v2383
        %v2434 = vmul.f32 %v2383, %v2433
        %v2435 = vsub.f32 1.0, %v2434
        %v2436 = vmul.f32 %v2433, %v2435
        %v2437 = vadd.f32 %v2433, %v2436
        %vm2438 = vweird.f32 %v2383
        %vm2439 = vweird.f32 %v2433
        %vm2440 = vmor %vm2438, %vm2439
        %v2441 = vsel %vm2440, %v2433, %v2437
        %v2442 = vand.u32 2147483647, %v2383
        %vm2443 = vcmp.eq.f32.partialorder %v2442, 8.507059e+37
        %v2444 = vand.u32 %v2383, 2147483648
        %v2445 = vor.u32 1.1754944e-38, %v2444
        %v2446 = vsel %vm2443, %v2445, %v2441
        %v2447 = vmul.f32 1.0, %v2446
        %v2448 = vrcp.pop %v2384
        %v2449 = vmul.f32 %v2384, %v2448
        %v2450 = vsub.f32 1.0, %v2449
        %v2451 = vmul.f32 %v2448, %v2450
        %v2452 = vadd.f32 %v2448, %v2451
        %vm2453 = vweird.f32 %v2384
        %vm2454 = vweird.f32 %v2448
        %vm2455 = vmor %vm2453, %vm2454
        %v2456 = vsel %vm2455, %v2448, %v2452
        %v2457 = vand.u32 2147483647, %v2384
        %vm2458 = vcmp.eq.f32.partialorder %v2457, 8.507059e+37
        %v2459 = vand.u32 %v2384, 2147483648
        %v2460 = vor.u32 1.1754944e-38, %v2459
        %v2461 = vsel %vm2458, %v2460, %v2456
        %v2462 = vmul.f32 1.0, %v2461
        %v2463 = vrcp.pop %v2385
        %v2464 = vmul.f32 %v2385, %v2463
        %v2465 = vsub.f32 1.0, %v2464
        %v2466 = vmul.f32 %v2463, %v2465
        %v2467 = vadd.f32 %v2463, %v2466
        %vm2468 = vweird.f32 %v2385
        %vm2469 = vweird.f32 %v2463
        %vm2470 = vmor %vm2468, %vm2469
        %v2471 = vsel %vm2470, %v2463, %v2467
        %v2472 = vand.u32 2147483647, %v2385
        %vm2473 = vcmp.eq.f32.partialorder %v2472, 8.507059e+37
        %v2474 = vand.u32 %v2385, 2147483648
        %v2475 = vor.u32 1.1754944e-38, %v2474
        %v2476 = vsel %vm2473, %v2475, %v2471
        %v2477 = vmul.f32 1.0, %v2476
        %v2478 = vrcp.pop %v2386
        %v2479 = vmul.f32 %v2386, %v2478
        %v2480 = vsub.f32 1.0, %v2479
        %v2481 = vmul.f32 %v2478, %v2480
        %v2482 = vadd.f32 %v2478, %v2481
        %vm2483 = vweird.f32 %v2386
        %vm2484 = vweird.f32 %v2478
        %vm2485 = vmor %vm2483, %vm2484
        %v2486 = vsel %vm2485, %v2478, %v2482
        %v2487 = vand.u32 2147483647, %v2386
        %vm2488 = vcmp.eq.f32.partialorder %v2487, 8.507059e+37
        %v2489 = vand.u32 %v2386, 2147483648
        %v2490 = vor.u32 1.1754944e-38, %v2489
        %v2491 = vsel %vm2488, %v2490, %v2486
        %v2492 = vmul.f32 1.0, %v2491
        %v2493 = vrcp.pop %v2387
        %v2494 = vmul.f32 %v2387, %v2493
        %v2495 = vsub.f32 1.0, %v2494
        %v2496 = vmul.f32 %v2493, %v2495
        %v2497 = vadd.f32 %v2493, %v2496
        %vm2498 = vweird.f32 %v2387
        %vm2499 = vweird.f32 %v2493
        %vm2500 = vmor %vm2498, %vm2499
        %v2501 = vsel %vm2500, %v2493, %v2497
        %v2502 = vand.u32 2147483647, %v2387
        %vm2503 = vcmp.eq.f32.partialorder %v2502, 8.507059e+37
        %v2504 = vand.u32 %v2387, 2147483648
        %v2505 = vor.u32 1.1754944e-38, %v2504
        %v2506 = vsel %vm2503, %v2505, %v2501
        %v2507 = vmul.f32 1.0, %v2506
        %v2508 = vxor.u32 %v2036, 2147483648
        %v2509 = vxor.u32 %v2038, 2147483648
        %v2510 = vxor.u32 %v2041, 2147483648
        %v2511 = vxor.u32 %v2043, 2147483648
        %v2512 = vxor.u32 %v2046, 2147483648
        %v2513 = vxor.u32 %v2048, 2147483648
        %v2514 = vxor.u32 %v2051, 2147483648
        %v2515 = vxor.u32 %v2053, 2147483648
        %v2516 = vmul.f32 %v2508, 1.442695
        %v2517 = vpow.pop %v2516
        %v2518 = vmul.f32 %v2509, 1.442695
        %v2519 = vpow.pop %v2518
        %v2520 = vmul.f32 %v2510, 1.442695
        %v2521 = vpow.pop %v2520
        %v2522 = vmul.f32 %v2511, 1.442695
        %v2523 = vpow.pop %v2522
        %v2524 = vmul.f32 %v2512, 1.442695
        %v2525 = vpow.pop %v2524
        %v2526 = vmul.f32 %v2513, 1.442695
        %v2527 = vpow.pop %v2526
        %v2528 = vmul.f32 %v2514, 1.442695
        %v2529 = vpow.pop %v2528
        %v2530 = vmul.f32 %v2515, 1.442695
        %v2531 = vpow.pop %v2530
        %v2532 = vadd.f32 %v2517, 1.0
        %v2533 = vadd.f32 %v2519, 1.0
        %v2534 = vadd.f32 %v2521, 1.0
        %v2535 = vadd.f32 %v2523, 1.0
        %v2536 = vadd.f32 %v2525, 1.0
        %v2537 = vadd.f32 %v2527, 1.0
        %v2538 = vadd.f32 %v2529, 1.0
        %v2539 = vadd.f32 %v2531, 1.0
        %v2540 = vrcp.pop %v2532
        %v2541 = vmul.f32 %v2532, %v2540
        %v2542 = vsub.f32 1.0, %v2541
        %v2543 = vmul.f32 %v2540, %v2542
        %v2544 = vadd.f32 %v2540, %v2543
        %vm2545 = vweird.f32 %v2532
        %vm2546 = vweird.f32 %v2540
        %vm2547 = vmor %vm2545, %vm2546
        %v2548 = vsel %vm2547, %v2540, %v2544
        %v2549 = vand.u32 2147483647, %v2532
        %vm2550 = vcmp.eq.f32.partialorder %v2549, 8.507059e+37
        %v2551 = vand.u32 %v2532, 2147483648
        %v2552 = vor.u32 1.1754944e-38, %v2551
        %v2553 = vsel %vm2550, %v2552, %v2548
        %v2554 = vmul.f32 1.0, %v2553
        %v2555 = vrcp.pop %v2533
        %v2556 = vmul.f32 %v2533, %v2555
        %v2557 = vsub.f32 1.0, %v2556
        %v2558 = vmul.f32 %v2555, %v2557
        %v2559 = vadd.f32 %v2555, %v2558
        %vm2560 = vweird.f32 %v2533
        %vm2561 = vweird.f32 %v2555
        %vm2562 = vmor %vm2560, %vm2561
        %v2563 = vsel %vm2562, %v2555, %v2559
        %v2564 = vand.u32 2147483647, %v2533
        %vm2565 = vcmp.eq.f32.partialorder %v2564, 8.507059e+37
        %v2566 = vand.u32 %v2533, 2147483648
        %v2567 = vor.u32 1.1754944e-38, %v2566
        %v2568 = vsel %vm2565, %v2567, %v2563
        %v2569 = vmul.f32 1.0, %v2568
        %v2570 = vrcp.pop %v2534
        %v2571 = vmul.f32 %v2534, %v2570
        %v2572 = vsub.f32 1.0, %v2571
        %v2573 = vmul.f32 %v2570, %v2572
        %v2574 = vadd.f32 %v2570, %v2573
        %vm2575 = vweird.f32 %v2534
        %vm2576 = vweird.f32 %v2570
        %vm2577 = vmor %vm2575, %vm2576
        %v2578 = vsel %vm2577, %v2570, %v2574
        %v2579 = vand.u32 2147483647, %v2534
        %vm2580 = vcmp.eq.f32.partialorder %v2579, 8.507059e+37
        %v2581 = vand.u32 %v2534, 2147483648
        %v2582 = vor.u32 1.1754944e-38, %v2581
        %v2583 = vsel %vm2580, %v2582, %v2578
        %v2584 = vmul.f32 1.0, %v2583
        %v2585 = vrcp.pop %v2535
        %v2586 = vmul.f32 %v2535, %v2585
        %v2587 = vsub.f32 1.0, %v2586
        %v2588 = vmul.f32 %v2585, %v2587
        %v2589 = vadd.f32 %v2585, %v2588
        %vm2590 = vweird.f32 %v2535
        %vm2591 = vweird.f32 %v2585
        %vm2592 = vmor %vm2590, %vm2591
        %v2593 = vsel %vm2592, %v2585, %v2589
        %v2594 = vand.u32 2147483647, %v2535
        %vm2595 = vcmp.eq.f32.partialorder %v2594, 8.507059e+37
        %v2596 = vand.u32 %v2535, 2147483648
        %v2597 = vor.u32 1.1754944e-38, %v2596
        %v2598 = vsel %vm2595, %v2597, %v2593
        %v2599 = vmul.f32 1.0, %v2598
        %v2600 = vrcp.pop %v2536
        %v2601 = vmul.f32 %v2536, %v2600
        %v2602 = vsub.f32 1.0, %v2601
        %v2603 = vmul.f32 %v2600, %v2602
        %v2604 = vadd.f32 %v2600, %v2603
        %vm2605 = vweird.f32 %v2536
        %vm2606 = vweird.f32 %v2600
        %vm2607 = vmor %vm2605, %vm2606
        %v2608 = vsel %vm2607, %v2600, %v2604
        %v2609 = vand.u32 2147483647, %v2536
        %vm2610 = vcmp.eq.f32.partialorder %v2609, 8.507059e+37
        %v2611 = vand.u32 %v2536, 2147483648
        %v2612 = vor.u32 1.1754944e-38, %v2611
        %v2613 = vsel %vm2610, %v2612, %v2608
        %v2614 = vmul.f32 1.0, %v2613
        %v2615 = vrcp.pop %v2537
        %v2616 = vmul.f32 %v2537, %v2615
        %v2617 = vsub.f32 1.0, %v2616
        %v2618 = vmul.f32 %v2615, %v2617
        %v2619 = vadd.f32 %v2615, %v2618
        %vm2620 = vweird.f32 %v2537
        %vm2621 = vweird.f32 %v2615
        %vm2622 = vmor %vm2620, %vm2621
        %v2623 = vsel %vm2622, %v2615, %v2619
        %v2624 = vand.u32 2147483647, %v2537
        %vm2625 = vcmp.eq.f32.partialorder %v2624, 8.507059e+37
        %v2626 = vand.u32 %v2537, 2147483648
        %v2627 = vor.u32 1.1754944e-38, %v2626
        %v2628 = vsel %vm2625, %v2627, %v2623
        %v2629 = vmul.f32 1.0, %v2628
        %v2630 = vrcp.pop %v2538
        %v2631 = vmul.f32 %v2538, %v2630
        %v2632 = vsub.f32 1.0, %v2631
        %v2633 = vmul.f32 %v2630, %v2632
        %v2634 = vadd.f32 %v2630, %v2633
        %vm2635 = vweird.f32 %v2538
        %vm2636 = vweird.f32 %v2630
        %vm2637 = vmor %vm2635, %vm2636
        %v2638 = vsel %vm2637, %v2630, %v2634
        %v2639 = vand.u32 2147483647, %v2538
        %vm2640 = vcmp.eq.f32.partialorder %v2639, 8.507059e+37
        %v2641 = vand.u32 %v2538, 2147483648
        %v2642 = vor.u32 1.1754944e-38, %v2641
        %v2643 = vsel %vm2640, %v2642, %v2638
        %v2644 = vmul.f32 1.0, %v2643
        %v2645 = vrcp.pop %v2539
        %v2646 = vmul.f32 %v2539, %v2645
        %v2647 = vsub.f32 1.0, %v2646
        %v2648 = vmul.f32 %v2645, %v2647
        %v2649 = vadd.f32 %v2645, %v2648
        %vm2650 = vweird.f32 %v2539
        %vm2651 = vweird.f32 %v2645
        %vm2652 = vmor %vm2650, %vm2651
        %v2653 = vsel %vm2652, %v2645, %v2649
        %v2654 = vand.u32 2147483647, %v2539
        %vm2655 = vcmp.eq.f32.partialorder %v2654, 8.507059e+37
        %v2656 = vand.u32 %v2539, 2147483648
        %v2657 = vor.u32 1.1754944e-38, %v2656
        %v2658 = vsel %vm2655, %v2657, %v2653
        %v2659 = vmul.f32 1.0, %v2658
        %v2660 = vtanh.pop %v2125
        %v2661 = vtanh.pop %v2127
        %v2662 = vtanh.pop %v2130
        %v2663 = vtanh.pop %v2132
        %v2664 = vtanh.pop %v2135
        %v2665 = vtanh.pop %v2137
        %v2666 = vtanh.pop %v2140
        %v2667 = vtanh.pop %v2142
        %v2668 = vmul.f32 %v2402, 0.0
        %v2669 = vmul.f32 %v2417, 0.0
        %v2670 = vmul.f32 %v2432, 0.0
        %v2671 = vmul.f32 %v2447, 0.0
        %v2672 = vmul.f32 %v2462, 0.0
        %v2673 = vmul.f32 %v2477, 0.0
        %v2674 = vmul.f32 %v2492, 0.0
        %v2675 = vmul.f32 %v2507, 0.0
        %v2676 = vmul.f32 %v2250, %v2660
        %v2677 = vmul.f32 %v2265, %v2661
        %v2678 = vmul.f32 %v2280, %v2662
        %v2679 = vmul.f32 %v2295, %v2663
        %v2680 = vmul.f32 %v2310, %v2664
        %v2681 = vmul.f32 %v2325, %v2665
        %v2682 = vmul.f32 %v2340, %v2666
        %v2683 = vmul.f32 %v2355, %v2667
        %v2684 = vadd.f32 %v2668, %v2676
        %v2685 = vadd.f32 %v2669, %v2677
        %v2686 = vadd.f32 %v2670, %v2678
        %v2687 = vadd.f32 %v2671, %v2679
        %v2688 = vadd.f32 %v2672, %v2680
        %v2689 = vadd.f32 %v2673, %v2681
        %v2690 = vadd.f32 %v2674, %v2682
        %v2691 = vadd.f32 %v2675, %v2683
        %v2692 = vtanh.pop %v2684
        %v2693 = vtanh.pop %v2685
        %v2694 = vtanh.pop %v2686
        %v2695 = vtanh.pop %v2687
        %v2696 = vtanh.pop %v2688
        %v2697 = vtanh.pop %v2689
        %v2698 = vtanh.pop %v2690
        %v2699 = vtanh.pop %v2691
        %v2700 = vmul.f32 %v2554, %v2692
        %v2701 = vmul.f32 %v2569, %v2693
        %v2702 = vmul.f32 %v2584, %v2694
        %v2703 = vmul.f32 %v2599, %v2695
        %v2704 = vmul.f32 %v2614, %v2696
        %v2705 = vmul.f32 %v2629, %v2697
        %v2706 = vmul.f32 %v2644, %v2698
        %v2707 = vmul.f32 %v2659, %v2699
        %v2708 = vpack.c.bf16 %v2700, %v2700
        %v2709 = vpack.c.bf16 %v2701, %v2701
        %v2710 = vpack.c.bf16 %v2702, %v2702
        %v2711 = vpack.c.bf16 %v2703, %v2703
        %v2712 = vpack.c.bf16 %v2704, %v2704
        %v2713 = vpack.c.bf16 %v2705, %v2705
        %v2714 = vpack.c.bf16 %v2706, %v2706
        %v2715 = vpack.c.bf16 %v2707, %v2707
        %2716 = vst [vmem:[#allocation2] sm:$0xf] %v2708
        %2717 = vst [vmem:[#allocation2 + $0x8] sm:$0xf] %v2709
        %2718 = vst [vmem:[#allocation2 + $0x10] sm:$0xf] %v2710
        %2719 = vst [vmem:[#allocation2 + $0x18] sm:$0xf] %v2711
        %2720 = vst [vmem:[#allocation2 + $0x20] sm:$0xf] %v2712
        %2721 = vst [vmem:[#allocation2 + $0x28] sm:$0xf] %v2713
        %2722 = vst [vmem:[#allocation2 + $0x30] sm:$0xf] %v2714
        %2723 = vst [vmem:[#allocation2 + $0x38] sm:$0xf] %v2715
        %v2724 = vld [vmem:[%s6] sm:$0xff]
        %v2725 = vld [vmem:[%s6 + $0x8] sm:$0xff]
        %v2726 = vld [vmem:[%s6 + $0x10] sm:$0xff]
        %v2727 = vld [vmem:[%s6 + $0x18] sm:$0xff]
        %v2728 = vld [vmem:[%s6 + $0x20] sm:$0xff]
        %v2729 = vld [vmem:[%s6 + $0x28] sm:$0xff]
        %v2730 = vld [vmem:[%s6 + $0x30] sm:$0xff]
        %v2731 = vld [vmem:[%s6 + $0x38] sm:$0xff]
        %v2732 = vld [vmem:[%s6 + $0x40] sm:$0xff]
        %v2733 = vld [vmem:[%s6 + $0x48] sm:$0xff]
        %v2734 = vld [vmem:[%s6 + $0x50] sm:$0xff]
        %v2735 = vld [vmem:[%s6 + $0x58] sm:$0xff]
        %v2736 = vld [vmem:[%s6 + $0x60] sm:$0xff]
        %v2737 = vld [vmem:[%s6 + $0x68] sm:$0xff]
        %v2738 = vld [vmem:[%s6 + $0x70] sm:$0xff]
        %v2739 = vld [vmem:[%s6 + $0x78] sm:$0xff]
        %v2748 = vunpack.c.l.b16 %v2708
        %v2749 = vunpack.c.l.b16 %v2709
        %v2750 = vunpack.c.l.b16 %v2710
        %v2751 = vunpack.c.l.b16 %v2711
        %v2752 = vunpack.c.l.b16 %v2712
        %v2753 = vunpack.c.l.b16 %v2713
        %v2754 = vunpack.c.l.b16 %v2714
        %v2755 = vunpack.c.l.b16 %v2715
        %v2756 = vpack.c.b16 %v2749, %v2748
        %v2757 = vpack.c.b16 %v2751, %v2750
        %v2758 = vpack.c.b16 %v2753, %v2752
        %v2759 = vpack.c.b16 %v2755, %v2754
        %v2780 = vunpack.c.l.b16 %v2724
        %v2781 = vunpack.c.h.b16 %v2724
        %v2782 = vunpack.c.l.b16 %v2725
        %v2783 = vunpack.c.h.b16 %v2725
        %v2784 = vunpack.c.l.b16 %v2726
        %v2785 = vunpack.c.h.b16 %v2726
        %v2786 = vunpack.c.l.b16 %v2727
        %v2787 = vunpack.c.h.b16 %v2727
        %v2788 = vunpack.c.l.b16 %v2728
        %v2789 = vunpack.c.h.b16 %v2728
        %v2790 = vunpack.c.l.b16 %v2729
        %v2791 = vunpack.c.h.b16 %v2729
        %v2792 = vunpack.c.l.b16 %v2730
        %v2793 = vunpack.c.h.b16 %v2730
        %v2794 = vunpack.c.l.b16 %v2731
        %v2795 = vunpack.c.h.b16 %v2731
        %v2796 = vunpack.c.l.b16 %v2732
        %v2797 = vunpack.c.h.b16 %v2732
        %v2798 = vunpack.c.l.b16 %v2733
        %v2799 = vunpack.c.h.b16 %v2733
        %v2800 = vunpack.c.l.b16 %v2734
        %v2801 = vunpack.c.h.b16 %v2734
        %v2802 = vunpack.c.l.b16 %v2735
        %v2803 = vunpack.c.h.b16 %v2735
        %v2804 = vunpack.c.l.b16 %v2736
        %v2805 = vunpack.c.h.b16 %v2736
        %v2806 = vunpack.c.l.b16 %v2737
        %v2807 = vunpack.c.h.b16 %v2737
        %v2808 = vunpack.c.l.b16 %v2738
        %v2809 = vunpack.c.h.b16 %v2738
        %v2810 = vunpack.c.l.b16 %v2739
        %v2811 = vunpack.c.h.b16 %v2739
        %v2812 = vpack.c.b16 %v2782, %v2780
        %v2813 = vpack.c.b16 %v2783, %v2781
        %v2814 = vpack.c.b16 %v2786, %v2784
        %v2815 = vpack.c.b16 %v2787, %v2785
        %v2816 = vpack.c.b16 %v2790, %v2788
        %v2817 = vpack.c.b16 %v2791, %v2789
        %v2818 = vpack.c.b16 %v2794, %v2792
        %v2819 = vpack.c.b16 %v2795, %v2793
        %v2820 = vpack.c.b16 %v2798, %v2796
        %v2821 = vpack.c.b16 %v2799, %v2797
        %v2822 = vpack.c.b16 %v2802, %v2800
        %v2823 = vpack.c.b16 %v2803, %v2801
        %v2824 = vpack.c.b16 %v2806, %v2804
        %v2825 = vpack.c.b16 %v2807, %v2805
        %v2826 = vpack.c.b16 %v2810, %v2808
        %v2827 = vpack.c.b16 %v2811, %v2809
        %2844 = vmatpush.bf16.msra.mxu0 %v2826
        %2845 = vmatpush.bf16.msra.mxu0 %v2824
        %2846 = vmatpush.bf16.msra.mxu0 %v2822
        %2847 = vmatpush.bf16.msra.mxu0 %v2820
        %2848 = vmatpush.bf16.msra.mxu0 %v2818
        %2849 = vmatpush.bf16.msra.mxu0 %v2816
        %2850 = vmatpush.bf16.msra.mxu0 %v2814
        %2851 = vmatpush.bf16.msra.mxu0 %v2812
        %2852 = vmatmul.bf16.gmra.mxu0 %v2756
        %v2853 = vpop.f32.mrf.mxu0
        %v2854 = vadd.f32 0.0, %v2853
        %v2855 = vpop.f32.mrf.mxu0
        %v2856 = vadd.f32 0.0, %v2855
        %2857 = vmatmul.bf16.gmra.mxu0 %v2757
        %v2858 = vpop.f32.mrf.mxu0
        %v2859 = vadd.f32 0.0, %v2858
        %v2860 = vpop.f32.mrf.mxu0
        %v2861 = vadd.f32 0.0, %v2860
        %2862 = vmatmul.bf16.gmra.mxu0 %v2758
        %v2863 = vpop.f32.mrf.mxu0
        %v2864 = vadd.f32 0.0, %v2863
        %v2865 = vpop.f32.mrf.mxu0
        %v2866 = vadd.f32 0.0, %v2865
        %2867 = vmatmul.bf16.gmra.mxu0 %v2759
        %v2868 = vpop.f32.mrf.mxu0
        %v2869 = vadd.f32 0.0, %v2868
        %v2870 = vpop.f32.mrf.mxu0
        %v2871 = vadd.f32 0.0, %v2870
        %2872 = vdwg.mxu0
        %2873 = vmatpush.bf16.msra.mxu0 %v2827
        %2874 = vmatpush.bf16.msra.mxu0 %v2825
        %2875 = vmatpush.bf16.msra.mxu0 %v2823
        %2876 = vmatpush.bf16.msra.mxu0 %v2821
        %2877 = vmatpush.bf16.msra.mxu0 %v2819
        %2878 = vmatpush.bf16.msra.mxu0 %v2817
        %2879 = vmatpush.bf16.msra.mxu0 %v2815
        %2880 = vmatpush.bf16.msra.mxu0 %v2813
        %2881 = vmatmul.bf16.gmra.mxu0 %v2756
        %v2882 = vpop.f32.mrf.mxu0
        %v2883 = vadd.f32 0.0, %v2882
        %v2884 = vpop.f32.mrf.mxu0
        %v2885 = vadd.f32 0.0, %v2884
        %2886 = vmatmul.bf16.gmra.mxu0 %v2757
        %v2887 = vpop.f32.mrf.mxu0
        %v2888 = vadd.f32 0.0, %v2887
        %v2889 = vpop.f32.mrf.mxu0
        %v2890 = vadd.f32 0.0, %v2889
        %2891 = vmatmul.bf16.gmra.mxu0 %v2758
        %v2892 = vpop.f32.mrf.mxu0
        %v2893 = vadd.f32 0.0, %v2892
        %v2894 = vpop.f32.mrf.mxu0
        %v2895 = vadd.f32 0.0, %v2894
        %2896 = vmatmul.bf16.gmra.mxu0 %v2759
        %v2897 = vpop.f32.mrf.mxu0
        %v2898 = vadd.f32 0.0, %v2897
        %v2899 = vpop.f32.mrf.mxu0
        %v2900 = vadd.f32 0.0, %v2899
        %2901 = vdwg.mxu0
        %v2902 = vld [vmem:[%s7] sm:$0x3]
        %v2904 = vperm.slane %v2902, 0
        %v2905 = vperm.slane %v2902, 1
        %v2908 = vmul.f32 %v2854, %v2904
        %v2909 = vmul.f32 %v2883, %v2905
        %v2910 = vmul.f32 %v2856, %v2904
        %v2911 = vmul.f32 %v2885, %v2905
        %v2912 = vmul.f32 %v2859, %v2904
        %v2913 = vmul.f32 %v2888, %v2905
        %v2914 = vmul.f32 %v2861, %v2904
        %v2915 = vmul.f32 %v2890, %v2905
        %v2916 = vmul.f32 %v2864, %v2904
        %v2917 = vmul.f32 %v2893, %v2905
        %v2918 = vmul.f32 %v2866, %v2904
        %v2919 = vmul.f32 %v2895, %v2905
        %v2920 = vmul.f32 %v2869, %v2904
        %v2921 = vmul.f32 %v2898, %v2905
        %v2922 = vmul.f32 %v2871, %v2904
        %v2923 = vmul.f32 %v2900, %v2905
        %v2924 = vld [vmem:[%s8] sm:$0x3]
        %v2926 = vperm.slane %v2924, 0
        %v2927 = vperm.slane %v2924, 1
        %v2930 = vadd.f32 %v2908, %v2926
        %v2931 = vadd.f32 %v2909, %v2927
        %v2932 = vadd.f32 %v2910, %v2926
        %v2933 = vadd.f32 %v2911, %v2927
        %v2934 = vadd.f32 %v2912, %v2926
        %v2935 = vadd.f32 %v2913, %v2927
        %v2936 = vadd.f32 %v2914, %v2926
        %v2937 = vadd.f32 %v2915, %v2927
        %v2938 = vadd.f32 %v2916, %v2926
        %v2939 = vadd.f32 %v2917, %v2927
        %v2940 = vadd.f32 %v2918, %v2926
        %v2941 = vadd.f32 %v2919, %v2927
        %v2942 = vadd.f32 %v2920, %v2926
        %v2943 = vadd.f32 %v2921, %v2927
        %v2944 = vadd.f32 %v2922, %v2926
        %v2945 = vadd.f32 %v2923, %v2927
        %v2946 = vmax.f32 %v2930, 0.0
        %v2947 = vmax.f32 %v2931, 0.0
        %v2948 = vmax.f32 %v2932, 0.0
        %v2949 = vmax.f32 %v2933, 0.0
        %v2950 = vmax.f32 %v2934, 0.0
        %v2951 = vmax.f32 %v2935, 0.0
        %v2952 = vmax.f32 %v2936, 0.0
        %v2953 = vmax.f32 %v2937, 0.0
        %v2954 = vmax.f32 %v2938, 0.0
        %v2955 = vmax.f32 %v2939, 0.0
        %v2956 = vmax.f32 %v2940, 0.0
        %v2957 = vmax.f32 %v2941, 0.0
        %v2958 = vmax.f32 %v2942, 0.0
        %v2959 = vmax.f32 %v2943, 0.0
        %v2960 = vmax.f32 %v2944, 0.0
        %v2961 = vmax.f32 %v2945, 0.0
        %v2962 = vadd.f32 %v2946, %v1101
        %v2963 = vadd.f32 %v2947, %v1279
        %v2964 = vadd.f32 %v2948, %v1103
        %v2965 = vadd.f32 %v2949, %v1281
        %v2966 = vadd.f32 %v2950, %v1106
        %v2967 = vadd.f32 %v2951, %v1284
        %v2968 = vadd.f32 %v2952, %v1108
        %v2969 = vadd.f32 %v2953, %v1286
        %v2970 = vadd.f32 %v2954, %v1111
        %v2971 = vadd.f32 %v2955, %v1289
        %v2972 = vadd.f32 %v2956, %v1113
        %v2973 = vadd.f32 %v2957, %v1291
        %v2974 = vadd.f32 %v2958, %v1116
        %v2975 = vadd.f32 %v2959, %v1294
        %v2976 = vadd.f32 %v2960, %v1118
        %v2977 = vadd.f32 %v2961, %v1296
        %2978 = vst [vmem:[%s487] sm:$0xff] %v2962
        %2979 = vst [vmem:[%s487 + $0x8] sm:$0xff] %v2963
        %2980 = vst [vmem:[%s487 + $0x10] sm:$0xff] %v2964
        %2981 = vst [vmem:[%s487 + $0x18] sm:$0xff] %v2965
        %2982 = vst [vmem:[%s487 + $0x20] sm:$0xff] %v2966
        %2983 = vst [vmem:[%s487 + $0x28] sm:$0xff] %v2967
        %2984 = vst [vmem:[%s487 + $0x30] sm:$0xff] %v2968
        %2985 = vst [vmem:[%s487 + $0x38] sm:$0xff] %v2969
        %2986 = vst [vmem:[%s487 + $0x40] sm:$0xff] %v2970
        %2987 = vst [vmem:[%s487 + $0x48] sm:$0xff] %v2971
        %2988 = vst [vmem:[%s487 + $0x50] sm:$0xff] %v2972
        %2989 = vst [vmem:[%s487 + $0x58] sm:$0xff] %v2973
        %2990 = vst [vmem:[%s487 + $0x60] sm:$0xff] %v2974
        %2991 = vst [vmem:[%s487 + $0x68] sm:$0xff] %v2975
        %2992 = vst [vmem:[%s487 + $0x70] sm:$0xff] %v2976
        %2993 = vst [vmem:[%s487 + $0x78] sm:$0xff] %v2977
        %v2994 = vld [vmem:[%s5 + $0x400] sm:$0xff]
        %v2995 = vld [vmem:[%s5 + $0x408] sm:$0xff]
        %v2996 = vld [vmem:[%s5 + $0x410] sm:$0xff]
        %v2997 = vld [vmem:[%s5 + $0x418] sm:$0xff]
        %v2998 = vld [vmem:[%s5 + $0x420] sm:$0xff]
        %v2999 = vld [vmem:[%s5 + $0x428] sm:$0xff]
        %v3000 = vld [vmem:[%s5 + $0x430] sm:$0xff]
        %v3001 = vld [vmem:[%s5 + $0x438] sm:$0xff]
        %v3002 = vld [vmem:[%s5 + $0x440] sm:$0xff]
        %v3003 = vld [vmem:[%s5 + $0x448] sm:$0xff]
        %v3004 = vld [vmem:[%s5 + $0x450] sm:$0xff]
        %v3005 = vld [vmem:[%s5 + $0x458] sm:$0xff]
        %v3006 = vld [vmem:[%s5 + $0x460] sm:$0xff]
        %v3007 = vld [vmem:[%s5 + $0x468] sm:$0xff]
        %v3008 = vld [vmem:[%s5 + $0x470] sm:$0xff]
        %v3009 = vld [vmem:[%s5 + $0x478] sm:$0xff]
        %v3010 = vld [vmem:[%s5 + $0x480] sm:$0xff]
        %v3011 = vld [vmem:[%s5 + $0x488] sm:$0xff]
        %v3012 = vld [vmem:[%s5 + $0x490] sm:$0xff]
        %v3013 = vld [vmem:[%s5 + $0x498] sm:$0xff]
        %v3014 = vld [vmem:[%s5 + $0x4a0] sm:$0xff]
        %v3015 = vld [vmem:[%s5 + $0x4a8] sm:$0xff]
        %v3016 = vld [vmem:[%s5 + $0x4b0] sm:$0xff]
        %v3017 = vld [vmem:[%s5 + $0x4b8] sm:$0xff]
        %v3018 = vld [vmem:[%s5 + $0x4c0] sm:$0xff]
        %v3019 = vld [vmem:[%s5 + $0x4c8] sm:$0xff]
        %v3020 = vld [vmem:[%s5 + $0x4d0] sm:$0xff]
        %v3021 = vld [vmem:[%s5 + $0x4d8] sm:$0xff]
        %v3022 = vld [vmem:[%s5 + $0x4e0] sm:$0xff]
        %v3023 = vld [vmem:[%s5 + $0x4e8] sm:$0xff]
        %v3024 = vld [vmem:[%s5 + $0x4f0] sm:$0xff]
        %v3025 = vld [vmem:[%s5 + $0x4f8] sm:$0xff]
        %v3058 = vunpack.c.l.b16 %v2994
        %v3059 = vunpack.c.h.b16 %v2994
        %v3060 = vunpack.c.l.b16 %v2995
        %v3061 = vunpack.c.h.b16 %v2995
        %v3062 = vunpack.c.l.b16 %v2996
        %v3063 = vunpack.c.h.b16 %v2996
        %v3064 = vunpack.c.l.b16 %v2997
        %v3065 = vunpack.c.h.b16 %v2997
        %v3066 = vunpack.c.l.b16 %v2998
        %v3067 = vunpack.c.h.b16 %v2998
        %v3068 = vunpack.c.l.b16 %v2999
        %v3069 = vunpack.c.h.b16 %v2999
        %v3070 = vunpack.c.l.b16 %v3000
        %v3071 = vunpack.c.h.b16 %v3000
        %v3072 = vunpack.c.l.b16 %v3001
        %v3073 = vunpack.c.h.b16 %v3001
        %v3074 = vunpack.c.l.b16 %v3002
        %v3075 = vunpack.c.h.b16 %v3002
        %v3076 = vunpack.c.l.b16 %v3003
        %v3077 = vunpack.c.h.b16 %v3003
        %v3078 = vunpack.c.l.b16 %v3004
        %v3079 = vunpack.c.h.b16 %v3004
        %v3080 = vunpack.c.l.b16 %v3005
        %v3081 = vunpack.c.h.b16 %v3005
        %v3082 = vunpack.c.l.b16 %v3006
        %v3083 = vunpack.c.h.b16 %v3006
        %v3084 = vunpack.c.l.b16 %v3007
        %v3085 = vunpack.c.h.b16 %v3007
        %v3086 = vunpack.c.l.b16 %v3008
        %v3087 = vunpack.c.h.b16 %v3008
        %v3088 = vunpack.c.l.b16 %v3009
        %v3089 = vunpack.c.h.b16 %v3009
        %v3090 = vunpack.c.l.b16 %v3010
        %v3091 = vunpack.c.h.b16 %v3010
        %v3092 = vunpack.c.l.b16 %v3011
        %v3093 = vunpack.c.h.b16 %v3011
        %v3094 = vunpack.c.l.b16 %v3012
        %v3095 = vunpack.c.h.b16 %v3012
        %v3096 = vunpack.c.l.b16 %v3013
        %v3097 = vunpack.c.h.b16 %v3013
        %v3098 = vunpack.c.l.b16 %v3014
        %v3099 = vunpack.c.h.b16 %v3014
        %v3100 = vunpack.c.l.b16 %v3015
        %v3101 = vunpack.c.h.b16 %v3015
        %v3102 = vunpack.c.l.b16 %v3016
        %v3103 = vunpack.c.h.b16 %v3016
        %v3104 = vunpack.c.l.b16 %v3017
        %v3105 = vunpack.c.h.b16 %v3017
        %v3106 = vunpack.c.l.b16 %v3018
        %v3107 = vunpack.c.h.b16 %v3018
        %v3108 = vunpack.c.l.b16 %v3019
        %v3109 = vunpack.c.h.b16 %v3019
        %v3110 = vunpack.c.l.b16 %v3020
        %v3111 = vunpack.c.h.b16 %v3020
        %v3112 = vunpack.c.l.b16 %v3021
        %v3113 = vunpack.c.h.b16 %v3021
        %v3114 = vunpack.c.l.b16 %v3022
        %v3115 = vunpack.c.h.b16 %v3022
        %v3116 = vunpack.c.l.b16 %v3023
        %v3117 = vunpack.c.h.b16 %v3023
        %v3118 = vunpack.c.l.b16 %v3024
        %v3119 = vunpack.c.h.b16 %v3024
        %v3120 = vunpack.c.l.b16 %v3025
        %v3121 = vunpack.c.h.b16 %v3025
        %v3122 = vpack.c.b16 %v3062, %v3058
        %v3123 = vpack.c.b16 %v3063, %v3059
        %v3124 = vpack.c.b16 %v3064, %v3060
        %v3125 = vpack.c.b16 %v3065, %v3061
        %v3126 = vpack.c.b16 %v3070, %v3066
        %v3127 = vpack.c.b16 %v3071, %v3067
        %v3128 = vpack.c.b16 %v3072, %v3068
        %v3129 = vpack.c.b16 %v3073, %v3069
        %v3130 = vpack.c.b16 %v3078, %v3074
        %v3131 = vpack.c.b16 %v3079, %v3075
        %v3132 = vpack.c.b16 %v3080, %v3076
        %v3133 = vpack.c.b16 %v3081, %v3077
        %v3134 = vpack.c.b16 %v3086, %v3082
        %v3135 = vpack.c.b16 %v3087, %v3083
        %v3136 = vpack.c.b16 %v3088, %v3084
        %v3137 = vpack.c.b16 %v3089, %v3085
        %v3138 = vpack.c.b16 %v3094, %v3090
        %v3139 = vpack.c.b16 %v3095, %v3091
        %v3140 = vpack.c.b16 %v3096, %v3092
        %v3141 = vpack.c.b16 %v3097, %v3093
        %v3142 = vpack.c.b16 %v3102, %v3098
        %v3143 = vpack.c.b16 %v3103, %v3099
        %v3144 = vpack.c.b16 %v3104, %v3100
        %v3145 = vpack.c.b16 %v3105, %v3101
        %v3146 = vpack.c.b16 %v3110, %v3106
        %v3147 = vpack.c.b16 %v3111, %v3107
        %v3148 = vpack.c.b16 %v3112, %v3108
        %v3149 = vpack.c.b16 %v3113, %v3109
        %v3150 = vpack.c.b16 %v3118, %v3114
        %v3151 = vpack.c.b16 %v3119, %v3115
        %v3152 = vpack.c.b16 %v3120, %v3116
        %v3153 = vpack.c.b16 %v3121, %v3117
        %3186 = vmatpush.bf16.msra.mxu0 %v3150
        %3187 = vmatpush.bf16.msra.mxu0 %v3146
        %3188 = vmatpush.bf16.msra.mxu0 %v3142
        %3189 = vmatpush.bf16.msra.mxu0 %v3138
        %3190 = vmatpush.bf16.msra.mxu0 %v3134
        %3191 = vmatpush.bf16.msra.mxu0 %v3130
        %3192 = vmatpush.bf16.msra.mxu0 %v3126
        %3193 = vmatpush.bf16.msra.mxu0 %v3122
        %3194 = vmatmul.bf16.gmra.mxu0 %v2756
        %v3195 = vpop.f32.mrf.mxu0
        %v3196 = vadd.f32 0.0, %v3195
        %v3197 = vpop.f32.mrf.mxu0
        %v3198 = vadd.f32 0.0, %v3197
        %3199 = vmatmul.bf16.gmra.mxu0 %v2757
        %v3200 = vpop.f32.mrf.mxu0
        %v3201 = vadd.f32 0.0, %v3200
        %v3202 = vpop.f32.mrf.mxu0
        %v3203 = vadd.f32 0.0, %v3202
        %3204 = vmatmul.bf16.gmra.mxu0 %v2758
        %v3205 = vpop.f32.mrf.mxu0
        %v3206 = vadd.f32 0.0, %v3205
        %v3207 = vpop.f32.mrf.mxu0
        %v3208 = vadd.f32 0.0, %v3207
        %3209 = vmatmul.bf16.gmra.mxu0 %v2759
        %v3210 = vpop.f32.mrf.mxu0
        %v3211 = vadd.f32 0.0, %v3210
        %v3212 = vpop.f32.mrf.mxu0
        %v3213 = vadd.f32 0.0, %v3212
        %3214 = vdwg.mxu0
        %3215 = vmatpush.bf16.msra.mxu0 %v3151
        %3216 = vmatpush.bf16.msra.mxu0 %v3147
        %3217 = vmatpush.bf16.msra.mxu0 %v3143
        %3218 = vmatpush.bf16.msra.mxu0 %v3139
        %3219 = vmatpush.bf16.msra.mxu0 %v3135
        %3220 = vmatpush.bf16.msra.mxu0 %v3131
        %3221 = vmatpush.bf16.msra.mxu0 %v3127
        %3222 = vmatpush.bf16.msra.mxu0 %v3123
        %3223 = vmatmul.bf16.gmra.mxu0 %v2756
        %v3224 = vpop.f32.mrf.mxu0
        %v3225 = vadd.f32 0.0, %v3224
        %v3226 = vpop.f32.mrf.mxu0
        %v3227 = vadd.f32 0.0, %v3226
        %3228 = vmatmul.bf16.gmra.mxu0 %v2757
        %v3229 = vpop.f32.mrf.mxu0
        %v3230 = vadd.f32 0.0, %v3229
        %v3231 = vpop.f32.mrf.mxu0
        %v3232 = vadd.f32 0.0, %v3231
        %3233 = vmatmul.bf16.gmra.mxu0 %v2758
        %v3234 = vpop.f32.mrf.mxu0
        %v3235 = vadd.f32 0.0, %v3234
        %v3236 = vpop.f32.mrf.mxu0
        %v3237 = vadd.f32 0.0, %v3236
        %3238 = vmatmul.bf16.gmra.mxu0 %v2759
        %v3239 = vpop.f32.mrf.mxu0
        %v3240 = vadd.f32 0.0, %v3239
        %v3241 = vpop.f32.mrf.mxu0
        %v3242 = vadd.f32 0.0, %v3241
        %3243 = vdwg.mxu0
        %3244 = vmatpush.bf16.msra.mxu0 %v3152
        %3245 = vmatpush.bf16.msra.mxu0 %v3148
        %3246 = vmatpush.bf16.msra.mxu0 %v3144
        %3247 = vmatpush.bf16.msra.mxu0 %v3140
        %3248 = vmatpush.bf16.msra.mxu0 %v3136
        %3249 = vmatpush.bf16.msra.mxu0 %v3132
        %3250 = vmatpush.bf16.msra.mxu0 %v3128
        %3251 = vmatpush.bf16.msra.mxu0 %v3124
        %3252 = vmatmul.bf16.gmra.mxu0 %v2756
        %v3253 = vpop.f32.mrf.mxu0
        %v3254 = vadd.f32 0.0, %v3253
        %v3255 = vpop.f32.mrf.mxu0
        %v3256 = vadd.f32 0.0, %v3255
        %3257 = vmatmul.bf16.gmra.mxu0 %v2757
        %v3258 = vpop.f32.mrf.mxu0
        %v3259 = vadd.f32 0.0, %v3258
        %v3260 = vpop.f32.mrf.mxu0
        %v3261 = vadd.f32 0.0, %v3260
        %3262 = vmatmul.bf16.gmra.mxu0 %v2758
        %v3263 = vpop.f32.mrf.mxu0
        %v3264 = vadd.f32 0.0, %v3263
        %v3265 = vpop.f32.mrf.mxu0
        %v3266 = vadd.f32 0.0, %v3265
        %3267 = vmatmul.bf16.gmra.mxu0 %v2759
        %v3268 = vpop.f32.mrf.mxu0
        %v3269 = vadd.f32 0.0, %v3268
        %v3270 = vpop.f32.mrf.mxu0
        %v3271 = vadd.f32 0.0, %v3270
        %3272 = vdwg.mxu0
        %3273 = vmatpush.bf16.msra.mxu0 %v3153
        %3274 = vmatpush.bf16.msra.mxu0 %v3149
        %3275 = vmatpush.bf16.msra.mxu0 %v3145
        %3276 = vmatpush.bf16.msra.mxu0 %v3141
        %3277 = vmatpush.bf16.msra.mxu0 %v3137
        %3278 = vmatpush.bf16.msra.mxu0 %v3133
        %3279 = vmatpush.bf16.msra.mxu0 %v3129
        %3280 = vmatpush.bf16.msra.mxu0 %v3125
        %3281 = vmatmul.bf16.gmra.mxu0 %v2756
        %v3282 = vpop.f32.mrf.mxu0
        %v3283 = vadd.f32 0.0, %v3282
        %v3284 = vpop.f32.mrf.mxu0
        %v3285 = vadd.f32 0.0, %v3284
        %3286 = vmatmul.bf16.gmra.mxu0 %v2757
        %v3287 = vpop.f32.mrf.mxu0
        %v3288 = vadd.f32 0.0, %v3287
        %v3289 = vpop.f32.mrf.mxu0
        %v3290 = vadd.f32 0.0, %v3289
        %3291 = vmatmul.bf16.gmra.mxu0 %v2758
        %v3292 = vpop.f32.mrf.mxu0
        %v3293 = vadd.f32 0.0, %v3292
        %v3294 = vpop.f32.mrf.mxu0
        %v3295 = vadd.f32 0.0, %v3294
        %3296 = vmatmul.bf16.gmra.mxu0 %v2759
        %v3297 = vpop.f32.mrf.mxu0
        %v3298 = vadd.f32 0.0, %v3297
        %v3299 = vpop.f32.mrf.mxu0
        %v3300 = vadd.f32 0.0, %v3299
        %3301 = vdwg.mxu0
        %v3302 = vadd.f32 %v1878, %v3196
        %v3303 = vadd.f32 %v1967, %v3225
        %v3304 = vadd.f32 %v2056, %v3254
        %v3305 = vadd.f32 %v2145, %v3283
        %v3306 = vadd.f32 %v1880, %v3198
        %v3307 = vadd.f32 %v1969, %v3227
        %v3308 = vadd.f32 %v2058, %v3256
        %v3309 = vadd.f32 %v2147, %v3285
        %v3310 = vadd.f32 %v1883, %v3201
        %v3311 = vadd.f32 %v1972, %v3230
        %v3312 = vadd.f32 %v2061, %v3259
        %v3313 = vadd.f32 %v2150, %v3288
        %v3314 = vadd.f32 %v1885, %v3203
        %v3315 = vadd.f32 %v1974, %v3232
        %v3316 = vadd.f32 %v2063, %v3261
        %v3317 = vadd.f32 %v2152, %v3290
        %v3318 = vadd.f32 %v1888, %v3206
        %v3319 = vadd.f32 %v1977, %v3235
        %v3320 = vadd.f32 %v2066, %v3264
        %v3321 = vadd.f32 %v2155, %v3293
        %v3322 = vadd.f32 %v1890, %v3208
        %v3323 = vadd.f32 %v1979, %v3237
        %v3324 = vadd.f32 %v2068, %v3266
        %v3325 = vadd.f32 %v2157, %v3295
        %v3326 = vadd.f32 %v1893, %v3211
        %v3327 = vadd.f32 %v1982, %v3240
        %v3328 = vadd.f32 %v2071, %v3269
        %v3329 = vadd.f32 %v2160, %v3298
        %v3330 = vadd.f32 %v1895, %v3213
        %v3331 = vadd.f32 %v1984, %v3242
        %v3332 = vadd.f32 %v2073, %v3271
        %v3333 = vadd.f32 %v2162, %v3300
        %v3334 = vxor.u32 %v3302, 2147483648
        %v3335 = vxor.u32 %v3306, 2147483648
        %v3336 = vxor.u32 %v3310, 2147483648
        %v3337 = vxor.u32 %v3314, 2147483648
        %v3338 = vxor.u32 %v3318, 2147483648
        %v3339 = vxor.u32 %v3322, 2147483648
        %v3340 = vxor.u32 %v3326, 2147483648
        %v3341 = vxor.u32 %v3330, 2147483648
        %v3342 = vmul.f32 %v3334, 1.442695
        %v3343 = vpow.pop %v3342
        %v3344 = vmul.f32 %v3335, 1.442695
        %v3345 = vpow.pop %v3344
        %v3346 = vmul.f32 %v3336, 1.442695
        %v3347 = vpow.pop %v3346
        %v3348 = vmul.f32 %v3337, 1.442695
        %v3349 = vpow.pop %v3348
        %v3350 = vmul.f32 %v3338, 1.442695
        %v3351 = vpow.pop %v3350
        %v3352 = vmul.f32 %v3339, 1.442695
        %v3353 = vpow.pop %v3352
        %v3354 = vmul.f32 %v3340, 1.442695
        %v3355 = vpow.pop %v3354
        %v3356 = vmul.f32 %v3341, 1.442695
        %v3357 = vpow.pop %v3356
        %v3358 = vadd.f32 %v3343, 1.0
        %v3359 = vadd.f32 %v3345, 1.0
        %v3360 = vadd.f32 %v3347, 1.0
        %v3361 = vadd.f32 %v3349, 1.0
        %v3362 = vadd.f32 %v3351, 1.0
        %v3363 = vadd.f32 %v3353, 1.0
        %v3364 = vadd.f32 %v3355, 1.0
        %v3365 = vadd.f32 %v3357, 1.0
        %v3366 = vrcp.pop %v3358
        %v3367 = vmul.f32 %v3358, %v3366
        %v3368 = vsub.f32 1.0, %v3367
        %v3369 = vmul.f32 %v3366, %v3368
        %v3370 = vadd.f32 %v3366, %v3369
        %vm3371 = vweird.f32 %v3358
        %vm3372 = vweird.f32 %v3366
        %vm3373 = vmor %vm3371, %vm3372
        %v3374 = vsel %vm3373, %v3366, %v3370
        %v3375 = vand.u32 2147483647, %v3358
        %vm3376 = vcmp.eq.f32.partialorder %v3375, 8.507059e+37
        %v3377 = vand.u32 %v3358, 2147483648
        %v3378 = vor.u32 1.1754944e-38, %v3377
        %v3379 = vsel %vm3376, %v3378, %v3374
        %v3380 = vmul.f32 1.0, %v3379
        %v3381 = vrcp.pop %v3359
        %v3382 = vmul.f32 %v3359, %v3381
        %v3383 = vsub.f32 1.0, %v3382
        %v3384 = vmul.f32 %v3381, %v3383
        %v3385 = vadd.f32 %v3381, %v3384
        %vm3386 = vweird.f32 %v3359
        %vm3387 = vweird.f32 %v3381
        %vm3388 = vmor %vm3386, %vm3387
        %v3389 = vsel %vm3388, %v3381, %v3385
        %v3390 = vand.u32 2147483647, %v3359
        %vm3391 = vcmp.eq.f32.partialorder %v3390, 8.507059e+37
        %v3392 = vand.u32 %v3359, 2147483648
        %v3393 = vor.u32 1.1754944e-38, %v3392
        %v3394 = vsel %vm3391, %v3393, %v3389
        %v3395 = vmul.f32 1.0, %v3394
        %v3396 = vrcp.pop %v3360
        %v3397 = vmul.f32 %v3360, %v3396
        %v3398 = vsub.f32 1.0, %v3397
        %v3399 = vmul.f32 %v3396, %v3398
        %v3400 = vadd.f32 %v3396, %v3399
        %vm3401 = vweird.f32 %v3360
        %vm3402 = vweird.f32 %v3396
        %vm3403 = vmor %vm3401, %vm3402
        %v3404 = vsel %vm3403, %v3396, %v3400
        %v3405 = vand.u32 2147483647, %v3360
        %vm3406 = vcmp.eq.f32.partialorder %v3405, 8.507059e+37
        %v3407 = vand.u32 %v3360, 2147483648
        %v3408 = vor.u32 1.1754944e-38, %v3407
        %v3409 = vsel %vm3406, %v3408, %v3404
        %v3410 = vmul.f32 1.0, %v3409
        %v3411 = vrcp.pop %v3361
        %v3412 = vmul.f32 %v3361, %v3411
        %v3413 = vsub.f32 1.0, %v3412
        %v3414 = vmul.f32 %v3411, %v3413
        %v3415 = vadd.f32 %v3411, %v3414
        %vm3416 = vweird.f32 %v3361
        %vm3417 = vweird.f32 %v3411
        %vm3418 = vmor %vm3416, %vm3417
        %v3419 = vsel %vm3418, %v3411, %v3415
        %v3420 = vand.u32 2147483647, %v3361
        %vm3421 = vcmp.eq.f32.partialorder %v3420, 8.507059e+37
        %v3422 = vand.u32 %v3361, 2147483648
        %v3423 = vor.u32 1.1754944e-38, %v3422
        %v3424 = vsel %vm3421, %v3423, %v3419
        %v3425 = vmul.f32 1.0, %v3424
        %v3426 = vrcp.pop %v3362
        %v3427 = vmul.f32 %v3362, %v3426
        %v3428 = vsub.f32 1.0, %v3427
        %v3429 = vmul.f32 %v3426, %v3428
        %v3430 = vadd.f32 %v3426, %v3429
        %vm3431 = vweird.f32 %v3362
        %vm3432 = vweird.f32 %v3426
        %vm3433 = vmor %vm3431, %vm3432
        %v3434 = vsel %vm3433, %v3426, %v3430
        %v3435 = vand.u32 2147483647, %v3362
        %vm3436 = vcmp.eq.f32.partialorder %v3435, 8.507059e+37
        %v3437 = vand.u32 %v3362, 2147483648
        %v3438 = vor.u32 1.1754944e-38, %v3437
        %v3439 = vsel %vm3436, %v3438, %v3434
        %v3440 = vmul.f32 1.0, %v3439
        %v3441 = vrcp.pop %v3363
        %v3442 = vmul.f32 %v3363, %v3441
        %v3443 = vsub.f32 1.0, %v3442
        %v3444 = vmul.f32 %v3441, %v3443
        %v3445 = vadd.f32 %v3441, %v3444
        %vm3446 = vweird.f32 %v3363
        %vm3447 = vweird.f32 %v3441
        %vm3448 = vmor %vm3446, %vm3447
        %v3449 = vsel %vm3448, %v3441, %v3445
        %v3450 = vand.u32 2147483647, %v3363
        %vm3451 = vcmp.eq.f32.partialorder %v3450, 8.507059e+37
        %v3452 = vand.u32 %v3363, 2147483648
        %v3453 = vor.u32 1.1754944e-38, %v3452
        %v3454 = vsel %vm3451, %v3453, %v3449
        %v3455 = vmul.f32 1.0, %v3454
        %v3456 = vrcp.pop %v3364
        %v3457 = vmul.f32 %v3364, %v3456
        %v3458 = vsub.f32 1.0, %v3457
        %v3459 = vmul.f32 %v3456, %v3458
        %v3460 = vadd.f32 %v3456, %v3459
        %vm3461 = vweird.f32 %v3364
        %vm3462 = vweird.f32 %v3456
        %vm3463 = vmor %vm3461, %vm3462
        %v3464 = vsel %vm3463, %v3456, %v3460
        %v3465 = vand.u32 2147483647, %v3364
        %vm3466 = vcmp.eq.f32.partialorder %v3465, 8.507059e+37
        %v3467 = vand.u32 %v3364, 2147483648
        %v3468 = vor.u32 1.1754944e-38, %v3467
        %v3469 = vsel %vm3466, %v3468, %v3464
        %v3470 = vmul.f32 1.0, %v3469
        %v3471 = vrcp.pop %v3365
        %v3472 = vmul.f32 %v3365, %v3471
        %v3473 = vsub.f32 1.0, %v3472
        %v3474 = vmul.f32 %v3471, %v3473
        %v3475 = vadd.f32 %v3471, %v3474
        %vm3476 = vweird.f32 %v3365
        %vm3477 = vweird.f32 %v3471
        %vm3478 = vmor %vm3476, %vm3477
        %v3479 = vsel %vm3478, %v3471, %v3475
        %v3480 = vand.u32 2147483647, %v3365
        %vm3481 = vcmp.eq.f32.partialorder %v3480, 8.507059e+37
        %v3482 = vand.u32 %v3365, 2147483648
        %v3483 = vor.u32 1.1754944e-38, %v3482
        %v3484 = vsel %vm3481, %v3483, %v3479
        %v3485 = vmul.f32 1.0, %v3484
        %v3486 = vxor.u32 %v3303, 2147483648
        %v3487 = vxor.u32 %v3307, 2147483648
        %v3488 = vxor.u32 %v3311, 2147483648
        %v3489 = vxor.u32 %v3315, 2147483648
        %v3490 = vxor.u32 %v3319, 2147483648
        %v3491 = vxor.u32 %v3323, 2147483648
        %v3492 = vxor.u32 %v3327, 2147483648
        %v3493 = vxor.u32 %v3331, 2147483648
        %v3494 = vmul.f32 %v3486, 1.442695
        %v3495 = vpow.pop %v3494
        %v3496 = vmul.f32 %v3487, 1.442695
        %v3497 = vpow.pop %v3496
        %v3498 = vmul.f32 %v3488, 1.442695
        %v3499 = vpow.pop %v3498
        %v3500 = vmul.f32 %v3489, 1.442695
        %v3501 = vpow.pop %v3500
        %v3502 = vmul.f32 %v3490, 1.442695
        %v3503 = vpow.pop %v3502
        %v3504 = vmul.f32 %v3491, 1.442695
        %v3505 = vpow.pop %v3504
        %v3506 = vmul.f32 %v3492, 1.442695
        %v3507 = vpow.pop %v3506
        %v3508 = vmul.f32 %v3493, 1.442695
        %v3509 = vpow.pop %v3508
        %v3510 = vadd.f32 %v3495, 1.0
        %v3511 = vadd.f32 %v3497, 1.0
        %v3512 = vadd.f32 %v3499, 1.0
        %v3513 = vadd.f32 %v3501, 1.0
        %v3514 = vadd.f32 %v3503, 1.0
        %v3515 = vadd.f32 %v3505, 1.0
        %v3516 = vadd.f32 %v3507, 1.0
        %v3517 = vadd.f32 %v3509, 1.0
        %v3518 = vrcp.pop %v3510
        %v3519 = vmul.f32 %v3510, %v3518
        %v3520 = vsub.f32 1.0, %v3519
        %v3521 = vmul.f32 %v3518, %v3520
        %v3522 = vadd.f32 %v3518, %v3521
        %vm3523 = vweird.f32 %v3510
        %vm3524 = vweird.f32 %v3518
        %vm3525 = vmor %vm3523, %vm3524
        %v3526 = vsel %vm3525, %v3518, %v3522
        %v3527 = vand.u32 2147483647, %v3510
        %vm3528 = vcmp.eq.f32.partialorder %v3527, 8.507059e+37
        %v3529 = vand.u32 %v3510, 2147483648
        %v3530 = vor.u32 1.1754944e-38, %v3529
        %v3531 = vsel %vm3528, %v3530, %v3526
        %v3532 = vmul.f32 1.0, %v3531
        %v3533 = vrcp.pop %v3511
        %v3534 = vmul.f32 %v3511, %v3533
        %v3535 = vsub.f32 1.0, %v3534
        %v3536 = vmul.f32 %v3533, %v3535
        %v3537 = vadd.f32 %v3533, %v3536
        %vm3538 = vweird.f32 %v3511
        %vm3539 = vweird.f32 %v3533
        %vm3540 = vmor %vm3538, %vm3539
        %v3541 = vsel %vm3540, %v3533, %v3537
        %v3542 = vand.u32 2147483647, %v3511
        %vm3543 = vcmp.eq.f32.partialorder %v3542, 8.507059e+37
        %v3544 = vand.u32 %v3511, 2147483648
        %v3545 = vor.u32 1.1754944e-38, %v3544
        %v3546 = vsel %vm3543, %v3545, %v3541
        %v3547 = vmul.f32 1.0, %v3546
        %v3548 = vrcp.pop %v3512
        %v3549 = vmul.f32 %v3512, %v3548
        %v3550 = vsub.f32 1.0, %v3549
        %v3551 = vmul.f32 %v3548, %v3550
        %v3552 = vadd.f32 %v3548, %v3551
        %vm3553 = vweird.f32 %v3512
        %vm3554 = vweird.f32 %v3548
        %vm3555 = vmor %vm3553, %vm3554
        %v3556 = vsel %vm3555, %v3548, %v3552
        %v3557 = vand.u32 2147483647, %v3512
        %vm3558 = vcmp.eq.f32.partialorder %v3557, 8.507059e+37
        %v3559 = vand.u32 %v3512, 2147483648
        %v3560 = vor.u32 1.1754944e-38, %v3559
        %v3561 = vsel %vm3558, %v3560, %v3556
        %v3562 = vmul.f32 1.0, %v3561
        %v3563 = vrcp.pop %v3513
        %v3564 = vmul.f32 %v3513, %v3563
        %v3565 = vsub.f32 1.0, %v3564
        %v3566 = vmul.f32 %v3563, %v3565
        %v3567 = vadd.f32 %v3563, %v3566
        %vm3568 = vweird.f32 %v3513
        %vm3569 = vweird.f32 %v3563
        %vm3570 = vmor %vm3568, %vm3569
        %v3571 = vsel %vm3570, %v3563, %v3567
        %v3572 = vand.u32 2147483647, %v3513
        %vm3573 = vcmp.eq.f32.partialorder %v3572, 8.507059e+37
        %v3574 = vand.u32 %v3513, 2147483648
        %v3575 = vor.u32 1.1754944e-38, %v3574
        %v3576 = vsel %vm3573, %v3575, %v3571
        %v3577 = vmul.f32 1.0, %v3576
        %v3578 = vrcp.pop %v3514
        %v3579 = vmul.f32 %v3514, %v3578
        %v3580 = vsub.f32 1.0, %v3579
        %v3581 = vmul.f32 %v3578, %v3580
        %v3582 = vadd.f32 %v3578, %v3581
        %vm3583 = vweird.f32 %v3514
        %vm3584 = vweird.f32 %v3578
        %vm3585 = vmor %vm3583, %vm3584
        %v3586 = vsel %vm3585, %v3578, %v3582
        %v3587 = vand.u32 2147483647, %v3514
        %vm3588 = vcmp.eq.f32.partialorder %v3587, 8.507059e+37
        %v3589 = vand.u32 %v3514, 2147483648
        %v3590 = vor.u32 1.1754944e-38, %v3589
        %v3591 = vsel %vm3588, %v3590, %v3586
        %v3592 = vmul.f32 1.0, %v3591
        %v3593 = vrcp.pop %v3515
        %v3594 = vmul.f32 %v3515, %v3593
        %v3595 = vsub.f32 1.0, %v3594
        %v3596 = vmul.f32 %v3593, %v3595
        %v3597 = vadd.f32 %v3593, %v3596
        %vm3598 = vweird.f32 %v3515
        %vm3599 = vweird.f32 %v3593
        %vm3600 = vmor %vm3598, %vm3599
        %v3601 = vsel %vm3600, %v3593, %v3597
        %v3602 = vand.u32 2147483647, %v3515
        %vm3603 = vcmp.eq.f32.partialorder %v3602, 8.507059e+37
        %v3604 = vand.u32 %v3515, 2147483648
        %v3605 = vor.u32 1.1754944e-38, %v3604
        %v3606 = vsel %vm3603, %v3605, %v3601
        %v3607 = vmul.f32 1.0, %v3606
        %v3608 = vrcp.pop %v3516
        %v3609 = vmul.f32 %v3516, %v3608
        %v3610 = vsub.f32 1.0, %v3609
        %v3611 = vmul.f32 %v3608, %v3610
        %v3612 = vadd.f32 %v3608, %v3611
        %vm3613 = vweird.f32 %v3516
        %vm3614 = vweird.f32 %v3608
        %vm3615 = vmor %vm3613, %vm3614
        %v3616 = vsel %vm3615, %v3608, %v3612
        %v3617 = vand.u32 2147483647, %v3516
        %vm3618 = vcmp.eq.f32.partialorder %v3617, 8.507059e+37
        %v3619 = vand.u32 %v3516, 2147483648
        %v3620 = vor.u32 1.1754944e-38, %v3619
        %v3621 = vsel %vm3618, %v3620, %v3616
        %v3622 = vmul.f32 1.0, %v3621
        %v3623 = vrcp.pop %v3517
        %v3624 = vmul.f32 %v3517, %v3623
        %v3625 = vsub.f32 1.0, %v3624
        %v3626 = vmul.f32 %v3623, %v3625
        %v3627 = vadd.f32 %v3623, %v3626
        %vm3628 = vweird.f32 %v3517
        %vm3629 = vweird.f32 %v3623
        %vm3630 = vmor %vm3628, %vm3629
        %v3631 = vsel %vm3630, %v3623, %v3627
        %v3632 = vand.u32 2147483647, %v3517
        %vm3633 = vcmp.eq.f32.partialorder %v3632, 8.507059e+37
        %v3634 = vand.u32 %v3517, 2147483648
        %v3635 = vor.u32 1.1754944e-38, %v3634
        %v3636 = vsel %vm3633, %v3635, %v3631
        %v3637 = vmul.f32 1.0, %v3636
        %v3638 = vxor.u32 %v3304, 2147483648
        %v3639 = vxor.u32 %v3308, 2147483648
        %v3640 = vxor.u32 %v3312, 2147483648
        %v3641 = vxor.u32 %v3316, 2147483648
        %v3642 = vxor.u32 %v3320, 2147483648
        %v3643 = vxor.u32 %v3324, 2147483648
        %v3644 = vxor.u32 %v3328, 2147483648
        %v3645 = vxor.u32 %v3332, 2147483648
        %v3646 = vmul.f32 %v3638, 1.442695
        %v3647 = vpow.pop %v3646
        %v3648 = vmul.f32 %v3639, 1.442695
        %v3649 = vpow.pop %v3648
        %v3650 = vmul.f32 %v3640, 1.442695
        %v3651 = vpow.pop %v3650
        %v3652 = vmul.f32 %v3641, 1.442695
        %v3653 = vpow.pop %v3652
        %v3654 = vmul.f32 %v3642, 1.442695
        %v3655 = vpow.pop %v3654
        %v3656 = vmul.f32 %v3643, 1.442695
        %v3657 = vpow.pop %v3656
        %v3658 = vmul.f32 %v3644, 1.442695
        %v3659 = vpow.pop %v3658
        %v3660 = vmul.f32 %v3645, 1.442695
        %v3661 = vpow.pop %v3660
        %v3662 = vadd.f32 %v3647, 1.0
        %v3663 = vadd.f32 %v3649, 1.0
        %v3664 = vadd.f32 %v3651, 1.0
        %v3665 = vadd.f32 %v3653, 1.0
        %v3666 = vadd.f32 %v3655, 1.0
        %v3667 = vadd.f32 %v3657, 1.0
        %v3668 = vadd.f32 %v3659, 1.0
        %v3669 = vadd.f32 %v3661, 1.0
        %v3670 = vrcp.pop %v3662
        %v3671 = vmul.f32 %v3662, %v3670
        %v3672 = vsub.f32 1.0, %v3671
        %v3673 = vmul.f32 %v3670, %v3672
        %v3674 = vadd.f32 %v3670, %v3673
        %vm3675 = vweird.f32 %v3662
        %vm3676 = vweird.f32 %v3670
        %vm3677 = vmor %vm3675, %vm3676
        %v3678 = vsel %vm3677, %v3670, %v3674
        %v3679 = vand.u32 2147483647, %v3662
        %vm3680 = vcmp.eq.f32.partialorder %v3679, 8.507059e+37
        %v3681 = vand.u32 %v3662, 2147483648
        %v3682 = vor.u32 1.1754944e-38, %v3681
        %v3683 = vsel %vm3680, %v3682, %v3678
        %v3684 = vmul.f32 1.0, %v3683
        %v3685 = vrcp.pop %v3663
        %v3686 = vmul.f32 %v3663, %v3685
        %v3687 = vsub.f32 1.0, %v3686
        %v3688 = vmul.f32 %v3685, %v3687
        %v3689 = vadd.f32 %v3685, %v3688
        %vm3690 = vweird.f32 %v3663
        %vm3691 = vweird.f32 %v3685
        %vm3692 = vmor %vm3690, %vm3691
        %v3693 = vsel %vm3692, %v3685, %v3689
        %v3694 = vand.u32 2147483647, %v3663
        %vm3695 = vcmp.eq.f32.partialorder %v3694, 8.507059e+37
        %v3696 = vand.u32 %v3663, 2147483648
        %v3697 = vor.u32 1.1754944e-38, %v3696
        %v3698 = vsel %vm3695, %v3697, %v3693
        %v3699 = vmul.f32 1.0, %v3698
        %v3700 = vrcp.pop %v3664
        %v3701 = vmul.f32 %v3664, %v3700
        %v3702 = vsub.f32 1.0, %v3701
        %v3703 = vmul.f32 %v3700, %v3702
        %v3704 = vadd.f32 %v3700, %v3703
        %vm3705 = vweird.f32 %v3664
        %vm3706 = vweird.f32 %v3700
        %vm3707 = vmor %vm3705, %vm3706
        %v3708 = vsel %vm3707, %v3700, %v3704
        %v3709 = vand.u32 2147483647, %v3664
        %vm3710 = vcmp.eq.f32.partialorder %v3709, 8.507059e+37
        %v3711 = vand.u32 %v3664, 2147483648
        %v3712 = vor.u32 1.1754944e-38, %v3711
        %v3713 = vsel %vm3710, %v3712, %v3708
        %v3714 = vmul.f32 1.0, %v3713
        %v3715 = vrcp.pop %v3665
        %v3716 = vmul.f32 %v3665, %v3715
        %v3717 = vsub.f32 1.0, %v3716
        %v3718 = vmul.f32 %v3715, %v3717
        %v3719 = vadd.f32 %v3715, %v3718
        %vm3720 = vweird.f32 %v3665
        %vm3721 = vweird.f32 %v3715
        %vm3722 = vmor %vm3720, %vm3721
        %v3723 = vsel %vm3722, %v3715, %v3719
        %v3724 = vand.u32 2147483647, %v3665
        %vm3725 = vcmp.eq.f32.partialorder %v3724, 8.507059e+37
        %v3726 = vand.u32 %v3665, 2147483648
        %v3727 = vor.u32 1.1754944e-38, %v3726
        %v3728 = vsel %vm3725, %v3727, %v3723
        %v3729 = vmul.f32 1.0, %v3728
        %v3730 = vrcp.pop %v3666
        %v3731 = vmul.f32 %v3666, %v3730
        %v3732 = vsub.f32 1.0, %v3731
        %v3733 = vmul.f32 %v3730, %v3732
        %v3734 = vadd.f32 %v3730, %v3733
        %vm3735 = vweird.f32 %v3666
        %vm3736 = vweird.f32 %v3730
        %vm3737 = vmor %vm3735, %vm3736
        %v3738 = vsel %vm3737, %v3730, %v3734
        %v3739 = vand.u32 2147483647, %v3666
        %vm3740 = vcmp.eq.f32.partialorder %v3739, 8.507059e+37
        %v3741 = vand.u32 %v3666, 2147483648
        %v3742 = vor.u32 1.1754944e-38, %v3741
        %v3743 = vsel %vm3740, %v3742, %v3738
        %v3744 = vmul.f32 1.0, %v3743
        %v3745 = vrcp.pop %v3667
        %v3746 = vmul.f32 %v3667, %v3745
        %v3747 = vsub.f32 1.0, %v3746
        %v3748 = vmul.f32 %v3745, %v3747
        %v3749 = vadd.f32 %v3745, %v3748
        %vm3750 = vweird.f32 %v3667
        %vm3751 = vweird.f32 %v3745
        %vm3752 = vmor %vm3750, %vm3751
        %v3753 = vsel %vm3752, %v3745, %v3749
        %v3754 = vand.u32 2147483647, %v3667
        %vm3755 = vcmp.eq.f32.partialorder %v3754, 8.507059e+37
        %v3756 = vand.u32 %v3667, 2147483648
        %v3757 = vor.u32 1.1754944e-38, %v3756
        %v3758 = vsel %vm3755, %v3757, %v3753
        %v3759 = vmul.f32 1.0, %v3758
        %v3760 = vrcp.pop %v3668
        %v3761 = vmul.f32 %v3668, %v3760
        %v3762 = vsub.f32 1.0, %v3761
        %v3763 = vmul.f32 %v3760, %v3762
        %v3764 = vadd.f32 %v3760, %v3763
        %vm3765 = vweird.f32 %v3668
        %vm3766 = vweird.f32 %v3760
        %vm3767 = vmor %vm3765, %vm3766
        %v3768 = vsel %vm3767, %v3760, %v3764
        %v3769 = vand.u32 2147483647, %v3668
        %vm3770 = vcmp.eq.f32.partialorder %v3769, 8.507059e+37
        %v3771 = vand.u32 %v3668, 2147483648
        %v3772 = vor.u32 1.1754944e-38, %v3771
        %v3773 = vsel %vm3770, %v3772, %v3768
        %v3774 = vmul.f32 1.0, %v3773
        %v3775 = vrcp.pop %v3669
        %v3776 = vmul.f32 %v3669, %v3775
        %v3777 = vsub.f32 1.0, %v3776
        %v3778 = vmul.f32 %v3775, %v3777
        %v3779 = vadd.f32 %v3775, %v3778
        %vm3780 = vweird.f32 %v3669
        %vm3781 = vweird.f32 %v3775
        %vm3782 = vmor %vm3780, %vm3781
        %v3783 = vsel %vm3782, %v3775, %v3779
        %v3784 = vand.u32 2147483647, %v3669
        %vm3785 = vcmp.eq.f32.partialorder %v3784, 8.507059e+37
        %v3786 = vand.u32 %v3669, 2147483648
        %v3787 = vor.u32 1.1754944e-38, %v3786
        %v3788 = vsel %vm3785, %v3787, %v3783
        %v3789 = vmul.f32 1.0, %v3788
        %v3790 = vtanh.pop %v3305
        %v3791 = vtanh.pop %v3309
        %v3792 = vtanh.pop %v3313
        %v3793 = vtanh.pop %v3317
        %v3794 = vtanh.pop %v3321
        %v3795 = vtanh.pop %v3325
        %v3796 = vtanh.pop %v3329
        %v3797 = vtanh.pop %v3333
        %v3798 = vmul.f32 %v3532, %v2684
        %v3799 = vmul.f32 %v3547, %v2685
        %v3800 = vmul.f32 %v3562, %v2686
        %v3801 = vmul.f32 %v3577, %v2687
        %v3802 = vmul.f32 %v3592, %v2688
        %v3803 = vmul.f32 %v3607, %v2689
        %v3804 = vmul.f32 %v3622, %v2690
        %v3805 = vmul.f32 %v3637, %v2691
        %v3806 = vmul.f32 %v3380, %v3790
        %v3807 = vmul.f32 %v3395, %v3791
        %v3808 = vmul.f32 %v3410, %v3792
        %v3809 = vmul.f32 %v3425, %v3793
        %v3810 = vmul.f32 %v3440, %v3794
        %v3811 = vmul.f32 %v3455, %v3795
        %v3812 = vmul.f32 %v3470, %v3796
        %v3813 = vmul.f32 %v3485, %v3797
        %v3814 = vadd.f32 %v3798, %v3806
        %v3815 = vadd.f32 %v3799, %v3807
        %v3816 = vadd.f32 %v3800, %v3808
        %v3817 = vadd.f32 %v3801, %v3809
        %v3818 = vadd.f32 %v3802, %v3810
        %v3819 = vadd.f32 %v3803, %v3811
        %v3820 = vadd.f32 %v3804, %v3812
        %v3821 = vadd.f32 %v3805, %v3813
        %v3822 = vtanh.pop %v3814
        %v3823 = vtanh.pop %v3815
        %v3824 = vtanh.pop %v3816
        %v3825 = vtanh.pop %v3817
        %v3826 = vtanh.pop %v3818
        %v3827 = vtanh.pop %v3819
        %v3828 = vtanh.pop %v3820
        %v3829 = vtanh.pop %v3821
        %v3830 = vmul.f32 %v3684, %v3822
        %v3831 = vmul.f32 %v3699, %v3823
        %v3832 = vmul.f32 %v3714, %v3824
        %v3833 = vmul.f32 %v3729, %v3825
        %v3834 = vmul.f32 %v3744, %v3826
        %v3835 = vmul.f32 %v3759, %v3827
        %v3836 = vmul.f32 %v3774, %v3828
        %v3837 = vmul.f32 %v3789, %v3829
        %v3838 = vpack.c.bf16 %v3830, %v3830
        %v3839 = vpack.c.bf16 %v3831, %v3831
        %v3840 = vpack.c.bf16 %v3832, %v3832
        %v3841 = vpack.c.bf16 %v3833, %v3833
        %v3842 = vpack.c.bf16 %v3834, %v3834
        %v3843 = vpack.c.bf16 %v3835, %v3835
        %v3844 = vpack.c.bf16 %v3836, %v3836
        %v3845 = vpack.c.bf16 %v3837, %v3837
        %3846 = vst [vmem:[#allocation2 + $0x4] sm:$0xf] %v3838
        %3847 = vst [vmem:[#allocation2 + $0xc] sm:$0xf] %v3839
        %3848 = vst [vmem:[#allocation2 + $0x14] sm:$0xf] %v3840
        %3849 = vst [vmem:[#allocation2 + $0x1c] sm:$0xf] %v3841
        %3850 = vst [vmem:[#allocation2 + $0x24] sm:$0xf] %v3842
        %3851 = vst [vmem:[#allocation2 + $0x2c] sm:$0xf] %v3843
        %3852 = vst [vmem:[#allocation2 + $0x34] sm:$0xf] %v3844
        %3853 = vst [vmem:[#allocation2 + $0x3c] sm:$0xf] %v3845
        %v3854 = vld [vmem:[%s6] sm:$0xff]
        %v3855 = vld [vmem:[%s6 + $0x8] sm:$0xff]
        %v3856 = vld [vmem:[%s6 + $0x10] sm:$0xff]
        %v3857 = vld [vmem:[%s6 + $0x18] sm:$0xff]
        %v3858 = vld [vmem:[%s6 + $0x20] sm:$0xff]
        %v3859 = vld [vmem:[%s6 + $0x28] sm:$0xff]
        %v3860 = vld [vmem:[%s6 + $0x30] sm:$0xff]
        %v3861 = vld [vmem:[%s6 + $0x38] sm:$0xff]
        %v3862 = vld [vmem:[%s6 + $0x40] sm:$0xff]
        %v3863 = vld [vmem:[%s6 + $0x48] sm:$0xff]
        %v3864 = vld [vmem:[%s6 + $0x50] sm:$0xff]
        %v3865 = vld [vmem:[%s6 + $0x58] sm:$0xff]
        %v3866 = vld [vmem:[%s6 + $0x60] sm:$0xff]
        %v3867 = vld [vmem:[%s6 + $0x68] sm:$0xff]
        %v3868 = vld [vmem:[%s6 + $0x70] sm:$0xff]
        %v3869 = vld [vmem:[%s6 + $0x78] sm:$0xff]
        %v3878 = vunpack.c.l.b16 %v3838
        %v3879 = vunpack.c.l.b16 %v3839
        %v3880 = vunpack.c.l.b16 %v3840
        %v3881 = vunpack.c.l.b16 %v3841
        %v3882 = vunpack.c.l.b16 %v3842
        %v3883 = vunpack.c.l.b16 %v3843
        %v3884 = vunpack.c.l.b16 %v3844
        %v3885 = vunpack.c.l.b16 %v3845
        %v3886 = vpack.c.b16 %v3879, %v3878
        %v3887 = vpack.c.b16 %v3881, %v3880
        %v3888 = vpack.c.b16 %v3883, %v3882
        %v3889 = vpack.c.b16 %v3885, %v3884
        %v3910 = vunpack.c.l.b16 %v3854
        %v3911 = vunpack.c.h.b16 %v3854
        %v3912 = vunpack.c.l.b16 %v3855
        %v3913 = vunpack.c.h.b16 %v3855
        %v3914 = vunpack.c.l.b16 %v3856
        %v3915 = vunpack.c.h.b16 %v3856
        %v3916 = vunpack.c.l.b16 %v3857
        %v3917 = vunpack.c.h.b16 %v3857
        %v3918 = vunpack.c.l.b16 %v3858
        %v3919 = vunpack.c.h.b16 %v3858
        %v3920 = vunpack.c.l.b16 %v3859
        %v3921 = vunpack.c.h.b16 %v3859
        %v3922 = vunpack.c.l.b16 %v3860
        %v3923 = vunpack.c.h.b16 %v3860
        %v3924 = vunpack.c.l.b16 %v3861
        %v3925 = vunpack.c.h.b16 %v3861
        %v3926 = vunpack.c.l.b16 %v3862
        %v3927 = vunpack.c.h.b16 %v3862
        %v3928 = vunpack.c.l.b16 %v3863
        %v3929 = vunpack.c.h.b16 %v3863
        %v3930 = vunpack.c.l.b16 %v3864
        %v3931 = vunpack.c.h.b16 %v3864
        %v3932 = vunpack.c.l.b16 %v3865
        %v3933 = vunpack.c.h.b16 %v3865
        %v3934 = vunpack.c.l.b16 %v3866
        %v3935 = vunpack.c.h.b16 %v3866
        %v3936 = vunpack.c.l.b16 %v3867
        %v3937 = vunpack.c.h.b16 %v3867
        %v3938 = vunpack.c.l.b16 %v3868
        %v3939 = vunpack.c.h.b16 %v3868
        %v3940 = vunpack.c.l.b16 %v3869
        %v3941 = vunpack.c.h.b16 %v3869
        %v3942 = vpack.c.b16 %v3912, %v3910
        %v3943 = vpack.c.b16 %v3913, %v3911
        %v3944 = vpack.c.b16 %v3916, %v3914
        %v3945 = vpack.c.b16 %v3917, %v3915
        %v3946 = vpack.c.b16 %v3920, %v3918
        %v3947 = vpack.c.b16 %v3921, %v3919
        %v3948 = vpack.c.b16 %v3924, %v3922
        %v3949 = vpack.c.b16 %v3925, %v3923
        %v3950 = vpack.c.b16 %v3928, %v3926
        %v3951 = vpack.c.b16 %v3929, %v3927
        %v3952 = vpack.c.b16 %v3932, %v3930
        %v3953 = vpack.c.b16 %v3933, %v3931
        %v3954 = vpack.c.b16 %v3936, %v3934
        %v3955 = vpack.c.b16 %v3937, %v3935
        %v3956 = vpack.c.b16 %v3940, %v3938
        %v3957 = vpack.c.b16 %v3941, %v3939
        %3974 = vmatpush.bf16.msra.mxu0 %v3956
        %3975 = vmatpush.bf16.msra.mxu0 %v3954
        %3976 = vmatpush.bf16.msra.mxu0 %v3952
        %3977 = vmatpush.bf16.msra.mxu0 %v3950
        %3978 = vmatpush.bf16.msra.mxu0 %v3948
        %3979 = vmatpush.bf16.msra.mxu0 %v3946
        %3980 = vmatpush.bf16.msra.mxu0 %v3944
        %3981 = vmatpush.bf16.msra.mxu0 %v3942
        %3982 = vmatmul.bf16.gmra.mxu0 %v3886
        %v3983 = vpop.f32.mrf.mxu0
        %v3984 = vadd.f32 0.0, %v3983
        %v3985 = vpop.f32.mrf.mxu0
        %v3986 = vadd.f32 0.0, %v3985
        %3987 = vmatmul.bf16.gmra.mxu0 %v3887
        %v3988 = vpop.f32.mrf.mxu0
        %v3989 = vadd.f32 0.0, %v3988
        %v3990 = vpop.f32.mrf.mxu0
        %v3991 = vadd.f32 0.0, %v3990
        %3992 = vmatmul.bf16.gmra.mxu0 %v3888
        %v3993 = vpop.f32.mrf.mxu0
        %v3994 = vadd.f32 0.0, %v3993
        %v3995 = vpop.f32.mrf.mxu0
        %v3996 = vadd.f32 0.0, %v3995
        %3997 = vmatmul.bf16.gmra.mxu0 %v3889
        %v3998 = vpop.f32.mrf.mxu0
        %v3999 = vadd.f32 0.0, %v3998
        %v4000 = vpop.f32.mrf.mxu0
        %v4001 = vadd.f32 0.0, %v4000
        %4002 = vdwg.mxu0
        %4003 = vmatpush.bf16.msra.mxu0 %v3957
        %4004 = vmatpush.bf16.msra.mxu0 %v3955
        %4005 = vmatpush.bf16.msra.mxu0 %v3953
        %4006 = vmatpush.bf16.msra.mxu0 %v3951
        %4007 = vmatpush.bf16.msra.mxu0 %v3949
        %4008 = vmatpush.bf16.msra.mxu0 %v3947
        %4009 = vmatpush.bf16.msra.mxu0 %v3945
        %4010 = vmatpush.bf16.msra.mxu0 %v3943
        %4011 = vmatmul.bf16.gmra.mxu0 %v3886
        %v4012 = vpop.f32.mrf.mxu0
        %v4013 = vadd.f32 0.0, %v4012
        %v4014 = vpop.f32.mrf.mxu0
        %v4015 = vadd.f32 0.0, %v4014
        %4016 = vmatmul.bf16.gmra.mxu0 %v3887
        %v4017 = vpop.f32.mrf.mxu0
        %v4018 = vadd.f32 0.0, %v4017
        %v4019 = vpop.f32.mrf.mxu0
        %v4020 = vadd.f32 0.0, %v4019
        %4021 = vmatmul.bf16.gmra.mxu0 %v3888
        %v4022 = vpop.f32.mrf.mxu0
        %v4023 = vadd.f32 0.0, %v4022
        %v4024 = vpop.f32.mrf.mxu0
        %v4025 = vadd.f32 0.0, %v4024
        %4026 = vmatmul.bf16.gmra.mxu0 %v3889
        %v4027 = vpop.f32.mrf.mxu0
        %v4028 = vadd.f32 0.0, %v4027
        %v4029 = vpop.f32.mrf.mxu0
        %v4030 = vadd.f32 0.0, %v4029
        %4031 = vdwg.mxu0
        %v4032 = vld [vmem:[%s7] sm:$0x3]
        %v4034 = vperm.slane %v4032, 0
        %v4035 = vperm.slane %v4032, 1
        %v4038 = vmul.f32 %v3984, %v4034
        %v4039 = vmul.f32 %v4013, %v4035
        %v4040 = vmul.f32 %v3986, %v4034
        %v4041 = vmul.f32 %v4015, %v4035
        %v4042 = vmul.f32 %v3989, %v4034
        %v4043 = vmul.f32 %v4018, %v4035
        %v4044 = vmul.f32 %v3991, %v4034
        %v4045 = vmul.f32 %v4020, %v4035
        %v4046 = vmul.f32 %v3994, %v4034
        %v4047 = vmul.f32 %v4023, %v4035
        %v4048 = vmul.f32 %v3996, %v4034
        %v4049 = vmul.f32 %v4025, %v4035
        %v4050 = vmul.f32 %v3999, %v4034
        %v4051 = vmul.f32 %v4028, %v4035
        %v4052 = vmul.f32 %v4001, %v4034
        %v4053 = vmul.f32 %v4030, %v4035
        %v4054 = vld [vmem:[%s8] sm:$0x3]
        %v4056 = vperm.slane %v4054, 0
        %v4057 = vperm.slane %v4054, 1
        %v4060 = vadd.f32 %v4038, %v4056
        %v4061 = vadd.f32 %v4039, %v4057
        %v4062 = vadd.f32 %v4040, %v4056
        %v4063 = vadd.f32 %v4041, %v4057
        %v4064 = vadd.f32 %v4042, %v4056
        %v4065 = vadd.f32 %v4043, %v4057
        %v4066 = vadd.f32 %v4044, %v4056
        %v4067 = vadd.f32 %v4045, %v4057
        %v4068 = vadd.f32 %v4046, %v4056
        %v4069 = vadd.f32 %v4047, %v4057
        %v4070 = vadd.f32 %v4048, %v4056
        %v4071 = vadd.f32 %v4049, %v4057
        %v4072 = vadd.f32 %v4050, %v4056
        %v4073 = vadd.f32 %v4051, %v4057
        %v4074 = vadd.f32 %v4052, %v4056
        %v4075 = vadd.f32 %v4053, %v4057
        %v4076 = vmax.f32 %v4060, 0.0
        %v4077 = vmax.f32 %v4061, 0.0
        %v4078 = vmax.f32 %v4062, 0.0
        %v4079 = vmax.f32 %v4063, 0.0
        %v4080 = vmax.f32 %v4064, 0.0
        %v4081 = vmax.f32 %v4065, 0.0
        %v4082 = vmax.f32 %v4066, 0.0
        %v4083 = vmax.f32 %v4067, 0.0
        %v4084 = vmax.f32 %v4068, 0.0
        %v4085 = vmax.f32 %v4069, 0.0
        %v4086 = vmax.f32 %v4070, 0.0
        %v4087 = vmax.f32 %v4071, 0.0
        %v4088 = vmax.f32 %v4072, 0.0
        %v4089 = vmax.f32 %v4073, 0.0
        %v4090 = vmax.f32 %v4074, 0.0
        %v4091 = vmax.f32 %v4075, 0.0
        %v4092 = vadd.f32 %v4076, %v1121
        %v4093 = vadd.f32 %v4077, %v1299
        %v4094 = vadd.f32 %v4078, %v1123
        %v4095 = vadd.f32 %v4079, %v1301
        %v4096 = vadd.f32 %v4080, %v1126
        %v4097 = vadd.f32 %v4081, %v1304
        %v4098 = vadd.f32 %v4082, %v1128
        %v4099 = vadd.f32 %v4083, %v1306
        %v4100 = vadd.f32 %v4084, %v1131
        %v4101 = vadd.f32 %v4085, %v1309
        %v4102 = vadd.f32 %v4086, %v1133
        %v4103 = vadd.f32 %v4087, %v1311
        %v4104 = vadd.f32 %v4088, %v1136
        %v4105 = vadd.f32 %v4089, %v1314
        %v4106 = vadd.f32 %v4090, %v1138
        %v4107 = vadd.f32 %v4091, %v1316
        %s4108 = scalar_lea.vmem %s487, 128 [#allocation4]
        %4109 = vst [vmem:[%s4108] sm:$0xff] %v4092
        %4110 = vst [vmem:[%s4108 + $0x8] sm:$0xff] %v4093
        %4111 = vst [vmem:[%s4108 + $0x10] sm:$0xff] %v4094
        %4112 = vst [vmem:[%s4108 + $0x18] sm:$0xff] %v4095
        %4113 = vst [vmem:[%s4108 + $0x20] sm:$0xff] %v4096
        %4114 = vst [vmem:[%s4108 + $0x28] sm:$0xff] %v4097
        %4115 = vst [vmem:[%s4108 + $0x30] sm:$0xff] %v4098
        %4116 = vst [vmem:[%s4108 + $0x38] sm:$0xff] %v4099
        %4117 = vst [vmem:[%s4108 + $0x40] sm:$0xff] %v4100
        %4118 = vst [vmem:[%s4108 + $0x48] sm:$0xff] %v4101
        %4119 = vst [vmem:[%s4108 + $0x50] sm:$0xff] %v4102
        %4120 = vst [vmem:[%s4108 + $0x58] sm:$0xff] %v4103
        %4121 = vst [vmem:[%s4108 + $0x60] sm:$0xff] %v4104
        %4122 = vst [vmem:[%s4108 + $0x68] sm:$0xff] %v4105
        %4123 = vst [vmem:[%s4108 + $0x70] sm:$0xff] %v4106
        %4124 = vst [vmem:[%s4108 + $0x78] sm:$0xff] %v4107
        %v4125 = vld [vmem:[#allocation2] sm:$0xf]
        %v4126 = vld [vmem:[#allocation2 + $0x8] sm:$0xf]
        %v4127 = vld [vmem:[#allocation2 + $0x10] sm:$0xf]
        %v4128 = vld [vmem:[#allocation2 + $0x18] sm:$0xf]
        %v4129 = vld [vmem:[#allocation2 + $0x20] sm:$0xf]
        %v4130 = vld [vmem:[#allocation2 + $0x28] sm:$0xf]
        %v4131 = vld [vmem:[#allocation2 + $0x30] sm:$0xf]
        %v4132 = vld [vmem:[#allocation2 + $0x38] sm:$0xf]
        %v4133 = vld [vmem:[%s5 + $0x300] sm:$0xff]
        %v4134 = vld [vmem:[%s5 + $0x308] sm:$0xff]
        %v4135 = vld [vmem:[%s5 + $0x310] sm:$0xff]
        %v4136 = vld [vmem:[%s5 + $0x318] sm:$0xff]
        %v4137 = vld [vmem:[%s5 + $0x320] sm:$0xff]
        %v4138 = vld [vmem:[%s5 + $0x328] sm:$0xff]
        %v4139 = vld [vmem:[%s5 + $0x330] sm:$0xff]
        %v4140 = vld [vmem:[%s5 + $0x338] sm:$0xff]
        %v4141 = vld [vmem:[%s5 + $0x340] sm:$0xff]
        %v4142 = vld [vmem:[%s5 + $0x348] sm:$0xff]
        %v4143 = vld [vmem:[%s5 + $0x350] sm:$0xff]
        %v4144 = vld [vmem:[%s5 + $0x358] sm:$0xff]
        %v4145 = vld [vmem:[%s5 + $0x360] sm:$0xff]
        %v4146 = vld [vmem:[%s5 + $0x368] sm:$0xff]
        %v4147 = vld [vmem:[%s5 + $0x370] sm:$0xff]
        %v4148 = vld [vmem:[%s5 + $0x378] sm:$0xff]
        %v4149 = vld [vmem:[%s5 + $0x380] sm:$0xff]
        %v4150 = vld [vmem:[%s5 + $0x388] sm:$0xff]
        %v4151 = vld [vmem:[%s5 + $0x390] sm:$0xff]
        %v4152 = vld [vmem:[%s5 + $0x398] sm:$0xff]
        %v4153 = vld [vmem:[%s5 + $0x3a0] sm:$0xff]
        %v4154 = vld [vmem:[%s5 + $0x3a8] sm:$0xff]
        %v4155 = vld [vmem:[%s5 + $0x3b0] sm:$0xff]
        %v4156 = vld [vmem:[%s5 + $0x3b8] sm:$0xff]
        %v4157 = vld [vmem:[%s5 + $0x3c0] sm:$0xff]
        %v4158 = vld [vmem:[%s5 + $0x3c8] sm:$0xff]
        %v4159 = vld [vmem:[%s5 + $0x3d0] sm:$0xff]
        %v4160 = vld [vmem:[%s5 + $0x3d8] sm:$0xff]
        %v4161 = vld [vmem:[%s5 + $0x3e0] sm:$0xff]
        %v4162 = vld [vmem:[%s5 + $0x3e8] sm:$0xff]
        %v4163 = vld [vmem:[%s5 + $0x3f0] sm:$0xff]
        %v4164 = vld [vmem:[%s5 + $0x3f8] sm:$0xff]
        %v4173 = vunpack.c.l.b16 %v4125
        %v4174 = vunpack.c.l.b16 %v4126
        %v4175 = vunpack.c.l.b16 %v4127
        %v4176 = vunpack.c.l.b16 %v4128
        %v4177 = vunpack.c.l.b16 %v4129
        %v4178 = vunpack.c.l.b16 %v4130
        %v4179 = vunpack.c.l.b16 %v4131
        %v4180 = vunpack.c.l.b16 %v4132
        %v4181 = vpack.c.b16 %v4174, %v4173
        %v4182 = vpack.c.b16 %v4176, %v4175
        %v4183 = vpack.c.b16 %v4178, %v4177
        %v4184 = vpack.c.b16 %v4180, %v4179
        %v4221 = vunpack.c.l.b16 %v4133
        %v4222 = vunpack.c.h.b16 %v4133
        %v4223 = vunpack.c.l.b16 %v4134
        %v4224 = vunpack.c.h.b16 %v4134
        %v4225 = vunpack.c.l.b16 %v4135
        %v4226 = vunpack.c.h.b16 %v4135
        %v4227 = vunpack.c.l.b16 %v4136
        %v4228 = vunpack.c.h.b16 %v4136
        %v4229 = vunpack.c.l.b16 %v4137
        %v4230 = vunpack.c.h.b16 %v4137
        %v4231 = vunpack.c.l.b16 %v4138
        %v4232 = vunpack.c.h.b16 %v4138
        %v4233 = vunpack.c.l.b16 %v4139
        %v4234 = vunpack.c.h.b16 %v4139
        %v4235 = vunpack.c.l.b16 %v4140
        %v4236 = vunpack.c.h.b16 %v4140
        %v4237 = vunpack.c.l.b16 %v4141
        %v4238 = vunpack.c.h.b16 %v4141
        %v4239 = vunpack.c.l.b16 %v4142
        %v4240 = vunpack.c.h.b16 %v4142
        %v4241 = vunpack.c.l.b16 %v4143
        %v4242 = vunpack.c.h.b16 %v4143
        %v4243 = vunpack.c.l.b16 %v4144
        %v4244 = vunpack.c.h.b16 %v4144
        %v4245 = vunpack.c.l.b16 %v4145
        %v4246 = vunpack.c.h.b16 %v4145
        %v4247 = vunpack.c.l.b16 %v4146
        %v4248 = vunpack.c.h.b16 %v4146
        %v4249 = vunpack.c.l.b16 %v4147
        %v4250 = vunpack.c.h.b16 %v4147
        %v4251 = vunpack.c.l.b16 %v4148
        %v4252 = vunpack.c.h.b16 %v4148
        %v4253 = vunpack.c.l.b16 %v4149
        %v4254 = vunpack.c.h.b16 %v4149
        %v4255 = vunpack.c.l.b16 %v4150
        %v4256 = vunpack.c.h.b16 %v4150
        %v4257 = vunpack.c.l.b16 %v4151
        %v4258 = vunpack.c.h.b16 %v4151
        %v4259 = vunpack.c.l.b16 %v4152
        %v4260 = vunpack.c.h.b16 %v4152
        %v4261 = vunpack.c.l.b16 %v4153
        %v4262 = vunpack.c.h.b16 %v4153
        %v4263 = vunpack.c.l.b16 %v4154
        %v4264 = vunpack.c.h.b16 %v4154
        %v4265 = vunpack.c.l.b16 %v4155
        %v4266 = vunpack.c.h.b16 %v4155
        %v4267 = vunpack.c.l.b16 %v4156
        %v4268 = vunpack.c.h.b16 %v4156
        %v4269 = vunpack.c.l.b16 %v4157
        %v4270 = vunpack.c.h.b16 %v4157
        %v4271 = vunpack.c.l.b16 %v4158
        %v4272 = vunpack.c.h.b16 %v4158
        %v4273 = vunpack.c.l.b16 %v4159
        %v4274 = vunpack.c.h.b16 %v4159
        %v4275 = vunpack.c.l.b16 %v4160
        %v4276 = vunpack.c.h.b16 %v4160
        %v4277 = vunpack.c.l.b16 %v4161
        %v4278 = vunpack.c.h.b16 %v4161
        %v4279 = vunpack.c.l.b16 %v4162
        %v4280 = vunpack.c.h.b16 %v4162
        %v4281 = vunpack.c.l.b16 %v4163
        %v4282 = vunpack.c.h.b16 %v4163
        %v4283 = vunpack.c.l.b16 %v4164
        %v4284 = vunpack.c.h.b16 %v4164
        %v4285 = vpack.c.b16 %v4225, %v4221
        %v4286 = vpack.c.b16 %v4226, %v4222
        %v4287 = vpack.c.b16 %v4227, %v4223
        %v4288 = vpack.c.b16 %v4228, %v4224
        %v4289 = vpack.c.b16 %v4233, %v4229
        %v4290 = vpack.c.b16 %v4234, %v4230
        %v4291 = vpack.c.b16 %v4235, %v4231
        %v4292 = vpack.c.b16 %v4236, %v4232
        %v4293 = vpack.c.b16 %v4241, %v4237
        %v4294 = vpack.c.b16 %v4242, %v4238
        %v4295 = vpack.c.b16 %v4243, %v4239
        %v4296 = vpack.c.b16 %v4244, %v4240
        %v4297 = vpack.c.b16 %v4249, %v4245
        %v4298 = vpack.c.b16 %v4250, %v4246
        %v4299 = vpack.c.b16 %v4251, %v4247
        %v4300 = vpack.c.b16 %v4252, %v4248
        %v4301 = vpack.c.b16 %v4257, %v4253
        %v4302 = vpack.c.b16 %v4258, %v4254
        %v4303 = vpack.c.b16 %v4259, %v4255
        %v4304 = vpack.c.b16 %v4260, %v4256
        %v4305 = vpack.c.b16 %v4265, %v4261
        %v4306 = vpack.c.b16 %v4266, %v4262
        %v4307 = vpack.c.b16 %v4267, %v4263
        %v4308 = vpack.c.b16 %v4268, %v4264
        %v4309 = vpack.c.b16 %v4273, %v4269
        %v4310 = vpack.c.b16 %v4274, %v4270
        %v4311 = vpack.c.b16 %v4275, %v4271
        %v4312 = vpack.c.b16 %v4276, %v4272
        %v4313 = vpack.c.b16 %v4281, %v4277
        %v4314 = vpack.c.b16 %v4282, %v4278
        %v4315 = vpack.c.b16 %v4283, %v4279
        %v4316 = vpack.c.b16 %v4284, %v4280
        %4349 = vmatpush.bf16.msra.mxu0 %v4313
        %4350 = vmatpush.bf16.msra.mxu0 %v4309
        %4351 = vmatpush.bf16.msra.mxu0 %v4305
        %4352 = vmatpush.bf16.msra.mxu0 %v4301
        %4353 = vmatpush.bf16.msra.mxu0 %v4297
        %4354 = vmatpush.bf16.msra.mxu0 %v4293
        %4355 = vmatpush.bf16.msra.mxu0 %v4289
        %4356 = vmatpush.bf16.msra.mxu0 %v4285
        %4357 = vmatmul.bf16.gmra.mxu0 %v4181
        %v4358 = vpop.f32.mrf.mxu0
        %v4359 = vadd.f32 0.0, %v4358
        %v4360 = vpop.f32.mrf.mxu0
        %v4361 = vadd.f32 0.0, %v4360
        %4362 = vmatmul.bf16.gmra.mxu0 %v4182
        %v4363 = vpop.f32.mrf.mxu0
        %v4364 = vadd.f32 0.0, %v4363
        %v4365 = vpop.f32.mrf.mxu0
        %v4366 = vadd.f32 0.0, %v4365
        %4367 = vmatmul.bf16.gmra.mxu0 %v4183
        %v4368 = vpop.f32.mrf.mxu0
        %v4369 = vadd.f32 0.0, %v4368
        %v4370 = vpop.f32.mrf.mxu0
        %v4371 = vadd.f32 0.0, %v4370
        %4372 = vmatmul.bf16.gmra.mxu0 %v4184
        %v4373 = vpop.f32.mrf.mxu0
        %v4374 = vadd.f32 0.0, %v4373
        %v4375 = vpop.f32.mrf.mxu0
        %v4376 = vadd.f32 0.0, %v4375
        %4377 = vdwg.mxu0
        %4378 = vmatpush.bf16.msra.mxu0 %v4314
        %4379 = vmatpush.bf16.msra.mxu0 %v4310
        %4380 = vmatpush.bf16.msra.mxu0 %v4306
        %4381 = vmatpush.bf16.msra.mxu0 %v4302
        %4382 = vmatpush.bf16.msra.mxu0 %v4298
        %4383 = vmatpush.bf16.msra.mxu0 %v4294
        %4384 = vmatpush.bf16.msra.mxu0 %v4290
        %4385 = vmatpush.bf16.msra.mxu0 %v4286
        %4386 = vmatmul.bf16.gmra.mxu0 %v4181
        %v4387 = vpop.f32.mrf.mxu0
        %v4388 = vadd.f32 0.0, %v4387
        %v4389 = vpop.f32.mrf.mxu0
        %v4390 = vadd.f32 0.0, %v4389
        %4391 = vmatmul.bf16.gmra.mxu0 %v4182
        %v4392 = vpop.f32.mrf.mxu0
        %v4393 = vadd.f32 0.0, %v4392
        %v4394 = vpop.f32.mrf.mxu0
        %v4395 = vadd.f32 0.0, %v4394
        %4396 = vmatmul.bf16.gmra.mxu0 %v4183
        %v4397 = vpop.f32.mrf.mxu0
        %v4398 = vadd.f32 0.0, %v4397
        %v4399 = vpop.f32.mrf.mxu0
        %v4400 = vadd.f32 0.0, %v4399
        %4401 = vmatmul.bf16.gmra.mxu0 %v4184
        %v4402 = vpop.f32.mrf.mxu0
        %v4403 = vadd.f32 0.0, %v4402
        %v4404 = vpop.f32.mrf.mxu0
        %v4405 = vadd.f32 0.0, %v4404
        %4406 = vdwg.mxu0
        %4407 = vmatpush.bf16.msra.mxu0 %v4315
        %4408 = vmatpush.bf16.msra.mxu0 %v4311
        %4409 = vmatpush.bf16.msra.mxu0 %v4307
        %4410 = vmatpush.bf16.msra.mxu0 %v4303
        %4411 = vmatpush.bf16.msra.mxu0 %v4299
        %4412 = vmatpush.bf16.msra.mxu0 %v4295
        %4413 = vmatpush.bf16.msra.mxu0 %v4291
        %4414 = vmatpush.bf16.msra.mxu0 %v4287
        %4415 = vmatmul.bf16.gmra.mxu0 %v4181
        %v4416 = vpop.f32.mrf.mxu0
        %v4417 = vadd.f32 0.0, %v4416
        %v4418 = vpop.f32.mrf.mxu0
        %v4419 = vadd.f32 0.0, %v4418
        %4420 = vmatmul.bf16.gmra.mxu0 %v4182
        %v4421 = vpop.f32.mrf.mxu0
        %v4422 = vadd.f32 0.0, %v4421
        %v4423 = vpop.f32.mrf.mxu0
        %v4424 = vadd.f32 0.0, %v4423
        %4425 = vmatmul.bf16.gmra.mxu0 %v4183
        %v4426 = vpop.f32.mrf.mxu0
        %v4427 = vadd.f32 0.0, %v4426
        %v4428 = vpop.f32.mrf.mxu0
        %v4429 = vadd.f32 0.0, %v4428
        %4430 = vmatmul.bf16.gmra.mxu0 %v4184
        %v4431 = vpop.f32.mrf.mxu0
        %v4432 = vadd.f32 0.0, %v4431
        %v4433 = vpop.f32.mrf.mxu0
        %v4434 = vadd.f32 0.0, %v4433
        %4435 = vdwg.mxu0
        %4436 = vmatpush.bf16.msra.mxu0 %v4316
        %4437 = vmatpush.bf16.msra.mxu0 %v4312
        %4438 = vmatpush.bf16.msra.mxu0 %v4308
        %4439 = vmatpush.bf16.msra.mxu0 %v4304
        %4440 = vmatpush.bf16.msra.mxu0 %v4300
        %4441 = vmatpush.bf16.msra.mxu0 %v4296
        %4442 = vmatpush.bf16.msra.mxu0 %v4292
        %4443 = vmatpush.bf16.msra.mxu0 %v4288
        %4444 = vmatmul.bf16.gmra.mxu0 %v4181
        %v4445 = vpop.f32.mrf.mxu0
        %v4446 = vadd.f32 0.0, %v4445
        %v4447 = vpop.f32.mrf.mxu0
        %v4448 = vadd.f32 0.0, %v4447
        %4449 = vmatmul.bf16.gmra.mxu0 %v4182
        %v4450 = vpop.f32.mrf.mxu0
        %v4451 = vadd.f32 0.0, %v4450
        %v4452 = vpop.f32.mrf.mxu0
        %v4453 = vadd.f32 0.0, %v4452
        %4454 = vmatmul.bf16.gmra.mxu0 %v4183
        %v4455 = vpop.f32.mrf.mxu0
        %v4456 = vadd.f32 0.0, %v4455
        %v4457 = vpop.f32.mrf.mxu0
        %v4458 = vadd.f32 0.0, %v4457
        %4459 = vmatmul.bf16.gmra.mxu0 %v4184
        %v4460 = vpop.f32.mrf.mxu0
        %v4461 = vadd.f32 0.0, %v4460
        %v4462 = vpop.f32.mrf.mxu0
        %v4463 = vadd.f32 0.0, %v4462
        %4464 = vdwg.mxu0
        %v4465 = vadd.f32 %v1898, %v4359
        %v4466 = vadd.f32 %v1987, %v4388
        %v4467 = vadd.f32 %v2076, %v4417
        %v4468 = vadd.f32 %v2165, %v4446
        %v4469 = vadd.f32 %v1900, %v4361
        %v4470 = vadd.f32 %v1989, %v4390
        %v4471 = vadd.f32 %v2078, %v4419
        %v4472 = vadd.f32 %v2167, %v4448
        %v4473 = vadd.f32 %v1903, %v4364
        %v4474 = vadd.f32 %v1992, %v4393
        %v4475 = vadd.f32 %v2081, %v4422
        %v4476 = vadd.f32 %v2170, %v4451
        %v4477 = vadd.f32 %v1905, %v4366
        %v4478 = vadd.f32 %v1994, %v4395
        %v4479 = vadd.f32 %v2083, %v4424
        %v4480 = vadd.f32 %v2172, %v4453
        %v4481 = vadd.f32 %v1908, %v4369
        %v4482 = vadd.f32 %v1997, %v4398
        %v4483 = vadd.f32 %v2086, %v4427
        %v4484 = vadd.f32 %v2175, %v4456
        %v4485 = vadd.f32 %v1910, %v4371
        %v4486 = vadd.f32 %v1999, %v4400
        %v4487 = vadd.f32 %v2088, %v4429
        %v4488 = vadd.f32 %v2177, %v4458
        %v4489 = vadd.f32 %v1913, %v4374
        %v4490 = vadd.f32 %v2002, %v4403
        %v4491 = vadd.f32 %v2091, %v4432
        %v4492 = vadd.f32 %v2180, %v4461
        %v4493 = vadd.f32 %v1915, %v4376
        %v4494 = vadd.f32 %v2004, %v4405
        %v4495 = vadd.f32 %v2093, %v4434
        %v4496 = vadd.f32 %v2182, %v4463
        %v4497 = vld [vmem:[%s5 + $0x400] sm:$0xff]
        %v4498 = vld [vmem:[%s5 + $0x408] sm:$0xff]
        %v4499 = vld [vmem:[%s5 + $0x410] sm:$0xff]
        %v4500 = vld [vmem:[%s5 + $0x418] sm:$0xff]
        %v4501 = vld [vmem:[%s5 + $0x420] sm:$0xff]
        %v4502 = vld [vmem:[%s5 + $0x428] sm:$0xff]
        %v4503 = vld [vmem:[%s5 + $0x430] sm:$0xff]
        %v4504 = vld [vmem:[%s5 + $0x438] sm:$0xff]
        %v4505 = vld [vmem:[%s5 + $0x440] sm:$0xff]
        %v4506 = vld [vmem:[%s5 + $0x448] sm:$0xff]
        %v4507 = vld [vmem:[%s5 + $0x450] sm:$0xff]
        %v4508 = vld [vmem:[%s5 + $0x458] sm:$0xff]
        %v4509 = vld [vmem:[%s5 + $0x460] sm:$0xff]
        %v4510 = vld [vmem:[%s5 + $0x468] sm:$0xff]
        %v4511 = vld [vmem:[%s5 + $0x470] sm:$0xff]
        %v4512 = vld [vmem:[%s5 + $0x478] sm:$0xff]
        %v4513 = vld [vmem:[%s5 + $0x480] sm:$0xff]
        %v4514 = vld [vmem:[%s5 + $0x488] sm:$0xff]
        %v4515 = vld [vmem:[%s5 + $0x490] sm:$0xff]
        %v4516 = vld [vmem:[%s5 + $0x498] sm:$0xff]
        %v4517 = vld [vmem:[%s5 + $0x4a0] sm:$0xff]
        %v4518 = vld [vmem:[%s5 + $0x4a8] sm:$0xff]
        %v4519 = vld [vmem:[%s5 + $0x4b0] sm:$0xff]
        %v4520 = vld [vmem:[%s5 + $0x4b8] sm:$0xff]
        %v4521 = vld [vmem:[%s5 + $0x4c0] sm:$0xff]
        %v4522 = vld [vmem:[%s5 + $0x4c8] sm:$0xff]
        %v4523 = vld [vmem:[%s5 + $0x4d0] sm:$0xff]
        %v4524 = vld [vmem:[%s5 + $0x4d8] sm:$0xff]
        %v4525 = vld [vmem:[%s5 + $0x4e0] sm:$0xff]
        %v4526 = vld [vmem:[%s5 + $0x4e8] sm:$0xff]
        %v4527 = vld [vmem:[%s5 + $0x4f0] sm:$0xff]
        %v4528 = vld [vmem:[%s5 + $0x4f8] sm:$0xff]
        %v4561 = vunpack.c.l.b16 %v4497
        %v4562 = vunpack.c.h.b16 %v4497
        %v4563 = vunpack.c.l.b16 %v4498
        %v4564 = vunpack.c.h.b16 %v4498
        %v4565 = vunpack.c.l.b16 %v4499
        %v4566 = vunpack.c.h.b16 %v4499
        %v4567 = vunpack.c.l.b16 %v4500
        %v4568 = vunpack.c.h.b16 %v4500
        %v4569 = vunpack.c.l.b16 %v4501
        %v4570 = vunpack.c.h.b16 %v4501
        %v4571 = vunpack.c.l.b16 %v4502
        %v4572 = vunpack.c.h.b16 %v4502
        %v4573 = vunpack.c.l.b16 %v4503
        %v4574 = vunpack.c.h.b16 %v4503
        %v4575 = vunpack.c.l.b16 %v4504
        %v4576 = vunpack.c.h.b16 %v4504
        %v4577 = vunpack.c.l.b16 %v4505
        %v4578 = vunpack.c.h.b16 %v4505
        %v4579 = vunpack.c.l.b16 %v4506
        %v4580 = vunpack.c.h.b16 %v4506
        %v4581 = vunpack.c.l.b16 %v4507
        %v4582 = vunpack.c.h.b16 %v4507
        %v4583 = vunpack.c.l.b16 %v4508
        %v4584 = vunpack.c.h.b16 %v4508
        %v4585 = vunpack.c.l.b16 %v4509
        %v4586 = vunpack.c.h.b16 %v4509
        %v4587 = vunpack.c.l.b16 %v4510
        %v4588 = vunpack.c.h.b16 %v4510
        %v4589 = vunpack.c.l.b16 %v4511
        %v4590 = vunpack.c.h.b16 %v4511
        %v4591 = vunpack.c.l.b16 %v4512
        %v4592 = vunpack.c.h.b16 %v4512
        %v4593 = vunpack.c.l.b16 %v4513
        %v4594 = vunpack.c.h.b16 %v4513
        %v4595 = vunpack.c.l.b16 %v4514
        %v4596 = vunpack.c.h.b16 %v4514
        %v4597 = vunpack.c.l.b16 %v4515
        %v4598 = vunpack.c.h.b16 %v4515
        %v4599 = vunpack.c.l.b16 %v4516
        %v4600 = vunpack.c.h.b16 %v4516
        %v4601 = vunpack.c.l.b16 %v4517
        %v4602 = vunpack.c.h.b16 %v4517
        %v4603 = vunpack.c.l.b16 %v4518
        %v4604 = vunpack.c.h.b16 %v4518
        %v4605 = vunpack.c.l.b16 %v4519
        %v4606 = vunpack.c.h.b16 %v4519
        %v4607 = vunpack.c.l.b16 %v4520
        %v4608 = vunpack.c.h.b16 %v4520
        %v4609 = vunpack.c.l.b16 %v4521
        %v4610 = vunpack.c.h.b16 %v4521
        %v4611 = vunpack.c.l.b16 %v4522
        %v4612 = vunpack.c.h.b16 %v4522
        %v4613 = vunpack.c.l.b16 %v4523
        %v4614 = vunpack.c.h.b16 %v4523
        %v4615 = vunpack.c.l.b16 %v4524
        %v4616 = vunpack.c.h.b16 %v4524
        %v4617 = vunpack.c.l.b16 %v4525
        %v4618 = vunpack.c.h.b16 %v4525
        %v4619 = vunpack.c.l.b16 %v4526
        %v4620 = vunpack.c.h.b16 %v4526
        %v4621 = vunpack.c.l.b16 %v4527
        %v4622 = vunpack.c.h.b16 %v4527
        %v4623 = vunpack.c.l.b16 %v4528
        %v4624 = vunpack.c.h.b16 %v4528
        %v4625 = vpack.c.b16 %v4565, %v4561
        %v4626 = vpack.c.b16 %v4566, %v4562
        %v4627 = vpack.c.b16 %v4567, %v4563
        %v4628 = vpack.c.b16 %v4568, %v4564
        %v4629 = vpack.c.b16 %v4573, %v4569
        %v4630 = vpack.c.b16 %v4574, %v4570
        %v4631 = vpack.c.b16 %v4575, %v4571
        %v4632 = vpack.c.b16 %v4576, %v4572
        %v4633 = vpack.c.b16 %v4581, %v4577
        %v4634 = vpack.c.b16 %v4582, %v4578
        %v4635 = vpack.c.b16 %v4583, %v4579
        %v4636 = vpack.c.b16 %v4584, %v4580
        %v4637 = vpack.c.b16 %v4589, %v4585
        %v4638 = vpack.c.b16 %v4590, %v4586
        %v4639 = vpack.c.b16 %v4591, %v4587
        %v4640 = vpack.c.b16 %v4592, %v4588
        %v4641 = vpack.c.b16 %v4597, %v4593
        %v4642 = vpack.c.b16 %v4598, %v4594
        %v4643 = vpack.c.b16 %v4599, %v4595
        %v4644 = vpack.c.b16 %v4600, %v4596
        %v4645 = vpack.c.b16 %v4605, %v4601
        %v4646 = vpack.c.b16 %v4606, %v4602
        %v4647 = vpack.c.b16 %v4607, %v4603
        %v4648 = vpack.c.b16 %v4608, %v4604
        %v4649 = vpack.c.b16 %v4613, %v4609
        %v4650 = vpack.c.b16 %v4614, %v4610
        %v4651 = vpack.c.b16 %v4615, %v4611
        %v4652 = vpack.c.b16 %v4616, %v4612
        %v4653 = vpack.c.b16 %v4621, %v4617
        %v4654 = vpack.c.b16 %v4622, %v4618
        %v4655 = vpack.c.b16 %v4623, %v4619
        %v4656 = vpack.c.b16 %v4624, %v4620
        %4689 = vmatpush.bf16.msra.mxu0 %v4653
        %4690 = vmatpush.bf16.msra.mxu0 %v4649
        %4691 = vmatpush.bf16.msra.mxu0 %v4645
        %4692 = vmatpush.bf16.msra.mxu0 %v4641
        %4693 = vmatpush.bf16.msra.mxu0 %v4637
        %4694 = vmatpush.bf16.msra.mxu0 %v4633
        %4695 = vmatpush.bf16.msra.mxu0 %v4629
        %4696 = vmatpush.bf16.msra.mxu0 %v4625
        %4697 = vmatmul.bf16.gmra.mxu0 %v3886
        %v4698 = vpop.f32.mrf.mxu0
        %v4699 = vadd.f32 0.0, %v4698
        %v4700 = vpop.f32.mrf.mxu0
        %v4701 = vadd.f32 0.0, %v4700
        %4702 = vmatmul.bf16.gmra.mxu0 %v3887
        %v4703 = vpop.f32.mrf.mxu0
        %v4704 = vadd.f32 0.0, %v4703
        %v4705 = vpop.f32.mrf.mxu0
        %v4706 = vadd.f32 0.0, %v4705
        %4707 = vmatmul.bf16.gmra.mxu0 %v3888
        %v4708 = vpop.f32.mrf.mxu0
        %v4709 = vadd.f32 0.0, %v4708
        %v4710 = vpop.f32.mrf.mxu0
        %v4711 = vadd.f32 0.0, %v4710
        %4712 = vmatmul.bf16.gmra.mxu0 %v3889
        %v4713 = vpop.f32.mrf.mxu0
        %v4714 = vadd.f32 0.0, %v4713
        %v4715 = vpop.f32.mrf.mxu0
        %v4716 = vadd.f32 0.0, %v4715
        %4717 = vdwg.mxu0
        %4718 = vmatpush.bf16.msra.mxu0 %v4654
        %4719 = vmatpush.bf16.msra.mxu0 %v4650
        %4720 = vmatpush.bf16.msra.mxu0 %v4646
        %4721 = vmatpush.bf16.msra.mxu0 %v4642
        %4722 = vmatpush.bf16.msra.mxu0 %v4638
        %4723 = vmatpush.bf16.msra.mxu0 %v4634
        %4724 = vmatpush.bf16.msra.mxu0 %v4630
        %4725 = vmatpush.bf16.msra.mxu0 %v4626
        %4726 = vmatmul.bf16.gmra.mxu0 %v3886
        %v4727 = vpop.f32.mrf.mxu0
        %v4728 = vadd.f32 0.0, %v4727
        %v4729 = vpop.f32.mrf.mxu0
        %v4730 = vadd.f32 0.0, %v4729
        %4731 = vmatmul.bf16.gmra.mxu0 %v3887
        %v4732 = vpop.f32.mrf.mxu0
        %v4733 = vadd.f32 0.0, %v4732
        %v4734 = vpop.f32.mrf.mxu0
        %v4735 = vadd.f32 0.0, %v4734
        %4736 = vmatmul.bf16.gmra.mxu0 %v3888
        %v4737 = vpop.f32.mrf.mxu0
        %v4738 = vadd.f32 0.0, %v4737
        %v4739 = vpop.f32.mrf.mxu0
        %v4740 = vadd.f32 0.0, %v4739
        %4741 = vmatmul.bf16.gmra.mxu0 %v3889
        %v4742 = vpop.f32.mrf.mxu0
        %v4743 = vadd.f32 0.0, %v4742
        %v4744 = vpop.f32.mrf.mxu0
        %v4745 = vadd.f32 0.0, %v4744
        %4746 = vdwg.mxu0
        %4747 = vmatpush.bf16.msra.mxu0 %v4655
        %4748 = vmatpush.bf16.msra.mxu0 %v4651
        %4749 = vmatpush.bf16.msra.mxu0 %v4647
        %4750 = vmatpush.bf16.msra.mxu0 %v4643
        %4751 = vmatpush.bf16.msra.mxu0 %v4639
        %4752 = vmatpush.bf16.msra.mxu0 %v4635
        %4753 = vmatpush.bf16.msra.mxu0 %v4631
        %4754 = vmatpush.bf16.msra.mxu0 %v4627
        %4755 = vmatmul.bf16.gmra.mxu0 %v3886
        %v4756 = vpop.f32.mrf.mxu0
        %v4757 = vadd.f32 0.0, %v4756
        %v4758 = vpop.f32.mrf.mxu0
        %v4759 = vadd.f32 0.0, %v4758
        %4760 = vmatmul.bf16.gmra.mxu0 %v3887
        %v4761 = vpop.f32.mrf.mxu0
        %v4762 = vadd.f32 0.0, %v4761
        %v4763 = vpop.f32.mrf.mxu0
        %v4764 = vadd.f32 0.0, %v4763
        %4765 = vmatmul.bf16.gmra.mxu0 %v3888
        %v4766 = vpop.f32.mrf.mxu0
        %v4767 = vadd.f32 0.0, %v4766
        %v4768 = vpop.f32.mrf.mxu0
        %v4769 = vadd.f32 0.0, %v4768
        %4770 = vmatmul.bf16.gmra.mxu0 %v3889
        %v4771 = vpop.f32.mrf.mxu0
        %v4772 = vadd.f32 0.0, %v4771
        %v4773 = vpop.f32.mrf.mxu0
        %v4774 = vadd.f32 0.0, %v4773
        %4775 = vdwg.mxu0
        %4776 = vmatpush.bf16.msra.mxu0 %v4656
        %4777 = vmatpush.bf16.msra.mxu0 %v4652
        %4778 = vmatpush.bf16.msra.mxu0 %v4648
        %4779 = vmatpush.bf16.msra.mxu0 %v4644
        %4780 = vmatpush.bf16.msra.mxu0 %v4640
        %4781 = vmatpush.bf16.msra.mxu0 %v4636
        %4782 = vmatpush.bf16.msra.mxu0 %v4632
        %4783 = vmatpush.bf16.msra.mxu0 %v4628
        %4784 = vmatmul.bf16.gmra.mxu0 %v3886
        %v4785 = vpop.f32.mrf.mxu0
        %v4786 = vadd.f32 0.0, %v4785
        %v4787 = vpop.f32.mrf.mxu0
        %v4788 = vadd.f32 0.0, %v4787
        %4789 = vmatmul.bf16.gmra.mxu0 %v3887
        %v4790 = vpop.f32.mrf.mxu0
        %v4791 = vadd.f32 0.0, %v4790
        %v4792 = vpop.f32.mrf.mxu0
        %v4793 = vadd.f32 0.0, %v4792
        %4794 = vmatmul.bf16.gmra.mxu0 %v3888
        %v4795 = vpop.f32.mrf.mxu0
        %v4796 = vadd.f32 0.0, %v4795
        %v4797 = vpop.f32.mrf.mxu0
        %v4798 = vadd.f32 0.0, %v4797
        %4799 = vmatmul.bf16.gmra.mxu0 %v3889
        %v4800 = vpop.f32.mrf.mxu0
        %v4801 = vadd.f32 0.0, %v4800
        %v4802 = vpop.f32.mrf.mxu0
        %v4803 = vadd.f32 0.0, %v4802
        %4804 = vdwg.mxu0
        %v4805 = vadd.f32 %v4465, %v4699
        %v4806 = vadd.f32 %v4466, %v4728
        %v4807 = vadd.f32 %v4467, %v4757
        %v4808 = vadd.f32 %v4468, %v4786
        %v4809 = vadd.f32 %v4469, %v4701
        %v4810 = vadd.f32 %v4470, %v4730
        %v4811 = vadd.f32 %v4471, %v4759
        %v4812 = vadd.f32 %v4472, %v4788
        %v4813 = vadd.f32 %v4473, %v4704
        %v4814 = vadd.f32 %v4474, %v4733
        %v4815 = vadd.f32 %v4475, %v4762
        %v4816 = vadd.f32 %v4476, %v4791
        %v4817 = vadd.f32 %v4477, %v4706
        %v4818 = vadd.f32 %v4478, %v4735
        %v4819 = vadd.f32 %v4479, %v4764
        %v4820 = vadd.f32 %v4480, %v4793
        %v4821 = vadd.f32 %v4481, %v4709
        %v4822 = vadd.f32 %v4482, %v4738
        %v4823 = vadd.f32 %v4483, %v4767
        %v4824 = vadd.f32 %v4484, %v4796
        %v4825 = vadd.f32 %v4485, %v4711
        %v4826 = vadd.f32 %v4486, %v4740
        %v4827 = vadd.f32 %v4487, %v4769
        %v4828 = vadd.f32 %v4488, %v4798
        %v4829 = vadd.f32 %v4489, %v4714
        %v4830 = vadd.f32 %v4490, %v4743
        %v4831 = vadd.f32 %v4491, %v4772
        %v4832 = vadd.f32 %v4492, %v4801
        %v4833 = vadd.f32 %v4493, %v4716
        %v4834 = vadd.f32 %v4494, %v4745
        %v4835 = vadd.f32 %v4495, %v4774
        %v4836 = vadd.f32 %v4496, %v4803
        %v4837 = vxor.u32 %v4805, 2147483648
        %v4838 = vxor.u32 %v4809, 2147483648
        %v4839 = vxor.u32 %v4813, 2147483648
        %v4840 = vxor.u32 %v4817, 2147483648
        %v4841 = vxor.u32 %v4821, 2147483648
        %v4842 = vxor.u32 %v4825, 2147483648
        %v4843 = vxor.u32 %v4829, 2147483648
        %v4844 = vxor.u32 %v4833, 2147483648
        %v4845 = vmul.f32 %v4837, 1.442695
        %v4846 = vpow.pop %v4845
        %v4847 = vmul.f32 %v4838, 1.442695
        %v4848 = vpow.pop %v4847
        %v4849 = vmul.f32 %v4839, 1.442695
        %v4850 = vpow.pop %v4849
        %v4851 = vmul.f32 %v4840, 1.442695
        %v4852 = vpow.pop %v4851
        %v4853 = vmul.f32 %v4841, 1.442695
        %v4854 = vpow.pop %v4853
        %v4855 = vmul.f32 %v4842, 1.442695
        %v4856 = vpow.pop %v4855
        %v4857 = vmul.f32 %v4843, 1.442695
        %v4858 = vpow.pop %v4857
        %v4859 = vmul.f32 %v4844, 1.442695
        %v4860 = vpow.pop %v4859
        %v4861 = vadd.f32 %v4846, 1.0
        %v4862 = vadd.f32 %v4848, 1.0
        %v4863 = vadd.f32 %v4850, 1.0
        %v4864 = vadd.f32 %v4852, 1.0
        %v4865 = vadd.f32 %v4854, 1.0
        %v4866 = vadd.f32 %v4856, 1.0
        %v4867 = vadd.f32 %v4858, 1.0
        %v4868 = vadd.f32 %v4860, 1.0
        %v4869 = vrcp.pop %v4861
        %v4870 = vmul.f32 %v4861, %v4869
        %v4871 = vsub.f32 1.0, %v4870
        %v4872 = vmul.f32 %v4869, %v4871
        %v4873 = vadd.f32 %v4869, %v4872
        %vm4874 = vweird.f32 %v4861
        %vm4875 = vweird.f32 %v4869
        %vm4876 = vmor %vm4874, %vm4875
        %v4877 = vsel %vm4876, %v4869, %v4873
        %v4878 = vand.u32 2147483647, %v4861
        %vm4879 = vcmp.eq.f32.partialorder %v4878, 8.507059e+37
        %v4880 = vand.u32 %v4861, 2147483648
        %v4881 = vor.u32 1.1754944e-38, %v4880
        %v4882 = vsel %vm4879, %v4881, %v4877
        %v4883 = vmul.f32 1.0, %v4882
        %v4884 = vrcp.pop %v4862
        %v4885 = vmul.f32 %v4862, %v4884
        %v4886 = vsub.f32 1.0, %v4885
        %v4887 = vmul.f32 %v4884, %v4886
        %v4888 = vadd.f32 %v4884, %v4887
        %vm4889 = vweird.f32 %v4862
        %vm4890 = vweird.f32 %v4884
        %vm4891 = vmor %vm4889, %vm4890
        %v4892 = vsel %vm4891, %v4884, %v4888
        %v4893 = vand.u32 2147483647, %v4862
        %vm4894 = vcmp.eq.f32.partialorder %v4893, 8.507059e+37
        %v4895 = vand.u32 %v4862, 2147483648
        %v4896 = vor.u32 1.1754944e-38, %v4895
        %v4897 = vsel %vm4894, %v4896, %v4892
        %v4898 = vmul.f32 1.0, %v4897
        %v4899 = vrcp.pop %v4863
        %v4900 = vmul.f32 %v4863, %v4899
        %v4901 = vsub.f32 1.0, %v4900
        %v4902 = vmul.f32 %v4899, %v4901
        %v4903 = vadd.f32 %v4899, %v4902
        %vm4904 = vweird.f32 %v4863
        %vm4905 = vweird.f32 %v4899
        %vm4906 = vmor %vm4904, %vm4905
        %v4907 = vsel %vm4906, %v4899, %v4903
        %v4908 = vand.u32 2147483647, %v4863
        %vm4909 = vcmp.eq.f32.partialorder %v4908, 8.507059e+37
        %v4910 = vand.u32 %v4863, 2147483648
        %v4911 = vor.u32 1.1754944e-38, %v4910
        %v4912 = vsel %vm4909, %v4911, %v4907
        %v4913 = vmul.f32 1.0, %v4912
        %v4914 = vrcp.pop %v4864
        %v4915 = vmul.f32 %v4864, %v4914
        %v4916 = vsub.f32 1.0, %v4915
        %v4917 = vmul.f32 %v4914, %v4916
        %v4918 = vadd.f32 %v4914, %v4917
        %vm4919 = vweird.f32 %v4864
        %vm4920 = vweird.f32 %v4914
        %vm4921 = vmor %vm4919, %vm4920
        %v4922 = vsel %vm4921, %v4914, %v4918
        %v4923 = vand.u32 2147483647, %v4864
        %vm4924 = vcmp.eq.f32.partialorder %v4923, 8.507059e+37
        %v4925 = vand.u32 %v4864, 2147483648
        %v4926 = vor.u32 1.1754944e-38, %v4925
        %v4927 = vsel %vm4924, %v4926, %v4922
        %v4928 = vmul.f32 1.0, %v4927
        %v4929 = vrcp.pop %v4865
        %v4930 = vmul.f32 %v4865, %v4929
        %v4931 = vsub.f32 1.0, %v4930
        %v4932 = vmul.f32 %v4929, %v4931
        %v4933 = vadd.f32 %v4929, %v4932
        %vm4934 = vweird.f32 %v4865
        %vm4935 = vweird.f32 %v4929
        %vm4936 = vmor %vm4934, %vm4935
        %v4937 = vsel %vm4936, %v4929, %v4933
        %v4938 = vand.u32 2147483647, %v4865
        %vm4939 = vcmp.eq.f32.partialorder %v4938, 8.507059e+37
        %v4940 = vand.u32 %v4865, 2147483648
        %v4941 = vor.u32 1.1754944e-38, %v4940
        %v4942 = vsel %vm4939, %v4941, %v4937
        %v4943 = vmul.f32 1.0, %v4942
        %v4944 = vrcp.pop %v4866
        %v4945 = vmul.f32 %v4866, %v4944
        %v4946 = vsub.f32 1.0, %v4945
        %v4947 = vmul.f32 %v4944, %v4946
        %v4948 = vadd.f32 %v4944, %v4947
        %vm4949 = vweird.f32 %v4866
        %vm4950 = vweird.f32 %v4944
        %vm4951 = vmor %vm4949, %vm4950
        %v4952 = vsel %vm4951, %v4944, %v4948
        %v4953 = vand.u32 2147483647, %v4866
        %vm4954 = vcmp.eq.f32.partialorder %v4953, 8.507059e+37
        %v4955 = vand.u32 %v4866, 2147483648
        %v4956 = vor.u32 1.1754944e-38, %v4955
        %v4957 = vsel %vm4954, %v4956, %v4952
        %v4958 = vmul.f32 1.0, %v4957
        %v4959 = vrcp.pop %v4867
        %v4960 = vmul.f32 %v4867, %v4959
        %v4961 = vsub.f32 1.0, %v4960
        %v4962 = vmul.f32 %v4959, %v4961
        %v4963 = vadd.f32 %v4959, %v4962
        %vm4964 = vweird.f32 %v4867
        %vm4965 = vweird.f32 %v4959
        %vm4966 = vmor %vm4964, %vm4965
        %v4967 = vsel %vm4966, %v4959, %v4963
        %v4968 = vand.u32 2147483647, %v4867
        %vm4969 = vcmp.eq.f32.partialorder %v4968, 8.507059e+37
        %v4970 = vand.u32 %v4867, 2147483648
        %v4971 = vor.u32 1.1754944e-38, %v4970
        %v4972 = vsel %vm4969, %v4971, %v4967
        %v4973 = vmul.f32 1.0, %v4972
        %v4974 = vrcp.pop %v4868
        %v4975 = vmul.f32 %v4868, %v4974
        %v4976 = vsub.f32 1.0, %v4975
        %v4977 = vmul.f32 %v4974, %v4976
        %v4978 = vadd.f32 %v4974, %v4977
        %vm4979 = vweird.f32 %v4868
        %vm4980 = vweird.f32 %v4974
        %vm4981 = vmor %vm4979, %vm4980
        %v4982 = vsel %vm4981, %v4974, %v4978
        %v4983 = vand.u32 2147483647, %v4868
        %vm4984 = vcmp.eq.f32.partialorder %v4983, 8.507059e+37
        %v4985 = vand.u32 %v4868, 2147483648
        %v4986 = vor.u32 1.1754944e-38, %v4985
        %v4987 = vsel %vm4984, %v4986, %v4982
        %v4988 = vmul.f32 1.0, %v4987
        %v4989 = vxor.u32 %v4806, 2147483648
        %v4990 = vxor.u32 %v4810, 2147483648
        %v4991 = vxor.u32 %v4814, 2147483648
        %v4992 = vxor.u32 %v4818, 2147483648
        %v4993 = vxor.u32 %v4822, 2147483648
        %v4994 = vxor.u32 %v4826, 2147483648
        %v4995 = vxor.u32 %v4830, 2147483648
        %v4996 = vxor.u32 %v4834, 2147483648
        %v4997 = vmul.f32 %v4989, 1.442695
        %v4998 = vpow.pop %v4997
        %v4999 = vmul.f32 %v4990, 1.442695
        %v5000 = vpow.pop %v4999
        %v5001 = vmul.f32 %v4991, 1.442695
        %v5002 = vpow.pop %v5001
        %v5003 = vmul.f32 %v4992, 1.442695
        %v5004 = vpow.pop %v5003
        %v5005 = vmul.f32 %v4993, 1.442695
        %v5006 = vpow.pop %v5005
        %v5007 = vmul.f32 %v4994, 1.442695
        %v5008 = vpow.pop %v5007
        %v5009 = vmul.f32 %v4995, 1.442695
        %v5010 = vpow.pop %v5009
        %v5011 = vmul.f32 %v4996, 1.442695
        %v5012 = vpow.pop %v5011
        %v5013 = vadd.f32 %v4998, 1.0
        %v5014 = vadd.f32 %v5000, 1.0
        %v5015 = vadd.f32 %v5002, 1.0
        %v5016 = vadd.f32 %v5004, 1.0
        %v5017 = vadd.f32 %v5006, 1.0
        %v5018 = vadd.f32 %v5008, 1.0
        %v5019 = vadd.f32 %v5010, 1.0
        %v5020 = vadd.f32 %v5012, 1.0
        %v5021 = vrcp.pop %v5013
        %v5022 = vmul.f32 %v5013, %v5021
        %v5023 = vsub.f32 1.0, %v5022
        %v5024 = vmul.f32 %v5021, %v5023
        %v5025 = vadd.f32 %v5021, %v5024
        %vm5026 = vweird.f32 %v5013
        %vm5027 = vweird.f32 %v5021
        %vm5028 = vmor %vm5026, %vm5027
        %v5029 = vsel %vm5028, %v5021, %v5025
        %v5030 = vand.u32 2147483647, %v5013
        %vm5031 = vcmp.eq.f32.partialorder %v5030, 8.507059e+37
        %v5032 = vand.u32 %v5013, 2147483648
        %v5033 = vor.u32 1.1754944e-38, %v5032
        %v5034 = vsel %vm5031, %v5033, %v5029
        %v5035 = vmul.f32 1.0, %v5034
        %v5036 = vrcp.pop %v5014
        %v5037 = vmul.f32 %v5014, %v5036
        %v5038 = vsub.f32 1.0, %v5037
        %v5039 = vmul.f32 %v5036, %v5038
        %v5040 = vadd.f32 %v5036, %v5039
        %vm5041 = vweird.f32 %v5014
        %vm5042 = vweird.f32 %v5036
        %vm5043 = vmor %vm5041, %vm5042
        %v5044 = vsel %vm5043, %v5036, %v5040
        %v5045 = vand.u32 2147483647, %v5014
        %vm5046 = vcmp.eq.f32.partialorder %v5045, 8.507059e+37
        %v5047 = vand.u32 %v5014, 2147483648
        %v5048 = vor.u32 1.1754944e-38, %v5047
        %v5049 = vsel %vm5046, %v5048, %v5044
        %v5050 = vmul.f32 1.0, %v5049
        %v5051 = vrcp.pop %v5015
        %v5052 = vmul.f32 %v5015, %v5051
        %v5053 = vsub.f32 1.0, %v5052
        %v5054 = vmul.f32 %v5051, %v5053
        %v5055 = vadd.f32 %v5051, %v5054
        %vm5056 = vweird.f32 %v5015
        %vm5057 = vweird.f32 %v5051
        %vm5058 = vmor %vm5056, %vm5057
        %v5059 = vsel %vm5058, %v5051, %v5055
        %v5060 = vand.u32 2147483647, %v5015
        %vm5061 = vcmp.eq.f32.partialorder %v5060, 8.507059e+37
        %v5062 = vand.u32 %v5015, 2147483648
        %v5063 = vor.u32 1.1754944e-38, %v5062
        %v5064 = vsel %vm5061, %v5063, %v5059
        %v5065 = vmul.f32 1.0, %v5064
        %v5066 = vrcp.pop %v5016
        %v5067 = vmul.f32 %v5016, %v5066
        %v5068 = vsub.f32 1.0, %v5067
        %v5069 = vmul.f32 %v5066, %v5068
        %v5070 = vadd.f32 %v5066, %v5069
        %vm5071 = vweird.f32 %v5016
        %vm5072 = vweird.f32 %v5066
        %vm5073 = vmor %vm5071, %vm5072
        %v5074 = vsel %vm5073, %v5066, %v5070
        %v5075 = vand.u32 2147483647, %v5016
        %vm5076 = vcmp.eq.f32.partialorder %v5075, 8.507059e+37
        %v5077 = vand.u32 %v5016, 2147483648
        %v5078 = vor.u32 1.1754944e-38, %v5077
        %v5079 = vsel %vm5076, %v5078, %v5074
        %v5080 = vmul.f32 1.0, %v5079
        %v5081 = vrcp.pop %v5017
        %v5082 = vmul.f32 %v5017, %v5081
        %v5083 = vsub.f32 1.0, %v5082
        %v5084 = vmul.f32 %v5081, %v5083
        %v5085 = vadd.f32 %v5081, %v5084
        %vm5086 = vweird.f32 %v5017
        %vm5087 = vweird.f32 %v5081
        %vm5088 = vmor %vm5086, %vm5087
        %v5089 = vsel %vm5088, %v5081, %v5085
        %v5090 = vand.u32 2147483647, %v5017
        %vm5091 = vcmp.eq.f32.partialorder %v5090, 8.507059e+37
        %v5092 = vand.u32 %v5017, 2147483648
        %v5093 = vor.u32 1.1754944e-38, %v5092
        %v5094 = vsel %vm5091, %v5093, %v5089
        %v5095 = vmul.f32 1.0, %v5094
        %v5096 = vrcp.pop %v5018
        %v5097 = vmul.f32 %v5018, %v5096
        %v5098 = vsub.f32 1.0, %v5097
        %v5099 = vmul.f32 %v5096, %v5098
        %v5100 = vadd.f32 %v5096, %v5099
        %vm5101 = vweird.f32 %v5018
        %vm5102 = vweird.f32 %v5096
        %vm5103 = vmor %vm5101, %vm5102
        %v5104 = vsel %vm5103, %v5096, %v5100
        %v5105 = vand.u32 2147483647, %v5018
        %vm5106 = vcmp.eq.f32.partialorder %v5105, 8.507059e+37
        %v5107 = vand.u32 %v5018, 2147483648
        %v5108 = vor.u32 1.1754944e-38, %v5107
        %v5109 = vsel %vm5106, %v5108, %v5104
        %v5110 = vmul.f32 1.0, %v5109
        %v5111 = vrcp.pop %v5019
        %v5112 = vmul.f32 %v5019, %v5111
        %v5113 = vsub.f32 1.0, %v5112
        %v5114 = vmul.f32 %v5111, %v5113
        %v5115 = vadd.f32 %v5111, %v5114
        %vm5116 = vweird.f32 %v5019
        %vm5117 = vweird.f32 %v5111
        %vm5118 = vmor %vm5116, %vm5117
        %v5119 = vsel %vm5118, %v5111, %v5115
        %v5120 = vand.u32 2147483647, %v5019
        %vm5121 = vcmp.eq.f32.partialorder %v5120, 8.507059e+37
        %v5122 = vand.u32 %v5019, 2147483648
        %v5123 = vor.u32 1.1754944e-38, %v5122
        %v5124 = vsel %vm5121, %v5123, %v5119
        %v5125 = vmul.f32 1.0, %v5124
        %v5126 = vrcp.pop %v5020
        %v5127 = vmul.f32 %v5020, %v5126
        %v5128 = vsub.f32 1.0, %v5127
        %v5129 = vmul.f32 %v5126, %v5128
        %v5130 = vadd.f32 %v5126, %v5129
        %vm5131 = vweird.f32 %v5020
        %vm5132 = vweird.f32 %v5126
        %vm5133 = vmor %vm5131, %vm5132
        %v5134 = vsel %vm5133, %v5126, %v5130
        %v5135 = vand.u32 2147483647, %v5020
        %vm5136 = vcmp.eq.f32.partialorder %v5135, 8.507059e+37
        %v5137 = vand.u32 %v5020, 2147483648
        %v5138 = vor.u32 1.1754944e-38, %v5137
        %v5139 = vsel %vm5136, %v5138, %v5134
        %v5140 = vmul.f32 1.0, %v5139
        %v5141 = vxor.u32 %v4807, 2147483648
        %v5142 = vxor.u32 %v4811, 2147483648
        %v5143 = vxor.u32 %v4815, 2147483648
        %v5144 = vxor.u32 %v4819, 2147483648
        %v5145 = vxor.u32 %v4823, 2147483648
        %v5146 = vxor.u32 %v4827, 2147483648
        %v5147 = vxor.u32 %v4831, 2147483648
        %v5148 = vxor.u32 %v4835, 2147483648
        %v5149 = vmul.f32 %v5141, 1.442695
        %v5150 = vpow.pop %v5149
        %v5151 = vmul.f32 %v5142, 1.442695
        %v5152 = vpow.pop %v5151
        %v5153 = vmul.f32 %v5143, 1.442695
        %v5154 = vpow.pop %v5153
        %v5155 = vmul.f32 %v5144, 1.442695
        %v5156 = vpow.pop %v5155
        %v5157 = vmul.f32 %v5145, 1.442695
        %v5158 = vpow.pop %v5157
        %v5159 = vmul.f32 %v5146, 1.442695
        %v5160 = vpow.pop %v5159
        %v5161 = vmul.f32 %v5147, 1.442695
        %v5162 = vpow.pop %v5161
        %v5163 = vmul.f32 %v5148, 1.442695
        %v5164 = vpow.pop %v5163
        %v5165 = vadd.f32 %v5150, 1.0
        %v5166 = vadd.f32 %v5152, 1.0
        %v5167 = vadd.f32 %v5154, 1.0
        %v5168 = vadd.f32 %v5156, 1.0
        %v5169 = vadd.f32 %v5158, 1.0
        %v5170 = vadd.f32 %v5160, 1.0
        %v5171 = vadd.f32 %v5162, 1.0
        %v5172 = vadd.f32 %v5164, 1.0
        %v5173 = vrcp.pop %v5165
        %v5174 = vmul.f32 %v5165, %v5173
        %v5175 = vsub.f32 1.0, %v5174
        %v5176 = vmul.f32 %v5173, %v5175
        %v5177 = vadd.f32 %v5173, %v5176
        %vm5178 = vweird.f32 %v5165
        %vm5179 = vweird.f32 %v5173
        %vm5180 = vmor %vm5178, %vm5179
        %v5181 = vsel %vm5180, %v5173, %v5177
        %v5182 = vand.u32 2147483647, %v5165
        %vm5183 = vcmp.eq.f32.partialorder %v5182, 8.507059e+37
        %v5184 = vand.u32 %v5165, 2147483648
        %v5185 = vor.u32 1.1754944e-38, %v5184
        %v5186 = vsel %vm5183, %v5185, %v5181
        %v5187 = vmul.f32 1.0, %v5186
        %v5188 = vrcp.pop %v5166
        %v5189 = vmul.f32 %v5166, %v5188
        %v5190 = vsub.f32 1.0, %v5189
        %v5191 = vmul.f32 %v5188, %v5190
        %v5192 = vadd.f32 %v5188, %v5191
        %vm5193 = vweird.f32 %v5166
        %vm5194 = vweird.f32 %v5188
        %vm5195 = vmor %vm5193, %vm5194
        %v5196 = vsel %vm5195, %v5188, %v5192
        %v5197 = vand.u32 2147483647, %v5166
        %vm5198 = vcmp.eq.f32.partialorder %v5197, 8.507059e+37
        %v5199 = vand.u32 %v5166, 2147483648
        %v5200 = vor.u32 1.1754944e-38, %v5199
        %v5201 = vsel %vm5198, %v5200, %v5196
        %v5202 = vmul.f32 1.0, %v5201
        %v5203 = vrcp.pop %v5167
        %v5204 = vmul.f32 %v5167, %v5203
        %v5205 = vsub.f32 1.0, %v5204
        %v5206 = vmul.f32 %v5203, %v5205
        %v5207 = vadd.f32 %v5203, %v5206
        %vm5208 = vweird.f32 %v5167
        %vm5209 = vweird.f32 %v5203
        %vm5210 = vmor %vm5208, %vm5209
        %v5211 = vsel %vm5210, %v5203, %v5207
        %v5212 = vand.u32 2147483647, %v5167
        %vm5213 = vcmp.eq.f32.partialorder %v5212, 8.507059e+37
        %v5214 = vand.u32 %v5167, 2147483648
        %v5215 = vor.u32 1.1754944e-38, %v5214
        %v5216 = vsel %vm5213, %v5215, %v5211
        %v5217 = vmul.f32 1.0, %v5216
        %v5218 = vrcp.pop %v5168
        %v5219 = vmul.f32 %v5168, %v5218
        %v5220 = vsub.f32 1.0, %v5219
        %v5221 = vmul.f32 %v5218, %v5220
        %v5222 = vadd.f32 %v5218, %v5221
        %vm5223 = vweird.f32 %v5168
        %vm5224 = vweird.f32 %v5218
        %vm5225 = vmor %vm5223, %vm5224
        %v5226 = vsel %vm5225, %v5218, %v5222
        %v5227 = vand.u32 2147483647, %v5168
        %vm5228 = vcmp.eq.f32.partialorder %v5227, 8.507059e+37
        %v5229 = vand.u32 %v5168, 2147483648
        %v5230 = vor.u32 1.1754944e-38, %v5229
        %v5231 = vsel %vm5228, %v5230, %v5226
        %v5232 = vmul.f32 1.0, %v5231
        %v5233 = vrcp.pop %v5169
        %v5234 = vmul.f32 %v5169, %v5233
        %v5235 = vsub.f32 1.0, %v5234
        %v5236 = vmul.f32 %v5233, %v5235
        %v5237 = vadd.f32 %v5233, %v5236
        %vm5238 = vweird.f32 %v5169
        %vm5239 = vweird.f32 %v5233
        %vm5240 = vmor %vm5238, %vm5239
        %v5241 = vsel %vm5240, %v5233, %v5237
        %v5242 = vand.u32 2147483647, %v5169
        %vm5243 = vcmp.eq.f32.partialorder %v5242, 8.507059e+37
        %v5244 = vand.u32 %v5169, 2147483648
        %v5245 = vor.u32 1.1754944e-38, %v5244
        %v5246 = vsel %vm5243, %v5245, %v5241
        %v5247 = vmul.f32 1.0, %v5246
        %v5248 = vrcp.pop %v5170
        %v5249 = vmul.f32 %v5170, %v5248
        %v5250 = vsub.f32 1.0, %v5249
        %v5251 = vmul.f32 %v5248, %v5250
        %v5252 = vadd.f32 %v5248, %v5251
        %vm5253 = vweird.f32 %v5170
        %vm5254 = vweird.f32 %v5248
        %vm5255 = vmor %vm5253, %vm5254
        %v5256 = vsel %vm5255, %v5248, %v5252
        %v5257 = vand.u32 2147483647, %v5170
        %vm5258 = vcmp.eq.f32.partialorder %v5257, 8.507059e+37
        %v5259 = vand.u32 %v5170, 2147483648
        %v5260 = vor.u32 1.1754944e-38, %v5259
        %v5261 = vsel %vm5258, %v5260, %v5256
        %v5262 = vmul.f32 1.0, %v5261
        %v5263 = vrcp.pop %v5171
        %v5264 = vmul.f32 %v5171, %v5263
        %v5265 = vsub.f32 1.0, %v5264
        %v5266 = vmul.f32 %v5263, %v5265
        %v5267 = vadd.f32 %v5263, %v5266
        %vm5268 = vweird.f32 %v5171
        %vm5269 = vweird.f32 %v5263
        %vm5270 = vmor %vm5268, %vm5269
        %v5271 = vsel %vm5270, %v5263, %v5267
        %v5272 = vand.u32 2147483647, %v5171
        %vm5273 = vcmp.eq.f32.partialorder %v5272, 8.507059e+37
        %v5274 = vand.u32 %v5171, 2147483648
        %v5275 = vor.u32 1.1754944e-38, %v5274
        %v5276 = vsel %vm5273, %v5275, %v5271
        %v5277 = vmul.f32 1.0, %v5276
        %v5278 = vrcp.pop %v5172
        %v5279 = vmul.f32 %v5172, %v5278
        %v5280 = vsub.f32 1.0, %v5279
        %v5281 = vmul.f32 %v5278, %v5280
        %v5282 = vadd.f32 %v5278, %v5281
        %vm5283 = vweird.f32 %v5172
        %vm5284 = vweird.f32 %v5278
        %vm5285 = vmor %vm5283, %vm5284
        %v5286 = vsel %vm5285, %v5278, %v5282
        %v5287 = vand.u32 2147483647, %v5172
        %vm5288 = vcmp.eq.f32.partialorder %v5287, 8.507059e+37
        %v5289 = vand.u32 %v5172, 2147483648
        %v5290 = vor.u32 1.1754944e-38, %v5289
        %v5291 = vsel %vm5288, %v5290, %v5286
        %v5292 = vmul.f32 1.0, %v5291
        %v5293 = vtanh.pop %v4808
        %v5294 = vtanh.pop %v4812
        %v5295 = vtanh.pop %v4816
        %v5296 = vtanh.pop %v4820
        %v5297 = vtanh.pop %v4824
        %v5298 = vtanh.pop %v4828
        %v5299 = vtanh.pop %v4832
        %v5300 = vtanh.pop %v4836
        %v5301 = vmul.f32 %v5035, %v3814
        %v5302 = vmul.f32 %v5050, %v3815
        %v5303 = vmul.f32 %v5065, %v3816
        %v5304 = vmul.f32 %v5080, %v3817
        %v5305 = vmul.f32 %v5095, %v3818
        %v5306 = vmul.f32 %v5110, %v3819
        %v5307 = vmul.f32 %v5125, %v3820
        %v5308 = vmul.f32 %v5140, %v3821
        %v5309 = vmul.f32 %v4883, %v5293
        %v5310 = vmul.f32 %v4898, %v5294
        %v5311 = vmul.f32 %v4913, %v5295
        %v5312 = vmul.f32 %v4928, %v5296
        %v5313 = vmul.f32 %v4943, %v5297
        %v5314 = vmul.f32 %v4958, %v5298
        %v5315 = vmul.f32 %v4973, %v5299
        %v5316 = vmul.f32 %v4988, %v5300
        %v5317 = vadd.f32 %v5301, %v5309
        %v5318 = vadd.f32 %v5302, %v5310
        %v5319 = vadd.f32 %v5303, %v5311
        %v5320 = vadd.f32 %v5304, %v5312
        %v5321 = vadd.f32 %v5305, %v5313
        %v5322 = vadd.f32 %v5306, %v5314
        %v5323 = vadd.f32 %v5307, %v5315
        %v5324 = vadd.f32 %v5308, %v5316
        %v5325 = vtanh.pop %v5317
        %v5326 = vtanh.pop %v5318
        %v5327 = vtanh.pop %v5319
        %v5328 = vtanh.pop %v5320
        %v5329 = vtanh.pop %v5321
        %v5330 = vtanh.pop %v5322
        %v5331 = vtanh.pop %v5323
        %v5332 = vtanh.pop %v5324
        %v5333 = vmul.f32 %v5187, %v5325
        %v5334 = vmul.f32 %v5202, %v5326
        %v5335 = vmul.f32 %v5217, %v5327
        %v5336 = vmul.f32 %v5232, %v5328
        %v5337 = vmul.f32 %v5247, %v5329
        %v5338 = vmul.f32 %v5262, %v5330
        %v5339 = vmul.f32 %v5277, %v5331
        %v5340 = vmul.f32 %v5292, %v5332
        %v5341 = vpack.c.bf16 %v5334, %v5333
        %v5342 = vpack.c.bf16 %v5336, %v5335
        %v5343 = vpack.c.bf16 %v5338, %v5337
        %v5344 = vpack.c.bf16 %v5340, %v5339
        %v5345 = vld [vmem:[%s6] sm:$0xff]
        %v5346 = vld [vmem:[%s6 + $0x8] sm:$0xff]
        %v5347 = vld [vmem:[%s6 + $0x10] sm:$0xff]
        %v5348 = vld [vmem:[%s6 + $0x18] sm:$0xff]
        %v5349 = vld [vmem:[%s6 + $0x20] sm:$0xff]
        %v5350 = vld [vmem:[%s6 + $0x28] sm:$0xff]
        %v5351 = vld [vmem:[%s6 + $0x30] sm:$0xff]
        %v5352 = vld [vmem:[%s6 + $0x38] sm:$0xff]
        %v5353 = vld [vmem:[%s6 + $0x40] sm:$0xff]
        %v5354 = vld [vmem:[%s6 + $0x48] sm:$0xff]
        %v5355 = vld [vmem:[%s6 + $0x50] sm:$0xff]
        %v5356 = vld [vmem:[%s6 + $0x58] sm:$0xff]
        %v5357 = vld [vmem:[%s6 + $0x60] sm:$0xff]
        %v5358 = vld [vmem:[%s6 + $0x68] sm:$0xff]
        %v5359 = vld [vmem:[%s6 + $0x70] sm:$0xff]
        %v5360 = vld [vmem:[%s6 + $0x78] sm:$0xff]
        %v5377 = vunpack.c.l.b16 %v5345
        %v5378 = vunpack.c.h.b16 %v5345
        %v5379 = vunpack.c.l.b16 %v5346
        %v5380 = vunpack.c.h.b16 %v5346
        %v5381 = vunpack.c.l.b16 %v5347
        %v5382 = vunpack.c.h.b16 %v5347
        %v5383 = vunpack.c.l.b16 %v5348
        %v5384 = vunpack.c.h.b16 %v5348
        %v5385 = vunpack.c.l.b16 %v5349
        %v5386 = vunpack.c.h.b16 %v5349
        %v5387 = vunpack.c.l.b16 %v5350
        %v5388 = vunpack.c.h.b16 %v5350
        %v5389 = vunpack.c.l.b16 %v5351
        %v5390 = vunpack.c.h.b16 %v5351
        %v5391 = vunpack.c.l.b16 %v5352
        %v5392 = vunpack.c.h.b16 %v5352
        %v5393 = vunpack.c.l.b16 %v5353
        %v5394 = vunpack.c.h.b16 %v5353
        %v5395 = vunpack.c.l.b16 %v5354
        %v5396 = vunpack.c.h.b16 %v5354
        %v5397 = vunpack.c.l.b16 %v5355
        %v5398 = vunpack.c.h.b16 %v5355
        %v5399 = vunpack.c.l.b16 %v5356
        %v5400 = vunpack.c.h.b16 %v5356
        %v5401 = vunpack.c.l.b16 %v5357
        %v5402 = vunpack.c.h.b16 %v5357
        %v5403 = vunpack.c.l.b16 %v5358
        %v5404 = vunpack.c.h.b16 %v5358
        %v5405 = vunpack.c.l.b16 %v5359
        %v5406 = vunpack.c.h.b16 %v5359
        %v5407 = vunpack.c.l.b16 %v5360
        %v5408 = vunpack.c.h.b16 %v5360
        %v5409 = vpack.c.b16 %v5379, %v5377
        %v5410 = vpack.c.b16 %v5380, %v5378
        %v5411 = vpack.c.b16 %v5383, %v5381
        %v5412 = vpack.c.b16 %v5384, %v5382
        %v5413 = vpack.c.b16 %v5387, %v5385
        %v5414 = vpack.c.b16 %v5388, %v5386
        %v5415 = vpack.c.b16 %v5391, %v5389
        %v5416 = vpack.c.b16 %v5392, %v5390
        %v5417 = vpack.c.b16 %v5395, %v5393
        %v5418 = vpack.c.b16 %v5396, %v5394
        %v5419 = vpack.c.b16 %v5399, %v5397
        %v5420 = vpack.c.b16 %v5400, %v5398
        %v5421 = vpack.c.b16 %v5403, %v5401
        %v5422 = vpack.c.b16 %v5404, %v5402
        %v5423 = vpack.c.b16 %v5407, %v5405
        %v5424 = vpack.c.b16 %v5408, %v5406
        %5441 = vmatpush.bf16.msra.mxu0 %v5423
        %5442 = vmatpush.bf16.msra.mxu0 %v5421
        %5443 = vmatpush.bf16.msra.mxu0 %v5419
        %5444 = vmatpush.bf16.msra.mxu0 %v5417
        %5445 = vmatpush.bf16.msra.mxu0 %v5415
        %5446 = vmatpush.bf16.msra.mxu0 %v5413
        %5447 = vmatpush.bf16.msra.mxu0 %v5411
        %5448 = vmatpush.bf16.msra.mxu0 %v5409
        %5449 = vmatmul.bf16.gmra.mxu0 %v5341
        %v5450 = vpop.f32.mrf.mxu0
        %v5451 = vadd.f32 0.0, %v5450
        %v5452 = vpop.f32.mrf.mxu0
        %v5453 = vadd.f32 0.0, %v5452
        %5454 = vmatmul.bf16.gmra.mxu0 %v5342
        %v5455 = vpop.f32.mrf.mxu0
        %v5456 = vadd.f32 0.0, %v5455
        %v5457 = vpop.f32.mrf.mxu0
        %v5458 = vadd.f32 0.0, %v5457
        %5459 = vmatmul.bf16.gmra.mxu0 %v5343
        %v5460 = vpop.f32.mrf.mxu0
        %v5461 = vadd.f32 0.0, %v5460
        %v5462 = vpop.f32.mrf.mxu0
        %v5463 = vadd.f32 0.0, %v5462
        %5464 = vmatmul.bf16.gmra.mxu0 %v5344
        %v5465 = vpop.f32.mrf.mxu0
        %v5466 = vadd.f32 0.0, %v5465
        %v5467 = vpop.f32.mrf.mxu0
        %v5468 = vadd.f32 0.0, %v5467
        %5469 = vdwg.mxu0
        %5470 = vmatpush.bf16.msra.mxu0 %v5424
        %5471 = vmatpush.bf16.msra.mxu0 %v5422
        %5472 = vmatpush.bf16.msra.mxu0 %v5420
        %5473 = vmatpush.bf16.msra.mxu0 %v5418
        %5474 = vmatpush.bf16.msra.mxu0 %v5416
        %5475 = vmatpush.bf16.msra.mxu0 %v5414
        %5476 = vmatpush.bf16.msra.mxu0 %v5412
        %5477 = vmatpush.bf16.msra.mxu0 %v5410
        %5478 = vmatmul.bf16.gmra.mxu0 %v5341
        %v5479 = vpop.f32.mrf.mxu0
        %v5480 = vadd.f32 0.0, %v5479
        %v5481 = vpop.f32.mrf.mxu0
        %v5482 = vadd.f32 0.0, %v5481
        %5483 = vmatmul.bf16.gmra.mxu0 %v5342
        %v5484 = vpop.f32.mrf.mxu0
        %v5485 = vadd.f32 0.0, %v5484
        %v5486 = vpop.f32.mrf.mxu0
        %v5487 = vadd.f32 0.0, %v5486
        %5488 = vmatmul.bf16.gmra.mxu0 %v5343
        %v5489 = vpop.f32.mrf.mxu0
        %v5490 = vadd.f32 0.0, %v5489
        %v5491 = vpop.f32.mrf.mxu0
        %v5492 = vadd.f32 0.0, %v5491
        %5493 = vmatmul.bf16.gmra.mxu0 %v5344
        %v5494 = vpop.f32.mrf.mxu0
        %v5495 = vadd.f32 0.0, %v5494
        %v5496 = vpop.f32.mrf.mxu0
        %v5497 = vadd.f32 0.0, %v5496
        %5498 = vdwg.mxu0
        %v5499 = vld [vmem:[%s7] sm:$0x3]
        %v5501 = vperm.slane %v5499, 0
        %v5502 = vperm.slane %v5499, 1
        %v5505 = vmul.f32 %v5451, %v5501
        %v5506 = vmul.f32 %v5480, %v5502
        %v5507 = vmul.f32 %v5453, %v5501
        %v5508 = vmul.f32 %v5482, %v5502
        %v5509 = vmul.f32 %v5456, %v5501
        %v5510 = vmul.f32 %v5485, %v5502
        %v5511 = vmul.f32 %v5458, %v5501
        %v5512 = vmul.f32 %v5487, %v5502
        %v5513 = vmul.f32 %v5461, %v5501
        %v5514 = vmul.f32 %v5490, %v5502
        %v5515 = vmul.f32 %v5463, %v5501
        %v5516 = vmul.f32 %v5492, %v5502
        %v5517 = vmul.f32 %v5466, %v5501
        %v5518 = vmul.f32 %v5495, %v5502
        %v5519 = vmul.f32 %v5468, %v5501
        %v5520 = vmul.f32 %v5497, %v5502
        %v5521 = vld [vmem:[%s8] sm:$0x3]
        %v5523 = vperm.slane %v5521, 0
        %v5524 = vperm.slane %v5521, 1
        %v5527 = vadd.f32 %v5505, %v5523
        %v5528 = vadd.f32 %v5506, %v5524
        %v5529 = vadd.f32 %v5507, %v5523
        %v5530 = vadd.f32 %v5508, %v5524
        %v5531 = vadd.f32 %v5509, %v5523
        %v5532 = vadd.f32 %v5510, %v5524
        %v5533 = vadd.f32 %v5511, %v5523
        %v5534 = vadd.f32 %v5512, %v5524
        %v5535 = vadd.f32 %v5513, %v5523
        %v5536 = vadd.f32 %v5514, %v5524
        %v5537 = vadd.f32 %v5515, %v5523
        %v5538 = vadd.f32 %v5516, %v5524
        %v5539 = vadd.f32 %v5517, %v5523
        %v5540 = vadd.f32 %v5518, %v5524
        %v5541 = vadd.f32 %v5519, %v5523
        %v5542 = vadd.f32 %v5520, %v5524
        %v5543 = vmax.f32 %v5527, 0.0
        %v5544 = vmax.f32 %v5528, 0.0
        %v5545 = vmax.f32 %v5529, 0.0
        %v5546 = vmax.f32 %v5530, 0.0
        %v5547 = vmax.f32 %v5531, 0.0
        %v5548 = vmax.f32 %v5532, 0.0
        %v5549 = vmax.f32 %v5533, 0.0
        %v5550 = vmax.f32 %v5534, 0.0
        %v5551 = vmax.f32 %v5535, 0.0
        %v5552 = vmax.f32 %v5536, 0.0
        %v5553 = vmax.f32 %v5537, 0.0
        %v5554 = vmax.f32 %v5538, 0.0
        %v5555 = vmax.f32 %v5539, 0.0
        %v5556 = vmax.f32 %v5540, 0.0
        %v5557 = vmax.f32 %v5541, 0.0
        %v5558 = vmax.f32 %v5542, 0.0
        %v5559 = vadd.f32 %v5543, %v1141
        %v5560 = vadd.f32 %v5544, %v1319
        %v5561 = vadd.f32 %v5545, %v1143
        %v5562 = vadd.f32 %v5546, %v1321
        %v5563 = vadd.f32 %v5547, %v1146
        %v5564 = vadd.f32 %v5548, %v1324
        %v5565 = vadd.f32 %v5549, %v1148
        %v5566 = vadd.f32 %v5550, %v1326
        %v5567 = vadd.f32 %v5551, %v1151
        %v5568 = vadd.f32 %v5552, %v1329
        %v5569 = vadd.f32 %v5553, %v1153
        %v5570 = vadd.f32 %v5554, %v1331
        %v5571 = vadd.f32 %v5555, %v1156
        %v5572 = vadd.f32 %v5556, %v1334
        %v5573 = vadd.f32 %v5557, %v1158
        %v5574 = vadd.f32 %v5558, %v1336
        %s5575 = scalar_lea.vmem %s487, 256 [#allocation4]
        %5576 = vst [vmem:[%s5575] sm:$0xff] %v5559
        %5577 = vst [vmem:[%s5575 + $0x8] sm:$0xff] %v5560
        %5578 = vst [vmem:[%s5575 + $0x10] sm:$0xff] %v5561
        %5579 = vst [vmem:[%s5575 + $0x18] sm:$0xff] %v5562
        %5580 = vst [vmem:[%s5575 + $0x20] sm:$0xff] %v5563
        %5581 = vst [vmem:[%s5575 + $0x28] sm:$0xff] %v5564
        %5582 = vst [vmem:[%s5575 + $0x30] sm:$0xff] %v5565
        %5583 = vst [vmem:[%s5575 + $0x38] sm:$0xff] %v5566
        %5584 = vst [vmem:[%s5575 + $0x40] sm:$0xff] %v5567
        %5585 = vst [vmem:[%s5575 + $0x48] sm:$0xff] %v5568
        %5586 = vst [vmem:[%s5575 + $0x50] sm:$0xff] %v5569
        %5587 = vst [vmem:[%s5575 + $0x58] sm:$0xff] %v5570
        %5588 = vst [vmem:[%s5575 + $0x60] sm:$0xff] %v5571
        %5589 = vst [vmem:[%s5575 + $0x68] sm:$0xff] %v5572
        %5590 = vst [vmem:[%s5575 + $0x70] sm:$0xff] %v5573
        %5591 = vst [vmem:[%s5575 + $0x78] sm:$0xff] %v5574
        %v5592 = vld [vmem:[#allocation2] sm:$0xff]
        %v5593 = vld [vmem:[#allocation2 + $0x8] sm:$0xff]
        %v5594 = vld [vmem:[#allocation2 + $0x10] sm:$0xff]
        %v5595 = vld [vmem:[#allocation2 + $0x18] sm:$0xff]
        %v5596 = vld [vmem:[#allocation2 + $0x20] sm:$0xff]
        %v5597 = vld [vmem:[#allocation2 + $0x28] sm:$0xff]
        %v5598 = vld [vmem:[#allocation2 + $0x30] sm:$0xff]
        %v5599 = vld [vmem:[#allocation2 + $0x38] sm:$0xff]
        %v5600 = vld [vmem:[%s5 + $0x200] sm:$0xff]
        %v5601 = vld [vmem:[%s5 + $0x208] sm:$0xff]
        %v5602 = vld [vmem:[%s5 + $0x210] sm:$0xff]
        %v5603 = vld [vmem:[%s5 + $0x218] sm:$0xff]
        %v5604 = vld [vmem:[%s5 + $0x220] sm:$0xff]
        %v5605 = vld [vmem:[%s5 + $0x228] sm:$0xff]
        %v5606 = vld [vmem:[%s5 + $0x230] sm:$0xff]
        %v5607 = vld [vmem:[%s5 + $0x238] sm:$0xff]
        %v5608 = vld [vmem:[%s5 + $0x240] sm:$0xff]
        %v5609 = vld [vmem:[%s5 + $0x248] sm:$0xff]
        %v5610 = vld [vmem:[%s5 + $0x250] sm:$0xff]
        %v5611 = vld [vmem:[%s5 + $0x258] sm:$0xff]
        %v5612 = vld [vmem:[%s5 + $0x260] sm:$0xff]
        %v5613 = vld [vmem:[%s5 + $0x268] sm:$0xff]
        %v5614 = vld [vmem:[%s5 + $0x270] sm:$0xff]
        %v5615 = vld [vmem:[%s5 + $0x278] sm:$0xff]
        %v5616 = vld [vmem:[%s5 + $0x280] sm:$0xff]
        %v5617 = vld [vmem:[%s5 + $0x288] sm:$0xff]
        %v5618 = vld [vmem:[%s5 + $0x290] sm:$0xff]
        %v5619 = vld [vmem:[%s5 + $0x298] sm:$0xff]
        %v5620 = vld [vmem:[%s5 + $0x2a0] sm:$0xff]
        %v5621 = vld [vmem:[%s5 + $0x2a8] sm:$0xff]
        %v5622 = vld [vmem:[%s5 + $0x2b0] sm:$0xff]
        %v5623 = vld [vmem:[%s5 + $0x2b8] sm:$0xff]
        %v5624 = vld [vmem:[%s5 + $0x2c0] sm:$0xff]
        %v5625 = vld [vmem:[%s5 + $0x2c8] sm:$0xff]
        %v5626 = vld [vmem:[%s5 + $0x2d0] sm:$0xff]
        %v5627 = vld [vmem:[%s5 + $0x2d8] sm:$0xff]
        %v5628 = vld [vmem:[%s5 + $0x2e0] sm:$0xff]
        %v5629 = vld [vmem:[%s5 + $0x2e8] sm:$0xff]
        %v5630 = vld [vmem:[%s5 + $0x2f0] sm:$0xff]
        %v5631 = vld [vmem:[%s5 + $0x2f8] sm:$0xff]
        %v5632 = vld [vmem:[%s5 + $0x300] sm:$0xff]
        %v5633 = vld [vmem:[%s5 + $0x308] sm:$0xff]
        %v5634 = vld [vmem:[%s5 + $0x310] sm:$0xff]
        %v5635 = vld [vmem:[%s5 + $0x318] sm:$0xff]
        %v5636 = vld [vmem:[%s5 + $0x320] sm:$0xff]
        %v5637 = vld [vmem:[%s5 + $0x328] sm:$0xff]
        %v5638 = vld [vmem:[%s5 + $0x330] sm:$0xff]
        %v5639 = vld [vmem:[%s5 + $0x338] sm:$0xff]
        %v5640 = vld [vmem:[%s5 + $0x340] sm:$0xff]
        %v5641 = vld [vmem:[%s5 + $0x348] sm:$0xff]
        %v5642 = vld [vmem:[%s5 + $0x350] sm:$0xff]
        %v5643 = vld [vmem:[%s5 + $0x358] sm:$0xff]
        %v5644 = vld [vmem:[%s5 + $0x360] sm:$0xff]
        %v5645 = vld [vmem:[%s5 + $0x368] sm:$0xff]
        %v5646 = vld [vmem:[%s5 + $0x370] sm:$0xff]
        %v5647 = vld [vmem:[%s5 + $0x378] sm:$0xff]
        %v5648 = vld [vmem:[%s5 + $0x380] sm:$0xff]
        %v5649 = vld [vmem:[%s5 + $0x388] sm:$0xff]
        %v5650 = vld [vmem:[%s5 + $0x390] sm:$0xff]
        %v5651 = vld [vmem:[%s5 + $0x398] sm:$0xff]
        %v5652 = vld [vmem:[%s5 + $0x3a0] sm:$0xff]
        %v5653 = vld [vmem:[%s5 + $0x3a8] sm:$0xff]
        %v5654 = vld [vmem:[%s5 + $0x3b0] sm:$0xff]
        %v5655 = vld [vmem:[%s5 + $0x3b8] sm:$0xff]
        %v5656 = vld [vmem:[%s5 + $0x3c0] sm:$0xff]
        %v5657 = vld [vmem:[%s5 + $0x3c8] sm:$0xff]
        %v5658 = vld [vmem:[%s5 + $0x3d0] sm:$0xff]
        %v5659 = vld [vmem:[%s5 + $0x3d8] sm:$0xff]
        %v5660 = vld [vmem:[%s5 + $0x3e0] sm:$0xff]
        %v5661 = vld [vmem:[%s5 + $0x3e8] sm:$0xff]
        %v5662 = vld [vmem:[%s5 + $0x3f0] sm:$0xff]
        %v5663 = vld [vmem:[%s5 + $0x3f8] sm:$0xff]
        %v5672 = vunpack.c.l.b16 %v5592
        %v5673 = vunpack.c.h.b16 %v5592
        %v5674 = vunpack.c.l.b16 %v5593
        %v5675 = vunpack.c.h.b16 %v5593
        %v5676 = vunpack.c.l.b16 %v5594
        %v5677 = vunpack.c.h.b16 %v5594
        %v5678 = vunpack.c.l.b16 %v5595
        %v5679 = vunpack.c.h.b16 %v5595
        %v5680 = vunpack.c.l.b16 %v5596
        %v5681 = vunpack.c.h.b16 %v5596
        %v5682 = vunpack.c.l.b16 %v5597
        %v5683 = vunpack.c.h.b16 %v5597
        %v5684 = vunpack.c.l.b16 %v5598
        %v5685 = vunpack.c.h.b16 %v5598
        %v5686 = vunpack.c.l.b16 %v5599
        %v5687 = vunpack.c.h.b16 %v5599
        %v5688 = vpack.c.b16 %v5674, %v5672
        %v5689 = vpack.c.b16 %v5675, %v5673
        %v5690 = vpack.c.b16 %v5678, %v5676
        %v5691 = vpack.c.b16 %v5679, %v5677
        %v5692 = vpack.c.b16 %v5682, %v5680
        %v5693 = vpack.c.b16 %v5683, %v5681
        %v5694 = vpack.c.b16 %v5686, %v5684
        %v5695 = vpack.c.b16 %v5687, %v5685
        %v5768 = vunpack.c.l.b16 %v5600
        %v5769 = vunpack.c.h.b16 %v5600
        %v5770 = vunpack.c.l.b16 %v5601
        %v5771 = vunpack.c.h.b16 %v5601
        %v5772 = vunpack.c.l.b16 %v5602
        %v5773 = vunpack.c.h.b16 %v5602
        %v5774 = vunpack.c.l.b16 %v5603
        %v5775 = vunpack.c.h.b16 %v5603
        %v5776 = vunpack.c.l.b16 %v5604
        %v5777 = vunpack.c.h.b16 %v5604
        %v5778 = vunpack.c.l.b16 %v5605
        %v5779 = vunpack.c.h.b16 %v5605
        %v5780 = vunpack.c.l.b16 %v5606
        %v5781 = vunpack.c.h.b16 %v5606
        %v5782 = vunpack.c.l.b16 %v5607
        %v5783 = vunpack.c.h.b16 %v5607
        %v5784 = vunpack.c.l.b16 %v5608
        %v5785 = vunpack.c.h.b16 %v5608
        %v5786 = vunpack.c.l.b16 %v5609
        %v5787 = vunpack.c.h.b16 %v5609
        %v5788 = vunpack.c.l.b16 %v5610
        %v5789 = vunpack.c.h.b16 %v5610
        %v5790 = vunpack.c.l.b16 %v5611
        %v5791 = vunpack.c.h.b16 %v5611
        %v5792 = vunpack.c.l.b16 %v5612
        %v5793 = vunpack.c.h.b16 %v5612
        %v5794 = vunpack.c.l.b16 %v5613
        %v5795 = vunpack.c.h.b16 %v5613
        %v5796 = vunpack.c.l.b16 %v5614
        %v5797 = vunpack.c.h.b16 %v5614
        %v5798 = vunpack.c.l.b16 %v5615
        %v5799 = vunpack.c.h.b16 %v5615
        %v5800 = vunpack.c.l.b16 %v5616
        %v5801 = vunpack.c.h.b16 %v5616
        %v5802 = vunpack.c.l.b16 %v5617
        %v5803 = vunpack.c.h.b16 %v5617
        %v5804 = vunpack.c.l.b16 %v5618
        %v5805 = vunpack.c.h.b16 %v5618
        %v5806 = vunpack.c.l.b16 %v5619
        %v5807 = vunpack.c.h.b16 %v5619
        %v5808 = vunpack.c.l.b16 %v5620
        %v5809 = vunpack.c.h.b16 %v5620
        %v5810 = vunpack.c.l.b16 %v5621
        %v5811 = vunpack.c.h.b16 %v5621
        %v5812 = vunpack.c.l.b16 %v5622
        %v5813 = vunpack.c.h.b16 %v5622
        %v5814 = vunpack.c.l.b16 %v5623
        %v5815 = vunpack.c.h.b16 %v5623
        %v5816 = vunpack.c.l.b16 %v5624
        %v5817 = vunpack.c.h.b16 %v5624
        %v5818 = vunpack.c.l.b16 %v5625
        %v5819 = vunpack.c.h.b16 %v5625
        %v5820 = vunpack.c.l.b16 %v5626
        %v5821 = vunpack.c.h.b16 %v5626
        %v5822 = vunpack.c.l.b16 %v5627
        %v5823 = vunpack.c.h.b16 %v5627
        %v5824 = vunpack.c.l.b16 %v5628
        %v5825 = vunpack.c.h.b16 %v5628
        %v5826 = vunpack.c.l.b16 %v5629
        %v5827 = vunpack.c.h.b16 %v5629
        %v5828 = vunpack.c.l.b16 %v5630
        %v5829 = vunpack.c.h.b16 %v5630
        %v5830 = vunpack.c.l.b16 %v5631
        %v5831 = vunpack.c.h.b16 %v5631
        %v5832 = vunpack.c.l.b16 %v5632
        %v5833 = vunpack.c.h.b16 %v5632
        %v5834 = vunpack.c.l.b16 %v5633
        %v5835 = vunpack.c.h.b16 %v5633
        %v5836 = vunpack.c.l.b16 %v5634
        %v5837 = vunpack.c.h.b16 %v5634
        %v5838 = vunpack.c.l.b16 %v5635
        %v5839 = vunpack.c.h.b16 %v5635
        %v5840 = vunpack.c.l.b16 %v5636
        %v5841 = vunpack.c.h.b16 %v5636
        %v5842 = vunpack.c.l.b16 %v5637
        %v5843 = vunpack.c.h.b16 %v5637
        %v5844 = vunpack.c.l.b16 %v5638
        %v5845 = vunpack.c.h.b16 %v5638
        %v5846 = vunpack.c.l.b16 %v5639
        %v5847 = vunpack.c.h.b16 %v5639
        %v5848 = vunpack.c.l.b16 %v5640
        %v5849 = vunpack.c.h.b16 %v5640
        %v5850 = vunpack.c.l.b16 %v5641
        %v5851 = vunpack.c.h.b16 %v5641
        %v5852 = vunpack.c.l.b16 %v5642
        %v5853 = vunpack.c.h.b16 %v5642
        %v5854 = vunpack.c.l.b16 %v5643
        %v5855 = vunpack.c.h.b16 %v5643
        %v5856 = vunpack.c.l.b16 %v5644
        %v5857 = vunpack.c.h.b16 %v5644
        %v5858 = vunpack.c.l.b16 %v5645
        %v5859 = vunpack.c.h.b16 %v5645
        %v5860 = vunpack.c.l.b16 %v5646
        %v5861 = vunpack.c.h.b16 %v5646
        %v5862 = vunpack.c.l.b16 %v5647
        %v5863 = vunpack.c.h.b16 %v5647
        %v5864 = vunpack.c.l.b16 %v5648
        %v5865 = vunpack.c.h.b16 %v5648
        %v5866 = vunpack.c.l.b16 %v5649
        %v5867 = vunpack.c.h.b16 %v5649
        %v5868 = vunpack.c.l.b16 %v5650
        %v5869 = vunpack.c.h.b16 %v5650
        %v5870 = vunpack.c.l.b16 %v5651
        %v5871 = vunpack.c.h.b16 %v5651
        %v5872 = vunpack.c.l.b16 %v5652
        %v5873 = vunpack.c.h.b16 %v5652
        %v5874 = vunpack.c.l.b16 %v5653
        %v5875 = vunpack.c.h.b16 %v5653
        %v5876 = vunpack.c.l.b16 %v5654
        %v5877 = vunpack.c.h.b16 %v5654
        %v5878 = vunpack.c.l.b16 %v5655
        %v5879 = vunpack.c.h.b16 %v5655
        %v5880 = vunpack.c.l.b16 %v5656
        %v5881 = vunpack.c.h.b16 %v5656
        %v5882 = vunpack.c.l.b16 %v5657
        %v5883 = vunpack.c.h.b16 %v5657
        %v5884 = vunpack.c.l.b16 %v5658
        %v5885 = vunpack.c.h.b16 %v5658
        %v5886 = vunpack.c.l.b16 %v5659
        %v5887 = vunpack.c.h.b16 %v5659
        %v5888 = vunpack.c.l.b16 %v5660
        %v5889 = vunpack.c.h.b16 %v5660
        %v5890 = vunpack.c.l.b16 %v5661
        %v5891 = vunpack.c.h.b16 %v5661
        %v5892 = vunpack.c.l.b16 %v5662
        %v5893 = vunpack.c.h.b16 %v5662
        %v5894 = vunpack.c.l.b16 %v5663
        %v5895 = vunpack.c.h.b16 %v5663
        %v5896 = vpack.c.b16 %v5772, %v5768
        %v5897 = vpack.c.b16 %v5773, %v5769
        %v5898 = vpack.c.b16 %v5774, %v5770
        %v5899 = vpack.c.b16 %v5775, %v5771
        %v5900 = vpack.c.b16 %v5780, %v5776
        %v5901 = vpack.c.b16 %v5781, %v5777
        %v5902 = vpack.c.b16 %v5782, %v5778
        %v5903 = vpack.c.b16 %v5783, %v5779
        %v5904 = vpack.c.b16 %v5788, %v5784
        %v5905 = vpack.c.b16 %v5789, %v5785
        %v5906 = vpack.c.b16 %v5790, %v5786
        %v5907 = vpack.c.b16 %v5791, %v5787
        %v5908 = vpack.c.b16 %v5796, %v5792
        %v5909 = vpack.c.b16 %v5797, %v5793
        %v5910 = vpack.c.b16 %v5798, %v5794
        %v5911 = vpack.c.b16 %v5799, %v5795
        %v5912 = vpack.c.b16 %v5804, %v5800
        %v5913 = vpack.c.b16 %v5805, %v5801
        %v5914 = vpack.c.b16 %v5806, %v5802
        %v5915 = vpack.c.b16 %v5807, %v5803
        %v5916 = vpack.c.b16 %v5812, %v5808
        %v5917 = vpack.c.b16 %v5813, %v5809
        %v5918 = vpack.c.b16 %v5814, %v5810
        %v5919 = vpack.c.b16 %v5815, %v5811
        %v5920 = vpack.c.b16 %v5820, %v5816
        %v5921 = vpack.c.b16 %v5821, %v5817
        %v5922 = vpack.c.b16 %v5822, %v5818
        %v5923 = vpack.c.b16 %v5823, %v5819
        %v5924 = vpack.c.b16 %v5828, %v5824
        %v5925 = vpack.c.b16 %v5829, %v5825
        %v5926 = vpack.c.b16 %v5830, %v5826
        %v5927 = vpack.c.b16 %v5831, %v5827
        %v5928 = vpack.c.b16 %v5836, %v5832
        %v5929 = vpack.c.b16 %v5837, %v5833
        %v5930 = vpack.c.b16 %v5838, %v5834
        %v5931 = vpack.c.b16 %v5839, %v5835
        %v5932 = vpack.c.b16 %v5844, %v5840
        %v5933 = vpack.c.b16 %v5845, %v5841
        %v5934 = vpack.c.b16 %v5846, %v5842
        %v5935 = vpack.c.b16 %v5847, %v5843
        %v5936 = vpack.c.b16 %v5852, %v5848
        %v5937 = vpack.c.b16 %v5853, %v5849
        %v5938 = vpack.c.b16 %v5854, %v5850
        %v5939 = vpack.c.b16 %v5855, %v5851
        %v5940 = vpack.c.b16 %v5860, %v5856
        %v5941 = vpack.c.b16 %v5861, %v5857
        %v5942 = vpack.c.b16 %v5862, %v5858
        %v5943 = vpack.c.b16 %v5863, %v5859
        %v5944 = vpack.c.b16 %v5868, %v5864
        %v5945 = vpack.c.b16 %v5869, %v5865
        %v5946 = vpack.c.b16 %v5870, %v5866
        %v5947 = vpack.c.b16 %v5871, %v5867
        %v5948 = vpack.c.b16 %v5876, %v5872
        %v5949 = vpack.c.b16 %v5877, %v5873
        %v5950 = vpack.c.b16 %v5878, %v5874
        %v5951 = vpack.c.b16 %v5879, %v5875
        %v5952 = vpack.c.b16 %v5884, %v5880
        %v5953 = vpack.c.b16 %v5885, %v5881
        %v5954 = vpack.c.b16 %v5886, %v5882
        %v5955 = vpack.c.b16 %v5887, %v5883
        %v5956 = vpack.c.b16 %v5892, %v5888
        %v5957 = vpack.c.b16 %v5893, %v5889
        %v5958 = vpack.c.b16 %v5894, %v5890
        %v5959 = vpack.c.b16 %v5895, %v5891
        %6024 = vmatpush.bf16.msra.mxu0 %v5924
        %6025 = vmatpush.bf16.msra.mxu0 %v5920
        %6026 = vmatpush.bf16.msra.mxu0 %v5916
        %6027 = vmatpush.bf16.msra.mxu0 %v5912
        %6028 = vmatpush.bf16.msra.mxu0 %v5908
        %6029 = vmatpush.bf16.msra.mxu0 %v5904
        %6030 = vmatpush.bf16.msra.mxu0 %v5900
        %6031 = vmatpush.bf16.msra.mxu0 %v5896
        %6032 = vmatmul.bf16.gmra.mxu0 %v5688
        %v6033 = vpop.f32.mrf.mxu0
        %v6034 = vadd.f32 0.0, %v6033
        %v6035 = vpop.f32.mrf.mxu0
        %v6036 = vadd.f32 0.0, %v6035
        %6037 = vmatmul.bf16.gmra.mxu0 %v5690
        %v6038 = vpop.f32.mrf.mxu0
        %v6039 = vadd.f32 0.0, %v6038
        %v6040 = vpop.f32.mrf.mxu0
        %v6041 = vadd.f32 0.0, %v6040
        %6042 = vmatmul.bf16.gmra.mxu0 %v5692
        %v6043 = vpop.f32.mrf.mxu0
        %v6044 = vadd.f32 0.0, %v6043
        %v6045 = vpop.f32.mrf.mxu0
        %v6046 = vadd.f32 0.0, %v6045
        %6047 = vmatmul.bf16.gmra.mxu0 %v5694
        %v6048 = vpop.f32.mrf.mxu0
        %v6049 = vadd.f32 0.0, %v6048
        %v6050 = vpop.f32.mrf.mxu0
        %v6051 = vadd.f32 0.0, %v6050
        %6052 = vdwg.mxu0
        %6053 = vmatpush.bf16.msra.mxu0 %v5956
        %6054 = vmatpush.bf16.msra.mxu0 %v5952
        %6055 = vmatpush.bf16.msra.mxu0 %v5948
        %6056 = vmatpush.bf16.msra.mxu0 %v5944
        %6057 = vmatpush.bf16.msra.mxu0 %v5940
        %6058 = vmatpush.bf16.msra.mxu0 %v5936
        %6059 = vmatpush.bf16.msra.mxu0 %v5932
        %6060 = vmatpush.bf16.msra.mxu0 %v5928
        %6061 = vmatmul.bf16.gmra.mxu0 %v5689
        %v6062 = vpop.f32.mrf.mxu0
        %v6063 = vadd.f32 %v6034, %v6062
        %v6064 = vpop.f32.mrf.mxu0
        %v6065 = vadd.f32 %v6036, %v6064
        %6066 = vmatmul.bf16.gmra.mxu0 %v5691
        %v6067 = vpop.f32.mrf.mxu0
        %v6068 = vadd.f32 %v6039, %v6067
        %v6069 = vpop.f32.mrf.mxu0
        %v6070 = vadd.f32 %v6041, %v6069
        %6071 = vmatmul.bf16.gmra.mxu0 %v5693
        %v6072 = vpop.f32.mrf.mxu0
        %v6073 = vadd.f32 %v6044, %v6072
        %v6074 = vpop.f32.mrf.mxu0
        %v6075 = vadd.f32 %v6046, %v6074
        %6076 = vmatmul.bf16.gmra.mxu0 %v5695
        %v6077 = vpop.f32.mrf.mxu0
        %v6078 = vadd.f32 %v6049, %v6077
        %v6079 = vpop.f32.mrf.mxu0
        %v6080 = vadd.f32 %v6051, %v6079
        %6081 = vdwg.mxu0
        %6082 = vmatpush.bf16.msra.mxu0 %v5925
        %6083 = vmatpush.bf16.msra.mxu0 %v5921
        %6084 = vmatpush.bf16.msra.mxu0 %v5917
        %6085 = vmatpush.bf16.msra.mxu0 %v5913
        %6086 = vmatpush.bf16.msra.mxu0 %v5909
        %6087 = vmatpush.bf16.msra.mxu0 %v5905
        %6088 = vmatpush.bf16.msra.mxu0 %v5901
        %6089 = vmatpush.bf16.msra.mxu0 %v5897
        %6090 = vmatmul.bf16.gmra.mxu0 %v5688
        %v6091 = vpop.f32.mrf.mxu0
        %v6092 = vadd.f32 0.0, %v6091
        %v6093 = vpop.f32.mrf.mxu0
        %v6094 = vadd.f32 0.0, %v6093
        %6095 = vmatmul.bf16.gmra.mxu0 %v5690
        %v6096 = vpop.f32.mrf.mxu0
        %v6097 = vadd.f32 0.0, %v6096
        %v6098 = vpop.f32.mrf.mxu0
        %v6099 = vadd.f32 0.0, %v6098
        %6100 = vmatmul.bf16.gmra.mxu0 %v5692
        %v6101 = vpop.f32.mrf.mxu0
        %v6102 = vadd.f32 0.0, %v6101
        %v6103 = vpop.f32.mrf.mxu0
        %v6104 = vadd.f32 0.0, %v6103
        %6105 = vmatmul.bf16.gmra.mxu0 %v5694
        %v6106 = vpop.f32.mrf.mxu0
        %v6107 = vadd.f32 0.0, %v6106
        %v6108 = vpop.f32.mrf.mxu0
        %v6109 = vadd.f32 0.0, %v6108
        %6110 = vdwg.mxu0
        %6111 = vmatpush.bf16.msra.mxu0 %v5957
        %6112 = vmatpush.bf16.msra.mxu0 %v5953
        %6113 = vmatpush.bf16.msra.mxu0 %v5949
        %6114 = vmatpush.bf16.msra.mxu0 %v5945
        %6115 = vmatpush.bf16.msra.mxu0 %v5941
        %6116 = vmatpush.bf16.msra.mxu0 %v5937
        %6117 = vmatpush.bf16.msra.mxu0 %v5933
        %6118 = vmatpush.bf16.msra.mxu0 %v5929
        %6119 = vmatmul.bf16.gmra.mxu0 %v5689
        %v6120 = vpop.f32.mrf.mxu0
        %v6121 = vadd.f32 %v6092, %v6120
        %v6122 = vpop.f32.mrf.mxu0
        %v6123 = vadd.f32 %v6094, %v6122
        %6124 = vmatmul.bf16.gmra.mxu0 %v5691
        %v6125 = vpop.f32.mrf.mxu0
        %v6126 = vadd.f32 %v6097, %v6125
        %v6127 = vpop.f32.mrf.mxu0
        %v6128 = vadd.f32 %v6099, %v6127
        %6129 = vmatmul.bf16.gmra.mxu0 %v5693
        %v6130 = vpop.f32.mrf.mxu0
        %v6131 = vadd.f32 %v6102, %v6130
        %v6132 = vpop.f32.mrf.mxu0
        %v6133 = vadd.f32 %v6104, %v6132
        %6134 = vmatmul.bf16.gmra.mxu0 %v5695
        %v6135 = vpop.f32.mrf.mxu0
        %v6136 = vadd.f32 %v6107, %v6135
        %v6137 = vpop.f32.mrf.mxu0
        %v6138 = vadd.f32 %v6109, %v6137
        %6139 = vdwg.mxu0
        %6140 = vmatpush.bf16.msra.mxu0 %v5926
        %6141 = vmatpush.bf16.msra.mxu0 %v5922
        %6142 = vmatpush.bf16.msra.mxu0 %v5918
        %6143 = vmatpush.bf16.msra.mxu0 %v5914
        %6144 = vmatpush.bf16.msra.mxu0 %v5910
        %6145 = vmatpush.bf16.msra.mxu0 %v5906
        %6146 = vmatpush.bf16.msra.mxu0 %v5902
        %6147 = vmatpush.bf16.msra.mxu0 %v5898
        %6148 = vmatmul.bf16.gmra.mxu0 %v5688
        %v6149 = vpop.f32.mrf.mxu0
        %v6150 = vadd.f32 0.0, %v6149
        %v6151 = vpop.f32.mrf.mxu0
        %v6152 = vadd.f32 0.0, %v6151
        %6153 = vmatmul.bf16.gmra.mxu0 %v5690
        %v6154 = vpop.f32.mrf.mxu0
        %v6155 = vadd.f32 0.0, %v6154
        %v6156 = vpop.f32.mrf.mxu0
        %v6157 = vadd.f32 0.0, %v6156
        %6158 = vmatmul.bf16.gmra.mxu0 %v5692
        %v6159 = vpop.f32.mrf.mxu0
        %v6160 = vadd.f32 0.0, %v6159
        %v6161 = vpop.f32.mrf.mxu0
        %v6162 = vadd.f32 0.0, %v6161
        %6163 = vmatmul.bf16.gmra.mxu0 %v5694
        %v6164 = vpop.f32.mrf.mxu0
        %v6165 = vadd.f32 0.0, %v6164
        %v6166 = vpop.f32.mrf.mxu0
        %v6167 = vadd.f32 0.0, %v6166
        %6168 = vdwg.mxu0
        %6169 = vmatpush.bf16.msra.mxu0 %v5958
        %6170 = vmatpush.bf16.msra.mxu0 %v5954
        %6171 = vmatpush.bf16.msra.mxu0 %v5950
        %6172 = vmatpush.bf16.msra.mxu0 %v5946
        %6173 = vmatpush.bf16.msra.mxu0 %v5942
        %6174 = vmatpush.bf16.msra.mxu0 %v5938
        %6175 = vmatpush.bf16.msra.mxu0 %v5934
        %6176 = vmatpush.bf16.msra.mxu0 %v5930
        %6177 = vmatmul.bf16.gmra.mxu0 %v5689
        %v6178 = vpop.f32.mrf.mxu0
        %v6179 = vadd.f32 %v6150, %v6178
        %v6180 = vpop.f32.mrf.mxu0
        %v6181 = vadd.f32 %v6152, %v6180
        %6182 = vmatmul.bf16.gmra.mxu0 %v5691
        %v6183 = vpop.f32.mrf.mxu0
        %v6184 = vadd.f32 %v6155, %v6183
        %v6185 = vpop.f32.mrf.mxu0
        %v6186 = vadd.f32 %v6157, %v6185
        %6187 = vmatmul.bf16.gmra.mxu0 %v5693
        %v6188 = vpop.f32.mrf.mxu0
        %v6189 = vadd.f32 %v6160, %v6188
        %v6190 = vpop.f32.mrf.mxu0
        %v6191 = vadd.f32 %v6162, %v6190
        %6192 = vmatmul.bf16.gmra.mxu0 %v5695
        %v6193 = vpop.f32.mrf.mxu0
        %v6194 = vadd.f32 %v6165, %v6193
        %v6195 = vpop.f32.mrf.mxu0
        %v6196 = vadd.f32 %v6167, %v6195
        %6197 = vdwg.mxu0
        %6198 = vmatpush.bf16.msra.mxu0 %v5927
        %6199 = vmatpush.bf16.msra.mxu0 %v5923
        %6200 = vmatpush.bf16.msra.mxu0 %v5919
        %6201 = vmatpush.bf16.msra.mxu0 %v5915
        %6202 = vmatpush.bf16.msra.mxu0 %v5911
        %6203 = vmatpush.bf16.msra.mxu0 %v5907
        %6204 = vmatpush.bf16.msra.mxu0 %v5903
        %6205 = vmatpush.bf16.msra.mxu0 %v5899
        %6206 = vmatmul.bf16.gmra.mxu0 %v5688
        %v6207 = vpop.f32.mrf.mxu0
        %v6208 = vadd.f32 0.0, %v6207
        %v6209 = vpop.f32.mrf.mxu0
        %v6210 = vadd.f32 0.0, %v6209
        %6211 = vmatmul.bf16.gmra.mxu0 %v5690
        %v6212 = vpop.f32.mrf.mxu0
        %v6213 = vadd.f32 0.0, %v6212
        %v6214 = vpop.f32.mrf.mxu0
        %v6215 = vadd.f32 0.0, %v6214
        %6216 = vmatmul.bf16.gmra.mxu0 %v5692
        %v6217 = vpop.f32.mrf.mxu0
        %v6218 = vadd.f32 0.0, %v6217
        %v6219 = vpop.f32.mrf.mxu0
        %v6220 = vadd.f32 0.0, %v6219
        %6221 = vmatmul.bf16.gmra.mxu0 %v5694
        %v6222 = vpop.f32.mrf.mxu0
        %v6223 = vadd.f32 0.0, %v6222
        %v6224 = vpop.f32.mrf.mxu0
        %v6225 = vadd.f32 0.0, %v6224
        %6226 = vdwg.mxu0
        %6227 = vmatpush.bf16.msra.mxu0 %v5959
        %6228 = vmatpush.bf16.msra.mxu0 %v5955
        %6229 = vmatpush.bf16.msra.mxu0 %v5951
        %6230 = vmatpush.bf16.msra.mxu0 %v5947
        %6231 = vmatpush.bf16.msra.mxu0 %v5943
        %6232 = vmatpush.bf16.msra.mxu0 %v5939
        %6233 = vmatpush.bf16.msra.mxu0 %v5935
        %6234 = vmatpush.bf16.msra.mxu0 %v5931
        %6235 = vmatmul.bf16.gmra.mxu0 %v5689
        %v6236 = vpop.f32.mrf.mxu0
        %v6237 = vadd.f32 %v6208, %v6236
        %v6238 = vpop.f32.mrf.mxu0
        %v6239 = vadd.f32 %v6210, %v6238
        %6240 = vmatmul.bf16.gmra.mxu0 %v5691
        %v6241 = vpop.f32.mrf.mxu0
        %v6242 = vadd.f32 %v6213, %v6241
        %v6243 = vpop.f32.mrf.mxu0
        %v6244 = vadd.f32 %v6215, %v6243
        %6245 = vmatmul.bf16.gmra.mxu0 %v5693
        %v6246 = vpop.f32.mrf.mxu0
        %v6247 = vadd.f32 %v6218, %v6246
        %v6248 = vpop.f32.mrf.mxu0
        %v6249 = vadd.f32 %v6220, %v6248
        %6250 = vmatmul.bf16.gmra.mxu0 %v5695
        %v6251 = vpop.f32.mrf.mxu0
        %v6252 = vadd.f32 %v6223, %v6251
        %v6253 = vpop.f32.mrf.mxu0
        %v6254 = vadd.f32 %v6225, %v6253
        %6255 = vdwg.mxu0
        %v6256 = vadd.f32 %v1918, %v6063
        %v6257 = vadd.f32 %v2007, %v6121
        %v6258 = vadd.f32 %v2096, %v6179
        %v6259 = vadd.f32 %v2185, %v6237
        %v6260 = vadd.f32 %v1920, %v6065
        %v6261 = vadd.f32 %v2009, %v6123
        %v6262 = vadd.f32 %v2098, %v6181
        %v6263 = vadd.f32 %v2187, %v6239
        %v6264 = vadd.f32 %v1923, %v6068
        %v6265 = vadd.f32 %v2012, %v6126
        %v6266 = vadd.f32 %v2101, %v6184
        %v6267 = vadd.f32 %v2190, %v6242
        %v6268 = vadd.f32 %v1925, %v6070
        %v6269 = vadd.f32 %v2014, %v6128
        %v6270 = vadd.f32 %v2103, %v6186
        %v6271 = vadd.f32 %v2192, %v6244
        %v6272 = vadd.f32 %v1928, %v6073
        %v6273 = vadd.f32 %v2017, %v6131
        %v6274 = vadd.f32 %v2106, %v6189
        %v6275 = vadd.f32 %v2195, %v6247
        %v6276 = vadd.f32 %v1930, %v6075
        %v6277 = vadd.f32 %v2019, %v6133
        %v6278 = vadd.f32 %v2108, %v6191
        %v6279 = vadd.f32 %v2197, %v6249
        %v6280 = vadd.f32 %v1933, %v6078
        %v6281 = vadd.f32 %v2022, %v6136
        %v6282 = vadd.f32 %v2111, %v6194
        %v6283 = vadd.f32 %v2200, %v6252
        %v6284 = vadd.f32 %v1935, %v6080
        %v6285 = vadd.f32 %v2024, %v6138
        %v6286 = vadd.f32 %v2113, %v6196
        %v6287 = vadd.f32 %v2202, %v6254
        %v6288 = vld [vmem:[%s5 + $0x400] sm:$0xff]
        %v6289 = vld [vmem:[%s5 + $0x408] sm:$0xff]
        %v6290 = vld [vmem:[%s5 + $0x410] sm:$0xff]
        %v6291 = vld [vmem:[%s5 + $0x418] sm:$0xff]
        %v6292 = vld [vmem:[%s5 + $0x420] sm:$0xff]
        %v6293 = vld [vmem:[%s5 + $0x428] sm:$0xff]
        %v6294 = vld [vmem:[%s5 + $0x430] sm:$0xff]
        %v6295 = vld [vmem:[%s5 + $0x438] sm:$0xff]
        %v6296 = vld [vmem:[%s5 + $0x440] sm:$0xff]
        %v6297 = vld [vmem:[%s5 + $0x448] sm:$0xff]
        %v6298 = vld [vmem:[%s5 + $0x450] sm:$0xff]
        %v6299 = vld [vmem:[%s5 + $0x458] sm:$0xff]
        %v6300 = vld [vmem:[%s5 + $0x460] sm:$0xff]
        %v6301 = vld [vmem:[%s5 + $0x468] sm:$0xff]
        %v6302 = vld [vmem:[%s5 + $0x470] sm:$0xff]
        %v6303 = vld [vmem:[%s5 + $0x478] sm:$0xff]
        %v6304 = vld [vmem:[%s5 + $0x480] sm:$0xff]
        %v6305 = vld [vmem:[%s5 + $0x488] sm:$0xff]
        %v6306 = vld [vmem:[%s5 + $0x490] sm:$0xff]
        %v6307 = vld [vmem:[%s5 + $0x498] sm:$0xff]
        %v6308 = vld [vmem:[%s5 + $0x4a0] sm:$0xff]
        %v6309 = vld [vmem:[%s5 + $0x4a8] sm:$0xff]
        %v6310 = vld [vmem:[%s5 + $0x4b0] sm:$0xff]
        %v6311 = vld [vmem:[%s5 + $0x4b8] sm:$0xff]
        %v6312 = vld [vmem:[%s5 + $0x4c0] sm:$0xff]
        %v6313 = vld [vmem:[%s5 + $0x4c8] sm:$0xff]
        %v6314 = vld [vmem:[%s5 + $0x4d0] sm:$0xff]
        %v6315 = vld [vmem:[%s5 + $0x4d8] sm:$0xff]
        %v6316 = vld [vmem:[%s5 + $0x4e0] sm:$0xff]
        %v6317 = vld [vmem:[%s5 + $0x4e8] sm:$0xff]
        %v6318 = vld [vmem:[%s5 + $0x4f0] sm:$0xff]
        %v6319 = vld [vmem:[%s5 + $0x4f8] sm:$0xff]
        %v6352 = vunpack.c.l.b16 %v6288
        %v6353 = vunpack.c.h.b16 %v6288
        %v6354 = vunpack.c.l.b16 %v6289
        %v6355 = vunpack.c.h.b16 %v6289
        %v6356 = vunpack.c.l.b16 %v6290
        %v6357 = vunpack.c.h.b16 %v6290
        %v6358 = vunpack.c.l.b16 %v6291
        %v6359 = vunpack.c.h.b16 %v6291
        %v6360 = vunpack.c.l.b16 %v6292
        %v6361 = vunpack.c.h.b16 %v6292
        %v6362 = vunpack.c.l.b16 %v6293
        %v6363 = vunpack.c.h.b16 %v6293
        %v6364 = vunpack.c.l.b16 %v6294
        %v6365 = vunpack.c.h.b16 %v6294
        %v6366 = vunpack.c.l.b16 %v6295
        %v6367 = vunpack.c.h.b16 %v6295
        %v6368 = vunpack.c.l.b16 %v6296
        %v6369 = vunpack.c.h.b16 %v6296
        %v6370 = vunpack.c.l.b16 %v6297
        %v6371 = vunpack.c.h.b16 %v6297
        %v6372 = vunpack.c.l.b16 %v6298
        %v6373 = vunpack.c.h.b16 %v6298
        %v6374 = vunpack.c.l.b16 %v6299
        %v6375 = vunpack.c.h.b16 %v6299
        %v6376 = vunpack.c.l.b16 %v6300
        %v6377 = vunpack.c.h.b16 %v6300
        %v6378 = vunpack.c.l.b16 %v6301
        %v6379 = vunpack.c.h.b16 %v6301
        %v6380 = vunpack.c.l.b16 %v6302
        %v6381 = vunpack.c.h.b16 %v6302
        %v6382 = vunpack.c.l.b16 %v6303
        %v6383 = vunpack.c.h.b16 %v6303
        %v6384 = vunpack.c.l.b16 %v6304
        %v6385 = vunpack.c.h.b16 %v6304
        %v6386 = vunpack.c.l.b16 %v6305
        %v6387 = vunpack.c.h.b16 %v6305
        %v6388 = vunpack.c.l.b16 %v6306
        %v6389 = vunpack.c.h.b16 %v6306
        %v6390 = vunpack.c.l.b16 %v6307
        %v6391 = vunpack.c.h.b16 %v6307
        %v6392 = vunpack.c.l.b16 %v6308
        %v6393 = vunpack.c.h.b16 %v6308
        %v6394 = vunpack.c.l.b16 %v6309
        %v6395 = vunpack.c.h.b16 %v6309
        %v6396 = vunpack.c.l.b16 %v6310
        %v6397 = vunpack.c.h.b16 %v6310
        %v6398 = vunpack.c.l.b16 %v6311
        %v6399 = vunpack.c.h.b16 %v6311
        %v6400 = vunpack.c.l.b16 %v6312
        %v6401 = vunpack.c.h.b16 %v6312
        %v6402 = vunpack.c.l.b16 %v6313
        %v6403 = vunpack.c.h.b16 %v6313
        %v6404 = vunpack.c.l.b16 %v6314
        %v6405 = vunpack.c.h.b16 %v6314
        %v6406 = vunpack.c.l.b16 %v6315
        %v6407 = vunpack.c.h.b16 %v6315
        %v6408 = vunpack.c.l.b16 %v6316
        %v6409 = vunpack.c.h.b16 %v6316
        %v6410 = vunpack.c.l.b16 %v6317
        %v6411 = vunpack.c.h.b16 %v6317
        %v6412 = vunpack.c.l.b16 %v6318
        %v6413 = vunpack.c.h.b16 %v6318
        %v6414 = vunpack.c.l.b16 %v6319
        %v6415 = vunpack.c.h.b16 %v6319
        %v6416 = vpack.c.b16 %v6356, %v6352
        %v6417 = vpack.c.b16 %v6357, %v6353
        %v6418 = vpack.c.b16 %v6358, %v6354
        %v6419 = vpack.c.b16 %v6359, %v6355
        %v6420 = vpack.c.b16 %v6364, %v6360
        %v6421 = vpack.c.b16 %v6365, %v6361
        %v6422 = vpack.c.b16 %v6366, %v6362
        %v6423 = vpack.c.b16 %v6367, %v6363
        %v6424 = vpack.c.b16 %v6372, %v6368
        %v6425 = vpack.c.b16 %v6373, %v6369
        %v6426 = vpack.c.b16 %v6374, %v6370
        %v6427 = vpack.c.b16 %v6375, %v6371
        %v6428 = vpack.c.b16 %v6380, %v6376
        %v6429 = vpack.c.b16 %v6381, %v6377
        %v6430 = vpack.c.b16 %v6382, %v6378
        %v6431 = vpack.c.b16 %v6383, %v6379
        %v6432 = vpack.c.b16 %v6388, %v6384
        %v6433 = vpack.c.b16 %v6389, %v6385
        %v6434 = vpack.c.b16 %v6390, %v6386
        %v6435 = vpack.c.b16 %v6391, %v6387
        %v6436 = vpack.c.b16 %v6396, %v6392
        %v6437 = vpack.c.b16 %v6397, %v6393
        %v6438 = vpack.c.b16 %v6398, %v6394
        %v6439 = vpack.c.b16 %v6399, %v6395
        %v6440 = vpack.c.b16 %v6404, %v6400
        %v6441 = vpack.c.b16 %v6405, %v6401
        %v6442 = vpack.c.b16 %v6406, %v6402
        %v6443 = vpack.c.b16 %v6407, %v6403
        %v6444 = vpack.c.b16 %v6412, %v6408
        %v6445 = vpack.c.b16 %v6413, %v6409
        %v6446 = vpack.c.b16 %v6414, %v6410
        %v6447 = vpack.c.b16 %v6415, %v6411
        %6480 = vmatpush.bf16.msra.mxu0 %v6444
        %6481 = vmatpush.bf16.msra.mxu0 %v6440
        %6482 = vmatpush.bf16.msra.mxu0 %v6436
        %6483 = vmatpush.bf16.msra.mxu0 %v6432
        %6484 = vmatpush.bf16.msra.mxu0 %v6428
        %6485 = vmatpush.bf16.msra.mxu0 %v6424
        %6486 = vmatpush.bf16.msra.mxu0 %v6420
        %6487 = vmatpush.bf16.msra.mxu0 %v6416
        %6488 = vmatmul.bf16.gmra.mxu0 %v5341
        %v6489 = vpop.f32.mrf.mxu0
        %v6490 = vadd.f32 0.0, %v6489
        %v6491 = vpop.f32.mrf.mxu0
        %v6492 = vadd.f32 0.0, %v6491
        %6493 = vmatmul.bf16.gmra.mxu0 %v5342
        %v6494 = vpop.f32.mrf.mxu0
        %v6495 = vadd.f32 0.0, %v6494
        %v6496 = vpop.f32.mrf.mxu0
        %v6497 = vadd.f32 0.0, %v6496
        %6498 = vmatmul.bf16.gmra.mxu0 %v5343
        %v6499 = vpop.f32.mrf.mxu0
        %v6500 = vadd.f32 0.0, %v6499
        %v6501 = vpop.f32.mrf.mxu0
        %v6502 = vadd.f32 0.0, %v6501
        %6503 = vmatmul.bf16.gmra.mxu0 %v5344
        %v6504 = vpop.f32.mrf.mxu0
        %v6505 = vadd.f32 0.0, %v6504
        %v6506 = vpop.f32.mrf.mxu0
        %v6507 = vadd.f32 0.0, %v6506
        %6508 = vdwg.mxu0
        %6509 = vmatpush.bf16.msra.mxu0 %v6445
        %6510 = vmatpush.bf16.msra.mxu0 %v6441
        %6511 = vmatpush.bf16.msra.mxu0 %v6437
        %6512 = vmatpush.bf16.msra.mxu0 %v6433
        %6513 = vmatpush.bf16.msra.mxu0 %v6429
        %6514 = vmatpush.bf16.msra.mxu0 %v6425
        %6515 = vmatpush.bf16.msra.mxu0 %v6421
        %6516 = vmatpush.bf16.msra.mxu0 %v6417
        %6517 = vmatmul.bf16.gmra.mxu0 %v5341
        %v6518 = vpop.f32.mrf.mxu0
        %v6519 = vadd.f32 0.0, %v6518
        %v6520 = vpop.f32.mrf.mxu0
        %v6521 = vadd.f32 0.0, %v6520
        %6522 = vmatmul.bf16.gmra.mxu0 %v5342
        %v6523 = vpop.f32.mrf.mxu0
        %v6524 = vadd.f32 0.0, %v6523
        %v6525 = vpop.f32.mrf.mxu0
        %v6526 = vadd.f32 0.0, %v6525
        %6527 = vmatmul.bf16.gmra.mxu0 %v5343
        %v6528 = vpop.f32.mrf.mxu0
        %v6529 = vadd.f32 0.0, %v6528
        %v6530 = vpop.f32.mrf.mxu0
        %v6531 = vadd.f32 0.0, %v6530
        %6532 = vmatmul.bf16.gmra.mxu0 %v5344
        %v6533 = vpop.f32.mrf.mxu0
        %v6534 = vadd.f32 0.0, %v6533
        %v6535 = vpop.f32.mrf.mxu0
        %v6536 = vadd.f32 0.0, %v6535
        %6537 = vdwg.mxu0
        %6538 = vmatpush.bf16.msra.mxu0 %v6446
        %6539 = vmatpush.bf16.msra.mxu0 %v6442
        %6540 = vmatpush.bf16.msra.mxu0 %v6438
        %6541 = vmatpush.bf16.msra.mxu0 %v6434
        %6542 = vmatpush.bf16.msra.mxu0 %v6430
        %6543 = vmatpush.bf16.msra.mxu0 %v6426
        %6544 = vmatpush.bf16.msra.mxu0 %v6422
        %6545 = vmatpush.bf16.msra.mxu0 %v6418
        %6546 = vmatmul.bf16.gmra.mxu0 %v5341
        %v6547 = vpop.f32.mrf.mxu0
        %v6548 = vadd.f32 0.0, %v6547
        %v6549 = vpop.f32.mrf.mxu0
        %v6550 = vadd.f32 0.0, %v6549
        %6551 = vmatmul.bf16.gmra.mxu0 %v5342
        %v6552 = vpop.f32.mrf.mxu0
        %v6553 = vadd.f32 0.0, %v6552
        %v6554 = vpop.f32.mrf.mxu0
        %v6555 = vadd.f32 0.0, %v6554
        %6556 = vmatmul.bf16.gmra.mxu0 %v5343
        %v6557 = vpop.f32.mrf.mxu0
        %v6558 = vadd.f32 0.0, %v6557
        %v6559 = vpop.f32.mrf.mxu0
        %v6560 = vadd.f32 0.0, %v6559
        %6561 = vmatmul.bf16.gmra.mxu0 %v5344
        %v6562 = vpop.f32.mrf.mxu0
        %v6563 = vadd.f32 0.0, %v6562
        %v6564 = vpop.f32.mrf.mxu0
        %v6565 = vadd.f32 0.0, %v6564
        %6566 = vdwg.mxu0
        %6567 = vmatpush.bf16.msra.mxu0 %v6447
        %6568 = vmatpush.bf16.msra.mxu0 %v6443
        %6569 = vmatpush.bf16.msra.mxu0 %v6439
        %6570 = vmatpush.bf16.msra.mxu0 %v6435
        %6571 = vmatpush.bf16.msra.mxu0 %v6431
        %6572 = vmatpush.bf16.msra.mxu0 %v6427
        %6573 = vmatpush.bf16.msra.mxu0 %v6423
        %6574 = vmatpush.bf16.msra.mxu0 %v6419
        %6575 = vmatmul.bf16.gmra.mxu0 %v5341
        %v6576 = vpop.f32.mrf.mxu0
        %v6577 = vadd.f32 0.0, %v6576
        %v6578 = vpop.f32.mrf.mxu0
        %v6579 = vadd.f32 0.0, %v6578
        %6580 = vmatmul.bf16.gmra.mxu0 %v5342
        %v6581 = vpop.f32.mrf.mxu0
        %v6582 = vadd.f32 0.0, %v6581
        %v6583 = vpop.f32.mrf.mxu0
        %v6584 = vadd.f32 0.0, %v6583
        %6585 = vmatmul.bf16.gmra.mxu0 %v5343
        %v6586 = vpop.f32.mrf.mxu0
        %v6587 = vadd.f32 0.0, %v6586
        %v6588 = vpop.f32.mrf.mxu0
        %v6589 = vadd.f32 0.0, %v6588
        %6590 = vmatmul.bf16.gmra.mxu0 %v5344
        %v6591 = vpop.f32.mrf.mxu0
        %v6592 = vadd.f32 0.0, %v6591
        %v6593 = vpop.f32.mrf.mxu0
        %v6594 = vadd.f32 0.0, %v6593
        %6595 = vdwg.mxu0
        %v6596 = vadd.f32 %v6256, %v6490
        %v6597 = vadd.f32 %v6257, %v6519
        %v6598 = vadd.f32 %v6258, %v6548
        %v6599 = vadd.f32 %v6259, %v6577
        %v6600 = vadd.f32 %v6260, %v6492
        %v6601 = vadd.f32 %v6261, %v6521
        %v6602 = vadd.f32 %v6262, %v6550
        %v6603 = vadd.f32 %v6263, %v6579
        %v6604 = vadd.f32 %v6264, %v6495
        %v6605 = vadd.f32 %v6265, %v6524
        %v6606 = vadd.f32 %v6266, %v6553
        %v6607 = vadd.f32 %v6267, %v6582
        %v6608 = vadd.f32 %v6268, %v6497
        %v6609 = vadd.f32 %v6269, %v6526
        %v6610 = vadd.f32 %v6270, %v6555
        %v6611 = vadd.f32 %v6271, %v6584
        %v6612 = vadd.f32 %v6272, %v6500
        %v6613 = vadd.f32 %v6273, %v6529
        %v6614 = vadd.f32 %v6274, %v6558
        %v6615 = vadd.f32 %v6275, %v6587
        %v6616 = vadd.f32 %v6276, %v6502
        %v6617 = vadd.f32 %v6277, %v6531
        %v6618 = vadd.f32 %v6278, %v6560
        %v6619 = vadd.f32 %v6279, %v6589
        %v6620 = vadd.f32 %v6280, %v6505
        %v6621 = vadd.f32 %v6281, %v6534
        %v6622 = vadd.f32 %v6282, %v6563
        %v6623 = vadd.f32 %v6283, %v6592
        %v6624 = vadd.f32 %v6284, %v6507
        %v6625 = vadd.f32 %v6285, %v6536
        %v6626 = vadd.f32 %v6286, %v6565
        %v6627 = vadd.f32 %v6287, %v6594
        %v6628 = vxor.u32 %v6596, 2147483648
        %v6629 = vxor.u32 %v6600, 2147483648
        %v6630 = vxor.u32 %v6604, 2147483648
        %v6631 = vxor.u32 %v6608, 2147483648
        %v6632 = vxor.u32 %v6612, 2147483648
        %v6633 = vxor.u32 %v6616, 2147483648
        %v6634 = vxor.u32 %v6620, 2147483648
        %v6635 = vxor.u32 %v6624, 2147483648
        %v6636 = vmul.f32 %v6628, 1.442695
        %v6637 = vpow.pop %v6636
        %v6638 = vmul.f32 %v6629, 1.442695
        %v6639 = vpow.pop %v6638
        %v6640 = vmul.f32 %v6630, 1.442695
        %v6641 = vpow.pop %v6640
        %v6642 = vmul.f32 %v6631, 1.442695
        %v6643 = vpow.pop %v6642
        %v6644 = vmul.f32 %v6632, 1.442695
        %v6645 = vpow.pop %v6644
        %v6646 = vmul.f32 %v6633, 1.442695
        %v6647 = vpow.pop %v6646
        %v6648 = vmul.f32 %v6634, 1.442695
        %v6649 = vpow.pop %v6648
        %v6650 = vmul.f32 %v6635, 1.442695
        %v6651 = vpow.pop %v6650
        %v6652 = vadd.f32 %v6637, 1.0
        %v6653 = vadd.f32 %v6639, 1.0
        %v6654 = vadd.f32 %v6641, 1.0
        %v6655 = vadd.f32 %v6643, 1.0
        %v6656 = vadd.f32 %v6645, 1.0
        %v6657 = vadd.f32 %v6647, 1.0
        %v6658 = vadd.f32 %v6649, 1.0
        %v6659 = vadd.f32 %v6651, 1.0
        %v6660 = vrcp.pop %v6652
        %v6661 = vmul.f32 %v6652, %v6660
        %v6662 = vsub.f32 1.0, %v6661
        %v6663 = vmul.f32 %v6660, %v6662
        %v6664 = vadd.f32 %v6660, %v6663
        %vm6665 = vweird.f32 %v6652
        %vm6666 = vweird.f32 %v6660
        %vm6667 = vmor %vm6665, %vm6666
        %v6668 = vsel %vm6667, %v6660, %v6664
        %v6669 = vand.u32 2147483647, %v6652
        %vm6670 = vcmp.eq.f32.partialorder %v6669, 8.507059e+37
        %v6671 = vand.u32 %v6652, 2147483648
        %v6672 = vor.u32 1.1754944e-38, %v6671
        %v6673 = vsel %vm6670, %v6672, %v6668
        %v6674 = vmul.f32 1.0, %v6673
        %v6675 = vrcp.pop %v6653
        %v6676 = vmul.f32 %v6653, %v6675
        %v6677 = vsub.f32 1.0, %v6676
        %v6678 = vmul.f32 %v6675, %v6677
        %v6679 = vadd.f32 %v6675, %v6678
        %vm6680 = vweird.f32 %v6653
        %vm6681 = vweird.f32 %v6675
        %vm6682 = vmor %vm6680, %vm6681
        %v6683 = vsel %vm6682, %v6675, %v6679
        %v6684 = vand.u32 2147483647, %v6653
        %vm6685 = vcmp.eq.f32.partialorder %v6684, 8.507059e+37
        %v6686 = vand.u32 %v6653, 2147483648
        %v6687 = vor.u32 1.1754944e-38, %v6686
        %v6688 = vsel %vm6685, %v6687, %v6683
        %v6689 = vmul.f32 1.0, %v6688
        %v6690 = vrcp.pop %v6654
        %v6691 = vmul.f32 %v6654, %v6690
        %v6692 = vsub.f32 1.0, %v6691
        %v6693 = vmul.f32 %v6690, %v6692
        %v6694 = vadd.f32 %v6690, %v6693
        %vm6695 = vweird.f32 %v6654
        %vm6696 = vweird.f32 %v6690
        %vm6697 = vmor %vm6695, %vm6696
        %v6698 = vsel %vm6697, %v6690, %v6694
        %v6699 = vand.u32 2147483647, %v6654
        %vm6700 = vcmp.eq.f32.partialorder %v6699, 8.507059e+37
        %v6701 = vand.u32 %v6654, 2147483648
        %v6702 = vor.u32 1.1754944e-38, %v6701
        %v6703 = vsel %vm6700, %v6702, %v6698
        %v6704 = vmul.f32 1.0, %v6703
        %v6705 = vrcp.pop %v6655
        %v6706 = vmul.f32 %v6655, %v6705
        %v6707 = vsub.f32 1.0, %v6706
        %v6708 = vmul.f32 %v6705, %v6707
        %v6709 = vadd.f32 %v6705, %v6708
        %vm6710 = vweird.f32 %v6655
        %vm6711 = vweird.f32 %v6705
        %vm6712 = vmor %vm6710, %vm6711
        %v6713 = vsel %vm6712, %v6705, %v6709
        %v6714 = vand.u32 2147483647, %v6655
        %vm6715 = vcmp.eq.f32.partialorder %v6714, 8.507059e+37
        %v6716 = vand.u32 %v6655, 2147483648
        %v6717 = vor.u32 1.1754944e-38, %v6716
        %v6718 = vsel %vm6715, %v6717, %v6713
        %v6719 = vmul.f32 1.0, %v6718
        %v6720 = vrcp.pop %v6656
        %v6721 = vmul.f32 %v6656, %v6720
        %v6722 = vsub.f32 1.0, %v6721
        %v6723 = vmul.f32 %v6720, %v6722
        %v6724 = vadd.f32 %v6720, %v6723
        %vm6725 = vweird.f32 %v6656
        %vm6726 = vweird.f32 %v6720
        %vm6727 = vmor %vm6725, %vm6726
        %v6728 = vsel %vm6727, %v6720, %v6724
        %v6729 = vand.u32 2147483647, %v6656
        %vm6730 = vcmp.eq.f32.partialorder %v6729, 8.507059e+37
        %v6731 = vand.u32 %v6656, 2147483648
        %v6732 = vor.u32 1.1754944e-38, %v6731
        %v6733 = vsel %vm6730, %v6732, %v6728
        %v6734 = vmul.f32 1.0, %v6733
        %v6735 = vrcp.pop %v6657
        %v6736 = vmul.f32 %v6657, %v6735
        %v6737 = vsub.f32 1.0, %v6736
        %v6738 = vmul.f32 %v6735, %v6737
        %v6739 = vadd.f32 %v6735, %v6738
        %vm6740 = vweird.f32 %v6657
        %vm6741 = vweird.f32 %v6735
        %vm6742 = vmor %vm6740, %vm6741
        %v6743 = vsel %vm6742, %v6735, %v6739
        %v6744 = vand.u32 2147483647, %v6657
        %vm6745 = vcmp.eq.f32.partialorder %v6744, 8.507059e+37
        %v6746 = vand.u32 %v6657, 2147483648
        %v6747 = vor.u32 1.1754944e-38, %v6746
        %v6748 = vsel %vm6745, %v6747, %v6743
        %v6749 = vmul.f32 1.0, %v6748
        %v6750 = vrcp.pop %v6658
        %v6751 = vmul.f32 %v6658, %v6750
        %v6752 = vsub.f32 1.0, %v6751
        %v6753 = vmul.f32 %v6750, %v6752
        %v6754 = vadd.f32 %v6750, %v6753
        %vm6755 = vweird.f32 %v6658
        %vm6756 = vweird.f32 %v6750
        %vm6757 = vmor %vm6755, %vm6756
        %v6758 = vsel %vm6757, %v6750, %v6754
        %v6759 = vand.u32 2147483647, %v6658
        %vm6760 = vcmp.eq.f32.partialorder %v6759, 8.507059e+37
        %v6761 = vand.u32 %v6658, 2147483648
        %v6762 = vor.u32 1.1754944e-38, %v6761
        %v6763 = vsel %vm6760, %v6762, %v6758
        %v6764 = vmul.f32 1.0, %v6763
        %v6765 = vrcp.pop %v6659
        %v6766 = vmul.f32 %v6659, %v6765
        %v6767 = vsub.f32 1.0, %v6766
        %v6768 = vmul.f32 %v6765, %v6767
        %v6769 = vadd.f32 %v6765, %v6768
        %vm6770 = vweird.f32 %v6659
        %vm6771 = vweird.f32 %v6765
        %vm6772 = vmor %vm6770, %vm6771
        %v6773 = vsel %vm6772, %v6765, %v6769
        %v6774 = vand.u32 2147483647, %v6659
        %vm6775 = vcmp.eq.f32.partialorder %v6774, 8.507059e+37
        %v6776 = vand.u32 %v6659, 2147483648
        %v6777 = vor.u32 1.1754944e-38, %v6776
        %v6778 = vsel %vm6775, %v6777, %v6773
        %v6779 = vmul.f32 1.0, %v6778
        %v6780 = vxor.u32 %v6597, 2147483648
        %v6781 = vxor.u32 %v6601, 2147483648
        %v6782 = vxor.u32 %v6605, 2147483648
        %v6783 = vxor.u32 %v6609, 2147483648
        %v6784 = vxor.u32 %v6613, 2147483648
        %v6785 = vxor.u32 %v6617, 2147483648
        %v6786 = vxor.u32 %v6621, 2147483648
        %v6787 = vxor.u32 %v6625, 2147483648
        %v6788 = vmul.f32 %v6780, 1.442695
        %v6789 = vpow.pop %v6788
        %v6790 = vmul.f32 %v6781, 1.442695
        %v6791 = vpow.pop %v6790
        %v6792 = vmul.f32 %v6782, 1.442695
        %v6793 = vpow.pop %v6792
        %v6794 = vmul.f32 %v6783, 1.442695
        %v6795 = vpow.pop %v6794
        %v6796 = vmul.f32 %v6784, 1.442695
        %v6797 = vpow.pop %v6796
        %v6798 = vmul.f32 %v6785, 1.442695
        %v6799 = vpow.pop %v6798
        %v6800 = vmul.f32 %v6786, 1.442695
        %v6801 = vpow.pop %v6800
        %v6802 = vmul.f32 %v6787, 1.442695
        %v6803 = vpow.pop %v6802
        %v6804 = vadd.f32 %v6789, 1.0
        %v6805 = vadd.f32 %v6791, 1.0
        %v6806 = vadd.f32 %v6793, 1.0
        %v6807 = vadd.f32 %v6795, 1.0
        %v6808 = vadd.f32 %v6797, 1.0
        %v6809 = vadd.f32 %v6799, 1.0
        %v6810 = vadd.f32 %v6801, 1.0
        %v6811 = vadd.f32 %v6803, 1.0
        %v6812 = vrcp.pop %v6804
        %v6813 = vmul.f32 %v6804, %v6812
        %v6814 = vsub.f32 1.0, %v6813
        %v6815 = vmul.f32 %v6812, %v6814
        %v6816 = vadd.f32 %v6812, %v6815
        %vm6817 = vweird.f32 %v6804
        %vm6818 = vweird.f32 %v6812
        %vm6819 = vmor %vm6817, %vm6818
        %v6820 = vsel %vm6819, %v6812, %v6816
        %v6821 = vand.u32 2147483647, %v6804
        %vm6822 = vcmp.eq.f32.partialorder %v6821, 8.507059e+37
        %v6823 = vand.u32 %v6804, 2147483648
        %v6824 = vor.u32 1.1754944e-38, %v6823
        %v6825 = vsel %vm6822, %v6824, %v6820
        %v6826 = vmul.f32 1.0, %v6825
        %v6827 = vrcp.pop %v6805
        %v6828 = vmul.f32 %v6805, %v6827
        %v6829 = vsub.f32 1.0, %v6828
        %v6830 = vmul.f32 %v6827, %v6829
        %v6831 = vadd.f32 %v6827, %v6830
        %vm6832 = vweird.f32 %v6805
        %vm6833 = vweird.f32 %v6827
        %vm6834 = vmor %vm6832, %vm6833
        %v6835 = vsel %vm6834, %v6827, %v6831
        %v6836 = vand.u32 2147483647, %v6805
        %vm6837 = vcmp.eq.f32.partialorder %v6836, 8.507059e+37
        %v6838 = vand.u32 %v6805, 2147483648
        %v6839 = vor.u32 1.1754944e-38, %v6838
        %v6840 = vsel %vm6837, %v6839, %v6835
        %v6841 = vmul.f32 1.0, %v6840
        %v6842 = vrcp.pop %v6806
        %v6843 = vmul.f32 %v6806, %v6842
        %v6844 = vsub.f32 1.0, %v6843
        %v6845 = vmul.f32 %v6842, %v6844
        %v6846 = vadd.f32 %v6842, %v6845
        %vm6847 = vweird.f32 %v6806
        %vm6848 = vweird.f32 %v6842
        %vm6849 = vmor %vm6847, %vm6848
        %v6850 = vsel %vm6849, %v6842, %v6846
        %v6851 = vand.u32 2147483647, %v6806
        %vm6852 = vcmp.eq.f32.partialorder %v6851, 8.507059e+37
        %v6853 = vand.u32 %v6806, 2147483648
        %v6854 = vor.u32 1.1754944e-38, %v6853
        %v6855 = vsel %vm6852, %v6854, %v6850
        %v6856 = vmul.f32 1.0, %v6855
        %v6857 = vrcp.pop %v6807
        %v6858 = vmul.f32 %v6807, %v6857
        %v6859 = vsub.f32 1.0, %v6858
        %v6860 = vmul.f32 %v6857, %v6859
        %v6861 = vadd.f32 %v6857, %v6860
        %vm6862 = vweird.f32 %v6807
        %vm6863 = vweird.f32 %v6857
        %vm6864 = vmor %vm6862, %vm6863
        %v6865 = vsel %vm6864, %v6857, %v6861
        %v6866 = vand.u32 2147483647, %v6807
        %vm6867 = vcmp.eq.f32.partialorder %v6866, 8.507059e+37
        %v6868 = vand.u32 %v6807, 2147483648
        %v6869 = vor.u32 1.1754944e-38, %v6868
        %v6870 = vsel %vm6867, %v6869, %v6865
        %v6871 = vmul.f32 1.0, %v6870
        %v6872 = vrcp.pop %v6808
        %v6873 = vmul.f32 %v6808, %v6872
        %v6874 = vsub.f32 1.0, %v6873
        %v6875 = vmul.f32 %v6872, %v6874
        %v6876 = vadd.f32 %v6872, %v6875
        %vm6877 = vweird.f32 %v6808
        %vm6878 = vweird.f32 %v6872
        %vm6879 = vmor %vm6877, %vm6878
        %v6880 = vsel %vm6879, %v6872, %v6876
        %v6881 = vand.u32 2147483647, %v6808
        %vm6882 = vcmp.eq.f32.partialorder %v6881, 8.507059e+37
        %v6883 = vand.u32 %v6808, 2147483648
        %v6884 = vor.u32 1.1754944e-38, %v6883
        %v6885 = vsel %vm6882, %v6884, %v6880
        %v6886 = vmul.f32 1.0, %v6885
        %v6887 = vrcp.pop %v6809
        %v6888 = vmul.f32 %v6809, %v6887
        %v6889 = vsub.f32 1.0, %v6888
        %v6890 = vmul.f32 %v6887, %v6889
        %v6891 = vadd.f32 %v6887, %v6890
        %vm6892 = vweird.f32 %v6809
        %vm6893 = vweird.f32 %v6887
        %vm6894 = vmor %vm6892, %vm6893
        %v6895 = vsel %vm6894, %v6887, %v6891
        %v6896 = vand.u32 2147483647, %v6809
        %vm6897 = vcmp.eq.f32.partialorder %v6896, 8.507059e+37
        %v6898 = vand.u32 %v6809, 2147483648
        %v6899 = vor.u32 1.1754944e-38, %v6898
        %v6900 = vsel %vm6897, %v6899, %v6895
        %v6901 = vmul.f32 1.0, %v6900
        %v6902 = vrcp.pop %v6810
        %v6903 = vmul.f32 %v6810, %v6902
        %v6904 = vsub.f32 1.0, %v6903
        %v6905 = vmul.f32 %v6902, %v6904
        %v6906 = vadd.f32 %v6902, %v6905
        %vm6907 = vweird.f32 %v6810
        %vm6908 = vweird.f32 %v6902
        %vm6909 = vmor %vm6907, %vm6908
        %v6910 = vsel %vm6909, %v6902, %v6906
        %v6911 = vand.u32 2147483647, %v6810
        %vm6912 = vcmp.eq.f32.partialorder %v6911, 8.507059e+37
        %v6913 = vand.u32 %v6810, 2147483648
        %v6914 = vor.u32 1.1754944e-38, %v6913
        %v6915 = vsel %vm6912, %v6914, %v6910
        %v6916 = vmul.f32 1.0, %v6915
        %v6917 = vrcp.pop %v6811
        %v6918 = vmul.f32 %v6811, %v6917
        %v6919 = vsub.f32 1.0, %v6918
        %v6920 = vmul.f32 %v6917, %v6919
        %v6921 = vadd.f32 %v6917, %v6920
        %vm6922 = vweird.f32 %v6811
        %vm6923 = vweird.f32 %v6917
        %vm6924 = vmor %vm6922, %vm6923
        %v6925 = vsel %vm6924, %v6917, %v6921
        %v6926 = vand.u32 2147483647, %v6811
        %vm6927 = vcmp.eq.f32.partialorder %v6926, 8.507059e+37
        %v6928 = vand.u32 %v6811, 2147483648
        %v6929 = vor.u32 1.1754944e-38, %v6928
        %v6930 = vsel %vm6927, %v6929, %v6925
        %v6931 = vmul.f32 1.0, %v6930
        %v6932 = vxor.u32 %v6598, 2147483648
        %v6933 = vxor.u32 %v6602, 2147483648
        %v6934 = vxor.u32 %v6606, 2147483648
        %v6935 = vxor.u32 %v6610, 2147483648
        %v6936 = vxor.u32 %v6614, 2147483648
        %v6937 = vxor.u32 %v6618, 2147483648
        %v6938 = vxor.u32 %v6622, 2147483648
        %v6939 = vxor.u32 %v6626, 2147483648
        %v6940 = vmul.f32 %v6932, 1.442695
        %v6941 = vpow.pop %v6940
        %v6942 = vmul.f32 %v6933, 1.442695
        %v6943 = vpow.pop %v6942
        %v6944 = vmul.f32 %v6934, 1.442695
        %v6945 = vpow.pop %v6944
        %v6946 = vmul.f32 %v6935, 1.442695
        %v6947 = vpow.pop %v6946
        %v6948 = vmul.f32 %v6936, 1.442695
        %v6949 = vpow.pop %v6948
        %v6950 = vmul.f32 %v6937, 1.442695
        %v6951 = vpow.pop %v6950
        %v6952 = vmul.f32 %v6938, 1.442695
        %v6953 = vpow.pop %v6952
        %v6954 = vmul.f32 %v6939, 1.442695
        %v6955 = vpow.pop %v6954
        %v6956 = vadd.f32 %v6941, 1.0
        %v6957 = vadd.f32 %v6943, 1.0
        %v6958 = vadd.f32 %v6945, 1.0
        %v6959 = vadd.f32 %v6947, 1.0
        %v6960 = vadd.f32 %v6949, 1.0
        %v6961 = vadd.f32 %v6951, 1.0
        %v6962 = vadd.f32 %v6953, 1.0
        %v6963 = vadd.f32 %v6955, 1.0
        %v6964 = vrcp.pop %v6956
        %v6965 = vmul.f32 %v6956, %v6964
        %v6966 = vsub.f32 1.0, %v6965
        %v6967 = vmul.f32 %v6964, %v6966
        %v6968 = vadd.f32 %v6964, %v6967
        %vm6969 = vweird.f32 %v6956
        %vm6970 = vweird.f32 %v6964
        %vm6971 = vmor %vm6969, %vm6970
        %v6972 = vsel %vm6971, %v6964, %v6968
        %v6973 = vand.u32 2147483647, %v6956
        %vm6974 = vcmp.eq.f32.partialorder %v6973, 8.507059e+37
        %v6975 = vand.u32 %v6956, 2147483648
        %v6976 = vor.u32 1.1754944e-38, %v6975
        %v6977 = vsel %vm6974, %v6976, %v6972
        %v6978 = vmul.f32 1.0, %v6977
        %v6979 = vrcp.pop %v6957
        %v6980 = vmul.f32 %v6957, %v6979
        %v6981 = vsub.f32 1.0, %v6980
        %v6982 = vmul.f32 %v6979, %v6981
        %v6983 = vadd.f32 %v6979, %v6982
        %vm6984 = vweird.f32 %v6957
        %vm6985 = vweird.f32 %v6979
        %vm6986 = vmor %vm6984, %vm6985
        %v6987 = vsel %vm6986, %v6979, %v6983
        %v6988 = vand.u32 2147483647, %v6957
        %vm6989 = vcmp.eq.f32.partialorder %v6988, 8.507059e+37
        %v6990 = vand.u32 %v6957, 2147483648
        %v6991 = vor.u32 1.1754944e-38, %v6990
        %v6992 = vsel %vm6989, %v6991, %v6987
        %v6993 = vmul.f32 1.0, %v6992
        %v6994 = vrcp.pop %v6958
        %v6995 = vmul.f32 %v6958, %v6994
        %v6996 = vsub.f32 1.0, %v6995
        %v6997 = vmul.f32 %v6994, %v6996
        %v6998 = vadd.f32 %v6994, %v6997
        %vm6999 = vweird.f32 %v6958
        %vm7000 = vweird.f32 %v6994
        %vm7001 = vmor %vm6999, %vm7000
        %v7002 = vsel %vm7001, %v6994, %v6998
        %v7003 = vand.u32 2147483647, %v6958
        %vm7004 = vcmp.eq.f32.partialorder %v7003, 8.507059e+37
        %v7005 = vand.u32 %v6958, 2147483648
        %v7006 = vor.u32 1.1754944e-38, %v7005
        %v7007 = vsel %vm7004, %v7006, %v7002
        %v7008 = vmul.f32 1.0, %v7007
        %v7009 = vrcp.pop %v6959
        %v7010 = vmul.f32 %v6959, %v7009
        %v7011 = vsub.f32 1.0, %v7010
        %v7012 = vmul.f32 %v7009, %v7011
        %v7013 = vadd.f32 %v7009, %v7012
        %vm7014 = vweird.f32 %v6959
        %vm7015 = vweird.f32 %v7009
        %vm7016 = vmor %vm7014, %vm7015
        %v7017 = vsel %vm7016, %v7009, %v7013
        %v7018 = vand.u32 2147483647, %v6959
        %vm7019 = vcmp.eq.f32.partialorder %v7018, 8.507059e+37
        %v7020 = vand.u32 %v6959, 2147483648
        %v7021 = vor.u32 1.1754944e-38, %v7020
        %v7022 = vsel %vm7019, %v7021, %v7017
        %v7023 = vmul.f32 1.0, %v7022
        %v7024 = vrcp.pop %v6960
        %v7025 = vmul.f32 %v6960, %v7024
        %v7026 = vsub.f32 1.0, %v7025
        %v7027 = vmul.f32 %v7024, %v7026
        %v7028 = vadd.f32 %v7024, %v7027
        %vm7029 = vweird.f32 %v6960
        %vm7030 = vweird.f32 %v7024
        %vm7031 = vmor %vm7029, %vm7030
        %v7032 = vsel %vm7031, %v7024, %v7028
        %v7033 = vand.u32 2147483647, %v6960
        %vm7034 = vcmp.eq.f32.partialorder %v7033, 8.507059e+37
        %v7035 = vand.u32 %v6960, 2147483648
        %v7036 = vor.u32 1.1754944e-38, %v7035
        %v7037 = vsel %vm7034, %v7036, %v7032
        %v7038 = vmul.f32 1.0, %v7037
        %v7039 = vrcp.pop %v6961
        %v7040 = vmul.f32 %v6961, %v7039
        %v7041 = vsub.f32 1.0, %v7040
        %v7042 = vmul.f32 %v7039, %v7041
        %v7043 = vadd.f32 %v7039, %v7042
        %vm7044 = vweird.f32 %v6961
        %vm7045 = vweird.f32 %v7039
        %vm7046 = vmor %vm7044, %vm7045
        %v7047 = vsel %vm7046, %v7039, %v7043
        %v7048 = vand.u32 2147483647, %v6961
        %vm7049 = vcmp.eq.f32.partialorder %v7048, 8.507059e+37
        %v7050 = vand.u32 %v6961, 2147483648
        %v7051 = vor.u32 1.1754944e-38, %v7050
        %v7052 = vsel %vm7049, %v7051, %v7047
        %v7053 = vmul.f32 1.0, %v7052
        %v7054 = vrcp.pop %v6962
        %v7055 = vmul.f32 %v6962, %v7054
        %v7056 = vsub.f32 1.0, %v7055
        %v7057 = vmul.f32 %v7054, %v7056
        %v7058 = vadd.f32 %v7054, %v7057
        %vm7059 = vweird.f32 %v6962
        %vm7060 = vweird.f32 %v7054
        %vm7061 = vmor %vm7059, %vm7060
        %v7062 = vsel %vm7061, %v7054, %v7058
        %v7063 = vand.u32 2147483647, %v6962
        %vm7064 = vcmp.eq.f32.partialorder %v7063, 8.507059e+37
        %v7065 = vand.u32 %v6962, 2147483648
        %v7066 = vor.u32 1.1754944e-38, %v7065
        %v7067 = vsel %vm7064, %v7066, %v7062
        %v7068 = vmul.f32 1.0, %v7067
        %v7069 = vrcp.pop %v6963
        %v7070 = vmul.f32 %v6963, %v7069
        %v7071 = vsub.f32 1.0, %v7070
        %v7072 = vmul.f32 %v7069, %v7071
        %v7073 = vadd.f32 %v7069, %v7072
        %vm7074 = vweird.f32 %v6963
        %vm7075 = vweird.f32 %v7069
        %vm7076 = vmor %vm7074, %vm7075
        %v7077 = vsel %vm7076, %v7069, %v7073
        %v7078 = vand.u32 2147483647, %v6963
        %vm7079 = vcmp.eq.f32.partialorder %v7078, 8.507059e+37
        %v7080 = vand.u32 %v6963, 2147483648
        %v7081 = vor.u32 1.1754944e-38, %v7080
        %v7082 = vsel %vm7079, %v7081, %v7077
        %v7083 = vmul.f32 1.0, %v7082
        %v7084 = vtanh.pop %v6599
        %v7085 = vtanh.pop %v6603
        %v7086 = vtanh.pop %v6607
        %v7087 = vtanh.pop %v6611
        %v7088 = vtanh.pop %v6615
        %v7089 = vtanh.pop %v6619
        %v7090 = vtanh.pop %v6623
        %v7091 = vtanh.pop %v6627
        %v7092 = vmul.f32 %v6826, %v5317
        %v7093 = vmul.f32 %v6841, %v5318
        %v7094 = vmul.f32 %v6856, %v5319
        %v7095 = vmul.f32 %v6871, %v5320
        %v7096 = vmul.f32 %v6886, %v5321
        %v7097 = vmul.f32 %v6901, %v5322
        %v7098 = vmul.f32 %v6916, %v5323
        %v7099 = vmul.f32 %v6931, %v5324
        %v7100 = vmul.f32 %v6674, %v7084
        %v7101 = vmul.f32 %v6689, %v7085
        %v7102 = vmul.f32 %v6704, %v7086
        %v7103 = vmul.f32 %v6719, %v7087
        %v7104 = vmul.f32 %v6734, %v7088
        %v7105 = vmul.f32 %v6749, %v7089
        %v7106 = vmul.f32 %v6764, %v7090
        %v7107 = vmul.f32 %v6779, %v7091
        %v7108 = vadd.f32 %v7092, %v7100
        %v7109 = vadd.f32 %v7093, %v7101
        %v7110 = vadd.f32 %v7094, %v7102
        %v7111 = vadd.f32 %v7095, %v7103
        %v7112 = vadd.f32 %v7096, %v7104
        %v7113 = vadd.f32 %v7097, %v7105
        %v7114 = vadd.f32 %v7098, %v7106
        %v7115 = vadd.f32 %v7099, %v7107
        %v7116 = vtanh.pop %v7108
        %v7117 = vtanh.pop %v7109
        %v7118 = vtanh.pop %v7110
        %v7119 = vtanh.pop %v7111
        %v7120 = vtanh.pop %v7112
        %v7121 = vtanh.pop %v7113
        %v7122 = vtanh.pop %v7114
        %v7123 = vtanh.pop %v7115
        %v7124 = vmul.f32 %v6978, %v7116
        %v7125 = vmul.f32 %v6993, %v7117
        %v7126 = vmul.f32 %v7008, %v7118
        %v7127 = vmul.f32 %v7023, %v7119
        %v7128 = vmul.f32 %v7038, %v7120
        %v7129 = vmul.f32 %v7053, %v7121
        %v7130 = vmul.f32 %v7068, %v7122
        %v7131 = vmul.f32 %v7083, %v7123
        %v7132 = vpack.c.bf16 %v7125, %v7124
        %v7133 = vpack.c.bf16 %v7127, %v7126
        %v7134 = vpack.c.bf16 %v7129, %v7128
        %v7135 = vpack.c.bf16 %v7131, %v7130
        %v7136 = vld [vmem:[%s6] sm:$0xff]
        %v7137 = vld [vmem:[%s6 + $0x8] sm:$0xff]
        %v7138 = vld [vmem:[%s6 + $0x10] sm:$0xff]
        %v7139 = vld [vmem:[%s6 + $0x18] sm:$0xff]
        %v7140 = vld [vmem:[%s6 + $0x20] sm:$0xff]
        %v7141 = vld [vmem:[%s6 + $0x28] sm:$0xff]
        %v7142 = vld [vmem:[%s6 + $0x30] sm:$0xff]
        %v7143 = vld [vmem:[%s6 + $0x38] sm:$0xff]
        %v7144 = vld [vmem:[%s6 + $0x40] sm:$0xff]
        %v7145 = vld [vmem:[%s6 + $0x48] sm:$0xff]
        %v7146 = vld [vmem:[%s6 + $0x50] sm:$0xff]
        %v7147 = vld [vmem:[%s6 + $0x58] sm:$0xff]
        %v7148 = vld [vmem:[%s6 + $0x60] sm:$0xff]
        %v7149 = vld [vmem:[%s6 + $0x68] sm:$0xff]
        %v7150 = vld [vmem:[%s6 + $0x70] sm:$0xff]
        %v7151 = vld [vmem:[%s6 + $0x78] sm:$0xff]
        %v7168 = vunpack.c.l.b16 %v7136
        %v7169 = vunpack.c.h.b16 %v7136
        %v7170 = vunpack.c.l.b16 %v7137
        %v7171 = vunpack.c.h.b16 %v7137
        %v7172 = vunpack.c.l.b16 %v7138
        %v7173 = vunpack.c.h.b16 %v7138
        %v7174 = vunpack.c.l.b16 %v7139
        %v7175 = vunpack.c.h.b16 %v7139
        %v7176 = vunpack.c.l.b16 %v7140
        %v7177 = vunpack.c.h.b16 %v7140
        %v7178 = vunpack.c.l.b16 %v7141
        %v7179 = vunpack.c.h.b16 %v7141
        %v7180 = vunpack.c.l.b16 %v7142
        %v7181 = vunpack.c.h.b16 %v7142
        %v7182 = vunpack.c.l.b16 %v7143
        %v7183 = vunpack.c.h.b16 %v7143
        %v7184 = vunpack.c.l.b16 %v7144
        %v7185 = vunpack.c.h.b16 %v7144
        %v7186 = vunpack.c.l.b16 %v7145
        %v7187 = vunpack.c.h.b16 %v7145
        %v7188 = vunpack.c.l.b16 %v7146
        %v7189 = vunpack.c.h.b16 %v7146
        %v7190 = vunpack.c.l.b16 %v7147
        %v7191 = vunpack.c.h.b16 %v7147
        %v7192 = vunpack.c.l.b16 %v7148
        %v7193 = vunpack.c.h.b16 %v7148
        %v7194 = vunpack.c.l.b16 %v7149
        %v7195 = vunpack.c.h.b16 %v7149
        %v7196 = vunpack.c.l.b16 %v7150
        %v7197 = vunpack.c.h.b16 %v7150
        %v7198 = vunpack.c.l.b16 %v7151
        %v7199 = vunpack.c.h.b16 %v7151
        %v7200 = vpack.c.b16 %v7170, %v7168
        %v7201 = vpack.c.b16 %v7171, %v7169
        %v7202 = vpack.c.b16 %v7174, %v7172
        %v7203 = vpack.c.b16 %v7175, %v7173
        %v7204 = vpack.c.b16 %v7178, %v7176
        %v7205 = vpack.c.b16 %v7179, %v7177
        %v7206 = vpack.c.b16 %v7182, %v7180
        %v7207 = vpack.c.b16 %v7183, %v7181
        %v7208 = vpack.c.b16 %v7186, %v7184
        %v7209 = vpack.c.b16 %v7187, %v7185
        %v7210 = vpack.c.b16 %v7190, %v7188
        %v7211 = vpack.c.b16 %v7191, %v7189
        %v7212 = vpack.c.b16 %v7194, %v7192
        %v7213 = vpack.c.b16 %v7195, %v7193
        %v7214 = vpack.c.b16 %v7198, %v7196
        %v7215 = vpack.c.b16 %v7199, %v7197
        %7232 = vmatpush.bf16.msra.mxu0 %v7214
        %7233 = vmatpush.bf16.msra.mxu0 %v7212
        %7234 = vmatpush.bf16.msra.mxu0 %v7210
        %7235 = vmatpush.bf16.msra.mxu0 %v7208
        %7236 = vmatpush.bf16.msra.mxu0 %v7206
        %7237 = vmatpush.bf16.msra.mxu0 %v7204
        %7238 = vmatpush.bf16.msra.mxu0 %v7202
        %7239 = vmatpush.bf16.msra.mxu0 %v7200
        %7240 = vmatmul.bf16.gmra.mxu0 %v7132
        %v7241 = vpop.f32.mrf.mxu0
        %v7242 = vadd.f32 0.0, %v7241
        %v7243 = vpop.f32.mrf.mxu0
        %v7244 = vadd.f32 0.0, %v7243
        %7245 = vmatmul.bf16.gmra.mxu0 %v7133
        %v7246 = vpop.f32.mrf.mxu0
        %v7247 = vadd.f32 0.0, %v7246
        %v7248 = vpop.f32.mrf.mxu0
        %v7249 = vadd.f32 0.0, %v7248
        %7250 = vmatmul.bf16.gmra.mxu0 %v7134
        %v7251 = vpop.f32.mrf.mxu0
        %v7252 = vadd.f32 0.0, %v7251
        %v7253 = vpop.f32.mrf.mxu0
        %v7254 = vadd.f32 0.0, %v7253
        %7255 = vmatmul.bf16.gmra.mxu0 %v7135
        %v7256 = vpop.f32.mrf.mxu0
        %v7257 = vadd.f32 0.0, %v7256
        %v7258 = vpop.f32.mrf.mxu0
        %v7259 = vadd.f32 0.0, %v7258
        %7260 = vdwg.mxu0
        %7261 = vmatpush.bf16.msra.mxu0 %v7215
        %7262 = vmatpush.bf16.msra.mxu0 %v7213
        %7263 = vmatpush.bf16.msra.mxu0 %v7211
        %7264 = vmatpush.bf16.msra.mxu0 %v7209
        %7265 = vmatpush.bf16.msra.mxu0 %v7207
        %7266 = vmatpush.bf16.msra.mxu0 %v7205
        %7267 = vmatpush.bf16.msra.mxu0 %v7203
        %7268 = vmatpush.bf16.msra.mxu0 %v7201
        %7269 = vmatmul.bf16.gmra.mxu0 %v7132
        %v7270 = vpop.f32.mrf.mxu0
        %v7271 = vadd.f32 0.0, %v7270
        %v7272 = vpop.f32.mrf.mxu0
        %v7273 = vadd.f32 0.0, %v7272
        %7274 = vmatmul.bf16.gmra.mxu0 %v7133
        %v7275 = vpop.f32.mrf.mxu0
        %v7276 = vadd.f32 0.0, %v7275
        %v7277 = vpop.f32.mrf.mxu0
        %v7278 = vadd.f32 0.0, %v7277
        %7279 = vmatmul.bf16.gmra.mxu0 %v7134
        %v7280 = vpop.f32.mrf.mxu0
        %v7281 = vadd.f32 0.0, %v7280
        %v7282 = vpop.f32.mrf.mxu0
        %v7283 = vadd.f32 0.0, %v7282
        %7284 = vmatmul.bf16.gmra.mxu0 %v7135
        %v7285 = vpop.f32.mrf.mxu0
        %v7286 = vadd.f32 0.0, %v7285
        %v7287 = vpop.f32.mrf.mxu0
        %v7288 = vadd.f32 0.0, %v7287
        %7289 = vdwg.mxu0
        %v7290 = vld [vmem:[%s7] sm:$0x3]
        %v7292 = vperm.slane %v7290, 0
        %v7293 = vperm.slane %v7290, 1
        %v7296 = vmul.f32 %v7242, %v7292
        %v7297 = vmul.f32 %v7271, %v7293
        %v7298 = vmul.f32 %v7244, %v7292
        %v7299 = vmul.f32 %v7273, %v7293
        %v7300 = vmul.f32 %v7247, %v7292
        %v7301 = vmul.f32 %v7276, %v7293
        %v7302 = vmul.f32 %v7249, %v7292
        %v7303 = vmul.f32 %v7278, %v7293
        %v7304 = vmul.f32 %v7252, %v7292
        %v7305 = vmul.f32 %v7281, %v7293
        %v7306 = vmul.f32 %v7254, %v7292
        %v7307 = vmul.f32 %v7283, %v7293
        %v7308 = vmul.f32 %v7257, %v7292
        %v7309 = vmul.f32 %v7286, %v7293
        %v7310 = vmul.f32 %v7259, %v7292
        %v7311 = vmul.f32 %v7288, %v7293
        %v7312 = vld [vmem:[%s8] sm:$0x3]
        %v7314 = vperm.slane %v7312, 0
        %v7315 = vperm.slane %v7312, 1
        %v7318 = vadd.f32 %v7296, %v7314
        %v7319 = vadd.f32 %v7297, %v7315
        %v7320 = vadd.f32 %v7298, %v7314
        %v7321 = vadd.f32 %v7299, %v7315
        %v7322 = vadd.f32 %v7300, %v7314
        %v7323 = vadd.f32 %v7301, %v7315
        %v7324 = vadd.f32 %v7302, %v7314
        %v7325 = vadd.f32 %v7303, %v7315
        %v7326 = vadd.f32 %v7304, %v7314
        %v7327 = vadd.f32 %v7305, %v7315
        %v7328 = vadd.f32 %v7306, %v7314
        %v7329 = vadd.f32 %v7307, %v7315
        %v7330 = vadd.f32 %v7308, %v7314
        %v7331 = vadd.f32 %v7309, %v7315
        %v7332 = vadd.f32 %v7310, %v7314
        %v7333 = vadd.f32 %v7311, %v7315
        %v7334 = vmax.f32 %v7318, 0.0
        %v7335 = vmax.f32 %v7319, 0.0
        %v7336 = vmax.f32 %v7320, 0.0
        %v7337 = vmax.f32 %v7321, 0.0
        %v7338 = vmax.f32 %v7322, 0.0
        %v7339 = vmax.f32 %v7323, 0.0
        %v7340 = vmax.f32 %v7324, 0.0
        %v7341 = vmax.f32 %v7325, 0.0
        %v7342 = vmax.f32 %v7326, 0.0
        %v7343 = vmax.f32 %v7327, 0.0
        %v7344 = vmax.f32 %v7328, 0.0
        %v7345 = vmax.f32 %v7329, 0.0
        %v7346 = vmax.f32 %v7330, 0.0
        %v7347 = vmax.f32 %v7331, 0.0
        %v7348 = vmax.f32 %v7332, 0.0
        %v7349 = vmax.f32 %v7333, 0.0
        %v7350 = vadd.f32 %v7334, %v1161
        %v7351 = vadd.f32 %v7335, %v1339
        %v7352 = vadd.f32 %v7336, %v1163
        %v7353 = vadd.f32 %v7337, %v1341
        %v7354 = vadd.f32 %v7338, %v1166
        %v7355 = vadd.f32 %v7339, %v1344
        %v7356 = vadd.f32 %v7340, %v1168
        %v7357 = vadd.f32 %v7341, %v1346
        %v7358 = vadd.f32 %v7342, %v1171
        %v7359 = vadd.f32 %v7343, %v1349
        %v7360 = vadd.f32 %v7344, %v1173
        %v7361 = vadd.f32 %v7345, %v1351
        %v7362 = vadd.f32 %v7346, %v1176
        %v7363 = vadd.f32 %v7347, %v1354
        %v7364 = vadd.f32 %v7348, %v1178
        %v7365 = vadd.f32 %v7349, %v1356
        %s7366 = scalar_lea.vmem %s487, 384 [#allocation4]
        %7367 = vst [vmem:[%s7366] sm:$0xff] %v7350
        %7368 = vst [vmem:[%s7366 + $0x8] sm:$0xff] %v7351
        %7369 = vst [vmem:[%s7366 + $0x10] sm:$0xff] %v7352
        %7370 = vst [vmem:[%s7366 + $0x18] sm:$0xff] %v7353
        %7371 = vst [vmem:[%s7366 + $0x20] sm:$0xff] %v7354
        %7372 = vst [vmem:[%s7366 + $0x28] sm:$0xff] %v7355
        %7373 = vst [vmem:[%s7366 + $0x30] sm:$0xff] %v7356
        %7374 = vst [vmem:[%s7366 + $0x38] sm:$0xff] %v7357
        %7375 = vst [vmem:[%s7366 + $0x40] sm:$0xff] %v7358
        %7376 = vst [vmem:[%s7366 + $0x48] sm:$0xff] %v7359
        %7377 = vst [vmem:[%s7366 + $0x50] sm:$0xff] %v7360
        %7378 = vst [vmem:[%s7366 + $0x58] sm:$0xff] %v7361
        %7379 = vst [vmem:[%s7366 + $0x60] sm:$0xff] %v7362
        %7380 = vst [vmem:[%s7366 + $0x68] sm:$0xff] %v7363
        %7381 = vst [vmem:[%s7366 + $0x70] sm:$0xff] %v7364
        %7382 = vst [vmem:[%s7366 + $0x78] sm:$0xff] %v7365
        %s7383 = sand.u32 %s222, 1
        %s7384 = sand.u32 %s222, 1
        %s7385 = smul.addr %s7384, 512
        %s7386 = scalar_lea.vmem [#allocation4], %s7385
        // Predicated region
        $region95: #{convlstm_block_forward.1} parent=89 // pred_check
          %p7387 = pneg %p232
        $region96: #{convlstm_block_forward.1} parent=89 // pred_check_branch
          %7389 = sbr.rel (%p7387) target = $region98
        $region97: #{convlstm_block_forward.1} parent=89 // pred_region
          %s7390 = smul.u32 8, %s20
          %s7391 = smul.addr %s7390, 2
          %s7392 = smul.addr %s7391, 8
          %s7393 = scalar_lea.vmem %s9, %s7392
          // Predicated region
          $region99: #{convlstm_block_forward.1} parent=97 // pred_check
            _
          $region100: #{convlstm_block_forward.1} parent=97 // pred_check_branch
            %7395 = sbr.rel (0) target = $region102
          $region101: #{convlstm_block_forward.1} parent=97 // pred_region
            // Predicated region
            $region103: #{convlstm_block_forward.1} parent=101 // pred_check
              _
            $region104: #{convlstm_block_forward.1} parent=101 // pred_check_branch
              %7397 = sbr.rel (0) target = $region106
            $region105: #{convlstm_block_forward.1} parent=101 // pred_region
              loop: start=0, step=1, limit=1
              $region107: #{convlstm_block_forward.1} parent=105 // loop_pre_header
                _
              $region108: #{convlstm_block_forward.1} parent=105 // loop_header
                %s7399 = sphi 0, %s7403
                %p7400 = scmp.ge.s32.totalorder %s7399, 1
                %s7404 = sphi %s7386, %s7386
                %s7405 = sphi %s7393, %s7393
              $region109: #{convlstm_block_forward.1} parent=105 // loop_header_branch
                %7402 = sbr.rel (%p7400) target = $region113
              $region110: #{convlstm_block_forward.1} parent=105 // loop_body
                %v7406 = vld [vmem:[%s7404] sm:$0xff]
                %7407 = vst [vmem:[%s7405] sm:$0xff] %v7406
                %v7408 = vld [vmem:[%s7404 + $0x8] sm:$0xff]
                %7409 = vst [vmem:[%s7405 + $0x8] sm:$0xff] %v7408
                %v7410 = vld [vmem:[%s7404 + $0x10] sm:$0xff]
                %7411 = vst [vmem:[%s7405 + $0x10] sm:$0xff] %v7410
                %v7412 = vld [vmem:[%s7404 + $0x18] sm:$0xff]
                %7413 = vst [vmem:[%s7405 + $0x18] sm:$0xff] %v7412
                %v7414 = vld [vmem:[%s7404 + $0x20] sm:$0xff]
                %7415 = vst [vmem:[%s7405 + $0x20] sm:$0xff] %v7414
                %v7416 = vld [vmem:[%s7404 + $0x28] sm:$0xff]
                %7417 = vst [vmem:[%s7405 + $0x28] sm:$0xff] %v7416
                %v7418 = vld [vmem:[%s7404 + $0x30] sm:$0xff]
                %7419 = vst [vmem:[%s7405 + $0x30] sm:$0xff] %v7418
                %v7420 = vld [vmem:[%s7404 + $0x38] sm:$0xff]
                %7421 = vst [vmem:[%s7405 + $0x38] sm:$0xff] %v7420
                %v7422 = vld [vmem:[%s7404 + $0x40] sm:$0xff]
                %7423 = vst [vmem:[%s7405 + $0x40] sm:$0xff] %v7422
                %v7424 = vld [vmem:[%s7404 + $0x48] sm:$0xff]
                %7425 = vst [vmem:[%s7405 + $0x48] sm:$0xff] %v7424
                %v7426 = vld [vmem:[%s7404 + $0x50] sm:$0xff]
                %7427 = vst [vmem:[%s7405 + $0x50] sm:$0xff] %v7426
                %v7428 = vld [vmem:[%s7404 + $0x58] sm:$0xff]
                %7429 = vst [vmem:[%s7405 + $0x58] sm:$0xff] %v7428
                %v7430 = vld [vmem:[%s7404 + $0x60] sm:$0xff]
                %7431 = vst [vmem:[%s7405 + $0x60] sm:$0xff] %v7430
                %v7432 = vld [vmem:[%s7404 + $0x68] sm:$0xff]
                %7433 = vst [vmem:[%s7405 + $0x68] sm:$0xff] %v7432
                %v7434 = vld [vmem:[%s7404 + $0x70] sm:$0xff]
                %7435 = vst [vmem:[%s7405 + $0x70] sm:$0xff] %v7434
                %v7436 = vld [vmem:[%s7404 + $0x78] sm:$0xff]
                %7437 = vst [vmem:[%s7405 + $0x78] sm:$0xff] %v7436
                %v7438 = vld [vmem:[%s7404 + $0x80] sm:$0xff]
                %7439 = vst [vmem:[%s7405 + $0x100] sm:$0xff] %v7438
                %v7440 = vld [vmem:[%s7404 + $0x88] sm:$0xff]
                %7441 = vst [vmem:[%s7405 + $0x108] sm:$0xff] %v7440
                %v7442 = vld [vmem:[%s7404 + $0x90] sm:$0xff]
                %7443 = vst [vmem:[%s7405 + $0x110] sm:$0xff] %v7442
                %v7444 = vld [vmem:[%s7404 + $0x98] sm:$0xff]
                %7445 = vst [vmem:[%s7405 + $0x118] sm:$0xff] %v7444
                %v7446 = vld [vmem:[%s7404 + $0xa0] sm:$0xff]
                %7447 = vst [vmem:[%s7405 + $0x120] sm:$0xff] %v7446
                %v7448 = vld [vmem:[%s7404 + $0xa8] sm:$0xff]
                %7449 = vst [vmem:[%s7405 + $0x128] sm:$0xff] %v7448
                %v7450 = vld [vmem:[%s7404 + $0xb0] sm:$0xff]
                %7451 = vst [vmem:[%s7405 + $0x130] sm:$0xff] %v7450
                %v7452 = vld [vmem:[%s7404 + $0xb8] sm:$0xff]
                %7453 = vst [vmem:[%s7405 + $0x138] sm:$0xff] %v7452
                %v7454 = vld [vmem:[%s7404 + $0xc0] sm:$0xff]
                %7455 = vst [vmem:[%s7405 + $0x140] sm:$0xff] %v7454
                %v7456 = vld [vmem:[%s7404 + $0xc8] sm:$0xff]
                %7457 = vst [vmem:[%s7405 + $0x148] sm:$0xff] %v7456
                %v7458 = vld [vmem:[%s7404 + $0xd0] sm:$0xff]
                %7459 = vst [vmem:[%s7405 + $0x150] sm:$0xff] %v7458
                %v7460 = vld [vmem:[%s7404 + $0xd8] sm:$0xff]
                %7461 = vst [vmem:[%s7405 + $0x158] sm:$0xff] %v7460
                %v7462 = vld [vmem:[%s7404 + $0xe0] sm:$0xff]
                %7463 = vst [vmem:[%s7405 + $0x160] sm:$0xff] %v7462
                %v7464 = vld [vmem:[%s7404 + $0xe8] sm:$0xff]
                %7465 = vst [vmem:[%s7405 + $0x168] sm:$0xff] %v7464
                %v7466 = vld [vmem:[%s7404 + $0xf0] sm:$0xff]
                %7467 = vst [vmem:[%s7405 + $0x170] sm:$0xff] %v7466
                %v7468 = vld [vmem:[%s7404 + $0xf8] sm:$0xff]
                %7469 = vst [vmem:[%s7405 + $0x178] sm:$0xff] %v7468
                %v7470 = vld [vmem:[%s7404 + $0x100] sm:$0xff]
                %7471 = vst [vmem:[%s7405 + $0x200] sm:$0xff] %v7470
                %v7472 = vld [vmem:[%s7404 + $0x108] sm:$0xff]
                %7473 = vst [vmem:[%s7405 + $0x208] sm:$0xff] %v7472
                %v7474 = vld [vmem:[%s7404 + $0x110] sm:$0xff]
                %7475 = vst [vmem:[%s7405 + $0x210] sm:$0xff] %v7474
                %v7476 = vld [vmem:[%s7404 + $0x118] sm:$0xff]
                %7477 = vst [vmem:[%s7405 + $0x218] sm:$0xff] %v7476
                %v7478 = vld [vmem:[%s7404 + $0x120] sm:$0xff]
                %7479 = vst [vmem:[%s7405 + $0x220] sm:$0xff] %v7478
                %v7480 = vld [vmem:[%s7404 + $0x128] sm:$0xff]
                %7481 = vst [vmem:[%s7405 + $0x228] sm:$0xff] %v7480
                %v7482 = vld [vmem:[%s7404 + $0x130] sm:$0xff]
                %7483 = vst [vmem:[%s7405 + $0x230] sm:$0xff] %v7482
                %v7484 = vld [vmem:[%s7404 + $0x138] sm:$0xff]
                %7485 = vst [vmem:[%s7405 + $0x238] sm:$0xff] %v7484
                %v7486 = vld [vmem:[%s7404 + $0x140] sm:$0xff]
                %7487 = vst [vmem:[%s7405 + $0x240] sm:$0xff] %v7486
                %v7488 = vld [vmem:[%s7404 + $0x148] sm:$0xff]
                %7489 = vst [vmem:[%s7405 + $0x248] sm:$0xff] %v7488
                %v7490 = vld [vmem:[%s7404 + $0x150] sm:$0xff]
                %7491 = vst [vmem:[%s7405 + $0x250] sm:$0xff] %v7490
                %v7492 = vld [vmem:[%s7404 + $0x158] sm:$0xff]
                %7493 = vst [vmem:[%s7405 + $0x258] sm:$0xff] %v7492
                %v7494 = vld [vmem:[%s7404 + $0x160] sm:$0xff]
                %7495 = vst [vmem:[%s7405 + $0x260] sm:$0xff] %v7494
                %v7496 = vld [vmem:[%s7404 + $0x168] sm:$0xff]
                %7497 = vst [vmem:[%s7405 + $0x268] sm:$0xff] %v7496
                %v7498 = vld [vmem:[%s7404 + $0x170] sm:$0xff]
                %7499 = vst [vmem:[%s7405 + $0x270] sm:$0xff] %v7498
                %v7500 = vld [vmem:[%s7404 + $0x178] sm:$0xff]
                %7501 = vst [vmem:[%s7405 + $0x278] sm:$0xff] %v7500
                %v7502 = vld [vmem:[%s7404 + $0x180] sm:$0xff]
                %7503 = vst [vmem:[%s7405 + $0x300] sm:$0xff] %v7502
                %v7504 = vld [vmem:[%s7404 + $0x188] sm:$0xff]
                %7505 = vst [vmem:[%s7405 + $0x308] sm:$0xff] %v7504
                %v7506 = vld [vmem:[%s7404 + $0x190] sm:$0xff]
                %7507 = vst [vmem:[%s7405 + $0x310] sm:$0xff] %v7506
                %v7508 = vld [vmem:[%s7404 + $0x198] sm:$0xff]
                %7509 = vst [vmem:[%s7405 + $0x318] sm:$0xff] %v7508
                %v7510 = vld [vmem:[%s7404 + $0x1a0] sm:$0xff]
                %7511 = vst [vmem:[%s7405 + $0x320] sm:$0xff] %v7510
                %v7512 = vld [vmem:[%s7404 + $0x1a8] sm:$0xff]
                %7513 = vst [vmem:[%s7405 + $0x328] sm:$0xff] %v7512
                %v7514 = vld [vmem:[%s7404 + $0x1b0] sm:$0xff]
                %7515 = vst [vmem:[%s7405 + $0x330] sm:$0xff] %v7514
                %v7516 = vld [vmem:[%s7404 + $0x1b8] sm:$0xff]
                %7517 = vst [vmem:[%s7405 + $0x338] sm:$0xff] %v7516
                %v7518 = vld [vmem:[%s7404 + $0x1c0] sm:$0xff]
                %7519 = vst [vmem:[%s7405 + $0x340] sm:$0xff] %v7518
                %v7520 = vld [vmem:[%s7404 + $0x1c8] sm:$0xff]
                %7521 = vst [vmem:[%s7405 + $0x348] sm:$0xff] %v7520
                %v7522 = vld [vmem:[%s7404 + $0x1d0] sm:$0xff]
                %7523 = vst [vmem:[%s7405 + $0x350] sm:$0xff] %v7522
                %v7524 = vld [vmem:[%s7404 + $0x1d8] sm:$0xff]
                %7525 = vst [vmem:[%s7405 + $0x358] sm:$0xff] %v7524
                %v7526 = vld [vmem:[%s7404 + $0x1e0] sm:$0xff]
                %7527 = vst [vmem:[%s7405 + $0x360] sm:$0xff] %v7526
                %v7528 = vld [vmem:[%s7404 + $0x1e8] sm:$0xff]
                %7529 = vst [vmem:[%s7405 + $0x368] sm:$0xff] %v7528
                %v7530 = vld [vmem:[%s7404 + $0x1f0] sm:$0xff]
                %7531 = vst [vmem:[%s7405 + $0x370] sm:$0xff] %v7530
                %v7532 = vld [vmem:[%s7404 + $0x1f8] sm:$0xff]
                %7533 = vst [vmem:[%s7405 + $0x378] sm:$0xff] %v7532
              $region111: #{convlstm_block_forward.1} parent=105 // loop_footer
                %s7403 = sadd.s32 1, %s7399
              $region112: #{convlstm_block_forward.1} parent=105 // loop_footer_branch
                %7398 = sbr.rel target = $region108
              $region113: #{convlstm_block_forward.1} parent=105 // loop_exit
                _
            $region106: #{convlstm_block_forward.1} parent=101 // pred_fallthru
              _
            // Predicated region
            $region114: #{convlstm_block_forward.1} parent=101 // pred_check
              _
            $region115: #{convlstm_block_forward.1} parent=101 // pred_check_branch
              %7535 = sbr.rel target = $region117
            $region116: #{convlstm_block_forward.1} parent=101 // pred_region
              _
            $region117: #{convlstm_block_forward.1} parent=101 // pred_fallthru
              _
          $region102: #{convlstm_block_forward.1} parent=97 // pred_fallthru
            _
          %7536 = vnop
        $region98: #{convlstm_block_forward.1} parent=89 // pred_fallthru
          _
      $region90: #{convlstm_block_forward.1} parent=5 // pred_fallthru
        _
      %p7537 = scmp.le.s32.totalorder 2, %s15
      // Predicated region
      $region118: #{convlstm_block_forward.1} parent=5 // pred_check
        %p7538 = pneg %p7537
      $region119: #{convlstm_block_forward.1} parent=5 // pred_check_branch
        %7540 = sbr.rel (%p7538) target = $region121
      $region120: #{convlstm_block_forward.1} parent=5 // pred_region
        %s7541 = ssub.s32 %s15, 2
        // Predicated region
        $region122: #{convlstm_block_forward.1} parent=120 // pred_check
          %p7542 = pneg %p238
        $region123: #{convlstm_block_forward.1} parent=120 // pred_check_branch
          %7544 = sbr.rel (%p7542) target = $region125
        $region124: #{convlstm_block_forward.1} parent=120 // pred_region
          %s7545 = sand.u32 %s223, 1
          %s7546 = sand.u32 %s223, 1
          %s7547 = smul.addr %s7546, 512
          %s7548 = scalar_lea.vmem [#allocation4], %s7547
        $region125: #{convlstm_block_forward.1} parent=120 // pred_fallthru
          _
      $region121: #{convlstm_block_forward.1} parent=5 // pred_fallthru
        _
    $region6: #{convlstm_block_forward.1} parent=1 // loop_footer
      %s19 = sadd.s32 1, %s15
    $region7: #{convlstm_block_forward.1} parent=1 // loop_footer_branch
      %14 = sbr.rel target = $region3
    $region8: #{convlstm_block_forward.1} parent=1 // loop_exit
      _

</llo_original>
